<compile_context>
chip_gen: v5e
topology: v5e:2x2
jax: 0.10.0
libtpu: 0.0.40
codegen_flags: <defaults>
</compile_context>

<pallas_src>
import functools

import jax
import jax.numpy as jnp
from jax.experimental import pallas as pl
from jax.experimental.pallas import tpu as pltpu

BN_EPS = 1e-5
CONV_TM = 256      # lanes (spatial positions) per conv M-tile
LIN_MAX_TK = 2048  # max K-tile for FC layers; fits default scoped VMEM on v5e/v6e/v7x


def _round_up(x, m):
    return ((x + m - 1) // m) * m


def _pick_tile(dim, max_tile, quantum=128):
    """Largest multiple-of-`quantum` divisor of `dim` that is <= max_tile."""
    if dim <= max_tile:
        return dim
    t = (max_tile // quantum) * quantum
    while t >= quantum:
        if dim % t == 0:
            return t
        t -= quantum
    return dim  # fallback: single tile (always divides)


# ----------------------------------------------------------------------------
# Conv3x3 (single fused im2col matmul) + bias + ReLU + partial BN statistics
# ----------------------------------------------------------------------------
def conv_relu_stats_kernel(x9_ref, w_ref, b_ref, y_ref, stats_ref):
    # x9_ref   : (9*Cin, tm)  bf16   im2col tile, M on lanes
    # w_ref    : (Cout, 9*Cin) bf16
    # b_ref    : (Cout, 1)     f32
    # y_ref    : (Cout, tm)    f32   pre-BN, post-ReLU
    # stats_ref: (1, 2, Cout, 1) f32 per-tile [sum, sumsq] over the M tile
    y = jnp.dot(w_ref[...], x9_ref[...], preferred_element_type=jnp.float32)
    y = jnp.maximum(y + b_ref[...], 0.0)                 # bias + ReLU (pre-BN)
    y_ref[...] = y
    stats_ref[0, 0, :, :] = jnp.sum(y, axis=1, keepdims=True)        # XLU reduce
    stats_ref[0, 1, :, :] = jnp.sum(y * y, axis=1, keepdims=True)


def bn_apply_kernel(y_ref, scale_ref, shift_ref, o_ref):
    # y: (Cout, tm) f32 ; scale/shift: (Cout, 1) f32 ; o: (Cout, tm) bf16
    o_ref[...] = (y_ref[...] * scale_ref[...] + shift_ref[...]).astype(o_ref.dtype)


def conv_block(x_cnhw, w, b, gamma, beta, *, tm=CONV_TM):
    """ReflectionPad(1) -> Conv3x3 -> ReLU -> BatchNorm2d (training batch stats).

    x_cnhw: (Cin, N, H, W) bf16 channel-first activation.
    w: (Cout, Cin, 3, 3) f32 ; b/gamma/beta: (Cout,) f32
    returns (Cout, N, H, W) bf16.
    """
    Cin, N, H, W = x_cnhw.shape
    Cout = w.shape[0]
    M = N * H * W
    M_pad = _round_up(M, tm)
    n_pad = M_pad - M
    nt = M_pad // tm
    K9 = Cin * 9

    # TODO(synk): ReflectionPad2d + im2col window extraction have no clean Pallas
    # equivalent; done as XLA glue (jnp.pad/stack). Activations are tiny vs FC
    # weights, so the extra HBM traffic is negligible.
    xp = jnp.pad(x_cnhw, ((0, 0), (0, 0), (1, 1), (1, 1)), mode="reflect")
    taps = jnp.stack([xp[:, :, ky:ky + H, kx:kx + W]
                      for ky in range(3) for kx in range(3)], axis=1)
    x9 = taps.reshape(K9, M).astype(jnp.bfloat16)         # K ordered (cin, ky, kx)
    if n_pad:
        x9 = jnp.pad(x9, ((0, 0), (0, n_pad)))             # zero pad -> ReLU(bias) cols

    w2 = w.reshape(Cout, K9).astype(jnp.bfloat16)           # matches (cin, ky, kx) order
    b2 = b.reshape(Cout, 1).astype(jnp.float32)

    y, stats = pl.pallas_call(
        conv_relu_stats_kernel,
        out_shape=(jax.ShapeDtypeStruct((Cout, M_pad), jnp.float32),
                   jax.ShapeDtypeStruct((nt, 2, Cout, 1), jnp.float32)),
        grid=(nt,),
        in_specs=[
            pl.BlockSpec((K9, tm), lambda i: (0, i)),
            pl.BlockSpec((Cout, K9), lambda i: (0, 0)),
            pl.BlockSpec((Cout, 1), lambda i: (0, 0)),
        ],
        out_specs=(
            pl.BlockSpec((Cout, tm), lambda i: (0, i)),
            pl.BlockSpec((1, 2, Cout, 1), lambda i: (i, 0, 0, 0)),
        ),
        compiler_params=pltpu.CompilerParams(
            dimension_semantics=("parallel",)),
    )(x9, w2, b2)

    # Finish BN statistics (tiny O(Cout) glue). Padded columns each contributed
    # relu(bias_c); subtract analytically so stats match the un-padded batch.
    s = jnp.sum(stats, axis=0)                 # (2, Cout, 1)
    pad_val = jnp.maximum(b2, 0.0)             # value of padded columns
    ssum = s[0] - n_pad * pad_val
    ssq = s[1] - n_pad * pad_val * pad_val
    mean = ssum / M
    var = ssq / M - mean * mean                # biased batch variance (BN training)
    inv = jax.lax.rsqrt(var + BN_EPS)
    scale = gamma.reshape(Cout, 1).astype(jnp.float32) * inv
    shift = beta.reshape(Cout, 1).astype(jnp.float32) - mean * scale

    out = pl.pallas_call(
        bn_apply_kernel,
        out_shape=jax.ShapeDtypeStruct((Cout, M_pad), jnp.bfloat16),
        grid=(nt,),
        in_specs=[
            pl.BlockSpec((Cout, tm), lambda i: (0, i)),
            pl.BlockSpec((Cout, 1), lambda i: (0, 0)),
            pl.BlockSpec((Cout, 1), lambda i: (0, 0)),
        ],
        out_specs=pl.BlockSpec((Cout, tm), lambda i: (0, i)),
        compiler_params=pltpu.CompilerParams(
            dimension_semantics=("parallel",)),
    )(y, scale, shift)

    return out[:, :M].reshape(Cout, N, H, W)


# ----------------------------------------------------------------------------
# Linear (+ optional ReLU): K-tiled reduction + parallel Out tiles, bf16 in,
# f32 VMEM accumulator.
# ----------------------------------------------------------------------------
def linear_kernel(x_ref, w_ref, b_ref, o_ref, acc_ref, *, apply_relu):
    k = pl.program_id(1)

    @pl.when(k == 0)
    def _():
        acc_ref[...] = jnp.zeros_like(acc_ref)

    acc_ref[...] += jnp.dot(x_ref[...], w_ref[...],
                            preferred_element_type=jnp.float32)

    @pl.when(k == pl.num_programs(1) - 1)
    def _():
        y = acc_ref[...] + b_ref[...]
        if apply_relu:
            y = jnp.maximum(y, 0.0)
        o_ref[...] = y.astype(o_ref.dtype)


def linear(x, w, b, *, apply_relu=False, out_dtype=jnp.bfloat16,
           max_tk=LIN_MAX_TK):
    """y = x @ w + b (optional ReLU). x/w streamed in bf16, accumulated in f32."""
    N, K = x.shape
    Kw, Out = w.shape
    assert K == Kw
    tk = _pick_tile(K, max_tk)                     # always divides K
    tn = 256 if Out % 256 == 0 else (128 if Out % 128 == 0 else Out)
    kernel = functools.partial(linear_kernel, apply_relu=apply_relu)
    return pl.pallas_call(
        kernel,
        out_shape=jax.ShapeDtypeStruct((N, Out), out_dtype),
        grid=(Out // tn, K // tk),
        in_specs=[
            pl.BlockSpec((N, tk), lambda j, k: (0, k)),
            pl.BlockSpec((tk, tn), lambda j, k: (k, j)),
            pl.BlockSpec((1, tn), lambda j, k: (0, j)),
        ],
        out_specs=pl.BlockSpec((N, tn), lambda j, k: (0, j)),
        scratch_shapes=[pltpu.VMEM((N, tn), jnp.float32)],
        compiler_params=pltpu.CompilerParams(
            dimension_semantics=("parallel", "arbitrary")),
    )(x.astype(jnp.bfloat16), w.astype(jnp.bfloat16),
      b.reshape(1, Out).astype(jnp.float32))


# ----------------------------------------------------------------------------
# Parameters (deterministic synthetic init, matching module shapes)
# ----------------------------------------------------------------------------
def init_params(key, H, W):
    channels = [3, 4, 8, 16, 32]
    params = {"conv": [], "bn": [], "fc": []}
    for i in range(4):
        key, k1, k2 = jax.random.split(key, 3)
        cin, cout = channels[i], channels[i + 1]
        w = jax.random.normal(k1, (cout, cin, 3, 3), jnp.float32) / jnp.sqrt(9.0 * cin)
        b = jax.random.normal(k2, (cout,), jnp.float32) * 0.01
        params["conv"].append((w, b))
        # BatchNorm2d affine init: gamma=1, beta=0
        params["bn"].append((jnp.ones((cout,), jnp.float32),
                             jnp.zeros((cout,), jnp.float32)))
    # FC dims zero-padded to multiples of 128 (500->512, 5->128): padded lanes
    # carry zeros through the whole head, final logits sliced back to 5.
    fc_logical = [32 * H * W, 500, 500, 5]
    fc_padded = [_round_up(d, 128) for d in fc_logical]
    for i in range(3):
        key, k1, k2 = jax.random.split(key, 3)
        din, dout = fc_logical[i], fc_logical[i + 1]
        dinp, doutp = fc_padded[i], fc_padded[i + 1]
        w = jax.random.normal(k1, (din, dout), jnp.float32) / jnp.sqrt(float(din))
        b = jax.random.normal(k2, (dout,), jnp.float32) * 0.01
        wp = jnp.zeros((dinp, doutp), jnp.float32).at[:din, :dout].set(w)
        bp = jnp.zeros((doutp,), jnp.float32).at[:dout].set(b)
        params["fc"].append((wp.astype(jnp.bfloat16), bp))
    return params


# ----------------------------------------------------------------------------
# Forward pass (== SiameseNetwork.forward)
# ----------------------------------------------------------------------------
def siamese_forward(x_nchw, params):
    N = x_nchw.shape[0]
    # kernels run channel-first / spatial-last: activations are (C, N, H, W)
    x = jnp.transpose(x_nchw, (1, 0, 2, 3)).astype(jnp.bfloat16)
    for (w, b), (g, bt) in zip(params["conv"], params["bn"]):
        x = conv_block(x, w, b, g, bt)
    # output.view(N, -1) flattens NCHW in (C, H, W) order
    C, _, H, W = x.shape
    flat = jnp.transpose(x, (1, 0, 2, 3)).reshape(N, C * H * W)
    (w1, b1), (w2, b2), (w3, b3) = params["fc"]
    if w1.shape[0] > flat.shape[1]:
        flat = jnp.pad(flat, ((0, 0), (0, w1.shape[0] - flat.shape[1])))
    h = linear(flat, w1, b1, apply_relu=True)
    h = linear(h, w2, b2, apply_relu=True)
    out = linear(h, w3, b3, apply_relu=False, out_dtype=jnp.float32)
    return out[:, :5]


if __name__ == "__main__":
    H = W = 16  # scaled-down spatial size (original module assumes 100x100)
    key = jax.random.PRNGKey(0)
    kx, kp = jax.random.split(key)
    x = jax.random.normal(kx, (2, 3, H, W), jnp.float32)  # NCHW like PyTorch
    params = init_params(kp, H, W)

    out = jax.block_until_ready(jax.jit(siamese_forward)(x, params))
    assert out.shape == (2, 5) and out.dtype == jnp.float32
    assert bool(jnp.all(jnp.isfinite(out)))
    print("KERNEL_OK")
</pallas_src>

<mosaic_0001>
module attributes {stable_mosaic.version = 11 : i64} {
  func.func @conv_relu_stats_kernel(%arg0: i32, %arg1: memref<27x256xbf16, #tpu.memory_space<vmem>>, %arg2: memref<4x27xbf16, #tpu.memory_space<vmem>>, %arg3: memref<4x1xf32, #tpu.memory_space<vmem>>, %arg4: memref<4x256xf32, #tpu.memory_space<vmem>>, %arg5: memref<1x2x4x1xf32, #tpu.memory_space<vmem>>) attributes {dimension_semantics = [#tpu.dimension_semantics<parallel>], iteration_bounds = array<i64: 2>, scalar_prefetch = 0 : i64, scratch_operands = 0 : i64, tpu.core_type = #tpu.core_type<tc>, window_params = [{transform_indices = @transform_0, window_bounds = array<i64: 27, 256>}, {pipeline_mode = #tpu.pipeline_mode<synchronous>, transform_indices = @transform_1, window_bounds = array<i64: 4, 27>}, {pipeline_mode = #tpu.pipeline_mode<synchronous>, transform_indices = @transform_2, window_bounds = array<i64: 4, 1>}, {transform_indices = @transform_3, window_bounds = array<i64: 4, 256>}, {transform_indices = @transform_4, window_bounds = array<i64: 1, 2, 4, 1>}]} {
    %c0 = arith.constant 0 : index
    %c0_0 = arith.constant 0 : index
    %0 = vector.load %arg2[%c0, %c0_0] : memref<4x27xbf16, #tpu.memory_space<vmem>>, vector<4x27xbf16>
    %c0_1 = arith.constant 0 : index
    %c0_2 = arith.constant 0 : index
    %1 = vector.load %arg1[%c0_1, %c0_2] : memref<27x256xbf16, #tpu.memory_space<vmem>>, vector<27x256xbf16>
    %cst = arith.constant dense<0.000000e+00> : vector<4x256xf32>
    %2 = tpu.matmul %0, %1, %cst {dimension_numbers = #tpu.dot_dimension_numbers<[1], [0], [0], [1], [0, 0, 1, 1], [], []>} : vector<4x27xbf16>, vector<27x256xbf16>, vector<4x256xf32> -> vector<4x256xf32>
    %c0_3 = arith.constant 0 : index
    %c0_4 = arith.constant 0 : index
    %3 = vector.load %arg3[%c0_3, %c0_4] : memref<4x1xf32, #tpu.memory_space<vmem>>, vector<4x1xf32>
    %4 = vector.broadcast %3 : vector<4x1xf32> to vector<4x256xf32>
    %5 = arith.addf %2, %4 : vector<4x256xf32>
    %cst_5 = arith.constant 0.000000e+00 : f32
    %6 = vector.broadcast %cst_5 : f32 to vector<4x256xf32>
    %7 = arith.maximumf %5, %6 : vector<4x256xf32>
    %c0_6 = arith.constant 0 : index
    %c0_7 = arith.constant 0 : index
    %8 = vector.load %arg4[%c0_6, %c0_7] : memref<4x256xf32, #tpu.memory_space<vmem>>, vector<4x256xf32>
    tpu.vector_store %arg4[%c0_6, %c0_7], %7 {strides = array<i32>} : memref<4x256xf32, #tpu.memory_space<vmem>>, vector<4x256xf32>,
    %cst_8 = arith.constant dense<0.000000e+00> : vector<4xf32>
    %9 = vector.multi_reduction <add>, %7, %cst_8 [1] : vector<4x256xf32> to vector<4xf32>
    %10 = vector.shape_cast %9 : vector<4xf32> to vector<4x1xf32>
    %c0_9 = arith.constant 0 : index
    %c0_10 = arith.constant 0 : index
    %c0_11 = arith.constant 0 : index
    %c0_12 = arith.constant 0 : index
    %11 = vector.load %arg5[%c0_9, %c0_10, %c0_11, %c0_12] : memref<1x2x4x1xf32, #tpu.memory_space<vmem>>, vector<1x1x4x1xf32>
    %12 = vector.shape_cast %11 : vector<1x1x4x1xf32> to vector<4x1xf32>
    %13 = vector.shape_cast %10 : vector<4x1xf32> to vector<1x1x4x1xf32>
    tpu.vector_store %arg5[%c0_9, %c0_10, %c0_11, %c0_12], %13 {strides = array<i32>} : memref<1x2x4x1xf32, #tpu.memory_space<vmem>>, vector<1x1x4x1xf32>,
    %14 = arith.mulf %7, %7 : vector<4x256xf32>
    %cst_13 = arith.constant dense<0.000000e+00> : vector<4xf32>
    %15 = vector.multi_reduction <add>, %14, %cst_13 [1] : vector<4x256xf32> to vector<4xf32>
    %16 = vector.shape_cast %15 : vector<4xf32> to vector<4x1xf32>
    %c0_14 = arith.constant 0 : index
    %c1 = arith.constant 1 : index
    %c0_15 = arith.constant 0 : index
    %c0_16 = arith.constant 0 : index
    %17 = vector.load %arg5[%c0_14, %c1, %c0_15, %c0_16] : memref<1x2x4x1xf32, #tpu.memory_space<vmem>>, vector<1x1x4x1xf32>
    %18 = vector.shape_cast %17 : vector<1x1x4x1xf32> to vector<4x1xf32>
    %19 = vector.shape_cast %16 : vector<4x1xf32> to vector<1x1x4x1xf32>
    tpu.vector_store %arg5[%c0_14, %c1, %c0_15, %c0_16], %19 {strides = array<i32>} : memref<1x2x4x1xf32, #tpu.memory_space<vmem>>, vector<1x1x4x1xf32>,
    return
  }
  func.func @transform_0(%arg0: i32) -> (i32, i32) {
    %c0_i32 = arith.constant 0 : i32
    %c0_i32_0 = arith.constant 0 : i32
    return %c0_i32, %arg0 : i32, i32
  }
  func.func @transform_1(%arg0: i32) -> (i32, i32) {
    %c0_i32 = arith.constant 0 : i32
    %c0_i32_0 = arith.constant 0 : i32
    %c0_i32_1 = arith.constant 0 : i32
    return %c0_i32, %c0_i32_0 : i32, i32
  }
  func.func @transform_2(%arg0: i32) -> (i32, i32) {
    %c0_i32 = arith.constant 0 : i32
    %c0_i32_0 = arith.constant 0 : i32
    %c0_i32_1 = arith.constant 0 : i32
    return %c0_i32, %c0_i32_0 : i32, i32
  }
  func.func @transform_3(%arg0: i32) -> (i32, i32) {
    %c0_i32 = arith.constant 0 : i32
    %c0_i32_0 = arith.constant 0 : i32
    return %c0_i32, %arg0 : i32, i32
  }
  func.func @transform_4(%arg0: i32) -> (i32, i32, i32, i32) {
    %c0_i32 = arith.constant 0 : i32
    %c0_i32_0 = arith.constant 0 : i32
    %c0_i32_1 = arith.constant 0 : i32
    %c0_i32_2 = arith.constant 0 : i32
    return %arg0, %c0_i32, %c0_i32_0, %c0_i32_1 : i32, i32, i32, i32
  }
}

module attributes {stable_mosaic.version = 11 : i64} {
  func.func @bn_apply_kernel(%arg0: i32, %arg1: memref<4x256xf32, #tpu.memory_space<vmem>>, %arg2: memref<4x1xf32, #tpu.memory_space<vmem>>, %arg3: memref<4x1xf32, #tpu.memory_space<vmem>>, %arg4: memref<4x256xbf16, #tpu.memory_space<vmem>>) attributes {dimension_semantics = [#tpu.dimension_semantics<parallel>], iteration_bounds = array<i64: 2>, scalar_prefetch = 0 : i64, scratch_operands = 0 : i64, tpu.core_type = #tpu.core_type<tc>, window_params = [{transform_indices = @transform_0, window_bounds = array<i64: 4, 256>}, {pipeline_mode = #tpu.pipeline_mode<synchronous>, transform_indices = @transform_1, window_bounds = array<i64: 4, 1>}, {pipeline_mode = #tpu.pipeline_mode<synchronous>, transform_indices = @transform_2, window_bounds = array<i64: 4, 1>}, {transform_indices = @transform_3, window_bounds = array<i64: 4, 256>}]} {
    %c0 = arith.constant 0 : index
    %c0_0 = arith.constant 0 : index
    %0 = vector.load %arg1[%c0, %c0_0] : memref<4x256xf32, #tpu.memory_space<vmem>>, vector<4x256xf32>
    %c0_1 = arith.constant 0 : index
    %c0_2 = arith.constant 0 : index
    %1 = vector.load %arg2[%c0_1, %c0_2] : memref<4x1xf32, #tpu.memory_space<vmem>>, vector<4x1xf32>
    %2 = vector.broadcast %1 : vector<4x1xf32> to vector<4x256xf32>
    %3 = arith.mulf %0, %2 : vector<4x256xf32>
    %c0_3 = arith.constant 0 : index
    %c0_4 = arith.constant 0 : index
    %4 = vector.load %arg3[%c0_3, %c0_4] : memref<4x1xf32, #tpu.memory_space<vmem>>, vector<4x1xf32>
    %5 = vector.broadcast %4 : vector<4x1xf32> to vector<4x256xf32>
    %6 = arith.addf %3, %5 : vector<4x256xf32>
    %7 = arith.truncf %6 : vector<4x256xf32> to vector<4x256xbf16>
    %c0_5 = arith.constant 0 : index
    %c0_6 = arith.constant 0 : index
    %8 = vector.load %arg4[%c0_5, %c0_6] : memref<4x256xbf16, #tpu.memory_space<vmem>>, vector<4x256xbf16>
    tpu.vector_store %arg4[%c0_5, %c0_6], %7 {strides = array<i32>} : memref<4x256xbf16, #tpu.memory_space<vmem>>, vector<4x256xbf16>,
    return
  }
  func.func @transform_0(%arg0: i32) -> (i32, i32) {
    %c0_i32 = arith.constant 0 : i32
    %c0_i32_0 = arith.constant 0 : i32
    return %c0_i32, %arg0 : i32, i32
  }
  func.func @transform_1(%arg0: i32) -> (i32, i32) {
    %c0_i32 = arith.constant 0 : i32
    %c0_i32_0 = arith.constant 0 : i32
    %c0_i32_1 = arith.constant 0 : i32
    return %c0_i32, %c0_i32_0 : i32, i32
  }
  func.func @transform_2(%arg0: i32) -> (i32, i32) {
    %c0_i32 = arith.constant 0 : i32
    %c0_i32_0 = arith.constant 0 : i32
    %c0_i32_1 = arith.constant 0 : i32
    return %c0_i32, %c0_i32_0 : i32, i32
  }
  func.func @transform_3(%arg0: i32) -> (i32, i32) {
    %c0_i32 = arith.constant 0 : i32
    %c0_i32_0 = arith.constant 0 : i32
    return %c0_i32, %arg0 : i32, i32
  }
}

module attributes {stable_mosaic.version = 11 : i64} {
  func.func @bn_apply_kernel(%arg0: i32, %arg1: memref<8x256xf32, #tpu.memory_space<vmem>>, %arg2: memref<8x1xf32, #tpu.memory_space<vmem>>, %arg3: memref<8x1xf32, #tpu.memory_space<vmem>>, %arg4: memref<8x256xbf16, #tpu.memory_space<vmem>>) attributes {dimension_semantics = [#tpu.dimension_semantics<parallel>], iteration_bounds = array<i64: 2>, scalar_prefetch = 0 : i64, scratch_operands = 0 : i64, tpu.core_type = #tpu.core_type<tc>, window_params = [{transform_indices = @transform_0, window_bounds = array<i64: 8, 256>}, {pipeline_mode = #tpu.pipeline_mode<synchronous>, transform_indices = @transform_1, window_bounds = array<i64: 8, 1>}, {pipeline_mode = #tpu.pipeline_mode<synchronous>, transform_indices = @transform_2, window_bounds = array<i64: 8, 1>}, {transform_indices = @transform_3, window_bounds = array<i64: 8, 256>}]} {
    %c0 = arith.constant 0 : index
    %c0_0 = arith.constant 0 : index
    %0 = vector.load %arg1[%c0, %c0_0] : memref<8x256xf32, #tpu.memory_space<vmem>>, vector<8x256xf32>
    %c0_1 = arith.constant 0 : index
    %c0_2 = arith.constant 0 : index
    %1 = vector.load %arg2[%c0_1, %c0_2] : memref<8x1xf32, #tpu.memory_space<vmem>>, vector<8x1xf32>
    %2 = vector.broadcast %1 : vector<8x1xf32> to vector<8x256xf32>
    %3 = arith.mulf %0, %2 : vector<8x256xf32>
    %c0_3 = arith.constant 0 : index
    %c0_4 = arith.constant 0 : index
    %4 = vector.load %arg3[%c0_3, %c0_4] : memref<8x1xf32, #tpu.memory_space<vmem>>, vector<8x1xf32>
    %5 = vector.broadcast %4 : vector<8x1xf32> to vector<8x256xf32>
    %6 = arith.addf %3, %5 : vector<8x256xf32>
    %7 = arith.truncf %6 : vector<8x256xf32> to vector<8x256xbf16>
    %c0_5 = arith.constant 0 : index
    %c0_6 = arith.constant 0 : index
    %8 = vector.load %arg4[%c0_5, %c0_6] : memref<8x256xbf16, #tpu.memory_space<vmem>>, vector<8x256xbf16>
    tpu.vector_store %arg4[%c0_5, %c0_6], %7 {strides = array<i32>} : memref<8x256xbf16, #tpu.memory_space<vmem>>, vector<8x256xbf16>,
    return
  }
  func.func @transform_0(%arg0: i32) -> (i32, i32) {
    %c0_i32 = arith.constant 0 : i32
    %c0_i32_0 = arith.constant 0 : i32
    return %c0_i32, %arg0 : i32, i32
  }
  func.func @transform_1(%arg0: i32) -> (i32, i32) {
    %c0_i32 = arith.constant 0 : i32
    %c0_i32_0 = arith.constant 0 : i32
    %c0_i32_1 = arith.constant 0 : i32
    return %c0_i32, %c0_i32_0 : i32, i32
  }
  func.func @transform_2(%arg0: i32) -> (i32, i32) {
    %c0_i32 = arith.constant 0 : i32
    %c0_i32_0 = arith.constant 0 : i32
    %c0_i32_1 = arith.constant 0 : i32
    return %c0_i32, %c0_i32_0 : i32, i32
  }
  func.func @transform_3(%arg0: i32) -> (i32, i32) {
    %c0_i32 = arith.constant 0 : i32
    %c0_i32_0 = arith.constant 0 : i32
    return %c0_i32, %arg0 : i32, i32
  }
}

module attributes {stable_mosaic.version = 11 : i64} {
  func.func @conv_relu_stats_kernel(%arg0: i32, %arg1: memref<36x256xbf16, #tpu.memory_space<vmem>>, %arg2: memref<8x36xbf16, #tpu.memory_space<vmem>>, %arg3: memref<8x1xf32, #tpu.memory_space<vmem>>, %arg4: memref<8x256xf32, #tpu.memory_space<vmem>>, %arg5: memref<1x2x8x1xf32, #tpu.memory_space<vmem>>) attributes {dimension_semantics = [#tpu.dimension_semantics<parallel>], iteration_bounds = array<i64: 2>, scalar_prefetch = 0 : i64, scratch_operands = 0 : i64, tpu.core_type = #tpu.core_type<tc>, window_params = [{transform_indices = @transform_0, window_bounds = array<i64: 36, 256>}, {pipeline_mode = #tpu.pipeline_mode<synchronous>, transform_indices = @transform_1, window_bounds = array<i64: 8, 36>}, {pipeline_mode = #tpu.pipeline_mode<synchronous>, transform_indices = @transform_2, window_bounds = array<i64: 8, 1>}, {transform_indices = @transform_3, window_bounds = array<i64: 8, 256>}, {transform_indices = @transform_4, window_bounds = array<i64: 1, 2, 8, 1>}]} {
    %c0 = arith.constant 0 : index
    %c0_0 = arith.constant 0 : index
    %0 = vector.load %arg2[%c0, %c0_0] : memref<8x36xbf16, #tpu.memory_space<vmem>>, vector<8x36xbf16>
    %c0_1 = arith.constant 0 : index
    %c0_2 = arith.constant 0 : index
    %1 = vector.load %arg1[%c0_1, %c0_2] : memref<36x256xbf16, #tpu.memory_space<vmem>>, vector<36x256xbf16>
    %cst = arith.constant dense<0.000000e+00> : vector<8x256xf32>
    %2 = tpu.matmul %0, %1, %cst {dimension_numbers = #tpu.dot_dimension_numbers<[1], [0], [0], [1], [0, 0, 1, 1], [], []>} : vector<8x36xbf16>, vector<36x256xbf16>, vector<8x256xf32> -> vector<8x256xf32>
    %c0_3 = arith.constant 0 : index
    %c0_4 = arith.constant 0 : index
    %3 = vector.load %arg3[%c0_3, %c0_4] : memref<8x1xf32, #tpu.memory_space<vmem>>, vector<8x1xf32>
    %4 = vector.broadcast %3 : vector<8x1xf32> to vector<8x256xf32>
    %5 = arith.addf %2, %4 : vector<8x256xf32>
    %cst_5 = arith.constant 0.000000e+00 : f32
    %6 = vector.broadcast %cst_5 : f32 to vector<8x256xf32>
    %7 = arith.maximumf %5, %6 : vector<8x256xf32>
    %c0_6 = arith.constant 0 : index
    %c0_7 = arith.constant 0 : index
    %8 = vector.load %arg4[%c0_6, %c0_7] : memref<8x256xf32, #tpu.memory_space<vmem>>, vector<8x256xf32>
    tpu.vector_store %arg4[%c0_6, %c0_7], %7 {strides = array<i32>} : memref<8x256xf32, #tpu.memory_space<vmem>>, vector<8x256xf32>,
    %cst_8 = arith.constant dense<0.000000e+00> : vector<8xf32>
    %9 = vector.multi_reduction <add>, %7, %cst_8 [1] : vector<8x256xf32> to vector<8xf32>
    %10 = vector.shape_cast %9 : vector<8xf32> to vector<8x1xf32>
    %c0_9 = arith.constant 0 : index
    %c0_10 = arith.constant 0 : index
    %c0_11 = arith.constant 0 : index
    %c0_12 = arith.constant 0 : index
    %11 = vector.load %arg5[%c0_9, %c0_10, %c0_11, %c0_12] : memref<1x2x8x1xf32, #tpu.memory_space<vmem>>, vector<1x1x8x1xf32>
    %12 = vector.shape_cast %11 : vector<1x1x8x1xf32> to vector<8x1xf32>
    %13 = vector.shape_cast %10 : vector<8x1xf32> to vector<1x1x8x1xf32>
    tpu.vector_store %arg5[%c0_9, %c0_10, %c0_11, %c0_12], %13 {strides = array<i32>} : memref<1x2x8x1xf32, #tpu.memory_space<vmem>>, vector<1x1x8x1xf32>,
    %14 = arith.mulf %7, %7 : vector<8x256xf32>
    %cst_13 = arith.constant dense<0.000000e+00> : vector<8xf32>
    %15 = vector.multi_reduction <add>, %14, %cst_13 [1] : vector<8x256xf32> to vector<8xf32>
    %16 = vector.shape_cast %15 : vector<8xf32> to vector<8x1xf32>
    %c0_14 = arith.constant 0 : index
    %c1 = arith.constant 1 : index
    %c0_15 = arith.constant 0 : index
    %c0_16 = arith.constant 0 : index
    %17 = vector.load %arg5[%c0_14, %c1, %c0_15, %c0_16] : memref<1x2x8x1xf32, #tpu.memory_space<vmem>>, vector<1x1x8x1xf32>
    %18 = vector.shape_cast %17 : vector<1x1x8x1xf32> to vector<8x1xf32>
    %19 = vector.shape_cast %16 : vector<8x1xf32> to vector<1x1x8x1xf32>
    tpu.vector_store %arg5[%c0_14, %c1, %c0_15, %c0_16], %19 {strides = array<i32>} : memref<1x2x8x1xf32, #tpu.memory_space<vmem>>, vector<1x1x8x1xf32>,
    return
  }
  func.func @transform_0(%arg0: i32) -> (i32, i32) {
    %c0_i32 = arith.constant 0 : i32
    %c0_i32_0 = arith.constant 0 : i32
    return %c0_i32, %arg0 : i32, i32
  }
  func.func @transform_1(%arg0: i32) -> (i32, i32) {
    %c0_i32 = arith.constant 0 : i32
    %c0_i32_0 = arith.constant 0 : i32
    %c0_i32_1 = arith.constant 0 : i32
    return %c0_i32, %c0_i32_0 : i32, i32
  }
  func.func @transform_2(%arg0: i32) -> (i32, i32) {
    %c0_i32 = arith.constant 0 : i32
    %c0_i32_0 = arith.constant 0 : i32
    %c0_i32_1 = arith.constant 0 : i32
    return %c0_i32, %c0_i32_0 : i32, i32
  }
  func.func @transform_3(%arg0: i32) -> (i32, i32) {
    %c0_i32 = arith.constant 0 : i32
    %c0_i32_0 = arith.constant 0 : i32
    return %c0_i32, %arg0 : i32, i32
  }
  func.func @transform_4(%arg0: i32) -> (i32, i32, i32, i32) {
    %c0_i32 = arith.constant 0 : i32
    %c0_i32_0 = arith.constant 0 : i32
    %c0_i32_1 = arith.constant 0 : i32
    %c0_i32_2 = arith.constant 0 : i32
    return %arg0, %c0_i32, %c0_i32_0, %c0_i32_1 : i32, i32, i32, i32
  }
}

module attributes {stable_mosaic.version = 11 : i64} {
  func.func @conv_relu_stats_kernel(%arg0: i32, %arg1: memref<72x256xbf16, #tpu.memory_space<vmem>>, %arg2: memref<16x72xbf16, #tpu.memory_space<vmem>>, %arg3: memref<16x1xf32, #tpu.memory_space<vmem>>, %arg4: memref<16x256xf32, #tpu.memory_space<vmem>>, %arg5: memref<1x2x16x1xf32, #tpu.memory_space<vmem>>) attributes {dimension_semantics = [#tpu.dimension_semantics<parallel>], iteration_bounds = array<i64: 2>, scalar_prefetch = 0 : i64, scratch_operands = 0 : i64, tpu.core_type = #tpu.core_type<tc>, window_params = [{transform_indices = @transform_0, window_bounds = array<i64: 72, 256>}, {pipeline_mode = #tpu.pipeline_mode<synchronous>, transform_indices = @transform_1, window_bounds = array<i64: 16, 72>}, {pipeline_mode = #tpu.pipeline_mode<synchronous>, transform_indices = @transform_2, window_bounds = array<i64: 16, 1>}, {transform_indices = @transform_3, window_bounds = array<i64: 16, 256>}, {transform_indices = @transform_4, window_bounds = array<i64: 1, 2, 16, 1>}]} {
    %c0 = arith.constant 0 : index
    %c0_0 = arith.constant 0 : index
    %0 = vector.load %arg2[%c0, %c0_0] : memref<16x72xbf16, #tpu.memory_space<vmem>>, vector<16x72xbf16>
    %c0_1 = arith.constant 0 : index
    %c0_2 = arith.constant 0 : index
    %1 = vector.load %arg1[%c0_1, %c0_2] : memref<72x256xbf16, #tpu.memory_space<vmem>>, vector<72x256xbf16>
    %cst = arith.constant dense<0.000000e+00> : vector<16x256xf32>
    %2 = tpu.matmul %0, %1, %cst {dimension_numbers = #tpu.dot_dimension_numbers<[1], [0], [0], [1], [0, 0, 1, 1], [], []>} : vector<16x72xbf16>, vector<72x256xbf16>, vector<16x256xf32> -> vector<16x256xf32>
    %c0_3 = arith.constant 0 : index
    %c0_4 = arith.constant 0 : index
    %3 = vector.load %arg3[%c0_3, %c0_4] : memref<16x1xf32, #tpu.memory_space<vmem>>, vector<16x1xf32>
    %4 = vector.broadcast %3 : vector<16x1xf32> to vector<16x256xf32>
    %5 = arith.addf %2, %4 : vector<16x256xf32>
    %cst_5 = arith.constant 0.000000e+00 : f32
    %6 = vector.broadcast %cst_5 : f32 to vector<16x256xf32>
    %7 = arith.maximumf %5, %6 : vector<16x256xf32>
    %c0_6 = arith.constant 0 : index
    %c0_7 = arith.constant 0 : index
    %8 = vector.load %arg4[%c0_6, %c0_7] : memref<16x256xf32, #tpu.memory_space<vmem>>, vector<16x256xf32>
    tpu.vector_store %arg4[%c0_6, %c0_7], %7 {strides = array<i32>} : memref<16x256xf32, #tpu.memory_space<vmem>>, vector<16x256xf32>,
    %cst_8 = arith.constant dense<0.000000e+00> : vector<16xf32>
    %9 = vector.multi_reduction <add>, %7, %cst_8 [1] : vector<16x256xf32> to vector<16xf32>
    %10 = vector.shape_cast %9 : vector<16xf32> to vector<16x1xf32>
    %c0_9 = arith.constant 0 : index
    %c0_10 = arith.constant 0 : index
    %c0_11 = arith.constant 0 : index
    %c0_12 = arith.constant 0 : index
    %11 = vector.load %arg5[%c0_9, %c0_10, %c0_11, %c0_12] : memref<1x2x16x1xf32, #tpu.memory_space<vmem>>, vector<1x1x16x1xf32>
    %12 = vector.shape_cast %11 : vector<1x1x16x1xf32> to vector<16x1xf32>
    %13 = vector.shape_cast %10 : vector<16x1xf32> to vector<1x1x16x1xf32>
    tpu.vector_store %arg5[%c0_9, %c0_10, %c0_11, %c0_12], %13 {strides = array<i32>} : memref<1x2x16x1xf32, #tpu.memory_space<vmem>>, vector<1x1x16x1xf32>,
    %14 = arith.mulf %7, %7 : vector<16x256xf32>
    %cst_13 = arith.constant dense<0.000000e+00> : vector<16xf32>
    %15 = vector.multi_reduction <add>, %14, %cst_13 [1] : vector<16x256xf32> to vector<16xf32>
    %16 = vector.shape_cast %15 : vector<16xf32> to vector<16x1xf32>
    %c0_14 = arith.constant 0 : index
    %c1 = arith.constant 1 : index
    %c0_15 = arith.constant 0 : index
    %c0_16 = arith.constant 0 : index
    %17 = vector.load %arg5[%c0_14, %c1, %c0_15, %c0_16] : memref<1x2x16x1xf32, #tpu.memory_space<vmem>>, vector<1x1x16x1xf32>
    %18 = vector.shape_cast %17 : vector<1x1x16x1xf32> to vector<16x1xf32>
    %19 = vector.shape_cast %16 : vector<16x1xf32> to vector<1x1x16x1xf32>
    tpu.vector_store %arg5[%c0_14, %c1, %c0_15, %c0_16], %19 {strides = array<i32>} : memref<1x2x16x1xf32, #tpu.memory_space<vmem>>, vector<1x1x16x1xf32>,
    return
  }
  func.func @transform_0(%arg0: i32) -> (i32, i32) {
    %c0_i32 = arith.constant 0 : i32
    %c0_i32_0 = arith.constant 0 : i32
    return %c0_i32, %arg0 : i32, i32
  }
  func.func @transform_1(%arg0: i32) -> (i32, i32) {
    %c0_i32 = arith.constant 0 : i32
    %c0_i32_0 = arith.constant 0 : i32
    %c0_i32_1 = arith.constant 0 : i32
    return %c0_i32, %c0_i32_0 : i32, i32
  }
  func.func @transform_2(%arg0: i32) -> (i32, i32) {
    %c0_i32 = arith.constant 0 : i32
    %c0_i32_0 = arith.constant 0 : i32
    %c0_i32_1 = arith.constant 0 : i32
    return %c0_i32, %c0_i32_0 : i32, i32
  }
  func.func @transform_3(%arg0: i32) -> (i32, i32) {
    %c0_i32 = arith.constant 0 : i32
    %c0_i32_0 = arith.constant 0 : i32
    return %c0_i32, %arg0 : i32, i32
  }
  func.func @transform_4(%arg0: i32) -> (i32, i32, i32, i32) {
    %c0_i32 = arith.constant 0 : i32
    %c0_i32_0 = arith.constant 0 : i32
    %c0_i32_1 = arith.constant 0 : i32
    %c0_i32_2 = arith.constant 0 : i32
    return %arg0, %c0_i32, %c0_i32_0, %c0_i32_1 : i32, i32, i32, i32
  }
}

module attributes {stable_mosaic.version = 11 : i64} {
  func.func @bn_apply_kernel(%arg0: i32, %arg1: memref<16x256xf32, #tpu.memory_space<vmem>>, %arg2: memref<16x1xf32, #tpu.memory_space<vmem>>, %arg3: memref<16x1xf32, #tpu.memory_space<vmem>>, %arg4: memref<16x256xbf16, #tpu.memory_space<vmem>>) attributes {dimension_semantics = [#tpu.dimension_semantics<parallel>], iteration_bounds = array<i64: 2>, scalar_prefetch = 0 : i64, scratch_operands = 0 : i64, tpu.core_type = #tpu.core_type<tc>, window_params = [{transform_indices = @transform_0, window_bounds = array<i64: 16, 256>}, {pipeline_mode = #tpu.pipeline_mode<synchronous>, transform_indices = @transform_1, window_bounds = array<i64: 16, 1>}, {pipeline_mode = #tpu.pipeline_mode<synchronous>, transform_indices = @transform_2, window_bounds = array<i64: 16, 1>}, {transform_indices = @transform_3, window_bounds = array<i64: 16, 256>}]} {
    %c0 = arith.constant 0 : index
    %c0_0 = arith.constant 0 : index
    %0 = vector.load %arg1[%c0, %c0_0] : memref<16x256xf32, #tpu.memory_space<vmem>>, vector<16x256xf32>
    %c0_1 = arith.constant 0 : index
    %c0_2 = arith.constant 0 : index
    %1 = vector.load %arg2[%c0_1, %c0_2] : memref<16x1xf32, #tpu.memory_space<vmem>>, vector<16x1xf32>
    %2 = vector.broadcast %1 : vector<16x1xf32> to vector<16x256xf32>
    %3 = arith.mulf %0, %2 : vector<16x256xf32>
    %c0_3 = arith.constant 0 : index
    %c0_4 = arith.constant 0 : index
    %4 = vector.load %arg3[%c0_3, %c0_4] : memref<16x1xf32, #tpu.memory_space<vmem>>, vector<16x1xf32>
    %5 = vector.broadcast %4 : vector<16x1xf32> to vector<16x256xf32>
    %6 = arith.addf %3, %5 : vector<16x256xf32>
    %7 = arith.truncf %6 : vector<16x256xf32> to vector<16x256xbf16>
    %c0_5 = arith.constant 0 : index
    %c0_6 = arith.constant 0 : index
    %8 = vector.load %arg4[%c0_5, %c0_6] : memref<16x256xbf16, #tpu.memory_space<vmem>>, vector<16x256xbf16>
    tpu.vector_store %arg4[%c0_5, %c0_6], %7 {strides = array<i32>} : memref<16x256xbf16, #tpu.memory_space<vmem>>, vector<16x256xbf16>,
    return
  }
  func.func @transform_0(%arg0: i32) -> (i32, i32) {
    %c0_i32 = arith.constant 0 : i32
    %c0_i32_0 = arith.constant 0 : i32
    return %c0_i32, %arg0 : i32, i32
  }
  func.func @transform_1(%arg0: i32) -> (i32, i32) {
    %c0_i32 = arith.constant 0 : i32
    %c0_i32_0 = arith.constant 0 : i32
    %c0_i32_1 = arith.constant 0 : i32
    return %c0_i32, %c0_i32_0 : i32, i32
  }
  func.func @transform_2(%arg0: i32) -> (i32, i32) {
    %c0_i32 = arith.constant 0 : i32
    %c0_i32_0 = arith.constant 0 : i32
    %c0_i32_1 = arith.constant 0 : i32
    return %c0_i32, %c0_i32_0 : i32, i32
  }
  func.func @transform_3(%arg0: i32) -> (i32, i32) {
    %c0_i32 = arith.constant 0 : i32
    %c0_i32_0 = arith.constant 0 : i32
    return %c0_i32, %arg0 : i32, i32
  }
}

module attributes {stable_mosaic.version = 11 : i64} {
  func.func @conv_relu_stats_kernel(%arg0: i32, %arg1: memref<144x256xbf16, #tpu.memory_space<vmem>>, %arg2: memref<32x144xbf16, #tpu.memory_space<vmem>>, %arg3: memref<32x1xf32, #tpu.memory_space<vmem>>, %arg4: memref<32x256xf32, #tpu.memory_space<vmem>>, %arg5: memref<1x2x32x1xf32, #tpu.memory_space<vmem>>) attributes {dimension_semantics = [#tpu.dimension_semantics<parallel>], iteration_bounds = array<i64: 2>, scalar_prefetch = 0 : i64, scratch_operands = 0 : i64, tpu.core_type = #tpu.core_type<tc>, window_params = [{transform_indices = @transform_0, window_bounds = array<i64: 144, 256>}, {pipeline_mode = #tpu.pipeline_mode<synchronous>, transform_indices = @transform_1, window_bounds = array<i64: 32, 144>}, {pipeline_mode = #tpu.pipeline_mode<synchronous>, transform_indices = @transform_2, window_bounds = array<i64: 32, 1>}, {transform_indices = @transform_3, window_bounds = array<i64: 32, 256>}, {transform_indices = @transform_4, window_bounds = array<i64: 1, 2, 32, 1>}]} {
    %c0 = arith.constant 0 : index
    %c0_0 = arith.constant 0 : index
    %0 = vector.load %arg2[%c0, %c0_0] : memref<32x144xbf16, #tpu.memory_space<vmem>>, vector<32x144xbf16>
    %c0_1 = arith.constant 0 : index
    %c0_2 = arith.constant 0 : index
    %1 = vector.load %arg1[%c0_1, %c0_2] : memref<144x256xbf16, #tpu.memory_space<vmem>>, vector<144x256xbf16>
    %cst = arith.constant dense<0.000000e+00> : vector<32x256xf32>
    %2 = tpu.matmul %0, %1, %cst {dimension_numbers = #tpu.dot_dimension_numbers<[1], [0], [0], [1], [0, 0, 1, 1], [], []>} : vector<32x144xbf16>, vector<144x256xbf16>, vector<32x256xf32> -> vector<32x256xf32>
    %c0_3 = arith.constant 0 : index
    %c0_4 = arith.constant 0 : index
    %3 = vector.load %arg3[%c0_3, %c0_4] : memref<32x1xf32, #tpu.memory_space<vmem>>, vector<32x1xf32>
    %4 = vector.broadcast %3 : vector<32x1xf32> to vector<32x256xf32>
    %5 = arith.addf %2, %4 : vector<32x256xf32>
    %cst_5 = arith.constant 0.000000e+00 : f32
    %6 = vector.broadcast %cst_5 : f32 to vector<32x256xf32>
    %7 = arith.maximumf %5, %6 : vector<32x256xf32>
    %c0_6 = arith.constant 0 : index
    %c0_7 = arith.constant 0 : index
    %8 = vector.load %arg4[%c0_6, %c0_7] : memref<32x256xf32, #tpu.memory_space<vmem>>, vector<32x256xf32>
    tpu.vector_store %arg4[%c0_6, %c0_7], %7 {strides = array<i32>} : memref<32x256xf32, #tpu.memory_space<vmem>>, vector<32x256xf32>,
    %cst_8 = arith.constant dense<0.000000e+00> : vector<32xf32>
    %9 = vector.multi_reduction <add>, %7, %cst_8 [1] : vector<32x256xf32> to vector<32xf32>
    %10 = vector.shape_cast %9 : vector<32xf32> to vector<32x1xf32>
    %c0_9 = arith.constant 0 : index
    %c0_10 = arith.constant 0 : index
    %c0_11 = arith.constant 0 : index
    %c0_12 = arith.constant 0 : index
    %11 = vector.load %arg5[%c0_9, %c0_10, %c0_11, %c0_12] : memref<1x2x32x1xf32, #tpu.memory_space<vmem>>, vector<1x1x32x1xf32>
    %12 = vector.shape_cast %11 : vector<1x1x32x1xf32> to vector<32x1xf32>
    %13 = vector.shape_cast %10 : vector<32x1xf32> to vector<1x1x32x1xf32>
    tpu.vector_store %arg5[%c0_9, %c0_10, %c0_11, %c0_12], %13 {strides = array<i32>} : memref<1x2x32x1xf32, #tpu.memory_space<vmem>>, vector<1x1x32x1xf32>,
    %14 = arith.mulf %7, %7 : vector<32x256xf32>
    %cst_13 = arith.constant dense<0.000000e+00> : vector<32xf32>
    %15 = vector.multi_reduction <add>, %14, %cst_13 [1] : vector<32x256xf32> to vector<32xf32>
    %16 = vector.shape_cast %15 : vector<32xf32> to vector<32x1xf32>
    %c0_14 = arith.constant 0 : index
    %c1 = arith.constant 1 : index
    %c0_15 = arith.constant 0 : index
    %c0_16 = arith.constant 0 : index
    %17 = vector.load %arg5[%c0_14, %c1, %c0_15, %c0_16] : memref<1x2x32x1xf32, #tpu.memory_space<vmem>>, vector<1x1x32x1xf32>
    %18 = vector.shape_cast %17 : vector<1x1x32x1xf32> to vector<32x1xf32>
    %19 = vector.shape_cast %16 : vector<32x1xf32> to vector<1x1x32x1xf32>
    tpu.vector_store %arg5[%c0_14, %c1, %c0_15, %c0_16], %19 {strides = array<i32>} : memref<1x2x32x1xf32, #tpu.memory_space<vmem>>, vector<1x1x32x1xf32>,
    return
  }
  func.func @transform_0(%arg0: i32) -> (i32, i32) {
    %c0_i32 = arith.constant 0 : i32
    %c0_i32_0 = arith.constant 0 : i32
    return %c0_i32, %arg0 : i32, i32
  }
  func.func @transform_1(%arg0: i32) -> (i32, i32) {
    %c0_i32 = arith.constant 0 : i32
    %c0_i32_0 = arith.constant 0 : i32
    %c0_i32_1 = arith.constant 0 : i32
    return %c0_i32, %c0_i32_0 : i32, i32
  }
  func.func @transform_2(%arg0: i32) -> (i32, i32) {
    %c0_i32 = arith.constant 0 : i32
    %c0_i32_0 = arith.constant 0 : i32
    %c0_i32_1 = arith.constant 0 : i32
    return %c0_i32, %c0_i32_0 : i32, i32
  }
  func.func @transform_3(%arg0: i32) -> (i32, i32) {
    %c0_i32 = arith.constant 0 : i32
    %c0_i32_0 = arith.constant 0 : i32
    return %c0_i32, %arg0 : i32, i32
  }
  func.func @transform_4(%arg0: i32) -> (i32, i32, i32, i32) {
    %c0_i32 = arith.constant 0 : i32
    %c0_i32_0 = arith.constant 0 : i32
    %c0_i32_1 = arith.constant 0 : i32
    %c0_i32_2 = arith.constant 0 : i32
    return %arg0, %c0_i32, %c0_i32_0, %c0_i32_1 : i32, i32, i32, i32
  }
}

module attributes {stable_mosaic.version = 11 : i64} {
  func.func @bn_apply_kernel(%arg0: i32, %arg1: memref<32x256xf32, #tpu.memory_space<vmem>>, %arg2: memref<32x1xf32, #tpu.memory_space<vmem>>, %arg3: memref<32x1xf32, #tpu.memory_space<vmem>>, %arg4: memref<32x256xbf16, #tpu.memory_space<vmem>>) attributes {dimension_semantics = [#tpu.dimension_semantics<parallel>], iteration_bounds = array<i64: 2>, scalar_prefetch = 0 : i64, scratch_operands = 0 : i64, tpu.core_type = #tpu.core_type<tc>, window_params = [{transform_indices = @transform_0, window_bounds = array<i64: 32, 256>}, {pipeline_mode = #tpu.pipeline_mode<synchronous>, transform_indices = @transform_1, window_bounds = array<i64: 32, 1>}, {pipeline_mode = #tpu.pipeline_mode<synchronous>, transform_indices = @transform_2, window_bounds = array<i64: 32, 1>}, {transform_indices = @transform_3, window_bounds = array<i64: 32, 256>}]} {
    %c0 = arith.constant 0 : index
    %c0_0 = arith.constant 0 : index
    %0 = vector.load %arg1[%c0, %c0_0] : memref<32x256xf32, #tpu.memory_space<vmem>>, vector<32x256xf32>
    %c0_1 = arith.constant 0 : index
    %c0_2 = arith.constant 0 : index
    %1 = vector.load %arg2[%c0_1, %c0_2] : memref<32x1xf32, #tpu.memory_space<vmem>>, vector<32x1xf32>
    %2 = vector.broadcast %1 : vector<32x1xf32> to vector<32x256xf32>
    %3 = arith.mulf %0, %2 : vector<32x256xf32>
    %c0_3 = arith.constant 0 : index
    %c0_4 = arith.constant 0 : index
    %4 = vector.load %arg3[%c0_3, %c0_4] : memref<32x1xf32, #tpu.memory_space<vmem>>, vector<32x1xf32>
    %5 = vector.broadcast %4 : vector<32x1xf32> to vector<32x256xf32>
    %6 = arith.addf %3, %5 : vector<32x256xf32>
    %7 = arith.truncf %6 : vector<32x256xf32> to vector<32x256xbf16>
    %c0_5 = arith.constant 0 : index
    %c0_6 = arith.constant 0 : index
    %8 = vector.load %arg4[%c0_5, %c0_6] : memref<32x256xbf16, #tpu.memory_space<vmem>>, vector<32x256xbf16>
    tpu.vector_store %arg4[%c0_5, %c0_6], %7 {strides = array<i32>} : memref<32x256xbf16, #tpu.memory_space<vmem>>, vector<32x256xbf16>,
    return
  }
  func.func @transform_0(%arg0: i32) -> (i32, i32) {
    %c0_i32 = arith.constant 0 : i32
    %c0_i32_0 = arith.constant 0 : i32
    return %c0_i32, %arg0 : i32, i32
  }
  func.func @transform_1(%arg0: i32) -> (i32, i32) {
    %c0_i32 = arith.constant 0 : i32
    %c0_i32_0 = arith.constant 0 : i32
    %c0_i32_1 = arith.constant 0 : i32
    return %c0_i32, %c0_i32_0 : i32, i32
  }
  func.func @transform_2(%arg0: i32) -> (i32, i32) {
    %c0_i32 = arith.constant 0 : i32
    %c0_i32_0 = arith.constant 0 : i32
    %c0_i32_1 = arith.constant 0 : i32
    return %c0_i32, %c0_i32_0 : i32, i32
  }
  func.func @transform_3(%arg0: i32) -> (i32, i32) {
    %c0_i32 = arith.constant 0 : i32
    %c0_i32_0 = arith.constant 0 : i32
    return %c0_i32, %arg0 : i32, i32
  }
}

module attributes {stable_mosaic.version = 11 : i64} {
  func.func @linear_kernel(%arg0: i32, %arg1: i32, %arg2: memref<2x2048xbf16, #tpu.memory_space<vmem>>, %arg3: memref<2048x256xbf16, #tpu.memory_space<vmem>>, %arg4: memref<1x256xf32, #tpu.memory_space<vmem>>, %arg5: memref<2x256xbf16, #tpu.memory_space<vmem>>, %arg6: memref<2x256xf32, #tpu.memory_space<vmem>>) attributes {dimension_semantics = [#tpu.dimension_semantics<parallel>, #tpu.dimension_semantics<arbitrary>], iteration_bounds = array<i64: 2, 4>, scalar_prefetch = 0 : i64, scratch_operands = 1 : i64, tpu.core_type = #tpu.core_type<tc>, window_params = [{transform_indices = @transform_0, window_bounds = array<i64: 2, 2048>}, {transform_indices = @transform_1, window_bounds = array<i64: 2048, 256>}, {transform_indices = @transform_2, window_bounds = array<i64: 1, 256>}, {transform_indices = @transform_3, window_bounds = array<i64: 2, 256>}]} {
    %c0_i32 = arith.constant 0 : i32
    %0 = arith.cmpi eq, %arg1, %c0_i32 : i32
    %1 = arith.extui %0 : i1 to i32
    %c0_i32_0 = arith.constant 0 : i32
    %2 = arith.cmpi ne, %1, %c0_i32_0 : i32
    scf.if %2 {
      %cst_9 = arith.constant 0.000000e+00 : f32
      %12 = vector.broadcast %cst_9 : f32 to vector<2x256xf32>
      %c0_10 = arith.constant 0 : index
      %c0_11 = arith.constant 0 : index
      %13 = vector.load %arg6[%c0_10, %c0_11] : memref<2x256xf32, #tpu.memory_space<vmem>>, vector<2x256xf32>
      tpu.vector_store %arg6[%c0_10, %c0_11], %12 {strides = array<i32>} : memref<2x256xf32, #tpu.memory_space<vmem>>, vector<2x256xf32>,
    } else {
    }
    %c0 = arith.constant 0 : index
    %c0_1 = arith.constant 0 : index
    %3 = vector.load %arg6[%c0, %c0_1] : memref<2x256xf32, #tpu.memory_space<vmem>>, vector<2x256xf32>
    %c0_2 = arith.constant 0 : index
    %c0_3 = arith.constant 0 : index
    %4 = vector.load %arg2[%c0_2, %c0_3] : memref<2x2048xbf16, #tpu.memory_space<vmem>>, vector<2x2048xbf16>
    %c0_4 = arith.constant 0 : index
    %c0_5 = arith.constant 0 : index
    %5 = vector.load %arg3[%c0_4, %c0_5] : memref<2048x256xbf16, #tpu.memory_space<vmem>>, vector<2048x256xbf16>
    %cst = arith.constant dense<0.000000e+00> : vector<2x256xf32>
    %6 = tpu.matmul %4, %5, %cst {dimension_numbers = #tpu.dot_dimension_numbers<[1], [0], [0], [1], [0, 0, 1, 1], [], []>} : vector<2x2048xbf16>, vector<2048x256xbf16>, vector<2x256xf32> -> vector<2x256xf32>
    %7 = arith.addf %3, %6 : vector<2x256xf32>
    %c0_6 = arith.constant 0 : index
    %c0_7 = arith.constant 0 : index
    %8 = vector.load %arg6[%c0_6, %c0_7] : memref<2x256xf32, #tpu.memory_space<vmem>>, vector<2x256xf32>
    tpu.vector_store %arg6[%c0_6, %c0_7], %7 {strides = array<i32>} : memref<2x256xf32, #tpu.memory_space<vmem>>, vector<2x256xf32>,
    %c3_i32 = arith.constant 3 : i32
    %9 = arith.cmpi eq, %arg1, %c3_i32 : i32
    %10 = arith.extui %9 : i1 to i32
    %c0_i32_8 = arith.constant 0 : i32
    %11 = arith.cmpi ne, %10, %c0_i32_8 : i32
    scf.if %11 {
      %c0_9 = arith.constant 0 : index
      %c0_10 = arith.constant 0 : index
      %12 = vector.load %arg6[%c0_9, %c0_10] : memref<2x256xf32, #tpu.memory_space<vmem>>, vector<2x256xf32>
      %c0_11 = arith.constant 0 : index
      %c0_12 = arith.constant 0 : index
      %13 = vector.load %arg4[%c0_11, %c0_12] : memref<1x256xf32, #tpu.memory_space<vmem>>, vector<1x256xf32>
      %14 = vector.broadcast %13 : vector<1x256xf32> to vector<2x256xf32>
      %15 = arith.addf %12, %14 : vector<2x256xf32>
      %cst_13 = arith.constant 0.000000e+00 : f32
      %16 = vector.broadcast %cst_13 : f32 to vector<2x256xf32>
      %17 = arith.maximumf %15, %16 : vector<2x256xf32>
      %18 = arith.truncf %17 : vector<2x256xf32> to vector<2x256xbf16>
      %c0_14 = arith.constant 0 : index
      %c0_15 = arith.constant 0 : index
      %19 = vector.load %arg5[%c0_14, %c0_15] : memref<2x256xbf16, #tpu.memory_space<vmem>>, vector<2x256xbf16>
      tpu.vector_store %arg5[%c0_14, %c0_15], %18 {strides = array<i32>} : memref<2x256xbf16, #tpu.memory_space<vmem>>, vector<2x256xbf16>,
    } else {
    }
    return
  }
  func.func @transform_0(%arg0: i32, %arg1: i32) -> (i32, i32) {
    %c0_i32 = arith.constant 0 : i32
    %c0_i32_0 = arith.constant 0 : i32
    return %c0_i32, %arg1 : i32, i32
  }
  func.func @transform_1(%arg0: i32, %arg1: i32) -> (i32, i32) {
    %c0_i32 = arith.constant 0 : i32
    return %arg1, %arg0 : i32, i32
  }
  func.func @transform_2(%arg0: i32, %arg1: i32) -> (i32, i32) {
    %c0_i32 = arith.constant 0 : i32
    %c0_i32_0 = arith.constant 0 : i32
    return %c0_i32, %arg0 : i32, i32
  }
  func.func @transform_3(%arg0: i32, %arg1: i32) -> (i32, i32) {
    %c0_i32 = arith.constant 0 : i32
    %c0_i32_0 = arith.constant 0 : i32
    return %c0_i32, %arg0 : i32, i32
  }
}

module attributes {stable_mosaic.version = 11 : i64} {
  func.func @linear_kernel(%arg0: i32, %arg1: i32, %arg2: memref<2x512xbf16, #tpu.memory_space<vmem>>, %arg3: memref<512x256xbf16, #tpu.memory_space<vmem>>, %arg4: memref<1x256xf32, #tpu.memory_space<vmem>>, %arg5: memref<2x256xbf16, #tpu.memory_space<vmem>>, %arg6: memref<2x256xf32, #tpu.memory_space<vmem>>) attributes {dimension_semantics = [#tpu.dimension_semantics<parallel>, #tpu.dimension_semantics<arbitrary>], iteration_bounds = array<i64: 2, 1>, scalar_prefetch = 0 : i64, scratch_operands = 1 : i64, tpu.core_type = #tpu.core_type<tc>, window_params = [{transform_indices = @transform_0, window_bounds = array<i64: 2, 512>}, {transform_indices = @transform_1, window_bounds = array<i64: 512, 256>}, {transform_indices = @transform_2, window_bounds = array<i64: 1, 256>}, {transform_indices = @transform_3, window_bounds = array<i64: 2, 256>}]} {
    %c0_i32 = arith.constant 0 : i32
    %0 = arith.cmpi eq, %arg1, %c0_i32 : i32
    %1 = arith.extui %0 : i1 to i32
    %c0_i32_0 = arith.constant 0 : i32
    %2 = arith.cmpi ne, %1, %c0_i32_0 : i32
    scf.if %2 {
      %cst_10 = arith.constant 0.000000e+00 : f32
      %12 = vector.broadcast %cst_10 : f32 to vector<2x256xf32>
      %c0_11 = arith.constant 0 : index
      %c0_12 = arith.constant 0 : index
      %13 = vector.load %arg6[%c0_11, %c0_12] : memref<2x256xf32, #tpu.memory_space<vmem>>, vector<2x256xf32>
      tpu.vector_store %arg6[%c0_11, %c0_12], %12 {strides = array<i32>} : memref<2x256xf32, #tpu.memory_space<vmem>>, vector<2x256xf32>,
    } else {
    }
    %c0 = arith.constant 0 : index
    %c0_1 = arith.constant 0 : index
    %3 = vector.load %arg6[%c0, %c0_1] : memref<2x256xf32, #tpu.memory_space<vmem>>, vector<2x256xf32>
    %c0_2 = arith.constant 0 : index
    %c0_3 = arith.constant 0 : index
    %4 = vector.load %arg2[%c0_2, %c0_3] : memref<2x512xbf16, #tpu.memory_space<vmem>>, vector<2x512xbf16>
    %c0_4 = arith.constant 0 : index
    %c0_5 = arith.constant 0 : index
    %5 = vector.load %arg3[%c0_4, %c0_5] : memref<512x256xbf16, #tpu.memory_space<vmem>>, vector<512x256xbf16>
    %cst = arith.constant dense<0.000000e+00> : vector<2x256xf32>
    %6 = tpu.matmul %4, %5, %cst {dimension_numbers = #tpu.dot_dimension_numbers<[1], [0], [0], [1], [0, 0, 1, 1], [], []>} : vector<2x512xbf16>, vector<512x256xbf16>, vector<2x256xf32> -> vector<2x256xf32>
    %7 = arith.addf %3, %6 : vector<2x256xf32>
    %c0_6 = arith.constant 0 : index
    %c0_7 = arith.constant 0 : index
    %8 = vector.load %arg6[%c0_6, %c0_7] : memref<2x256xf32, #tpu.memory_space<vmem>>, vector<2x256xf32>
    tpu.vector_store %arg6[%c0_6, %c0_7], %7 {strides = array<i32>} : memref<2x256xf32, #tpu.memory_space<vmem>>, vector<2x256xf32>,
    %c0_i32_8 = arith.constant 0 : i32
    %9 = arith.cmpi eq, %arg1, %c0_i32_8 : i32
    %10 = arith.extui %9 : i1 to i32
    %c0_i32_9 = arith.constant 0 : i32
    %11 = arith.cmpi ne, %10, %c0_i32_9 : i32
    scf.if %11 {
      %c0_10 = arith.constant 0 : index
      %c0_11 = arith.constant 0 : index
      %12 = vector.load %arg6[%c0_10, %c0_11] : memref<2x256xf32, #tpu.memory_space<vmem>>, vector<2x256xf32>
      %c0_12 = arith.constant 0 : index
      %c0_13 = arith.constant 0 : index
      %13 = vector.load %arg4[%c0_12, %c0_13] : memref<1x256xf32, #tpu.memory_space<vmem>>, vector<1x256xf32>
      %14 = vector.broadcast %13 : vector<1x256xf32> to vector<2x256xf32>
      %15 = arith.addf %12, %14 : vector<2x256xf32>
      %cst_14 = arith.constant 0.000000e+00 : f32
      %16 = vector.broadcast %cst_14 : f32 to vector<2x256xf32>
      %17 = arith.maximumf %15, %16 : vector<2x256xf32>
      %18 = arith.truncf %17 : vector<2x256xf32> to vector<2x256xbf16>
      %c0_15 = arith.constant 0 : index
      %c0_16 = arith.constant 0 : index
      %19 = vector.load %arg5[%c0_15, %c0_16] : memref<2x256xbf16, #tpu.memory_space<vmem>>, vector<2x256xbf16>
      tpu.vector_store %arg5[%c0_15, %c0_16], %18 {strides = array<i32>} : memref<2x256xbf16, #tpu.memory_space<vmem>>, vector<2x256xbf16>,
    } else {
    }
    return
  }
  func.func @transform_0(%arg0: i32, %arg1: i32) -> (i32, i32) {
    %c0_i32 = arith.constant 0 : i32
    %c0_i32_0 = arith.constant 0 : i32
    return %c0_i32, %arg1 : i32, i32
  }
  func.func @transform_1(%arg0: i32, %arg1: i32) -> (i32, i32) {
    %c0_i32 = arith.constant 0 : i32
    return %arg1, %arg0 : i32, i32
  }
  func.func @transform_2(%arg0: i32, %arg1: i32) -> (i32, i32) {
    %c0_i32 = arith.constant 0 : i32
    %c0_i32_0 = arith.constant 0 : i32
    return %c0_i32, %arg0 : i32, i32
  }
  func.func @transform_3(%arg0: i32, %arg1: i32) -> (i32, i32) {
    %c0_i32 = arith.constant 0 : i32
    %c0_i32_0 = arith.constant 0 : i32
    return %c0_i32, %arg0 : i32, i32
  }
}

module attributes {stable_mosaic.version = 11 : i64} {
  func.func @linear_kernel(%arg0: i32, %arg1: i32, %arg2: memref<2x512xbf16, #tpu.memory_space<vmem>>, %arg3: memref<512x128xbf16, #tpu.memory_space<vmem>>, %arg4: memref<1x128xf32, #tpu.memory_space<vmem>>, %arg5: memref<2x128xf32, #tpu.memory_space<vmem>>, %arg6: memref<2x128xf32, #tpu.memory_space<vmem>>) attributes {dimension_semantics = [#tpu.dimension_semantics<parallel>, #tpu.dimension_semantics<arbitrary>], iteration_bounds = array<i64: 1, 1>, scalar_prefetch = 0 : i64, scratch_operands = 1 : i64, tpu.core_type = #tpu.core_type<tc>, window_params = [{transform_indices = @transform_0, window_bounds = array<i64: 2, 512>}, {transform_indices = @transform_1, window_bounds = array<i64: 512, 128>}, {transform_indices = @transform_2, window_bounds = array<i64: 1, 128>}, {transform_indices = @transform_3, window_bounds = array<i64: 2, 128>}]} {
    %c0_i32 = arith.constant 0 : i32
    %0 = arith.cmpi eq, %arg1, %c0_i32 : i32
    %1 = arith.extui %0 : i1 to i32
    %c0_i32_0 = arith.constant 0 : i32
    %2 = arith.cmpi ne, %1, %c0_i32_0 : i32
    scf.if %2 {
      %cst_10 = arith.constant 0.000000e+00 : f32
      %12 = vector.broadcast %cst_10 : f32 to vector<2x128xf32>
      %c0_11 = arith.constant 0 : index
      %c0_12 = arith.constant 0 : index
      %13 = vector.load %arg6[%c0_11, %c0_12] : memref<2x128xf32, #tpu.memory_space<vmem>>, vector<2x128xf32>
      tpu.vector_store %arg6[%c0_11, %c0_12], %12 {strides = array<i32>} : memref<2x128xf32, #tpu.memory_space<vmem>>, vector<2x128xf32>,
    } else {
    }
    %c0 = arith.constant 0 : index
    %c0_1 = arith.constant 0 : index
    %3 = vector.load %arg6[%c0, %c0_1] : memref<2x128xf32, #tpu.memory_space<vmem>>, vector<2x128xf32>
    %c0_2 = arith.constant 0 : index
    %c0_3 = arith.constant 0 : index
    %4 = vector.load %arg2[%c0_2, %c0_3] : memref<2x512xbf16, #tpu.memory_space<vmem>>, vector<2x512xbf16>
    %c0_4 = arith.constant 0 : index
    %c0_5 = arith.constant 0 : index
    %5 = vector.load %arg3[%c0_4, %c0_5] : memref<512x128xbf16, #tpu.memory_space<vmem>>, vector<512x128xbf16>
    %cst = arith.constant dense<0.000000e+00> : vector<2x128xf32>
    %6 = tpu.matmul %4, %5, %cst {dimension_numbers = #tpu.dot_dimension_numbers<[1], [0], [0], [1], [0, 0, 1, 1], [], []>} : vector<2x512xbf16>, vector<512x128xbf16>, vector<2x128xf32> -> vector<2x128xf32>
    %7 = arith.addf %3, %6 : vector<2x128xf32>
    %c0_6 = arith.constant 0 : index
    %c0_7 = arith.constant 0 : index
    %8 = vector.load %arg6[%c0_6, %c0_7] : memref<2x128xf32, #tpu.memory_space<vmem>>, vector<2x128xf32>
    tpu.vector_store %arg6[%c0_6, %c0_7], %7 {strides = array<i32>} : memref<2x128xf32, #tpu.memory_space<vmem>>, vector<2x128xf32>,
    %c0_i32_8 = arith.constant 0 : i32
    %9 = arith.cmpi eq, %arg1, %c0_i32_8 : i32
    %10 = arith.extui %9 : i1 to i32
    %c0_i32_9 = arith.constant 0 : i32
    %11 = arith.cmpi ne, %10, %c0_i32_9 : i32
    scf.if %11 {
      %c0_10 = arith.constant 0 : index
      %c0_11 = arith.constant 0 : index
      %12 = vector.load %arg6[%c0_10, %c0_11] : memref<2x128xf32, #tpu.memory_space<vmem>>, vector<2x128xf32>
      %c0_12 = arith.constant 0 : index
      %c0_13 = arith.constant 0 : index
      %13 = vector.load %arg4[%c0_12, %c0_13] : memref<1x128xf32, #tpu.memory_space<vmem>>, vector<1x128xf32>
      %14 = vector.broadcast %13 : vector<1x128xf32> to vector<2x128xf32>
      %15 = arith.addf %12, %14 : vector<2x128xf32>
      %c0_14 = arith.constant 0 : index
      %c0_15 = arith.constant 0 : index
      %16 = vector.load %arg5[%c0_14, %c0_15] : memref<2x128xf32, #tpu.memory_space<vmem>>, vector<2x128xf32>
      tpu.vector_store %arg5[%c0_14, %c0_15], %15 {strides = array<i32>} : memref<2x128xf32, #tpu.memory_space<vmem>>, vector<2x128xf32>,
    } else {
    }
    return
  }
  func.func @transform_0(%arg0: i32, %arg1: i32) -> (i32, i32) {
    %c0_i32 = arith.constant 0 : i32
    %c0_i32_0 = arith.constant 0 : i32
    return %c0_i32, %arg1 : i32, i32
  }
  func.func @transform_1(%arg0: i32, %arg1: i32) -> (i32, i32) {
    %c0_i32 = arith.constant 0 : i32
    return %arg1, %arg0 : i32, i32
  }
  func.func @transform_2(%arg0: i32, %arg1: i32) -> (i32, i32) {
    %c0_i32 = arith.constant 0 : i32
    %c0_i32_0 = arith.constant 0 : i32
    return %c0_i32, %arg0 : i32, i32
  }
  func.func @transform_3(%arg0: i32, %arg1: i32) -> (i32, i32) {
    %c0_i32 = arith.constant 0 : i32
    %c0_i32_0 = arith.constant 0 : i32
    return %c0_i32, %arg0 : i32, i32
  }
}

</mosaic_0001>

<llo_original>
// kernel: siamese_forward.12
$region0: #{siamese_forward.12}
  #allocation0 [shape = 'u32[]', space=smem, size = 0x4, offset = 0x4, fixed_abs, tag = 'smem constant byte address 0x4 - core index']
  #allocation1 [shape = 'u32[72,128]{1,0:T(1,128)}', space=vmem, size = 0x9000, scoped, tag = 'internal scratch']
  %s0 = inlined_call_operand.vmem [shape: f32[4,512], index: 0, kind: input, shape index: {}]
  %s1 = inlined_call_operand.vmem [shape: f32[4,1], index: 1, kind: input, shape index: {}]
  %s2 = inlined_call_operand.vmem [shape: f32[4,1], index: 2, kind: input, shape index: {}]
  %s3 = inlined_call_operand.vmem [shape: bf16[4,512], index: 3, kind: output, shape index: {}]
  %s4 = sld [smem:[#allocation0]]
  $region45: #{siamese_forward.12} parent=0
    _
  %s6 = ssub.s32 1, %s4
  %s7 = scalar_select 0, %s6, %s4
  loop: start=0, step=1, limit=4
  $region2: #{siamese_forward.12} parent=0 // loop_pre_header
    _
  $region3: #{siamese_forward.12} parent=0 // loop_header
    %s9 = sphi 0, %s13
    %p10 = scmp.ge.s32.totalorder %s9, 4
    %s19 = sphi 0, %s21
    %s22 = sphi 0, %s19
    %s23 = sphi 0, %s22
    %s39 = sphi 0, %s23
    %s43 = sphi 0, %s43
    %s45 = sphi 0, %s43
    %s46 = sphi 0, %s45
    %s60 = sphi 0, %s46
    %s64 = sphi 0, %s64
    %s66 = sphi 0, %s64
    %s67 = sphi 0, %s66
    %s81 = sphi 0, %s67
    %s87 = sphi 0, %s89
    %s90 = sphi 0, %s87
    %s91 = sphi 0, %s90
    %s107 = sphi 0, %s91
  $region4: #{siamese_forward.12} parent=0 // loop_header_branch
    %12 = sbr.rel (%p10) target = $region8
  $region5: #{siamese_forward.12} parent=0 // loop_body
    %s14 = ssub.s32 %s9, 1
    %s15 = ssub.s32 %s9, 2
    %s16 = sadd.s32 %s9, 1
    %s17 = ssub.s32 %s9, %s16
    %p18 = scmp.eq.s32.totalorder %s17, 0
    %s20 = sadd.s32 %s19, 1
    %s21 = scalar_select %p18, %s19, %s20
    %p24 = pneg %p18
    %p25 = scmp.eq.s32.totalorder %s9, 1
    %p26 = por %p24, %p25
    %p27 = scmp.ne.s32.totalorder %s19, %s22
    %p28 = scmp.eq.s32.totalorder %s9, 0
    %p29 = por %p27, %p28
    %p30 = scmp.ne.s32.totalorder %s19, %s22
    %p31 = scmp.eq.s32.totalorder %s14, 1
    %p32 = por %p30, %p31
    %p33 = scmp.ne.s32.totalorder %s22, %s23
    %p34 = scmp.eq.s32.totalorder %s14, 0
    %p35 = por %p33, %p34
    %p36 = scmp.ne.s32.totalorder %s22, %s23
    %p37 = scmp.eq.s32.totalorder %s15, 1
    %p38 = por %p36, %p37
    %p40 = scmp.ne.s32.totalorder %s23, %s39
    %p41 = scmp.eq.s32.totalorder %s15, 0
    %p42 = por %p40, %p41
    %s44 = sadd.s32 %s43, 1
    %p47 = scmp.eq.s32.totalorder %s9, 1
    %p48 = scmp.ne.s32.totalorder %s43, %s45
    %p49 = scmp.eq.s32.totalorder %s9, 0
    %p50 = por %p48, %p49
    %p51 = scmp.ne.s32.totalorder %s43, %s45
    %p52 = scmp.eq.s32.totalorder %s14, 1
    %p53 = por %p51, %p52
    %p54 = scmp.ne.s32.totalorder %s45, %s46
    %p55 = scmp.eq.s32.totalorder %s14, 0
    %p56 = por %p54, %p55
    %p57 = scmp.ne.s32.totalorder %s45, %s46
    %p58 = scmp.eq.s32.totalorder %s15, 1
    %p59 = por %p57, %p58
    %p61 = scmp.ne.s32.totalorder %s46, %s60
    %p62 = scmp.eq.s32.totalorder %s15, 0
    %p63 = por %p61, %p62
    %s65 = sadd.s32 %s64, 1
    %p68 = scmp.eq.s32.totalorder %s9, 1
    %p69 = scmp.ne.s32.totalorder %s64, %s66
    %p70 = scmp.eq.s32.totalorder %s9, 0
    %p71 = por %p69, %p70
    %p72 = scmp.ne.s32.totalorder %s64, %s66
    %p73 = scmp.eq.s32.totalorder %s14, 1
    %p74 = por %p72, %p73
    %p75 = scmp.ne.s32.totalorder %s66, %s67
    %p76 = scmp.eq.s32.totalorder %s14, 0
    %p77 = por %p75, %p76
    %p78 = scmp.ne.s32.totalorder %s66, %s67
    %p79 = scmp.eq.s32.totalorder %s15, 1
    %p80 = por %p78, %p79
    %p82 = scmp.ne.s32.totalorder %s67, %s81
    %p83 = scmp.eq.s32.totalorder %s15, 0
    %p84 = por %p82, %p83
    %s85 = ssub.s32 %s9, %s16
    %p86 = scmp.eq.s32.totalorder %s85, 0
    %s88 = sadd.s32 %s87, 1
    %s89 = scalar_select %p86, %s87, %s88
    %p92 = pneg %p86
    %p93 = scmp.eq.s32.totalorder %s9, 1
    %p94 = por %p92, %p93
    %p95 = scmp.ne.s32.totalorder %s87, %s90
    %p96 = scmp.eq.s32.totalorder %s9, 0
    %p97 = por %p95, %p96
    %p98 = scmp.ne.s32.totalorder %s87, %s90
    %p99 = scmp.eq.s32.totalorder %s14, 1
    %p100 = por %p98, %p99
    %p101 = scmp.ne.s32.totalorder %s90, %s91
    %p102 = scmp.eq.s32.totalorder %s14, 0
    %p103 = por %p101, %p102
    %p104 = scmp.ne.s32.totalorder %s90, %s91
    %p105 = scmp.eq.s32.totalorder %s15, 1
    %p106 = por %p104, %p105
    %p108 = scmp.ne.s32.totalorder %s91, %s107
    %p109 = scmp.eq.s32.totalorder %s15, 0
    %p110 = por %p108, %p109
    %p111 = scmp.le.s32.totalorder 1, %s9
    %p112 = scmp.lt.s32.totalorder %s9, 3
    %p113 = pnand %p111, %p112
    %p114 = pneg %p113
    // Predicated region
    $region9: #{siamese_forward.12} parent=5 // pred_check
      _
    $region10: #{siamese_forward.12} parent=5 // pred_check_branch
      %116 = sbr.rel (%p113) target = $region12
    $region11: #{siamese_forward.12} parent=5 // pred_region
      %s117 = ssub.s32 %s9, 1
      // Predicated region
      $region13: #{siamese_forward.12} parent=11 // pred_check
        %p118 = pneg %p56
      $region14: #{siamese_forward.12} parent=11 // pred_check_branch
        %120 = sbr.rel (%p118) target = $region16
      $region15: #{siamese_forward.12} parent=11 // pred_region
        _
      $region16: #{siamese_forward.12} parent=11 // pred_fallthru
        _
      // Predicated region
      $region17: #{siamese_forward.12} parent=11 // pred_check
        %p121 = pneg %p77
      $region18: #{siamese_forward.12} parent=11 // pred_check_branch
        %123 = sbr.rel (%p121) target = $region20
      $region19: #{siamese_forward.12} parent=11 // pred_region
        _
      $region20: #{siamese_forward.12} parent=11 // pred_fallthru
        _
    $region12: #{siamese_forward.12} parent=5 // pred_fallthru
      _
    %p124 = scmp.lt.s32.totalorder %s9, 2
    // Predicated region
    $region21: #{siamese_forward.12} parent=5 // pred_check
      %p125 = pneg %p124
    $region22: #{siamese_forward.12} parent=5 // pred_check_branch
      %127 = sbr.rel (%p125) target = $region24
    $region23: #{siamese_forward.12} parent=5 // pred_region
      // Predicated region
      $region25: #{siamese_forward.12} parent=23 // pred_check
        %p128 = pneg %p29
      $region26: #{siamese_forward.12} parent=23 // pred_check_branch
        %130 = sbr.rel (%p128) target = $region28
      $region27: #{siamese_forward.12} parent=23 // pred_region
        %s131 = smul.u32 2, %s9
        %p132 = scmp.lt.s32.totalorder %s131, 3
        %s133 = scalar_select %p132, %s131, 3
        %s134 = smul.addr %s133, 4
        %s135 = scalar_lea.vmem %s0, %s134
        %s136 = smul.u32 2, %s9
      $region28: #{siamese_forward.12} parent=23 // pred_fallthru
        _
    $region24: #{siamese_forward.12} parent=5 // pred_fallthru
      _
    %p137 = scmp.le.s32.totalorder 1, %s9
    %p138 = scmp.lt.s32.totalorder %s9, 3
    %p139 = pnand %p137, %p138
    %p140 = pneg %p139
    // Predicated region
    $region29: #{siamese_forward.12} parent=5 // pred_check
      _
    $region30: #{siamese_forward.12} parent=5 // pred_check_branch
      %142 = sbr.rel (%p139) target = $region32
    $region31: #{siamese_forward.12} parent=5 // pred_region
      %s143 = ssub.s32 %s9, 1
      %s144 = smul.u32 2, %s14
      %p145 = scmp.lt.s32.totalorder %s144, 3
      %s146 = scalar_select %p145, %s144, 3
      %s147 = smul.addr %s146, 4
      %s148 = scalar_lea.vmem %s0, %s147
      %p149 = pneg %p35
      %p150 = pneg %p32
      %p151 = pneg %p56
      %p152 = pneg %p53
      %p153 = pneg %p77
      %p154 = pneg %p74
      %p155 = pneg %p103
      %p156 = pneg %p100
      %s157 = smul.u32 2, %s14
      %p158 = scmp.lt.s32.totalorder %s157, 3
      %s159 = scalar_select %p158, %s157, 3
      %s160 = smul.addr %s159, 2
      %s161 = scalar_lea.vmem %s3, %s160
      %s162 = smul.u32 2, %s14
      %p163 = scmp.lt.s32.totalorder %s162, 3
      %s164 = scalar_select %p163, %s162, 3
      %s165 = smul.addr %s164, 4
      %s166 = scalar_lea.vmem %s0, %s165
      %s167 = smul.u32 2, %s14
      %s168 = smul.u32 2, %s14
      %p169 = scmp.lt.s32.totalorder %s168, 3
      %s170 = scalar_select %p169, %s168, 3
      %s171 = smul.addr %s170, 2
      %s172 = scalar_lea.vmem %s3, %s171
      %s173 = smul.u32 2, %s14
      %v174 = vld [vmem:[%s166] sm:$0xff]
      %v175 = vld [vmem:[%s1] sm:$0xf]
      %177 = vset.pattern.permute.xlu0 0
      %178 = vperm.xlu0 %177, %v175
      %v179 = vpop.permute.xlu0 %178
      %v181 = vunpack.c.l.s4 839922192
      %v182 = vunpack.c.0.s8 %v181
      %v183 = vperm.slane %v179, %v182
      %v185 = vmul.f32 %v174, %v183
      %v186 = vld [vmem:[%s2] sm:$0xf]
      %188 = vset.pattern.permute.xlu0 0
      %189 = vperm.xlu0 %188, %v186
      %v190 = vpop.permute.xlu0 %189
      %v192 = vunpack.c.l.s4 839922192
      %v193 = vunpack.c.0.s8 %v192
      %v194 = vperm.slane %v190, %v193
      %v196 = vadd.f32 %v185, %v194
      %198 = vst [vmem:[#allocation1] ss:$2 sm:$0xff] %v196
      %v199 = vld.sshfl [vmem:[#allocation1] sm:$0xff pattern:$0x75316420]
      %v200 = vld.sshfl [vmem:[#allocation1 + $0x8] sm:$0xff pattern:$0x75316420]
      %v203 = vpack.c.bf16 %v200, %v199
      %v205 = vrot.slane %v203, 2
      %vm206 = vcmask 1041408
      %v209 = vsel %vm206, %v203, %v205
      %211 = vst [vmem:[%s172] sm:$0xf] %v209
      %s212 = smul.u32 2, %s14
      %p213 = scmp.lt.s32.totalorder %s212, 3
      %s214 = scalar_select %p213, %s212, 3
      %s215 = smul.addr %s214, 2
      %s216 = scalar_lea.vmem %s3, %s215
      // Predicated region
      $region33: #{siamese_forward.12} parent=31 // pred_check
        %p217 = pneg %p100
      $region34: #{siamese_forward.12} parent=31 // pred_check_branch
        %219 = sbr.rel (%p217) target = $region36
      $region35: #{siamese_forward.12} parent=31 // pred_region
        %s220 = smul.u32 2, %s14
      $region36: #{siamese_forward.12} parent=31 // pred_fallthru
        _
    $region32: #{siamese_forward.12} parent=5 // pred_fallthru
      _
    %p221 = scmp.le.s32.totalorder 2, %s9
    // Predicated region
    $region37: #{siamese_forward.12} parent=5 // pred_check
      %p222 = pneg %p221
    $region38: #{siamese_forward.12} parent=5 // pred_check_branch
      %224 = sbr.rel (%p222) target = $region40
    $region39: #{siamese_forward.12} parent=5 // pred_region
      %s225 = ssub.s32 %s9, 2
      // Predicated region
      $region41: #{siamese_forward.12} parent=39 // pred_check
        %p226 = pneg %p106
      $region42: #{siamese_forward.12} parent=39 // pred_check_branch
        %228 = sbr.rel (%p226) target = $region44
      $region43: #{siamese_forward.12} parent=39 // pred_region
        %s229 = smul.u32 2, %s15
        %p230 = scmp.lt.s32.totalorder %s229, 3
        %s231 = scalar_select %p230, %s229, 3
        %s232 = smul.addr %s231, 2
        %s233 = scalar_lea.vmem %s3, %s232
      $region44: #{siamese_forward.12} parent=39 // pred_fallthru
        _
    $region40: #{siamese_forward.12} parent=5 // pred_fallthru
      _
  $region6: #{siamese_forward.12} parent=0 // loop_footer
    %s13 = sadd.s32 1, %s9
  $region7: #{siamese_forward.12} parent=0 // loop_footer_branch
    %8 = sbr.rel target = $region3
  $region8: #{siamese_forward.12} parent=0 // loop_exit
    _

// kernel: siamese_forward.11
$region0: #{siamese_forward.11}
  #allocation0 [shape = 'u32[]', space=smem, size = 0x4, offset = 0x4, fixed_abs, tag = 'smem constant byte address 0x4 - core index']
  #allocation1 [shape = 'u32[72,128]{1,0:T(1,128)}', space=vmem, size = 0x9000, scoped, tag = 'internal scratch']
  %s0 = inlined_call_operand.vmem [shape: bf16[27,512], index: 0, kind: input, shape index: {}]
  %s1 = inlined_call_operand.vmem [shape: bf16[4,27], index: 1, kind: input, shape index: {}]
  %s2 = inlined_call_operand.vmem [shape: f32[4,1], index: 2, kind: input, shape index: {}]
  %s3 = inlined_call_operand.vmem [shape: f32[4,512], index: 3, kind: output, shape index: {0}]
  %s4 = inlined_call_operand.vmem [shape: f32[2,2,4,1], index: 4, kind: output, shape index: {1}]
  %5 = xla_tuple %s3, %s4
  %s6 = sld [smem:[#allocation0]]
  $region91: #{siamese_forward.11} parent=0
    _
  %s8 = ssub.s32 1, %s6
  %s9 = scalar_select 0, %s8, %s6
  $region1: #{siamese_forward.11} parent=0
    #allocation2 [shape = 'u8[32768]{0}', space=vmem, size = 0x8000, scoped, tag = 'input window, operand 0']
    loop: start=0, step=1, limit=4
    $region2: #{siamese_forward.11} parent=1 // loop_pre_header
      _
    $region3: #{siamese_forward.11} parent=1 // loop_header
      %s11 = sphi 0, %s15
      %p12 = scmp.ge.s32.totalorder %s11, 4
      %s21 = sphi 0, %s23
      %s24 = sphi 0, %s21
      %s25 = sphi 0, %s24
      %s41 = sphi 0, %s25
      %s45 = sphi 0, %s45
      %s47 = sphi 0, %s45
      %s48 = sphi 0, %s47
      %s62 = sphi 0, %s48
      %s66 = sphi 0, %s66
      %s68 = sphi 0, %s66
      %s69 = sphi 0, %s68
      %s83 = sphi 0, %s69
      %s89 = sphi 0, %s91
      %s92 = sphi 0, %s89
      %s93 = sphi 0, %s92
      %s109 = sphi 0, %s93
      %s115 = sphi 0, %s117
      %s118 = sphi 0, %s115
      %s119 = sphi 0, %s118
      %s135 = sphi 0, %s119
    $region4: #{siamese_forward.11} parent=1 // loop_header_branch
      %14 = sbr.rel (%p12) target = $region8
    $region5: #{siamese_forward.11} parent=1 // loop_body
      %s16 = ssub.s32 %s11, 1
      %s17 = ssub.s32 %s11, 2
      %s18 = sadd.s32 %s11, 1
      %s19 = ssub.s32 %s11, %s18
      %p20 = scmp.eq.s32.totalorder %s19, 0
      %s22 = sadd.s32 %s21, 1
      %s23 = scalar_select %p20, %s21, %s22
      %p26 = pneg %p20
      %p27 = scmp.eq.s32.totalorder %s11, 1
      %p28 = por %p26, %p27
      %p29 = scmp.ne.s32.totalorder %s21, %s24
      %p30 = scmp.eq.s32.totalorder %s11, 0
      %p31 = por %p29, %p30
      %p32 = scmp.ne.s32.totalorder %s21, %s24
      %p33 = scmp.eq.s32.totalorder %s16, 1
      %p34 = por %p32, %p33
      %p35 = scmp.ne.s32.totalorder %s24, %s25
      %p36 = scmp.eq.s32.totalorder %s16, 0
      %p37 = por %p35, %p36
      %p38 = scmp.ne.s32.totalorder %s24, %s25
      %p39 = scmp.eq.s32.totalorder %s17, 1
      %p40 = por %p38, %p39
      %p42 = scmp.ne.s32.totalorder %s25, %s41
      %p43 = scmp.eq.s32.totalorder %s17, 0
      %p44 = por %p42, %p43
      %s46 = sadd.s32 %s45, 1
      %p49 = scmp.eq.s32.totalorder %s11, 1
      %p50 = scmp.ne.s32.totalorder %s45, %s47
      %p51 = scmp.eq.s32.totalorder %s11, 0
      %p52 = por %p50, %p51
      %p53 = scmp.ne.s32.totalorder %s45, %s47
      %p54 = scmp.eq.s32.totalorder %s16, 1
      %p55 = por %p53, %p54
      %p56 = scmp.ne.s32.totalorder %s47, %s48
      %p57 = scmp.eq.s32.totalorder %s16, 0
      %p58 = por %p56, %p57
      %p59 = scmp.ne.s32.totalorder %s47, %s48
      %p60 = scmp.eq.s32.totalorder %s17, 1
      %p61 = por %p59, %p60
      %p63 = scmp.ne.s32.totalorder %s48, %s62
      %p64 = scmp.eq.s32.totalorder %s17, 0
      %p65 = por %p63, %p64
      %s67 = sadd.s32 %s66, 1
      %p70 = scmp.eq.s32.totalorder %s11, 1
      %p71 = scmp.ne.s32.totalorder %s66, %s68
      %p72 = scmp.eq.s32.totalorder %s11, 0
      %p73 = por %p71, %p72
      %p74 = scmp.ne.s32.totalorder %s66, %s68
      %p75 = scmp.eq.s32.totalorder %s16, 1
      %p76 = por %p74, %p75
      %p77 = scmp.ne.s32.totalorder %s68, %s69
      %p78 = scmp.eq.s32.totalorder %s16, 0
      %p79 = por %p77, %p78
      %p80 = scmp.ne.s32.totalorder %s68, %s69
      %p81 = scmp.eq.s32.totalorder %s17, 1
      %p82 = por %p80, %p81
      %p84 = scmp.ne.s32.totalorder %s69, %s83
      %p85 = scmp.eq.s32.totalorder %s17, 0
      %p86 = por %p84, %p85
      %s87 = ssub.s32 %s11, %s18
      %p88 = scmp.eq.s32.totalorder %s87, 0
      %s90 = sadd.s32 %s89, 1
      %s91 = scalar_select %p88, %s89, %s90
      %p94 = pneg %p88
      %p95 = scmp.eq.s32.totalorder %s11, 1
      %p96 = por %p94, %p95
      %p97 = scmp.ne.s32.totalorder %s89, %s92
      %p98 = scmp.eq.s32.totalorder %s11, 0
      %p99 = por %p97, %p98
      %p100 = scmp.ne.s32.totalorder %s89, %s92
      %p101 = scmp.eq.s32.totalorder %s16, 1
      %p102 = por %p100, %p101
      %p103 = scmp.ne.s32.totalorder %s92, %s93
      %p104 = scmp.eq.s32.totalorder %s16, 0
      %p105 = por %p103, %p104
      %p106 = scmp.ne.s32.totalorder %s92, %s93
      %p107 = scmp.eq.s32.totalorder %s17, 1
      %p108 = por %p106, %p107
      %p110 = scmp.ne.s32.totalorder %s93, %s109
      %p111 = scmp.eq.s32.totalorder %s17, 0
      %p112 = por %p110, %p111
      %s113 = ssub.s32 %s11, %s18
      %p114 = scmp.eq.s32.totalorder %s113, 0
      %s116 = sadd.s32 %s115, 1
      %s117 = scalar_select %p114, %s115, %s116
      %p120 = pneg %p114
      %p121 = scmp.eq.s32.totalorder %s11, 1
      %p122 = por %p120, %p121
      %p123 = scmp.ne.s32.totalorder %s115, %s118
      %p124 = scmp.eq.s32.totalorder %s11, 0
      %p125 = por %p123, %p124
      %p126 = scmp.ne.s32.totalorder %s115, %s118
      %p127 = scmp.eq.s32.totalorder %s16, 1
      %p128 = por %p126, %p127
      %p129 = scmp.ne.s32.totalorder %s118, %s119
      %p130 = scmp.eq.s32.totalorder %s16, 0
      %p131 = por %p129, %p130
      %p132 = scmp.ne.s32.totalorder %s118, %s119
      %p133 = scmp.eq.s32.totalorder %s17, 1
      %p134 = por %p132, %p133
      %p136 = scmp.ne.s32.totalorder %s119, %s135
      %p137 = scmp.eq.s32.totalorder %s17, 0
      %p138 = por %p136, %p137
      %p139 = scmp.le.s32.totalorder 1, %s11
      %p140 = scmp.lt.s32.totalorder %s11, 3
      %p141 = pnand %p139, %p140
      %p142 = pneg %p141
      // Predicated region
      $region9: #{siamese_forward.11} parent=5 // pred_check
        _
      $region10: #{siamese_forward.11} parent=5 // pred_check_branch
        %144 = sbr.rel (%p141) target = $region12
      $region11: #{siamese_forward.11} parent=5 // pred_region
        %s145 = ssub.s32 %s11, 1
        // Predicated region
        $region13: #{siamese_forward.11} parent=11 // pred_check
          %p146 = pneg %p58
        $region14: #{siamese_forward.11} parent=11 // pred_check_branch
          %148 = sbr.rel (%p146) target = $region16
        $region15: #{siamese_forward.11} parent=11 // pred_region
          _
        $region16: #{siamese_forward.11} parent=11 // pred_fallthru
          _
        // Predicated region
        $region17: #{siamese_forward.11} parent=11 // pred_check
          %p149 = pneg %p79
        $region18: #{siamese_forward.11} parent=11 // pred_check_branch
          %151 = sbr.rel (%p149) target = $region20
        $region19: #{siamese_forward.11} parent=11 // pred_region
          _
        $region20: #{siamese_forward.11} parent=11 // pred_fallthru
          _
      $region12: #{siamese_forward.11} parent=5 // pred_fallthru
        _
      %p152 = scmp.lt.s32.totalorder %s11, 2
      // Predicated region
      $region21: #{siamese_forward.11} parent=5 // pred_check
        %p153 = pneg %p152
      $region22: #{siamese_forward.11} parent=5 // pred_check_branch
        %155 = sbr.rel (%p153) target = $region24
      $region23: #{siamese_forward.11} parent=5 // pred_region
        // Predicated region
        $region25: #{siamese_forward.11} parent=23 // pred_check
          %p156 = pneg %p31
        $region26: #{siamese_forward.11} parent=23 // pred_check_branch
          %158 = sbr.rel (%p156) target = $region28
        $region27: #{siamese_forward.11} parent=23 // pred_region
          %s159 = sand.u32 %s21, 1
          %s160 = sand.u32 %s21, 1
          %s161 = smul.addr %s160, 32
          %s162 = scalar_lea.vmem [#allocation2], %s161
          %s163 = smul.u32 2, %s11
          %s164 = smul.addr %s163, 4
          %s165 = scalar_lea.vmem %s0, %s164
          // Predicated region
          $region29: #{siamese_forward.11} parent=27 // pred_check
            _
          $region30: #{siamese_forward.11} parent=27 // pred_check_branch
            %167 = sbr.rel (0) target = $region32
          $region31: #{siamese_forward.11} parent=27 // pred_region
            // Predicated region
            $region33: #{siamese_forward.11} parent=31 // pred_check
              _
            $region34: #{siamese_forward.11} parent=31 // pred_check_branch
              %169 = sbr.rel (0) target = $region36
            $region35: #{siamese_forward.11} parent=31 // pred_region
              // Predicated region
              $region48: #{siamese_forward.11} parent=35 // pred_check
                _
              $region49: #{siamese_forward.11} parent=35 // pred_check_branch
                %191 = sbr.rel (0) target = $region51
              $region50: #{siamese_forward.11} parent=35 // pred_region
                loop: start=0, step=1, limit=1
                $region52: #{siamese_forward.11} parent=50 // loop_pre_header
                  _
                $region53: #{siamese_forward.11} parent=50 // loop_header
                  %s193 = sphi 0, %s197
                  %p194 = scmp.ge.s32.totalorder %s193, 1
                  %s198 = sphi %s165, %s165
                  %s199 = sphi %s162, %s162
                $region54: #{siamese_forward.11} parent=50 // loop_header_branch
                  %196 = sbr.rel (%p194) target = $region58
                $region55: #{siamese_forward.11} parent=50 // loop_body
                  %v200 = vld [vmem:[%s198] sm:$0xff]
                  %201 = vst [vmem:[%s199] sm:$0xff] %v200
                  %v202 = vld [vmem:[%s198 + $0x10] sm:$0xff]
                  %203 = vst [vmem:[%s199 + $0x8] sm:$0xff] %v202
                  %v204 = vld [vmem:[%s198 + $0x20] sm:$0xff]
                  %205 = vst [vmem:[%s199 + $0x10] sm:$0xff] %v204
                  %v206 = vld [vmem:[%s198 + $0x30] sm:$0xff]
                  %207 = vst [vmem:[%s199 + $0x18] sm:$0xff] %v206
                $region56: #{siamese_forward.11} parent=50 // loop_footer
                  %s197 = sadd.s32 1, %s193
                $region57: #{siamese_forward.11} parent=50 // loop_footer_branch
                  %192 = sbr.rel target = $region53
                $region58: #{siamese_forward.11} parent=50 // loop_exit
                  _
              $region51: #{siamese_forward.11} parent=35 // pred_fallthru
                _
              // Predicated region
              $region59: #{siamese_forward.11} parent=35 // pred_check
                _
              $region60: #{siamese_forward.11} parent=35 // pred_check_branch
                %209 = sbr.rel target = $region62
              $region61: #{siamese_forward.11} parent=35 // pred_region
                _
              $region62: #{siamese_forward.11} parent=35 // pred_fallthru
                _
            $region36: #{siamese_forward.11} parent=31 // pred_fallthru
              _
            // Predicated region
            $region37: #{siamese_forward.11} parent=31 // pred_check
              _
            $region38: #{siamese_forward.11} parent=31 // pred_check_branch
              %171 = sbr.rel target = $region40
            $region39: #{siamese_forward.11} parent=31 // pred_region
              %s173 = ssub.s32 256, 1
              loop: start=0, step=1, limit=1
              $region41: #{siamese_forward.11} parent=39 // loop_pre_header
                _
              $region42: #{siamese_forward.11} parent=39 // loop_header
                %s175 = sphi 0, %s179
                %p176 = scmp.ge.s32.totalorder %s175, 1
                %s180 = sphi %s165, %s165
                %s181 = sphi %s162, %s162
              $region43: #{siamese_forward.11} parent=39 // loop_header_branch
                %178 = sbr.rel (%p176) target = $region47
              $region44: #{siamese_forward.11} parent=39 // loop_body
                %v182 = vld [vmem:[%s180] sm:%s173]
                %183 = vst [vmem:[%s181] sm:%s173] %v182
                %v184 = vld [vmem:[%s180 + $0x10] sm:%s173]
                %185 = vst [vmem:[%s181 + $0x8] sm:%s173] %v184
                %v186 = vld [vmem:[%s180 + $0x20] sm:%s173]
                %187 = vst [vmem:[%s181 + $0x10] sm:%s173] %v186
                %v188 = vld [vmem:[%s180 + $0x30] sm:%s173]
                %189 = vst [vmem:[%s181 + $0x18] sm:%s173] %v188
              $region45: #{siamese_forward.11} parent=39 // loop_footer
                %s179 = sadd.s32 1, %s175
              $region46: #{siamese_forward.11} parent=39 // loop_footer_branch
                %174 = sbr.rel target = $region42
              $region47: #{siamese_forward.11} parent=39 // loop_exit
                _
            $region40: #{siamese_forward.11} parent=31 // pred_fallthru
              _
          $region32: #{siamese_forward.11} parent=27 // pred_fallthru
            _
          %210 = vnop
        $region28: #{siamese_forward.11} parent=23 // pred_fallthru
          _
      $region24: #{siamese_forward.11} parent=5 // pred_fallthru
        _
      %p211 = scmp.le.s32.totalorder 1, %s11
      %p212 = scmp.lt.s32.totalorder %s11, 3
      %p213 = pnand %p211, %p212
      %p214 = pneg %p213
      // Predicated region
      $region63: #{siamese_forward.11} parent=5 // pred_check
        _
      $region64: #{siamese_forward.11} parent=5 // pred_check_branch
        %216 = sbr.rel (%p213) target = $region66
      $region65: #{siamese_forward.11} parent=5 // pred_region
        %s217 = ssub.s32 %s11, 1
        %s218 = sand.u32 %s24, 1
        %s219 = sand.u32 %s24, 1
        %s220 = smul.addr %s219, 32
        %s221 = scalar_lea.vmem [#allocation2], %s220
        // Predicated region
        $region67: #{siamese_forward.11} parent=65 // pred_check
          %p222 = pneg %p37
        $region68: #{siamese_forward.11} parent=65 // pred_check_branch
          %224 = sbr.rel (%p222) target = $region70
        $region69: #{siamese_forward.11} parent=65 // pred_region
          _
        $region70: #{siamese_forward.11} parent=65 // pred_fallthru
          _
        %s225 = sand.u32 %s24, 1
        %s226 = sand.u32 %s24, 1
        %s227 = smul.addr %s226, 32
        %s228 = scalar_lea.vmem [#allocation2], %s227
        %p229 = pneg %p37
        %p230 = pneg %p34
        %p231 = pneg %p58
        %p232 = pneg %p55
        %p233 = pneg %p79
        %p234 = pneg %p76
        %p235 = pneg %p105
        %p236 = pneg %p102
        %s237 = smul.u32 2, %s16
        %p238 = scmp.lt.s32.totalorder %s237, 3
        %s239 = scalar_select %p238, %s237, 3
        %s240 = smul.addr %s239, 4
        %s241 = scalar_lea.vmem %s3, %s240
        %p242 = pneg %p131
        %p243 = pneg %p128
        %p244 = scmp.lt.s32.totalorder %s16, 1
        %s245 = scalar_select %p244, %s16, 1
        %s246 = smul.addr %s245, 2
        %s247 = smul.addr %s246, 4
        %s248 = scalar_lea.vmem %s4, %s247
        %s249 = smul.u32 2, %s16
        %s250 = smul.u32 2, %s16
        %p251 = scmp.lt.s32.totalorder %s250, 3
        %s252 = scalar_select %p251, %s250, 3
        %s253 = smul.addr %s252, 4
        %s254 = scalar_lea.vmem %s3, %s253
        %s255 = smul.u32 2, %s16
        %p256 = scmp.lt.s32.totalorder %s16, 1
        %s257 = scalar_select %p256, %s16, 1
        %s258 = smul.addr %s257, 2
        %s259 = smul.addr %s258, 4
        %s260 = scalar_lea.vmem %s4, %s259
        %v262 = vld [vmem:[%s1] sm:$0x3]
        %v263 = vld [vmem:[%s221] sm:$0xff]
        %v264 = vld [vmem:[%s221 + $0x8] sm:$0xff]
        %v265 = vld [vmem:[%s221 + $0x10] sm:$0xff]
        %v266 = vld [vmem:[%s221 + $0x18] sm:$0x33]
        %v267 = vld [vmem:[%s2] sm:$0xf]
        %269 = vset.pattern.permute.xlu0 0
        %270 = vperm.xlu0 %269, %v267
        %v271 = vpop.permute.xlu0 %270
        %v277 = vunpack.c.l.b16 %v263
        %v278 = vunpack.c.h.b16 %v263
        %v279 = vunpack.c.l.b16 %v264
        %v280 = vunpack.c.h.b16 %v264
        %v281 = vunpack.c.l.b16 %v265
        %v282 = vunpack.c.h.b16 %v265
        %v283 = vunpack.c.l.b16 %v266
        %v284 = vunpack.c.h.b16 %v266
        %v285 = vpack.c.b16 %v279, %v277
        %v286 = vpack.c.b16 %v280, %v278
        %v287 = vpack.c.b16 %v283, %v281
        %v288 = vpack.c.b16 %v284, %v282
        %vm291 = vcmask 220160
        %v293 = vsel %vm291, %v262, 0
        %vm295 = vcmask 1044480
        %vm296 = vcmask 1045504
        %v297 = vsel %vm295, 4294967295, 65535
        %v298 = vsel %vm296, %v297, 0
        %v300 = vand.u32 %v287, %v298
        %v303 = vand.u32 %v288, %v298
        %305 = vmatpush.bf16.msra.mxu0 0
        %306 = vmatpush.bf16.msra.mxu0 0
        %307 = vmatpush.bf16.msra.mxu0 0
        %308 = vmatpush.bf16.msra.mxu0 0
        %309 = vmatpush.bf16.msra.mxu0 0
        %310 = vmatpush.bf16.msra.mxu0 0
        %311 = vmatpush.bf16.msra.mxu0 %v300
        %312 = vmatpush.bf16.msra.mxu0 %v285
        %313 = vmatmul.bf16.gmra.mxu0 %v293
        %v314 = vpop.f32.mrf.mxu0
        %v315 = vadd.f32 %v271, %v314
        %v316 = vpop.f32.mrf.mxu0
        %317 = vdwg.mxu0
        %318 = vmatpush.bf16.msra.mxu0 0
        %319 = vmatpush.bf16.msra.mxu0 0
        %320 = vmatpush.bf16.msra.mxu0 0
        %321 = vmatpush.bf16.msra.mxu0 0
        %322 = vmatpush.bf16.msra.mxu0 0
        %323 = vmatpush.bf16.msra.mxu0 0
        %324 = vmatpush.bf16.msra.mxu0 %v303
        %325 = vmatpush.bf16.msra.mxu0 %v286
        %326 = vmatmul.bf16.gmra.mxu0 %v293
        %v327 = vpop.f32.mrf.mxu0
        %v328 = vadd.f32 %v271, %v327
        %v329 = vpop.f32.mrf.mxu0
        %330 = vdwg.mxu0
        %v331 = vmax.f32 %v315, 0.0
        %v332 = vmax.f32 %v328, 0.0
        %v335 = vrot.slane %v332, 4
        %vm336 = vcmask 1043456
        %v337 = vsel %vm336, %v331, %v335
        %339 = vst [vmem:[%s254] sm:$0xff] %v337
        %v340 = vsel %vm336, %v331, 0.0
        %v341 = vsel %vm336, %v332, 0.0
        %v342 = vadd.f32 %v340, %v341
        %343 = vadd.xlane.f32.xlu0 %v342
        %v344 = vpop.xlane.xlu0 %343
        %vm345 = vcmask 3072
        %346 = vst.msk [vmem:[%s260] sm:$0xf] %vm345, %v344
        %v347 = vmul.f32 %v331, %v331
        %v348 = vmul.f32 %v332, %v332
        %v349 = vsel %vm336, %v347, 0.0
        %v350 = vsel %vm336, %v348, 0.0
        %v351 = vadd.f32 %v349, %v350
        %352 = vadd.xlane.f32.xlu0 %v351
        %v353 = vpop.xlane.xlu0 %352
        %s354 = scalar_lea.vmem %s260, 4
        %355 = vst.msk [vmem:[%s354] sm:$0xf] %vm345, %v353
        %s356 = smul.u32 2, %s16
        %p357 = scmp.lt.s32.totalorder %s356, 3
        %s358 = scalar_select %p357, %s356, 3
        %s359 = smul.addr %s358, 4
        %s360 = scalar_lea.vmem %s3, %s359
        %p361 = scmp.lt.s32.totalorder %s16, 1
        %s362 = scalar_select %p361, %s16, 1
        %s363 = smul.addr %s362, 2
        %s364 = smul.addr %s363, 4
        %s365 = scalar_lea.vmem %s4, %s364
        // Predicated region
        $region71: #{siamese_forward.11} parent=65 // pred_check
          %p366 = pneg %p102
        $region72: #{siamese_forward.11} parent=65 // pred_check_branch
          %368 = sbr.rel (%p366) target = $region74
        $region73: #{siamese_forward.11} parent=65 // pred_region
          %s369 = smul.u32 2, %s16
        $region74: #{siamese_forward.11} parent=65 // pred_fallthru
          _
        // Predicated region
        $region75: #{siamese_forward.11} parent=65 // pred_check
          %p370 = pneg %p128
        $region76: #{siamese_forward.11} parent=65 // pred_check_branch
          %372 = sbr.rel (%p370) target = $region78
        $region77: #{siamese_forward.11} parent=65 // pred_region
          _
        $region78: #{siamese_forward.11} parent=65 // pred_fallthru
          _
      $region66: #{siamese_forward.11} parent=5 // pred_fallthru
        _
      %p373 = scmp.le.s32.totalorder 2, %s11
      // Predicated region
      $region79: #{siamese_forward.11} parent=5 // pred_check
        %p374 = pneg %p373
      $region80: #{siamese_forward.11} parent=5 // pred_check_branch
        %376 = sbr.rel (%p374) target = $region82
      $region81: #{siamese_forward.11} parent=5 // pred_region
        %s377 = ssub.s32 %s11, 2
        // Predicated region
        $region83: #{siamese_forward.11} parent=81 // pred_check
          %p378 = pneg %p108
        $region84: #{siamese_forward.11} parent=81 // pred_check_branch
          %380 = sbr.rel (%p378) target = $region86
        $region85: #{siamese_forward.11} parent=81 // pred_region
          %s381 = smul.u32 2, %s17
          %p382 = scmp.lt.s32.totalorder %s381, 3
          %s383 = scalar_select %p382, %s381, 3
          %s384 = smul.addr %s383, 4
          %s385 = scalar_lea.vmem %s3, %s384
        $region86: #{siamese_forward.11} parent=81 // pred_fallthru
          _
        // Predicated region
        $region87: #{siamese_forward.11} parent=81 // pred_check
          %p386 = pneg %p134
        $region88: #{siamese_forward.11} parent=81 // pred_check_branch
          %388 = sbr.rel (%p386) target = $region90
        $region89: #{siamese_forward.11} parent=81 // pred_region
          %p389 = scmp.lt.s32.totalorder %s17, 1
          %s390 = scalar_select %p389, %s17, 1
          %s391 = smul.addr %s390, 2
          %s392 = smul.addr %s391, 4
          %s393 = scalar_lea.vmem %s4, %s392
        $region90: #{siamese_forward.11} parent=81 // pred_fallthru
          _
      $region82: #{siamese_forward.11} parent=5 // pred_fallthru
        _
    $region6: #{siamese_forward.11} parent=1 // loop_footer
      %s15 = sadd.s32 1, %s11
    $region7: #{siamese_forward.11} parent=1 // loop_footer_branch
      %10 = sbr.rel target = $region3
    $region8: #{siamese_forward.11} parent=1 // loop_exit
      _

// kernel: siamese_forward.14
$region0: #{siamese_forward.14}
  #allocation0 [shape = 'u32[]', space=smem, size = 0x4, offset = 0x4, fixed_abs, tag = 'smem constant byte address 0x4 - core index']
  #allocation1 [shape = 'u32[72,128]{1,0:T(1,128)}', space=vmem, size = 0x9000, scoped, tag = 'internal scratch']
  %s0 = inlined_call_operand.vmem [shape: f32[8,512], index: 0, kind: input, shape index: {}]
  %s1 = inlined_call_operand.vmem [shape: f32[8,1], index: 1, kind: input, shape index: {}]
  %s2 = inlined_call_operand.vmem [shape: f32[8,1], index: 2, kind: input, shape index: {}]
  %s3 = inlined_call_operand.vmem [shape: bf16[8,512], index: 3, kind: output, shape index: {}]
  %s4 = sld [smem:[#allocation0]]
  $region45: #{siamese_forward.14} parent=0
    _
  %s6 = ssub.s32 1, %s4
  %s7 = scalar_select 0, %s6, %s4
  loop: start=0, step=1, limit=4
  $region2: #{siamese_forward.14} parent=0 // loop_pre_header
    _
  $region3: #{siamese_forward.14} parent=0 // loop_header
    %s9 = sphi 0, %s13
    %p10 = scmp.ge.s32.totalorder %s9, 4
    %s19 = sphi 0, %s21
    %s22 = sphi 0, %s19
    %s23 = sphi 0, %s22
    %s39 = sphi 0, %s23
    %s43 = sphi 0, %s43
    %s45 = sphi 0, %s43
    %s46 = sphi 0, %s45
    %s60 = sphi 0, %s46
    %s64 = sphi 0, %s64
    %s66 = sphi 0, %s64
    %s67 = sphi 0, %s66
    %s81 = sphi 0, %s67
    %s87 = sphi 0, %s89
    %s90 = sphi 0, %s87
    %s91 = sphi 0, %s90
    %s107 = sphi 0, %s91
  $region4: #{siamese_forward.14} parent=0 // loop_header_branch
    %12 = sbr.rel (%p10) target = $region8
  $region5: #{siamese_forward.14} parent=0 // loop_body
    %s14 = ssub.s32 %s9, 1
    %s15 = ssub.s32 %s9, 2
    %s16 = sadd.s32 %s9, 1
    %s17 = ssub.s32 %s9, %s16
    %p18 = scmp.eq.s32.totalorder %s17, 0
    %s20 = sadd.s32 %s19, 1
    %s21 = scalar_select %p18, %s19, %s20
    %p24 = pneg %p18
    %p25 = scmp.eq.s32.totalorder %s9, 1
    %p26 = por %p24, %p25
    %p27 = scmp.ne.s32.totalorder %s19, %s22
    %p28 = scmp.eq.s32.totalorder %s9, 0
    %p29 = por %p27, %p28
    %p30 = scmp.ne.s32.totalorder %s19, %s22
    %p31 = scmp.eq.s32.totalorder %s14, 1
    %p32 = por %p30, %p31
    %p33 = scmp.ne.s32.totalorder %s22, %s23
    %p34 = scmp.eq.s32.totalorder %s14, 0
    %p35 = por %p33, %p34
    %p36 = scmp.ne.s32.totalorder %s22, %s23
    %p37 = scmp.eq.s32.totalorder %s15, 1
    %p38 = por %p36, %p37
    %p40 = scmp.ne.s32.totalorder %s23, %s39
    %p41 = scmp.eq.s32.totalorder %s15, 0
    %p42 = por %p40, %p41
    %s44 = sadd.s32 %s43, 1
    %p47 = scmp.eq.s32.totalorder %s9, 1
    %p48 = scmp.ne.s32.totalorder %s43, %s45
    %p49 = scmp.eq.s32.totalorder %s9, 0
    %p50 = por %p48, %p49
    %p51 = scmp.ne.s32.totalorder %s43, %s45
    %p52 = scmp.eq.s32.totalorder %s14, 1
    %p53 = por %p51, %p52
    %p54 = scmp.ne.s32.totalorder %s45, %s46
    %p55 = scmp.eq.s32.totalorder %s14, 0
    %p56 = por %p54, %p55
    %p57 = scmp.ne.s32.totalorder %s45, %s46
    %p58 = scmp.eq.s32.totalorder %s15, 1
    %p59 = por %p57, %p58
    %p61 = scmp.ne.s32.totalorder %s46, %s60
    %p62 = scmp.eq.s32.totalorder %s15, 0
    %p63 = por %p61, %p62
    %s65 = sadd.s32 %s64, 1
    %p68 = scmp.eq.s32.totalorder %s9, 1
    %p69 = scmp.ne.s32.totalorder %s64, %s66
    %p70 = scmp.eq.s32.totalorder %s9, 0
    %p71 = por %p69, %p70
    %p72 = scmp.ne.s32.totalorder %s64, %s66
    %p73 = scmp.eq.s32.totalorder %s14, 1
    %p74 = por %p72, %p73
    %p75 = scmp.ne.s32.totalorder %s66, %s67
    %p76 = scmp.eq.s32.totalorder %s14, 0
    %p77 = por %p75, %p76
    %p78 = scmp.ne.s32.totalorder %s66, %s67
    %p79 = scmp.eq.s32.totalorder %s15, 1
    %p80 = por %p78, %p79
    %p82 = scmp.ne.s32.totalorder %s67, %s81
    %p83 = scmp.eq.s32.totalorder %s15, 0
    %p84 = por %p82, %p83
    %s85 = ssub.s32 %s9, %s16
    %p86 = scmp.eq.s32.totalorder %s85, 0
    %s88 = sadd.s32 %s87, 1
    %s89 = scalar_select %p86, %s87, %s88
    %p92 = pneg %p86
    %p93 = scmp.eq.s32.totalorder %s9, 1
    %p94 = por %p92, %p93
    %p95 = scmp.ne.s32.totalorder %s87, %s90
    %p96 = scmp.eq.s32.totalorder %s9, 0
    %p97 = por %p95, %p96
    %p98 = scmp.ne.s32.totalorder %s87, %s90
    %p99 = scmp.eq.s32.totalorder %s14, 1
    %p100 = por %p98, %p99
    %p101 = scmp.ne.s32.totalorder %s90, %s91
    %p102 = scmp.eq.s32.totalorder %s14, 0
    %p103 = por %p101, %p102
    %p104 = scmp.ne.s32.totalorder %s90, %s91
    %p105 = scmp.eq.s32.totalorder %s15, 1
    %p106 = por %p104, %p105
    %p108 = scmp.ne.s32.totalorder %s91, %s107
    %p109 = scmp.eq.s32.totalorder %s15, 0
    %p110 = por %p108, %p109
    %p111 = scmp.le.s32.totalorder 1, %s9
    %p112 = scmp.lt.s32.totalorder %s9, 3
    %p113 = pnand %p111, %p112
    %p114 = pneg %p113
    // Predicated region
    $region9: #{siamese_forward.14} parent=5 // pred_check
      _
    $region10: #{siamese_forward.14} parent=5 // pred_check_branch
      %116 = sbr.rel (%p113) target = $region12
    $region11: #{siamese_forward.14} parent=5 // pred_region
      %s117 = ssub.s32 %s9, 1
      // Predicated region
      $region13: #{siamese_forward.14} parent=11 // pred_check
        %p118 = pneg %p56
      $region14: #{siamese_forward.14} parent=11 // pred_check_branch
        %120 = sbr.rel (%p118) target = $region16
      $region15: #{siamese_forward.14} parent=11 // pred_region
        _
      $region16: #{siamese_forward.14} parent=11 // pred_fallthru
        _
      // Predicated region
      $region17: #{siamese_forward.14} parent=11 // pred_check
        %p121 = pneg %p77
      $region18: #{siamese_forward.14} parent=11 // pred_check_branch
        %123 = sbr.rel (%p121) target = $region20
      $region19: #{siamese_forward.14} parent=11 // pred_region
        _
      $region20: #{siamese_forward.14} parent=11 // pred_fallthru
        _
    $region12: #{siamese_forward.14} parent=5 // pred_fallthru
      _
    %p124 = scmp.lt.s32.totalorder %s9, 2
    // Predicated region
    $region21: #{siamese_forward.14} parent=5 // pred_check
      %p125 = pneg %p124
    $region22: #{siamese_forward.14} parent=5 // pred_check_branch
      %127 = sbr.rel (%p125) target = $region24
    $region23: #{siamese_forward.14} parent=5 // pred_region
      // Predicated region
      $region25: #{siamese_forward.14} parent=23 // pred_check
        %p128 = pneg %p29
      $region26: #{siamese_forward.14} parent=23 // pred_check_branch
        %130 = sbr.rel (%p128) target = $region28
      $region27: #{siamese_forward.14} parent=23 // pred_region
        %s131 = smul.u32 2, %s9
        %p132 = scmp.lt.s32.totalorder %s131, 3
        %s133 = scalar_select %p132, %s131, 3
        %s134 = smul.addr %s133, 8
        %s135 = scalar_lea.vmem %s0, %s134
        %s136 = smul.u32 2, %s9
      $region28: #{siamese_forward.14} parent=23 // pred_fallthru
        _
    $region24: #{siamese_forward.14} parent=5 // pred_fallthru
      _
    %p137 = scmp.le.s32.totalorder 1, %s9
    %p138 = scmp.lt.s32.totalorder %s9, 3
    %p139 = pnand %p137, %p138
    %p140 = pneg %p139
    // Predicated region
    $region29: #{siamese_forward.14} parent=5 // pred_check
      _
    $region30: #{siamese_forward.14} parent=5 // pred_check_branch
      %142 = sbr.rel (%p139) target = $region32
    $region31: #{siamese_forward.14} parent=5 // pred_region
      %s143 = ssub.s32 %s9, 1
      %s144 = smul.u32 2, %s14
      %p145 = scmp.lt.s32.totalorder %s144, 3
      %s146 = scalar_select %p145, %s144, 3
      %s147 = smul.addr %s146, 8
      %s148 = scalar_lea.vmem %s0, %s147
      %p149 = pneg %p35
      %p150 = pneg %p32
      %p151 = pneg %p56
      %p152 = pneg %p53
      %p153 = pneg %p77
      %p154 = pneg %p74
      %p155 = pneg %p103
      %p156 = pneg %p100
      %s157 = smul.u32 2, %s14
      %p158 = scmp.lt.s32.totalorder %s157, 3
      %s159 = scalar_select %p158, %s157, 3
      %s160 = smul.addr %s159, 4
      %s161 = scalar_lea.vmem %s3, %s160
      %s162 = smul.u32 2, %s14
      %p163 = scmp.lt.s32.totalorder %s162, 3
      %s164 = scalar_select %p163, %s162, 3
      %s165 = smul.addr %s164, 8
      %s166 = scalar_lea.vmem %s0, %s165
      %s167 = smul.u32 2, %s14
      %s168 = smul.u32 2, %s14
      %p169 = scmp.lt.s32.totalorder %s168, 3
      %s170 = scalar_select %p169, %s168, 3
      %s171 = smul.addr %s170, 4
      %s172 = scalar_lea.vmem %s3, %s171
      %s173 = smul.u32 2, %s14
      %v174 = vld [vmem:[%s166] sm:$0xff]
      %v175 = vld [vmem:[%s166 + $0x8] sm:$0xff]
      %v176 = vld [vmem:[%s1] sm:$0xff]
      %178 = vset.pattern.permute.xlu0 0
      %179 = vperm.xlu0 %178, %v176
      %v180 = vpop.permute.xlu0 %179
      %v182 = vmul.f32 %v174, %v180
      %v183 = vmul.f32 %v175, %v180
      %v184 = vld [vmem:[%s2] sm:$0xff]
      %186 = vset.pattern.permute.xlu0 0
      %187 = vperm.xlu0 %186, %v184
      %v188 = vpop.permute.xlu0 %187
      %v190 = vadd.f32 %v182, %v188
      %v191 = vadd.f32 %v183, %v188
      %v192 = vpack.c.bf16 %v191, %v190
      %193 = vst [vmem:[%s172] sm:$0xff] %v192
      %s194 = smul.u32 2, %s14
      %p195 = scmp.lt.s32.totalorder %s194, 3
      %s196 = scalar_select %p195, %s194, 3
      %s197 = smul.addr %s196, 4
      %s198 = scalar_lea.vmem %s3, %s197
      // Predicated region
      $region33: #{siamese_forward.14} parent=31 // pred_check
        %p199 = pneg %p100
      $region34: #{siamese_forward.14} parent=31 // pred_check_branch
        %201 = sbr.rel (%p199) target = $region36
      $region35: #{siamese_forward.14} parent=31 // pred_region
        %s202 = smul.u32 2, %s14
      $region36: #{siamese_forward.14} parent=31 // pred_fallthru
        _
    $region32: #{siamese_forward.14} parent=5 // pred_fallthru
      _
    %p203 = scmp.le.s32.totalorder 2, %s9
    // Predicated region
    $region37: #{siamese_forward.14} parent=5 // pred_check
      %p204 = pneg %p203
    $region38: #{siamese_forward.14} parent=5 // pred_check_branch
      %206 = sbr.rel (%p204) target = $region40
    $region39: #{siamese_forward.14} parent=5 // pred_region
      %s207 = ssub.s32 %s9, 2
      // Predicated region
      $region41: #{siamese_forward.14} parent=39 // pred_check
        %p208 = pneg %p106
      $region42: #{siamese_forward.14} parent=39 // pred_check_branch
        %210 = sbr.rel (%p208) target = $region44
      $region43: #{siamese_forward.14} parent=39 // pred_region
        %s211 = smul.u32 2, %s15
        %p212 = scmp.lt.s32.totalorder %s211, 3
        %s213 = scalar_select %p212, %s211, 3
        %s214 = smul.addr %s213, 4
        %s215 = scalar_lea.vmem %s3, %s214
      $region44: #{siamese_forward.14} parent=39 // pred_fallthru
        _
    $region40: #{siamese_forward.14} parent=5 // pred_fallthru
      _
  $region6: #{siamese_forward.14} parent=0 // loop_footer
    %s13 = sadd.s32 1, %s9
  $region7: #{siamese_forward.14} parent=0 // loop_footer_branch
    %8 = sbr.rel target = $region3
  $region8: #{siamese_forward.14} parent=0 // loop_exit
    _

// kernel: siamese_forward.13
$region0: #{siamese_forward.13}
  #allocation0 [shape = 'u32[]', space=smem, size = 0x4, offset = 0x4, fixed_abs, tag = 'smem constant byte address 0x4 - core index']
  #allocation1 [shape = 'u32[72,128]{1,0:T(1,128)}', space=vmem, size = 0x9000, scoped, tag = 'internal scratch']
  %s0 = inlined_call_operand.vmem [shape: bf16[36,512], index: 0, kind: input, shape index: {}]
  %s1 = inlined_call_operand.vmem [shape: bf16[8,36], index: 1, kind: input, shape index: {}]
  %s2 = inlined_call_operand.vmem [shape: f32[8,1], index: 2, kind: input, shape index: {}]
  %s3 = inlined_call_operand.vmem [shape: f32[8,512], index: 3, kind: output, shape index: {0}]
  %s4 = inlined_call_operand.vmem [shape: f32[2,2,8,1], index: 4, kind: output, shape index: {1}]
  %5 = xla_tuple %s3, %s4
  %s6 = sld [smem:[#allocation0]]
  $region91: #{siamese_forward.13} parent=0
    _
  %s8 = ssub.s32 1, %s6
  %s9 = scalar_select 0, %s8, %s6
  $region1: #{siamese_forward.13} parent=0
    #allocation2 [shape = 'u8[40960]{0}', space=vmem, size = 0xa000, scoped, tag = 'input window, operand 0']
    loop: start=0, step=1, limit=4
    $region2: #{siamese_forward.13} parent=1 // loop_pre_header
      _
    $region3: #{siamese_forward.13} parent=1 // loop_header
      %s11 = sphi 0, %s15
      %p12 = scmp.ge.s32.totalorder %s11, 4
      %s21 = sphi 0, %s23
      %s24 = sphi 0, %s21
      %s25 = sphi 0, %s24
      %s41 = sphi 0, %s25
      %s45 = sphi 0, %s45
      %s47 = sphi 0, %s45
      %s48 = sphi 0, %s47
      %s62 = sphi 0, %s48
      %s66 = sphi 0, %s66
      %s68 = sphi 0, %s66
      %s69 = sphi 0, %s68
      %s83 = sphi 0, %s69
      %s89 = sphi 0, %s91
      %s92 = sphi 0, %s89
      %s93 = sphi 0, %s92
      %s109 = sphi 0, %s93
      %s115 = sphi 0, %s117
      %s118 = sphi 0, %s115
      %s119 = sphi 0, %s118
      %s135 = sphi 0, %s119
    $region4: #{siamese_forward.13} parent=1 // loop_header_branch
      %14 = sbr.rel (%p12) target = $region8
    $region5: #{siamese_forward.13} parent=1 // loop_body
      %s16 = ssub.s32 %s11, 1
      %s17 = ssub.s32 %s11, 2
      %s18 = sadd.s32 %s11, 1
      %s19 = ssub.s32 %s11, %s18
      %p20 = scmp.eq.s32.totalorder %s19, 0
      %s22 = sadd.s32 %s21, 1
      %s23 = scalar_select %p20, %s21, %s22
      %p26 = pneg %p20
      %p27 = scmp.eq.s32.totalorder %s11, 1
      %p28 = por %p26, %p27
      %p29 = scmp.ne.s32.totalorder %s21, %s24
      %p30 = scmp.eq.s32.totalorder %s11, 0
      %p31 = por %p29, %p30
      %p32 = scmp.ne.s32.totalorder %s21, %s24
      %p33 = scmp.eq.s32.totalorder %s16, 1
      %p34 = por %p32, %p33
      %p35 = scmp.ne.s32.totalorder %s24, %s25
      %p36 = scmp.eq.s32.totalorder %s16, 0
      %p37 = por %p35, %p36
      %p38 = scmp.ne.s32.totalorder %s24, %s25
      %p39 = scmp.eq.s32.totalorder %s17, 1
      %p40 = por %p38, %p39
      %p42 = scmp.ne.s32.totalorder %s25, %s41
      %p43 = scmp.eq.s32.totalorder %s17, 0
      %p44 = por %p42, %p43
      %s46 = sadd.s32 %s45, 1
      %p49 = scmp.eq.s32.totalorder %s11, 1
      %p50 = scmp.ne.s32.totalorder %s45, %s47
      %p51 = scmp.eq.s32.totalorder %s11, 0
      %p52 = por %p50, %p51
      %p53 = scmp.ne.s32.totalorder %s45, %s47
      %p54 = scmp.eq.s32.totalorder %s16, 1
      %p55 = por %p53, %p54
      %p56 = scmp.ne.s32.totalorder %s47, %s48
      %p57 = scmp.eq.s32.totalorder %s16, 0
      %p58 = por %p56, %p57
      %p59 = scmp.ne.s32.totalorder %s47, %s48
      %p60 = scmp.eq.s32.totalorder %s17, 1
      %p61 = por %p59, %p60
      %p63 = scmp.ne.s32.totalorder %s48, %s62
      %p64 = scmp.eq.s32.totalorder %s17, 0
      %p65 = por %p63, %p64
      %s67 = sadd.s32 %s66, 1
      %p70 = scmp.eq.s32.totalorder %s11, 1
      %p71 = scmp.ne.s32.totalorder %s66, %s68
      %p72 = scmp.eq.s32.totalorder %s11, 0
      %p73 = por %p71, %p72
      %p74 = scmp.ne.s32.totalorder %s66, %s68
      %p75 = scmp.eq.s32.totalorder %s16, 1
      %p76 = por %p74, %p75
      %p77 = scmp.ne.s32.totalorder %s68, %s69
      %p78 = scmp.eq.s32.totalorder %s16, 0
      %p79 = por %p77, %p78
      %p80 = scmp.ne.s32.totalorder %s68, %s69
      %p81 = scmp.eq.s32.totalorder %s17, 1
      %p82 = por %p80, %p81
      %p84 = scmp.ne.s32.totalorder %s69, %s83
      %p85 = scmp.eq.s32.totalorder %s17, 0
      %p86 = por %p84, %p85
      %s87 = ssub.s32 %s11, %s18
      %p88 = scmp.eq.s32.totalorder %s87, 0
      %s90 = sadd.s32 %s89, 1
      %s91 = scalar_select %p88, %s89, %s90
      %p94 = pneg %p88
      %p95 = scmp.eq.s32.totalorder %s11, 1
      %p96 = por %p94, %p95
      %p97 = scmp.ne.s32.totalorder %s89, %s92
      %p98 = scmp.eq.s32.totalorder %s11, 0
      %p99 = por %p97, %p98
      %p100 = scmp.ne.s32.totalorder %s89, %s92
      %p101 = scmp.eq.s32.totalorder %s16, 1
      %p102 = por %p100, %p101
      %p103 = scmp.ne.s32.totalorder %s92, %s93
      %p104 = scmp.eq.s32.totalorder %s16, 0
      %p105 = por %p103, %p104
      %p106 = scmp.ne.s32.totalorder %s92, %s93
      %p107 = scmp.eq.s32.totalorder %s17, 1
      %p108 = por %p106, %p107
      %p110 = scmp.ne.s32.totalorder %s93, %s109
      %p111 = scmp.eq.s32.totalorder %s17, 0
      %p112 = por %p110, %p111
      %s113 = ssub.s32 %s11, %s18
      %p114 = scmp.eq.s32.totalorder %s113, 0
      %s116 = sadd.s32 %s115, 1
      %s117 = scalar_select %p114, %s115, %s116
      %p120 = pneg %p114
      %p121 = scmp.eq.s32.totalorder %s11, 1
      %p122 = por %p120, %p121
      %p123 = scmp.ne.s32.totalorder %s115, %s118
      %p124 = scmp.eq.s32.totalorder %s11, 0
      %p125 = por %p123, %p124
      %p126 = scmp.ne.s32.totalorder %s115, %s118
      %p127 = scmp.eq.s32.totalorder %s16, 1
      %p128 = por %p126, %p127
      %p129 = scmp.ne.s32.totalorder %s118, %s119
      %p130 = scmp.eq.s32.totalorder %s16, 0
      %p131 = por %p129, %p130
      %p132 = scmp.ne.s32.totalorder %s118, %s119
      %p133 = scmp.eq.s32.totalorder %s17, 1
      %p134 = por %p132, %p133
      %p136 = scmp.ne.s32.totalorder %s119, %s135
      %p137 = scmp.eq.s32.totalorder %s17, 0
      %p138 = por %p136, %p137
      %p139 = scmp.le.s32.totalorder 1, %s11
      %p140 = scmp.lt.s32.totalorder %s11, 3
      %p141 = pnand %p139, %p140
      %p142 = pneg %p141
      // Predicated region
      $region9: #{siamese_forward.13} parent=5 // pred_check
        _
      $region10: #{siamese_forward.13} parent=5 // pred_check_branch
        %144 = sbr.rel (%p141) target = $region12
      $region11: #{siamese_forward.13} parent=5 // pred_region
        %s145 = ssub.s32 %s11, 1
        // Predicated region
        $region13: #{siamese_forward.13} parent=11 // pred_check
          %p146 = pneg %p58
        $region14: #{siamese_forward.13} parent=11 // pred_check_branch
          %148 = sbr.rel (%p146) target = $region16
        $region15: #{siamese_forward.13} parent=11 // pred_region
          _
        $region16: #{siamese_forward.13} parent=11 // pred_fallthru
          _
        // Predicated region
        $region17: #{siamese_forward.13} parent=11 // pred_check
          %p149 = pneg %p79
        $region18: #{siamese_forward.13} parent=11 // pred_check_branch
          %151 = sbr.rel (%p149) target = $region20
        $region19: #{siamese_forward.13} parent=11 // pred_region
          _
        $region20: #{siamese_forward.13} parent=11 // pred_fallthru
          _
      $region12: #{siamese_forward.13} parent=5 // pred_fallthru
        _
      %p152 = scmp.lt.s32.totalorder %s11, 2
      // Predicated region
      $region21: #{siamese_forward.13} parent=5 // pred_check
        %p153 = pneg %p152
      $region22: #{siamese_forward.13} parent=5 // pred_check_branch
        %155 = sbr.rel (%p153) target = $region24
      $region23: #{siamese_forward.13} parent=5 // pred_region
        // Predicated region
        $region25: #{siamese_forward.13} parent=23 // pred_check
          %p156 = pneg %p31
        $region26: #{siamese_forward.13} parent=23 // pred_check_branch
          %158 = sbr.rel (%p156) target = $region28
        $region27: #{siamese_forward.13} parent=23 // pred_region
          %s159 = sand.u32 %s21, 1
          %s160 = sand.u32 %s21, 1
          %s161 = smul.addr %s160, 40
          %s162 = scalar_lea.vmem [#allocation2], %s161
          %s163 = smul.u32 2, %s11
          %s164 = smul.addr %s163, 4
          %s165 = scalar_lea.vmem %s0, %s164
          // Predicated region
          $region29: #{siamese_forward.13} parent=27 // pred_check
            _
          $region30: #{siamese_forward.13} parent=27 // pred_check_branch
            %167 = sbr.rel (0) target = $region32
          $region31: #{siamese_forward.13} parent=27 // pred_region
            // Predicated region
            $region33: #{siamese_forward.13} parent=31 // pred_check
              _
            $region34: #{siamese_forward.13} parent=31 // pred_check_branch
              %169 = sbr.rel (0) target = $region36
            $region35: #{siamese_forward.13} parent=31 // pred_region
              // Predicated region
              $region48: #{siamese_forward.13} parent=35 // pred_check
                _
              $region49: #{siamese_forward.13} parent=35 // pred_check_branch
                %193 = sbr.rel (0) target = $region51
              $region50: #{siamese_forward.13} parent=35 // pred_region
                loop: start=0, step=1, limit=1
                $region52: #{siamese_forward.13} parent=50 // loop_pre_header
                  _
                $region53: #{siamese_forward.13} parent=50 // loop_header
                  %s195 = sphi 0, %s199
                  %p196 = scmp.ge.s32.totalorder %s195, 1
                  %s200 = sphi %s165, %s165
                  %s201 = sphi %s162, %s162
                $region54: #{siamese_forward.13} parent=50 // loop_header_branch
                  %198 = sbr.rel (%p196) target = $region58
                $region55: #{siamese_forward.13} parent=50 // loop_body
                  %v202 = vld [vmem:[%s200] sm:$0xff]
                  %203 = vst [vmem:[%s201] sm:$0xff] %v202
                  %v204 = vld [vmem:[%s200 + $0x10] sm:$0xff]
                  %205 = vst [vmem:[%s201 + $0x8] sm:$0xff] %v204
                  %v206 = vld [vmem:[%s200 + $0x20] sm:$0xff]
                  %207 = vst [vmem:[%s201 + $0x10] sm:$0xff] %v206
                  %v208 = vld [vmem:[%s200 + $0x30] sm:$0xff]
                  %209 = vst [vmem:[%s201 + $0x18] sm:$0xff] %v208
                  %v210 = vld [vmem:[%s200 + $0x40] sm:$0xff]
                  %211 = vst [vmem:[%s201 + $0x20] sm:$0xff] %v210
                $region56: #{siamese_forward.13} parent=50 // loop_footer
                  %s199 = sadd.s32 1, %s195
                $region57: #{siamese_forward.13} parent=50 // loop_footer_branch
                  %194 = sbr.rel target = $region53
                $region58: #{siamese_forward.13} parent=50 // loop_exit
                  _
              $region51: #{siamese_forward.13} parent=35 // pred_fallthru
                _
              // Predicated region
              $region59: #{siamese_forward.13} parent=35 // pred_check
                _
              $region60: #{siamese_forward.13} parent=35 // pred_check_branch
                %213 = sbr.rel target = $region62
              $region61: #{siamese_forward.13} parent=35 // pred_region
                _
              $region62: #{siamese_forward.13} parent=35 // pred_fallthru
                _
            $region36: #{siamese_forward.13} parent=31 // pred_fallthru
              _
            // Predicated region
            $region37: #{siamese_forward.13} parent=31 // pred_check
              _
            $region38: #{siamese_forward.13} parent=31 // pred_check_branch
              %171 = sbr.rel target = $region40
            $region39: #{siamese_forward.13} parent=31 // pred_region
              %s173 = ssub.s32 256, 1
              loop: start=0, step=1, limit=1
              $region41: #{siamese_forward.13} parent=39 // loop_pre_header
                _
              $region42: #{siamese_forward.13} parent=39 // loop_header
                %s175 = sphi 0, %s179
                %p176 = scmp.ge.s32.totalorder %s175, 1
                %s180 = sphi %s165, %s165
                %s181 = sphi %s162, %s162
              $region43: #{siamese_forward.13} parent=39 // loop_header_branch
                %178 = sbr.rel (%p176) target = $region47
              $region44: #{siamese_forward.13} parent=39 // loop_body
                %v182 = vld [vmem:[%s180] sm:%s173]
                %183 = vst [vmem:[%s181] sm:%s173] %v182
                %v184 = vld [vmem:[%s180 + $0x10] sm:%s173]
                %185 = vst [vmem:[%s181 + $0x8] sm:%s173] %v184
                %v186 = vld [vmem:[%s180 + $0x20] sm:%s173]
                %187 = vst [vmem:[%s181 + $0x10] sm:%s173] %v186
                %v188 = vld [vmem:[%s180 + $0x30] sm:%s173]
                %189 = vst [vmem:[%s181 + $0x18] sm:%s173] %v188
                %v190 = vld [vmem:[%s180 + $0x40] sm:%s173]
                %191 = vst [vmem:[%s181 + $0x20] sm:%s173] %v190
              $region45: #{siamese_forward.13} parent=39 // loop_footer
                %s179 = sadd.s32 1, %s175
              $region46: #{siamese_forward.13} parent=39 // loop_footer_branch
                %174 = sbr.rel target = $region42
              $region47: #{siamese_forward.13} parent=39 // loop_exit
                _
            $region40: #{siamese_forward.13} parent=31 // pred_fallthru
              _
          $region32: #{siamese_forward.13} parent=27 // pred_fallthru
            _
          %214 = vnop
        $region28: #{siamese_forward.13} parent=23 // pred_fallthru
          _
      $region24: #{siamese_forward.13} parent=5 // pred_fallthru
        _
      %p215 = scmp.le.s32.totalorder 1, %s11
      %p216 = scmp.lt.s32.totalorder %s11, 3
      %p217 = pnand %p215, %p216
      %p218 = pneg %p217
      // Predicated region
      $region63: #{siamese_forward.13} parent=5 // pred_check
        _
      $region64: #{siamese_forward.13} parent=5 // pred_check_branch
        %220 = sbr.rel (%p217) target = $region66
      $region65: #{siamese_forward.13} parent=5 // pred_region
        %s221 = ssub.s32 %s11, 1
        %s222 = sand.u32 %s24, 1
        %s223 = sand.u32 %s24, 1
        %s224 = smul.addr %s223, 40
        %s225 = scalar_lea.vmem [#allocation2], %s224
        // Predicated region
        $region67: #{siamese_forward.13} parent=65 // pred_check
          %p226 = pneg %p37
        $region68: #{siamese_forward.13} parent=65 // pred_check_branch
          %228 = sbr.rel (%p226) target = $region70
        $region69: #{siamese_forward.13} parent=65 // pred_region
          _
        $region70: #{siamese_forward.13} parent=65 // pred_fallthru
          _
        %s229 = sand.u32 %s24, 1
        %s230 = sand.u32 %s24, 1
        %s231 = smul.addr %s230, 40
        %s232 = scalar_lea.vmem [#allocation2], %s231
        %p233 = pneg %p37
        %p234 = pneg %p34
        %p235 = pneg %p58
        %p236 = pneg %p55
        %p237 = pneg %p79
        %p238 = pneg %p76
        %p239 = pneg %p105
        %p240 = pneg %p102
        %s241 = smul.u32 2, %s16
        %p242 = scmp.lt.s32.totalorder %s241, 3
        %s243 = scalar_select %p242, %s241, 3
        %s244 = smul.addr %s243, 8
        %s245 = scalar_lea.vmem %s3, %s244
        %p246 = pneg %p131
        %p247 = pneg %p128
        %p248 = scmp.lt.s32.totalorder %s16, 1
        %s249 = scalar_select %p248, %s16, 1
        %s250 = smul.addr %s249, 2
        %s251 = smul.addr %s250, 8
        %s252 = scalar_lea.vmem %s4, %s251
        %s253 = smul.u32 2, %s16
        %s254 = smul.u32 2, %s16
        %p255 = scmp.lt.s32.totalorder %s254, 3
        %s256 = scalar_select %p255, %s254, 3
        %s257 = smul.addr %s256, 8
        %s258 = scalar_lea.vmem %s3, %s257
        %s259 = smul.u32 2, %s16
        %p260 = scmp.lt.s32.totalorder %s16, 1
        %s261 = scalar_select %p260, %s16, 1
        %s262 = smul.addr %s261, 2
        %s263 = smul.addr %s262, 8
        %s264 = scalar_lea.vmem %s4, %s263
        %v266 = vld [vmem:[%s1] sm:$0xf]
        %v267 = vld [vmem:[%s225] sm:$0xff]
        %v268 = vld [vmem:[%s225 + $0x8] sm:$0xff]
        %v269 = vld [vmem:[%s225 + $0x10] sm:$0xff]
        %v270 = vld [vmem:[%s225 + $0x18] sm:$0xff]
        %v271 = vld [vmem:[%s225 + $0x20] sm:$0x33]
        %v272 = vld [vmem:[%s2] sm:$0xff]
        %274 = vset.pattern.permute.xlu0 0
        %275 = vperm.xlu0 %274, %v272
        %v276 = vpop.permute.xlu0 %275
        %v283 = vunpack.c.l.b16 %v267
        %v284 = vunpack.c.h.b16 %v267
        %v285 = vunpack.c.l.b16 %v268
        %v286 = vunpack.c.h.b16 %v268
        %v287 = vunpack.c.l.b16 %v269
        %v288 = vunpack.c.h.b16 %v269
        %v289 = vunpack.c.l.b16 %v270
        %v290 = vunpack.c.h.b16 %v270
        %v291 = vunpack.c.l.b16 %v271
        %v292 = vunpack.c.h.b16 %v271
        %v293 = vpack.c.b16 %v285, %v283
        %v294 = vpack.c.b16 %v286, %v284
        %v295 = vpack.c.b16 %v289, %v287
        %v296 = vpack.c.b16 %v290, %v288
        %v297 = vpack.c.b16 %v291, %v291
        %v298 = vpack.c.b16 %v292, %v292
        %vm303 = vcmask 293888
        %v305 = vsel %vm303, %v266, 0
        %vm307 = vcmask 1041408
        %v309 = vsel %vm307, %v297, 0
        %v312 = vsel %vm307, %v298, 0
        %314 = vmatpush.bf16.msra.mxu0 0
        %315 = vmatpush.bf16.msra.mxu0 0
        %316 = vmatpush.bf16.msra.mxu0 0
        %317 = vmatpush.bf16.msra.mxu0 0
        %318 = vmatpush.bf16.msra.mxu0 0
        %319 = vmatpush.bf16.msra.mxu0 %v309
        %320 = vmatpush.bf16.msra.mxu0 %v295
        %321 = vmatpush.bf16.msra.mxu0 %v293
        %322 = vmatmul.bf16.gmra.mxu0 %v305
        %v323 = vpop.f32.mrf.mxu0
        %v324 = vadd.f32 %v276, %v323
        %v325 = vpop.f32.mrf.mxu0
        %326 = vdwg.mxu0
        %327 = vmatpush.bf16.msra.mxu0 0
        %328 = vmatpush.bf16.msra.mxu0 0
        %329 = vmatpush.bf16.msra.mxu0 0
        %330 = vmatpush.bf16.msra.mxu0 0
        %331 = vmatpush.bf16.msra.mxu0 0
        %332 = vmatpush.bf16.msra.mxu0 %v312
        %333 = vmatpush.bf16.msra.mxu0 %v296
        %334 = vmatpush.bf16.msra.mxu0 %v294
        %335 = vmatmul.bf16.gmra.mxu0 %v305
        %v336 = vpop.f32.mrf.mxu0
        %v337 = vadd.f32 %v276, %v336
        %v338 = vpop.f32.mrf.mxu0
        %339 = vdwg.mxu0
        %v340 = vmax.f32 %v324, 0.0
        %v341 = vmax.f32 %v337, 0.0
        %342 = vst [vmem:[%s258] sm:$0xff] %v340
        %343 = vst [vmem:[%s258 + $0x8] sm:$0xff] %v341
        %v344 = vadd.f32 %v340, %v341
        %345 = vadd.xlane.f32.xlu0 %v344
        %v346 = vpop.xlane.xlu0 %345
        %vm347 = vcmask 7168
        %348 = vst.msk [vmem:[%s264] sm:$0xff] %vm347, %v346
        %v349 = vmul.f32 %v340, %v340
        %v350 = vmul.f32 %v341, %v341
        %v351 = vadd.f32 %v349, %v350
        %352 = vadd.xlane.f32.xlu0 %v351
        %v353 = vpop.xlane.xlu0 %352
        %s354 = scalar_lea.vmem %s264, 8
        %355 = vst.msk [vmem:[%s354] sm:$0xff] %vm347, %v353
        %s356 = smul.u32 2, %s16
        %p357 = scmp.lt.s32.totalorder %s356, 3
        %s358 = scalar_select %p357, %s356, 3
        %s359 = smul.addr %s358, 8
        %s360 = scalar_lea.vmem %s3, %s359
        %p361 = scmp.lt.s32.totalorder %s16, 1
        %s362 = scalar_select %p361, %s16, 1
        %s363 = smul.addr %s362, 2
        %s364 = smul.addr %s363, 8
        %s365 = scalar_lea.vmem %s4, %s364
        // Predicated region
        $region71: #{siamese_forward.13} parent=65 // pred_check
          %p366 = pneg %p102
        $region72: #{siamese_forward.13} parent=65 // pred_check_branch
          %368 = sbr.rel (%p366) target = $region74
        $region73: #{siamese_forward.13} parent=65 // pred_region
          %s369 = smul.u32 2, %s16
        $region74: #{siamese_forward.13} parent=65 // pred_fallthru
          _
        // Predicated region
        $region75: #{siamese_forward.13} parent=65 // pred_check
          %p370 = pneg %p128
        $region76: #{siamese_forward.13} parent=65 // pred_check_branch
          %372 = sbr.rel (%p370) target = $region78
        $region77: #{siamese_forward.13} parent=65 // pred_region
          _
        $region78: #{siamese_forward.13} parent=65 // pred_fallthru
          _
      $region66: #{siamese_forward.13} parent=5 // pred_fallthru
        _
      %p373 = scmp.le.s32.totalorder 2, %s11
      // Predicated region
      $region79: #{siamese_forward.13} parent=5 // pred_check
        %p374 = pneg %p373
      $region80: #{siamese_forward.13} parent=5 // pred_check_branch
        %376 = sbr.rel (%p374) target = $region82
      $region81: #{siamese_forward.13} parent=5 // pred_region
        %s377 = ssub.s32 %s11, 2
        // Predicated region
        $region83: #{siamese_forward.13} parent=81 // pred_check
          %p378 = pneg %p108
        $region84: #{siamese_forward.13} parent=81 // pred_check_branch
          %380 = sbr.rel (%p378) target = $region86
        $region85: #{siamese_forward.13} parent=81 // pred_region
          %s381 = smul.u32 2, %s17
          %p382 = scmp.lt.s32.totalorder %s381, 3
          %s383 = scalar_select %p382, %s381, 3
          %s384 = smul.addr %s383, 8
          %s385 = scalar_lea.vmem %s3, %s384
        $region86: #{siamese_forward.13} parent=81 // pred_fallthru
          _
        // Predicated region
        $region87: #{siamese_forward.13} parent=81 // pred_check
          %p386 = pneg %p134
        $region88: #{siamese_forward.13} parent=81 // pred_check_branch
          %388 = sbr.rel (%p386) target = $region90
        $region89: #{siamese_forward.13} parent=81 // pred_region
          %p389 = scmp.lt.s32.totalorder %s17, 1
          %s390 = scalar_select %p389, %s17, 1
          %s391 = smul.addr %s390, 2
          %s392 = smul.addr %s391, 8
          %s393 = scalar_lea.vmem %s4, %s392
        $region90: #{siamese_forward.13} parent=81 // pred_fallthru
          _
      $region82: #{siamese_forward.13} parent=5 // pred_fallthru
        _
    $region6: #{siamese_forward.13} parent=1 // loop_footer
      %s15 = sadd.s32 1, %s11
    $region7: #{siamese_forward.13} parent=1 // loop_footer_branch
      %10 = sbr.rel target = $region3
    $region8: #{siamese_forward.13} parent=1 // loop_exit
      _

// kernel: siamese_forward.15
$region0: #{siamese_forward.15}
  #allocation0 [shape = 'u32[]', space=smem, size = 0x4, offset = 0x4, fixed_abs, tag = 'smem constant byte address 0x4 - core index']
  #allocation1 [shape = 'u32[72,128]{1,0:T(1,128)}', space=vmem, size = 0x9000, scoped, tag = 'internal scratch']
  %s0 = inlined_call_operand.vmem [shape: bf16[72,512], index: 0, kind: input, shape index: {}]
  %s1 = inlined_call_operand.vmem [shape: bf16[16,72], index: 1, kind: input, shape index: {}]
  %s2 = inlined_call_operand.vmem [shape: f32[16,1], index: 2, kind: input, shape index: {}]
  %s3 = inlined_call_operand.vmem [shape: f32[16,512], index: 3, kind: output, shape index: {0}]
  %s4 = inlined_call_operand.vmem [shape: f32[2,2,16,1], index: 4, kind: output, shape index: {1}]
  %5 = xla_tuple %s3, %s4
  %s6 = sld [smem:[#allocation0]]
  $region110: #{siamese_forward.15} parent=0
    _
  %s8 = ssub.s32 1, %s6
  %s9 = scalar_select 0, %s8, %s6
  $region1: #{siamese_forward.15} parent=0
    #allocation2 [shape = 'u8[73728]{0}', space=vmem, size = 0x12000, scoped, tag = 'input window, operand 0']
    #allocation3 [shape = 'u8[32768]{0}', space=vmem, size = 0x8000, scoped, tag = 'output window, operand 0']
    loop: start=0, step=1, limit=4
    $region2: #{siamese_forward.15} parent=1 // loop_pre_header
      _
    $region3: #{siamese_forward.15} parent=1 // loop_header
      %s11 = sphi 0, %s15
      %p12 = scmp.ge.s32.totalorder %s11, 4
      %s21 = sphi 0, %s23
      %s24 = sphi 0, %s21
      %s25 = sphi 0, %s24
      %s41 = sphi 0, %s25
      %s45 = sphi 0, %s45
      %s47 = sphi 0, %s45
      %s48 = sphi 0, %s47
      %s62 = sphi 0, %s48
      %s66 = sphi 0, %s66
      %s68 = sphi 0, %s66
      %s69 = sphi 0, %s68
      %s83 = sphi 0, %s69
      %s89 = sphi 0, %s91
      %s92 = sphi 0, %s89
      %s93 = sphi 0, %s92
      %s109 = sphi 0, %s93
      %s115 = sphi 0, %s117
      %s118 = sphi 0, %s115
      %s119 = sphi 0, %s118
      %s135 = sphi 0, %s119
    $region4: #{siamese_forward.15} parent=1 // loop_header_branch
      %14 = sbr.rel (%p12) target = $region8
    $region5: #{siamese_forward.15} parent=1 // loop_body
      %s16 = ssub.s32 %s11, 1
      %s17 = ssub.s32 %s11, 2
      %s18 = sadd.s32 %s11, 1
      %s19 = ssub.s32 %s11, %s18
      %p20 = scmp.eq.s32.totalorder %s19, 0
      %s22 = sadd.s32 %s21, 1
      %s23 = scalar_select %p20, %s21, %s22
      %p26 = pneg %p20
      %p27 = scmp.eq.s32.totalorder %s11, 1
      %p28 = por %p26, %p27
      %p29 = scmp.ne.s32.totalorder %s21, %s24
      %p30 = scmp.eq.s32.totalorder %s11, 0
      %p31 = por %p29, %p30
      %p32 = scmp.ne.s32.totalorder %s21, %s24
      %p33 = scmp.eq.s32.totalorder %s16, 1
      %p34 = por %p32, %p33
      %p35 = scmp.ne.s32.totalorder %s24, %s25
      %p36 = scmp.eq.s32.totalorder %s16, 0
      %p37 = por %p35, %p36
      %p38 = scmp.ne.s32.totalorder %s24, %s25
      %p39 = scmp.eq.s32.totalorder %s17, 1
      %p40 = por %p38, %p39
      %p42 = scmp.ne.s32.totalorder %s25, %s41
      %p43 = scmp.eq.s32.totalorder %s17, 0
      %p44 = por %p42, %p43
      %s46 = sadd.s32 %s45, 1
      %p49 = scmp.eq.s32.totalorder %s11, 1
      %p50 = scmp.ne.s32.totalorder %s45, %s47
      %p51 = scmp.eq.s32.totalorder %s11, 0
      %p52 = por %p50, %p51
      %p53 = scmp.ne.s32.totalorder %s45, %s47
      %p54 = scmp.eq.s32.totalorder %s16, 1
      %p55 = por %p53, %p54
      %p56 = scmp.ne.s32.totalorder %s47, %s48
      %p57 = scmp.eq.s32.totalorder %s16, 0
      %p58 = por %p56, %p57
      %p59 = scmp.ne.s32.totalorder %s47, %s48
      %p60 = scmp.eq.s32.totalorder %s17, 1
      %p61 = por %p59, %p60
      %p63 = scmp.ne.s32.totalorder %s48, %s62
      %p64 = scmp.eq.s32.totalorder %s17, 0
      %p65 = por %p63, %p64
      %s67 = sadd.s32 %s66, 1
      %p70 = scmp.eq.s32.totalorder %s11, 1
      %p71 = scmp.ne.s32.totalorder %s66, %s68
      %p72 = scmp.eq.s32.totalorder %s11, 0
      %p73 = por %p71, %p72
      %p74 = scmp.ne.s32.totalorder %s66, %s68
      %p75 = scmp.eq.s32.totalorder %s16, 1
      %p76 = por %p74, %p75
      %p77 = scmp.ne.s32.totalorder %s68, %s69
      %p78 = scmp.eq.s32.totalorder %s16, 0
      %p79 = por %p77, %p78
      %p80 = scmp.ne.s32.totalorder %s68, %s69
      %p81 = scmp.eq.s32.totalorder %s17, 1
      %p82 = por %p80, %p81
      %p84 = scmp.ne.s32.totalorder %s69, %s83
      %p85 = scmp.eq.s32.totalorder %s17, 0
      %p86 = por %p84, %p85
      %s87 = ssub.s32 %s11, %s18
      %p88 = scmp.eq.s32.totalorder %s87, 0
      %s90 = sadd.s32 %s89, 1
      %s91 = scalar_select %p88, %s89, %s90
      %p94 = pneg %p88
      %p95 = scmp.eq.s32.totalorder %s11, 1
      %p96 = por %p94, %p95
      %p97 = scmp.ne.s32.totalorder %s89, %s92
      %p98 = scmp.eq.s32.totalorder %s11, 0
      %p99 = por %p97, %p98
      %p100 = scmp.ne.s32.totalorder %s89, %s92
      %p101 = scmp.eq.s32.totalorder %s16, 1
      %p102 = por %p100, %p101
      %p103 = scmp.ne.s32.totalorder %s92, %s93
      %p104 = scmp.eq.s32.totalorder %s16, 0
      %p105 = por %p103, %p104
      %p106 = scmp.ne.s32.totalorder %s92, %s93
      %p107 = scmp.eq.s32.totalorder %s17, 1
      %p108 = por %p106, %p107
      %p110 = scmp.ne.s32.totalorder %s93, %s109
      %p111 = scmp.eq.s32.totalorder %s17, 0
      %p112 = por %p110, %p111
      %s113 = ssub.s32 %s11, %s18
      %p114 = scmp.eq.s32.totalorder %s113, 0
      %s116 = sadd.s32 %s115, 1
      %s117 = scalar_select %p114, %s115, %s116
      %p120 = pneg %p114
      %p121 = scmp.eq.s32.totalorder %s11, 1
      %p122 = por %p120, %p121
      %p123 = scmp.ne.s32.totalorder %s115, %s118
      %p124 = scmp.eq.s32.totalorder %s11, 0
      %p125 = por %p123, %p124
      %p126 = scmp.ne.s32.totalorder %s115, %s118
      %p127 = scmp.eq.s32.totalorder %s16, 1
      %p128 = por %p126, %p127
      %p129 = scmp.ne.s32.totalorder %s118, %s119
      %p130 = scmp.eq.s32.totalorder %s16, 0
      %p131 = por %p129, %p130
      %p132 = scmp.ne.s32.totalorder %s118, %s119
      %p133 = scmp.eq.s32.totalorder %s17, 1
      %p134 = por %p132, %p133
      %p136 = scmp.ne.s32.totalorder %s119, %s135
      %p137 = scmp.eq.s32.totalorder %s17, 0
      %p138 = por %p136, %p137
      %p139 = scmp.le.s32.totalorder 1, %s11
      %p140 = scmp.lt.s32.totalorder %s11, 3
      %p141 = pnand %p139, %p140
      %p142 = pneg %p141
      // Predicated region
      $region9: #{siamese_forward.15} parent=5 // pred_check
        _
      $region10: #{siamese_forward.15} parent=5 // pred_check_branch
        %144 = sbr.rel (%p141) target = $region12
      $region11: #{siamese_forward.15} parent=5 // pred_region
        %s145 = ssub.s32 %s11, 1
        // Predicated region
        $region13: #{siamese_forward.15} parent=11 // pred_check
          %p146 = pneg %p58
        $region14: #{siamese_forward.15} parent=11 // pred_check_branch
          %148 = sbr.rel (%p146) target = $region16
        $region15: #{siamese_forward.15} parent=11 // pred_region
          _
        $region16: #{siamese_forward.15} parent=11 // pred_fallthru
          _
        // Predicated region
        $region17: #{siamese_forward.15} parent=11 // pred_check
          %p149 = pneg %p79
        $region18: #{siamese_forward.15} parent=11 // pred_check_branch
          %151 = sbr.rel (%p149) target = $region20
        $region19: #{siamese_forward.15} parent=11 // pred_region
          _
        $region20: #{siamese_forward.15} parent=11 // pred_fallthru
          _
      $region12: #{siamese_forward.15} parent=5 // pred_fallthru
        _
      %p152 = scmp.lt.s32.totalorder %s11, 2
      // Predicated region
      $region21: #{siamese_forward.15} parent=5 // pred_check
        %p153 = pneg %p152
      $region22: #{siamese_forward.15} parent=5 // pred_check_branch
        %155 = sbr.rel (%p153) target = $region24
      $region23: #{siamese_forward.15} parent=5 // pred_region
        // Predicated region
        $region25: #{siamese_forward.15} parent=23 // pred_check
          %p156 = pneg %p31
        $region26: #{siamese_forward.15} parent=23 // pred_check_branch
          %158 = sbr.rel (%p156) target = $region28
        $region27: #{siamese_forward.15} parent=23 // pred_region
          %s159 = sand.u32 %s21, 1
          %s160 = sand.u32 %s21, 1
          %s161 = smul.addr %s160, 72
          %s162 = scalar_lea.vmem [#allocation2], %s161
          %s163 = smul.u32 2, %s11
          %s164 = smul.addr %s163, 4
          %s165 = scalar_lea.vmem %s0, %s164
          // Predicated region
          $region29: #{siamese_forward.15} parent=27 // pred_check
            _
          $region30: #{siamese_forward.15} parent=27 // pred_check_branch
            %167 = sbr.rel (0) target = $region32
          $region31: #{siamese_forward.15} parent=27 // pred_region
            // Predicated region
            $region33: #{siamese_forward.15} parent=31 // pred_check
              _
            $region34: #{siamese_forward.15} parent=31 // pred_check_branch
              %169 = sbr.rel (0) target = $region36
            $region35: #{siamese_forward.15} parent=31 // pred_region
              // Predicated region
              $region48: #{siamese_forward.15} parent=35 // pred_check
                _
              $region49: #{siamese_forward.15} parent=35 // pred_check_branch
                %201 = sbr.rel (0) target = $region51
              $region50: #{siamese_forward.15} parent=35 // pred_region
                loop: start=0, step=1, limit=1
                $region52: #{siamese_forward.15} parent=50 // loop_pre_header
                  _
                $region53: #{siamese_forward.15} parent=50 // loop_header
                  %s203 = sphi 0, %s207
                  %p204 = scmp.ge.s32.totalorder %s203, 1
                  %s208 = sphi %s165, %s165
                  %s209 = sphi %s162, %s162
                $region54: #{siamese_forward.15} parent=50 // loop_header_branch
                  %206 = sbr.rel (%p204) target = $region58
                $region55: #{siamese_forward.15} parent=50 // loop_body
                  %v210 = vld [vmem:[%s208] sm:$0xff]
                  %211 = vst [vmem:[%s209] sm:$0xff] %v210
                  %v212 = vld [vmem:[%s208 + $0x10] sm:$0xff]
                  %213 = vst [vmem:[%s209 + $0x8] sm:$0xff] %v212
                  %v214 = vld [vmem:[%s208 + $0x20] sm:$0xff]
                  %215 = vst [vmem:[%s209 + $0x10] sm:$0xff] %v214
                  %v216 = vld [vmem:[%s208 + $0x30] sm:$0xff]
                  %217 = vst [vmem:[%s209 + $0x18] sm:$0xff] %v216
                  %v218 = vld [vmem:[%s208 + $0x40] sm:$0xff]
                  %219 = vst [vmem:[%s209 + $0x20] sm:$0xff] %v218
                  %v220 = vld [vmem:[%s208 + $0x50] sm:$0xff]
                  %221 = vst [vmem:[%s209 + $0x28] sm:$0xff] %v220
                  %v222 = vld [vmem:[%s208 + $0x60] sm:$0xff]
                  %223 = vst [vmem:[%s209 + $0x30] sm:$0xff] %v222
                  %v224 = vld [vmem:[%s208 + $0x70] sm:$0xff]
                  %225 = vst [vmem:[%s209 + $0x38] sm:$0xff] %v224
                  %v226 = vld [vmem:[%s208 + $0x80] sm:$0xff]
                  %227 = vst [vmem:[%s209 + $0x40] sm:$0xff] %v226
                $region56: #{siamese_forward.15} parent=50 // loop_footer
                  %s207 = sadd.s32 1, %s203
                $region57: #{siamese_forward.15} parent=50 // loop_footer_branch
                  %202 = sbr.rel target = $region53
                $region58: #{siamese_forward.15} parent=50 // loop_exit
                  _
              $region51: #{siamese_forward.15} parent=35 // pred_fallthru
                _
              // Predicated region
              $region59: #{siamese_forward.15} parent=35 // pred_check
                _
              $region60: #{siamese_forward.15} parent=35 // pred_check_branch
                %229 = sbr.rel target = $region62
              $region61: #{siamese_forward.15} parent=35 // pred_region
                _
              $region62: #{siamese_forward.15} parent=35 // pred_fallthru
                _
            $region36: #{siamese_forward.15} parent=31 // pred_fallthru
              _
            // Predicated region
            $region37: #{siamese_forward.15} parent=31 // pred_check
              _
            $region38: #{siamese_forward.15} parent=31 // pred_check_branch
              %171 = sbr.rel target = $region40
            $region39: #{siamese_forward.15} parent=31 // pred_region
              %s173 = ssub.s32 256, 1
              loop: start=0, step=1, limit=1
              $region41: #{siamese_forward.15} parent=39 // loop_pre_header
                _
              $region42: #{siamese_forward.15} parent=39 // loop_header
                %s175 = sphi 0, %s179
                %p176 = scmp.ge.s32.totalorder %s175, 1
                %s180 = sphi %s165, %s165
                %s181 = sphi %s162, %s162
              $region43: #{siamese_forward.15} parent=39 // loop_header_branch
                %178 = sbr.rel (%p176) target = $region47
              $region44: #{siamese_forward.15} parent=39 // loop_body
                %v182 = vld [vmem:[%s180] sm:%s173]
                %183 = vst [vmem:[%s181] sm:%s173] %v182
                %v184 = vld [vmem:[%s180 + $0x10] sm:%s173]
                %185 = vst [vmem:[%s181 + $0x8] sm:%s173] %v184
                %v186 = vld [vmem:[%s180 + $0x20] sm:%s173]
                %187 = vst [vmem:[%s181 + $0x10] sm:%s173] %v186
                %v188 = vld [vmem:[%s180 + $0x30] sm:%s173]
                %189 = vst [vmem:[%s181 + $0x18] sm:%s173] %v188
                %v190 = vld [vmem:[%s180 + $0x40] sm:%s173]
                %191 = vst [vmem:[%s181 + $0x20] sm:%s173] %v190
                %v192 = vld [vmem:[%s180 + $0x50] sm:%s173]
                %193 = vst [vmem:[%s181 + $0x28] sm:%s173] %v192
                %v194 = vld [vmem:[%s180 + $0x60] sm:%s173]
                %195 = vst [vmem:[%s181 + $0x30] sm:%s173] %v194
                %v196 = vld [vmem:[%s180 + $0x70] sm:%s173]
                %197 = vst [vmem:[%s181 + $0x38] sm:%s173] %v196
                %v198 = vld [vmem:[%s180 + $0x80] sm:%s173]
                %199 = vst [vmem:[%s181 + $0x40] sm:%s173] %v198
              $region45: #{siamese_forward.15} parent=39 // loop_footer
                %s179 = sadd.s32 1, %s175
              $region46: #{siamese_forward.15} parent=39 // loop_footer_branch
                %174 = sbr.rel target = $region42
              $region47: #{siamese_forward.15} parent=39 // loop_exit
                _
            $region40: #{siamese_forward.15} parent=31 // pred_fallthru
              _
          $region32: #{siamese_forward.15} parent=27 // pred_fallthru
            _
          %230 = vnop
        $region28: #{siamese_forward.15} parent=23 // pred_fallthru
          _
      $region24: #{siamese_forward.15} parent=5 // pred_fallthru
        _
      %p231 = scmp.le.s32.totalorder 1, %s11
      %p232 = scmp.lt.s32.totalorder %s11, 3
      %p233 = pnand %p231, %p232
      %p234 = pneg %p233
      // Predicated region
      $region63: #{siamese_forward.15} parent=5 // pred_check
        _
      $region64: #{siamese_forward.15} parent=5 // pred_check_branch
        %236 = sbr.rel (%p233) target = $region66
      $region65: #{siamese_forward.15} parent=5 // pred_region
        %s237 = ssub.s32 %s11, 1
        %s238 = sand.u32 %s24, 1
        %s239 = sand.u32 %s24, 1
        %s240 = smul.addr %s239, 72
        %s241 = scalar_lea.vmem [#allocation2], %s240
        // Predicated region
        $region67: #{siamese_forward.15} parent=65 // pred_check
          %p242 = pneg %p37
        $region68: #{siamese_forward.15} parent=65 // pred_check_branch
          %244 = sbr.rel (%p242) target = $region70
        $region69: #{siamese_forward.15} parent=65 // pred_region
          _
        $region70: #{siamese_forward.15} parent=65 // pred_fallthru
          _
        %s245 = sand.u32 %s24, 1
        %s246 = sand.u32 %s24, 1
        %s247 = smul.addr %s246, 72
        %s248 = scalar_lea.vmem [#allocation2], %s247
        %p249 = pneg %p37
        %p250 = pneg %p34
        %p251 = pneg %p58
        %p252 = pneg %p55
        %p253 = pneg %p79
        %p254 = pneg %p76
        %p255 = pneg %p105
        %p256 = pneg %p102
        %s257 = sand.u32 %s92, 1
        %s258 = sand.u32 %s92, 1
        %s259 = smul.addr %s258, 32
        %s260 = scalar_lea.vmem [#allocation3], %s259
        %p261 = pneg %p131
        %p262 = pneg %p128
        %p263 = scmp.lt.s32.totalorder %s16, 1
        %s264 = scalar_select %p263, %s16, 1
        %s265 = smul.addr %s264, 4
        %s266 = smul.addr %s265, 8
        %s267 = scalar_lea.vmem %s4, %s266
        %s268 = smul.u32 2, %s16
        %s269 = smul.u32 2, %s16
        %p270 = scmp.lt.s32.totalorder %s16, 1
        %s271 = scalar_select %p270, %s16, 1
        %s272 = smul.addr %s271, 4
        %s273 = smul.addr %s272, 8
        %s274 = scalar_lea.vmem %s4, %s273
        %v276 = vld [vmem:[%s1] sm:$0xf]
        %v277 = vld [vmem:[%s1 + $0x4] sm:$0xf]
        %v278 = vld [vmem:[%s241] sm:$0xff]
        %v279 = vld [vmem:[%s241 + $0x8] sm:$0xff]
        %v280 = vld [vmem:[%s241 + $0x10] sm:$0xff]
        %v281 = vld [vmem:[%s241 + $0x18] sm:$0xff]
        %v282 = vld [vmem:[%s241 + $0x20] sm:$0xff]
        %v283 = vld [vmem:[%s241 + $0x28] sm:$0xff]
        %v284 = vld [vmem:[%s241 + $0x30] sm:$0xff]
        %v285 = vld [vmem:[%s241 + $0x38] sm:$0xff]
        %v286 = vld [vmem:[%s241 + $0x40] sm:$0xff]
        %v287 = vld [vmem:[%s2] sm:$0xff]
        %v288 = vld [vmem:[%s2 + $0x8] sm:$0xff]
        %290 = vset.pattern.permute.xlu0 0
        %291 = vperm.xlu0 %290, %v287
        %v292 = vpop.permute.xlu0 %291
        %295 = vset.pattern.permute.xlu0 0
        %296 = vperm.xlu0 %295, %v288
        %v297 = vpop.permute.xlu0 %296
        %v301 = vunpack.c.l.b16 %v276
        %v302 = vunpack.c.l.b16 %v277
        %v303 = vpack.c.b16 %v302, %v301
        %v313 = vunpack.c.l.b16 %v278
        %v314 = vunpack.c.h.b16 %v278
        %v315 = vunpack.c.l.b16 %v279
        %v316 = vunpack.c.h.b16 %v279
        %v317 = vunpack.c.l.b16 %v280
        %v318 = vunpack.c.h.b16 %v280
        %v319 = vunpack.c.l.b16 %v281
        %v320 = vunpack.c.h.b16 %v281
        %v321 = vunpack.c.l.b16 %v282
        %v322 = vunpack.c.h.b16 %v282
        %v323 = vunpack.c.l.b16 %v283
        %v324 = vunpack.c.h.b16 %v283
        %v325 = vunpack.c.l.b16 %v284
        %v326 = vunpack.c.h.b16 %v284
        %v327 = vunpack.c.l.b16 %v285
        %v328 = vunpack.c.h.b16 %v285
        %v329 = vunpack.c.l.b16 %v286
        %v330 = vunpack.c.h.b16 %v286
        %v331 = vpack.c.b16 %v315, %v313
        %v332 = vpack.c.b16 %v316, %v314
        %v333 = vpack.c.b16 %v319, %v317
        %v334 = vpack.c.b16 %v320, %v318
        %v335 = vpack.c.b16 %v323, %v321
        %v336 = vpack.c.b16 %v324, %v322
        %v337 = vpack.c.b16 %v327, %v325
        %v338 = vpack.c.b16 %v328, %v326
        %v339 = vpack.c.b16 %v329, %v329
        %v340 = vpack.c.b16 %v330, %v330
        %vm349 = vcmask 588800
        %v351 = vsel %vm349, %v303, 0
        %vm353 = vcmask 1043456
        %v355 = vsel %vm353, %v339, 0
        %v358 = vsel %vm353, %v340, 0
        %360 = vmatpush.bf16.msra.mxu0 0
        %361 = vmatpush.bf16.msra.mxu0 0
        %362 = vmatpush.bf16.msra.mxu0 0
        %363 = vmatpush.bf16.msra.mxu0 %v355
        %364 = vmatpush.bf16.msra.mxu0 %v337
        %365 = vmatpush.bf16.msra.mxu0 %v335
        %366 = vmatpush.bf16.msra.mxu0 %v333
        %367 = vmatpush.bf16.msra.mxu0 %v331
        %368 = vmatmul.bf16.gmra.mxu0 %v351
        %v369 = vpop.f32.mrf.mxu0
        %v370 = vadd.f32 %v292, %v369
        %v371 = vpop.f32.mrf.mxu0
        %v372 = vadd.f32 %v297, %v371
        %373 = vdwg.mxu0
        %374 = vmatpush.bf16.msra.mxu0 0
        %375 = vmatpush.bf16.msra.mxu0 0
        %376 = vmatpush.bf16.msra.mxu0 0
        %377 = vmatpush.bf16.msra.mxu0 %v358
        %378 = vmatpush.bf16.msra.mxu0 %v338
        %379 = vmatpush.bf16.msra.mxu0 %v336
        %380 = vmatpush.bf16.msra.mxu0 %v334
        %381 = vmatpush.bf16.msra.mxu0 %v332
        %382 = vmatmul.bf16.gmra.mxu0 %v351
        %v383 = vpop.f32.mrf.mxu0
        %v384 = vadd.f32 %v292, %v383
        %v385 = vpop.f32.mrf.mxu0
        %v386 = vadd.f32 %v297, %v385
        %387 = vdwg.mxu0
        %v388 = vmax.f32 %v370, 0.0
        %v389 = vmax.f32 %v384, 0.0
        %v390 = vmax.f32 %v372, 0.0
        %v391 = vmax.f32 %v386, 0.0
        %392 = vst [vmem:[%s260] sm:$0xff] %v388
        %393 = vst [vmem:[%s260 + $0x8] sm:$0xff] %v389
        %394 = vst [vmem:[%s260 + $0x10] sm:$0xff] %v390
        %395 = vst [vmem:[%s260 + $0x18] sm:$0xff] %v391
        %v396 = vadd.f32 %v388, %v389
        %397 = vadd.xlane.f32.xlu0 %v396
        %v398 = vpop.xlane.xlu0 %397
        %v399 = vadd.f32 %v390, %v391
        %400 = vadd.xlane.f32.xlu0 %v399
        %v401 = vpop.xlane.xlu0 %400
        %vm402 = vcmask 7168
        %403 = vst.msk [vmem:[%s274] sm:$0xff] %vm402, %v398
        %404 = vst.msk [vmem:[%s274 + $0x8] sm:$0xff] %vm402, %v401
        %v405 = vmul.f32 %v388, %v388
        %v406 = vmul.f32 %v389, %v389
        %v407 = vmul.f32 %v390, %v390
        %v408 = vmul.f32 %v391, %v391
        %v409 = vadd.f32 %v405, %v406
        %410 = vadd.xlane.f32.xlu0 %v409
        %v411 = vpop.xlane.xlu0 %410
        %v412 = vadd.f32 %v407, %v408
        %413 = vadd.xlane.f32.xlu0 %v412
        %v414 = vpop.xlane.xlu0 %413
        %s415 = scalar_lea.vmem %s274, 16
        %416 = vst.msk [vmem:[%s415] sm:$0xff] %vm402, %v411
        %417 = vst.msk [vmem:[%s415 + $0x8] sm:$0xff] %vm402, %v414
        %s418 = sand.u32 %s92, 1
        %s419 = sand.u32 %s92, 1
        %s420 = smul.addr %s419, 32
        %s421 = scalar_lea.vmem [#allocation3], %s420
        %p422 = scmp.lt.s32.totalorder %s16, 1
        %s423 = scalar_select %p422, %s16, 1
        %s424 = smul.addr %s423, 4
        %s425 = smul.addr %s424, 8
        %s426 = scalar_lea.vmem %s4, %s425
        // Predicated region
        $region71: #{siamese_forward.15} parent=65 // pred_check
          %p427 = pneg %p102
        $region72: #{siamese_forward.15} parent=65 // pred_check_branch
          %429 = sbr.rel (%p427) target = $region74
        $region73: #{siamese_forward.15} parent=65 // pred_region
          %s430 = smul.u32 2, %s16
          %s431 = smul.addr %s430, 8
          %s432 = scalar_lea.vmem %s3, %s431
          // Predicated region
          $region75: #{siamese_forward.15} parent=73 // pred_check
            _
          $region76: #{siamese_forward.15} parent=73 // pred_check_branch
            %434 = sbr.rel (0) target = $region78
          $region77: #{siamese_forward.15} parent=73 // pred_region
            // Predicated region
            $region79: #{siamese_forward.15} parent=77 // pred_check
              _
            $region80: #{siamese_forward.15} parent=77 // pred_check_branch
              %436 = sbr.rel (0) target = $region82
            $region81: #{siamese_forward.15} parent=77 // pred_region
              loop: start=0, step=1, limit=1
              $region83: #{siamese_forward.15} parent=81 // loop_pre_header
                _
              $region84: #{siamese_forward.15} parent=81 // loop_header
                %s438 = sphi 0, %s442
                %p439 = scmp.ge.s32.totalorder %s438, 1
                %s443 = sphi %s421, %s421
                %s444 = sphi %s432, %s432
              $region85: #{siamese_forward.15} parent=81 // loop_header_branch
                %441 = sbr.rel (%p439) target = $region89
              $region86: #{siamese_forward.15} parent=81 // loop_body
                %v445 = vld [vmem:[%s443] sm:$0xff]
                %446 = vst [vmem:[%s444] sm:$0xff] %v445
                %v447 = vld [vmem:[%s443 + $0x8] sm:$0xff]
                %448 = vst [vmem:[%s444 + $0x8] sm:$0xff] %v447
                %v449 = vld [vmem:[%s443 + $0x10] sm:$0xff]
                %450 = vst [vmem:[%s444 + $0x20] sm:$0xff] %v449
                %v451 = vld [vmem:[%s443 + $0x18] sm:$0xff]
                %452 = vst [vmem:[%s444 + $0x28] sm:$0xff] %v451
              $region87: #{siamese_forward.15} parent=81 // loop_footer
                %s442 = sadd.s32 1, %s438
              $region88: #{siamese_forward.15} parent=81 // loop_footer_branch
                %437 = sbr.rel target = $region84
              $region89: #{siamese_forward.15} parent=81 // loop_exit
                _
            $region82: #{siamese_forward.15} parent=77 // pred_fallthru
              _
            // Predicated region
            $region90: #{siamese_forward.15} parent=77 // pred_check
              _
            $region91: #{siamese_forward.15} parent=77 // pred_check_branch
              %454 = sbr.rel target = $region93
            $region92: #{siamese_forward.15} parent=77 // pred_region
              _
            $region93: #{siamese_forward.15} parent=77 // pred_fallthru
              _
          $region78: #{siamese_forward.15} parent=73 // pred_fallthru
            _
          %455 = vnop
        $region74: #{siamese_forward.15} parent=65 // pred_fallthru
          _
        // Predicated region
        $region94: #{siamese_forward.15} parent=65 // pred_check
          %p456 = pneg %p128
        $region95: #{siamese_forward.15} parent=65 // pred_check_branch
          %458 = sbr.rel (%p456) target = $region97
        $region96: #{siamese_forward.15} parent=65 // pred_region
          _
        $region97: #{siamese_forward.15} parent=65 // pred_fallthru
          _
      $region66: #{siamese_forward.15} parent=5 // pred_fallthru
        _
      %p459 = scmp.le.s32.totalorder 2, %s11
      // Predicated region
      $region98: #{siamese_forward.15} parent=5 // pred_check
        %p460 = pneg %p459
      $region99: #{siamese_forward.15} parent=5 // pred_check_branch
        %462 = sbr.rel (%p460) target = $region101
      $region100: #{siamese_forward.15} parent=5 // pred_region
        %s463 = ssub.s32 %s11, 2
        // Predicated region
        $region102: #{siamese_forward.15} parent=100 // pred_check
          %p464 = pneg %p108
        $region103: #{siamese_forward.15} parent=100 // pred_check_branch
          %466 = sbr.rel (%p464) target = $region105
        $region104: #{siamese_forward.15} parent=100 // pred_region
          %s467 = sand.u32 %s93, 1
          %s468 = sand.u32 %s93, 1
          %s469 = smul.addr %s468, 32
          %s470 = scalar_lea.vmem [#allocation3], %s469
        $region105: #{siamese_forward.15} parent=100 // pred_fallthru
          _
        // Predicated region
        $region106: #{siamese_forward.15} parent=100 // pred_check
          %p471 = pneg %p134
        $region107: #{siamese_forward.15} parent=100 // pred_check_branch
          %473 = sbr.rel (%p471) target = $region109
        $region108: #{siamese_forward.15} parent=100 // pred_region
          %p474 = scmp.lt.s32.totalorder %s17, 1
          %s475 = scalar_select %p474, %s17, 1
          %s476 = smul.addr %s475, 4
          %s477 = smul.addr %s476, 8
          %s478 = scalar_lea.vmem %s4, %s477
        $region109: #{siamese_forward.15} parent=100 // pred_fallthru
          _
      $region101: #{siamese_forward.15} parent=5 // pred_fallthru
        _
    $region6: #{siamese_forward.15} parent=1 // loop_footer
      %s15 = sadd.s32 1, %s11
    $region7: #{siamese_forward.15} parent=1 // loop_footer_branch
      %10 = sbr.rel target = $region3
    $region8: #{siamese_forward.15} parent=1 // loop_exit
      _

// kernel: siamese_forward.16
$region0: #{siamese_forward.16}
  #allocation0 [shape = 'u32[]', space=smem, size = 0x4, offset = 0x4, fixed_abs, tag = 'smem constant byte address 0x4 - core index']
  #allocation1 [shape = 'u32[72,128]{1,0:T(1,128)}', space=vmem, size = 0x9000, scoped, tag = 'internal scratch']
  %s0 = inlined_call_operand.vmem [shape: f32[16,512], index: 0, kind: input, shape index: {}]
  %s1 = inlined_call_operand.vmem [shape: f32[16,1], index: 1, kind: input, shape index: {}]
  %s2 = inlined_call_operand.vmem [shape: f32[16,1], index: 2, kind: input, shape index: {}]
  %s3 = inlined_call_operand.vmem [shape: bf16[16,512], index: 3, kind: output, shape index: {}]
  %s4 = sld [smem:[#allocation0]]
  $region102: #{siamese_forward.16} parent=0
    _
  %s6 = ssub.s32 1, %s4
  %s7 = scalar_select 0, %s6, %s4
  $region1: #{siamese_forward.16} parent=0
    #allocation2 [shape = 'u8[32768]{0}', space=vmem, size = 0x8000, scoped, tag = 'input window, operand 0']
    #allocation3 [shape = 'u8[16384]{0}', space=vmem, size = 0x4000, scoped, tag = 'output window, operand 0']
    loop: start=0, step=1, limit=4
    $region2: #{siamese_forward.16} parent=1 // loop_pre_header
      _
    $region3: #{siamese_forward.16} parent=1 // loop_header
      %s9 = sphi 0, %s13
      %p10 = scmp.ge.s32.totalorder %s9, 4
      %s19 = sphi 0, %s21
      %s22 = sphi 0, %s19
      %s23 = sphi 0, %s22
      %s39 = sphi 0, %s23
      %s43 = sphi 0, %s43
      %s45 = sphi 0, %s43
      %s46 = sphi 0, %s45
      %s60 = sphi 0, %s46
      %s64 = sphi 0, %s64
      %s66 = sphi 0, %s64
      %s67 = sphi 0, %s66
      %s81 = sphi 0, %s67
      %s87 = sphi 0, %s89
      %s90 = sphi 0, %s87
      %s91 = sphi 0, %s90
      %s107 = sphi 0, %s91
    $region4: #{siamese_forward.16} parent=1 // loop_header_branch
      %12 = sbr.rel (%p10) target = $region8
    $region5: #{siamese_forward.16} parent=1 // loop_body
      %s14 = ssub.s32 %s9, 1
      %s15 = ssub.s32 %s9, 2
      %s16 = sadd.s32 %s9, 1
      %s17 = ssub.s32 %s9, %s16
      %p18 = scmp.eq.s32.totalorder %s17, 0
      %s20 = sadd.s32 %s19, 1
      %s21 = scalar_select %p18, %s19, %s20
      %p24 = pneg %p18
      %p25 = scmp.eq.s32.totalorder %s9, 1
      %p26 = por %p24, %p25
      %p27 = scmp.ne.s32.totalorder %s19, %s22
      %p28 = scmp.eq.s32.totalorder %s9, 0
      %p29 = por %p27, %p28
      %p30 = scmp.ne.s32.totalorder %s19, %s22
      %p31 = scmp.eq.s32.totalorder %s14, 1
      %p32 = por %p30, %p31
      %p33 = scmp.ne.s32.totalorder %s22, %s23
      %p34 = scmp.eq.s32.totalorder %s14, 0
      %p35 = por %p33, %p34
      %p36 = scmp.ne.s32.totalorder %s22, %s23
      %p37 = scmp.eq.s32.totalorder %s15, 1
      %p38 = por %p36, %p37
      %p40 = scmp.ne.s32.totalorder %s23, %s39
      %p41 = scmp.eq.s32.totalorder %s15, 0
      %p42 = por %p40, %p41
      %s44 = sadd.s32 %s43, 1
      %p47 = scmp.eq.s32.totalorder %s9, 1
      %p48 = scmp.ne.s32.totalorder %s43, %s45
      %p49 = scmp.eq.s32.totalorder %s9, 0
      %p50 = por %p48, %p49
      %p51 = scmp.ne.s32.totalorder %s43, %s45
      %p52 = scmp.eq.s32.totalorder %s14, 1
      %p53 = por %p51, %p52
      %p54 = scmp.ne.s32.totalorder %s45, %s46
      %p55 = scmp.eq.s32.totalorder %s14, 0
      %p56 = por %p54, %p55
      %p57 = scmp.ne.s32.totalorder %s45, %s46
      %p58 = scmp.eq.s32.totalorder %s15, 1
      %p59 = por %p57, %p58
      %p61 = scmp.ne.s32.totalorder %s46, %s60
      %p62 = scmp.eq.s32.totalorder %s15, 0
      %p63 = por %p61, %p62
      %s65 = sadd.s32 %s64, 1
      %p68 = scmp.eq.s32.totalorder %s9, 1
      %p69 = scmp.ne.s32.totalorder %s64, %s66
      %p70 = scmp.eq.s32.totalorder %s9, 0
      %p71 = por %p69, %p70
      %p72 = scmp.ne.s32.totalorder %s64, %s66
      %p73 = scmp.eq.s32.totalorder %s14, 1
      %p74 = por %p72, %p73
      %p75 = scmp.ne.s32.totalorder %s66, %s67
      %p76 = scmp.eq.s32.totalorder %s14, 0
      %p77 = por %p75, %p76
      %p78 = scmp.ne.s32.totalorder %s66, %s67
      %p79 = scmp.eq.s32.totalorder %s15, 1
      %p80 = por %p78, %p79
      %p82 = scmp.ne.s32.totalorder %s67, %s81
      %p83 = scmp.eq.s32.totalorder %s15, 0
      %p84 = por %p82, %p83
      %s85 = ssub.s32 %s9, %s16
      %p86 = scmp.eq.s32.totalorder %s85, 0
      %s88 = sadd.s32 %s87, 1
      %s89 = scalar_select %p86, %s87, %s88
      %p92 = pneg %p86
      %p93 = scmp.eq.s32.totalorder %s9, 1
      %p94 = por %p92, %p93
      %p95 = scmp.ne.s32.totalorder %s87, %s90
      %p96 = scmp.eq.s32.totalorder %s9, 0
      %p97 = por %p95, %p96
      %p98 = scmp.ne.s32.totalorder %s87, %s90
      %p99 = scmp.eq.s32.totalorder %s14, 1
      %p100 = por %p98, %p99
      %p101 = scmp.ne.s32.totalorder %s90, %s91
      %p102 = scmp.eq.s32.totalorder %s14, 0
      %p103 = por %p101, %p102
      %p104 = scmp.ne.s32.totalorder %s90, %s91
      %p105 = scmp.eq.s32.totalorder %s15, 1
      %p106 = por %p104, %p105
      %p108 = scmp.ne.s32.totalorder %s91, %s107
      %p109 = scmp.eq.s32.totalorder %s15, 0
      %p110 = por %p108, %p109
      %p111 = scmp.le.s32.totalorder 1, %s9
      %p112 = scmp.lt.s32.totalorder %s9, 3
      %p113 = pnand %p111, %p112
      %p114 = pneg %p113
      // Predicated region
      $region9: #{siamese_forward.16} parent=5 // pred_check
        _
      $region10: #{siamese_forward.16} parent=5 // pred_check_branch
        %116 = sbr.rel (%p113) target = $region12
      $region11: #{siamese_forward.16} parent=5 // pred_region
        %s117 = ssub.s32 %s9, 1
        // Predicated region
        $region13: #{siamese_forward.16} parent=11 // pred_check
          %p118 = pneg %p56
        $region14: #{siamese_forward.16} parent=11 // pred_check_branch
          %120 = sbr.rel (%p118) target = $region16
        $region15: #{siamese_forward.16} parent=11 // pred_region
          _
        $region16: #{siamese_forward.16} parent=11 // pred_fallthru
          _
        // Predicated region
        $region17: #{siamese_forward.16} parent=11 // pred_check
          %p121 = pneg %p77
        $region18: #{siamese_forward.16} parent=11 // pred_check_branch
          %123 = sbr.rel (%p121) target = $region20
        $region19: #{siamese_forward.16} parent=11 // pred_region
          _
        $region20: #{siamese_forward.16} parent=11 // pred_fallthru
          _
      $region12: #{siamese_forward.16} parent=5 // pred_fallthru
        _
      %p124 = scmp.lt.s32.totalorder %s9, 2
      // Predicated region
      $region21: #{siamese_forward.16} parent=5 // pred_check
        %p125 = pneg %p124
      $region22: #{siamese_forward.16} parent=5 // pred_check_branch
        %127 = sbr.rel (%p125) target = $region24
      $region23: #{siamese_forward.16} parent=5 // pred_region
        // Predicated region
        $region25: #{siamese_forward.16} parent=23 // pred_check
          %p128 = pneg %p29
        $region26: #{siamese_forward.16} parent=23 // pred_check_branch
          %130 = sbr.rel (%p128) target = $region28
        $region27: #{siamese_forward.16} parent=23 // pred_region
          %s131 = sand.u32 %s19, 1
          %s132 = sand.u32 %s19, 1
          %s133 = smul.addr %s132, 32
          %s134 = scalar_lea.vmem [#allocation2], %s133
          %s135 = smul.u32 2, %s9
          %s136 = smul.addr %s135, 8
          %s137 = scalar_lea.vmem %s0, %s136
          // Predicated region
          $region29: #{siamese_forward.16} parent=27 // pred_check
            _
          $region30: #{siamese_forward.16} parent=27 // pred_check_branch
            %139 = sbr.rel (0) target = $region32
          $region31: #{siamese_forward.16} parent=27 // pred_region
            // Predicated region
            $region33: #{siamese_forward.16} parent=31 // pred_check
              _
            $region34: #{siamese_forward.16} parent=31 // pred_check_branch
              %141 = sbr.rel (0) target = $region36
            $region35: #{siamese_forward.16} parent=31 // pred_region
              loop: start=0, step=1, limit=1
              $region37: #{siamese_forward.16} parent=35 // loop_pre_header
                _
              $region38: #{siamese_forward.16} parent=35 // loop_header
                %s143 = sphi 0, %s147
                %p144 = scmp.ge.s32.totalorder %s143, 1
                %s148 = sphi %s137, %s137
                %s149 = sphi %s134, %s134
              $region39: #{siamese_forward.16} parent=35 // loop_header_branch
                %146 = sbr.rel (%p144) target = $region43
              $region40: #{siamese_forward.16} parent=35 // loop_body
                %v150 = vld [vmem:[%s148] sm:$0xff]
                %151 = vst [vmem:[%s149] sm:$0xff] %v150
                %v152 = vld [vmem:[%s148 + $0x8] sm:$0xff]
                %153 = vst [vmem:[%s149 + $0x8] sm:$0xff] %v152
                %v154 = vld [vmem:[%s148 + $0x20] sm:$0xff]
                %155 = vst [vmem:[%s149 + $0x10] sm:$0xff] %v154
                %v156 = vld [vmem:[%s148 + $0x28] sm:$0xff]
                %157 = vst [vmem:[%s149 + $0x18] sm:$0xff] %v156
              $region41: #{siamese_forward.16} parent=35 // loop_footer
                %s147 = sadd.s32 1, %s143
              $region42: #{siamese_forward.16} parent=35 // loop_footer_branch
                %142 = sbr.rel target = $region38
              $region43: #{siamese_forward.16} parent=35 // loop_exit
                _
            $region36: #{siamese_forward.16} parent=31 // pred_fallthru
              _
            // Predicated region
            $region44: #{siamese_forward.16} parent=31 // pred_check
              _
            $region45: #{siamese_forward.16} parent=31 // pred_check_branch
              %159 = sbr.rel target = $region47
            $region46: #{siamese_forward.16} parent=31 // pred_region
              _
            $region47: #{siamese_forward.16} parent=31 // pred_fallthru
              _
          $region32: #{siamese_forward.16} parent=27 // pred_fallthru
            _
          %160 = vnop
        $region28: #{siamese_forward.16} parent=23 // pred_fallthru
          _
      $region24: #{siamese_forward.16} parent=5 // pred_fallthru
        _
      %p161 = scmp.le.s32.totalorder 1, %s9
      %p162 = scmp.lt.s32.totalorder %s9, 3
      %p163 = pnand %p161, %p162
      %p164 = pneg %p163
      // Predicated region
      $region48: #{siamese_forward.16} parent=5 // pred_check
        _
      $region49: #{siamese_forward.16} parent=5 // pred_check_branch
        %166 = sbr.rel (%p163) target = $region51
      $region50: #{siamese_forward.16} parent=5 // pred_region
        %s167 = ssub.s32 %s9, 1
        %s168 = sand.u32 %s22, 1
        %s169 = sand.u32 %s22, 1
        %s170 = smul.addr %s169, 32
        %s171 = scalar_lea.vmem [#allocation2], %s170
        // Predicated region
        $region52: #{siamese_forward.16} parent=50 // pred_check
          %p172 = pneg %p35
        $region53: #{siamese_forward.16} parent=50 // pred_check_branch
          %174 = sbr.rel (%p172) target = $region55
        $region54: #{siamese_forward.16} parent=50 // pred_region
          _
        $region55: #{siamese_forward.16} parent=50 // pred_fallthru
          _
        %s175 = sand.u32 %s22, 1
        %s176 = sand.u32 %s22, 1
        %s177 = smul.addr %s176, 32
        %s178 = scalar_lea.vmem [#allocation2], %s177
        %p179 = pneg %p35
        %p180 = pneg %p32
        %p181 = pneg %p56
        %p182 = pneg %p53
        %p183 = pneg %p77
        %p184 = pneg %p74
        %p185 = pneg %p103
        %p186 = pneg %p100
        %s187 = sand.u32 %s90, 1
        %s188 = sand.u32 %s90, 1
        %s189 = smul.addr %s188, 16
        %s190 = scalar_lea.vmem [#allocation3], %s189
        %s191 = smul.u32 2, %s14
        %s192 = smul.u32 2, %s14
        %v193 = vld [vmem:[%s171] sm:$0xff]
        %v194 = vld [vmem:[%s171 + $0x8] sm:$0xff]
        %v195 = vld [vmem:[%s171 + $0x10] sm:$0xff]
        %v196 = vld [vmem:[%s171 + $0x18] sm:$0xff]
        %v197 = vld [vmem:[%s1] sm:$0xff]
        %v198 = vld [vmem:[%s1 + $0x8] sm:$0xff]
        %200 = vset.pattern.permute.xlu0 0
        %201 = vperm.xlu0 %200, %v197
        %v202 = vpop.permute.xlu0 %201
        %205 = vset.pattern.permute.xlu0 0
        %206 = vperm.xlu0 %205, %v198
        %v207 = vpop.permute.xlu0 %206
        %v209 = vmul.f32 %v193, %v202
        %v210 = vmul.f32 %v194, %v202
        %v211 = vmul.f32 %v195, %v207
        %v212 = vmul.f32 %v196, %v207
        %v213 = vld [vmem:[%s2] sm:$0xff]
        %v214 = vld [vmem:[%s2 + $0x8] sm:$0xff]
        %216 = vset.pattern.permute.xlu0 0
        %217 = vperm.xlu0 %216, %v213
        %v218 = vpop.permute.xlu0 %217
        %221 = vset.pattern.permute.xlu0 0
        %222 = vperm.xlu0 %221, %v214
        %v223 = vpop.permute.xlu0 %222
        %v225 = vadd.f32 %v209, %v218
        %v226 = vadd.f32 %v210, %v218
        %v227 = vadd.f32 %v211, %v223
        %v228 = vadd.f32 %v212, %v223
        %v229 = vpack.c.bf16 %v226, %v225
        %v230 = vpack.c.bf16 %v228, %v227
        %231 = vst [vmem:[%s190] sm:$0xff] %v229
        %232 = vst [vmem:[%s190 + $0x8] sm:$0xff] %v230
        %s233 = sand.u32 %s90, 1
        %s234 = sand.u32 %s90, 1
        %s235 = smul.addr %s234, 16
        %s236 = scalar_lea.vmem [#allocation3], %s235
        // Predicated region
        $region56: #{siamese_forward.16} parent=50 // pred_check
          %p237 = pneg %p100
        $region57: #{siamese_forward.16} parent=50 // pred_check_branch
          %239 = sbr.rel (%p237) target = $region59
        $region58: #{siamese_forward.16} parent=50 // pred_region
          %s240 = smul.u32 2, %s14
          %s241 = smul.addr %s240, 4
          %s242 = scalar_lea.vmem %s3, %s241
          // Predicated region
          $region60: #{siamese_forward.16} parent=58 // pred_check
            _
          $region61: #{siamese_forward.16} parent=58 // pred_check_branch
            %244 = sbr.rel (0) target = $region63
          $region62: #{siamese_forward.16} parent=58 // pred_region
            // Predicated region
            $region64: #{siamese_forward.16} parent=62 // pred_check
              _
            $region65: #{siamese_forward.16} parent=62 // pred_check_branch
              %246 = sbr.rel (0) target = $region67
            $region66: #{siamese_forward.16} parent=62 // pred_region
              // Predicated region
              $region79: #{siamese_forward.16} parent=66 // pred_check
                _
              $region80: #{siamese_forward.16} parent=66 // pred_check_branch
                %264 = sbr.rel (0) target = $region82
              $region81: #{siamese_forward.16} parent=66 // pred_region
                loop: start=0, step=1, limit=1
                $region83: #{siamese_forward.16} parent=81 // loop_pre_header
                  _
                $region84: #{siamese_forward.16} parent=81 // loop_header
                  %s266 = sphi 0, %s270
                  %p267 = scmp.ge.s32.totalorder %s266, 1
                  %s271 = sphi %s236, %s236
                  %s272 = sphi %s242, %s242
                $region85: #{siamese_forward.16} parent=81 // loop_header_branch
                  %269 = sbr.rel (%p267) target = $region89
                $region86: #{siamese_forward.16} parent=81 // loop_body
                  %v273 = vld [vmem:[%s271] sm:$0xff]
                  %274 = vst [vmem:[%s272] sm:$0xff] %v273
                  %v275 = vld [vmem:[%s271 + $0x8] sm:$0xff]
                  %276 = vst [vmem:[%s272 + $0x10] sm:$0xff] %v275
                $region87: #{siamese_forward.16} parent=81 // loop_footer
                  %s270 = sadd.s32 1, %s266
                $region88: #{siamese_forward.16} parent=81 // loop_footer_branch
                  %265 = sbr.rel target = $region84
                $region89: #{siamese_forward.16} parent=81 // loop_exit
                  _
              $region82: #{siamese_forward.16} parent=66 // pred_fallthru
                _
              // Predicated region
              $region90: #{siamese_forward.16} parent=66 // pred_check
                _
              $region91: #{siamese_forward.16} parent=66 // pred_check_branch
                %278 = sbr.rel target = $region93
              $region92: #{siamese_forward.16} parent=66 // pred_region
                _
              $region93: #{siamese_forward.16} parent=66 // pred_fallthru
                _
            $region67: #{siamese_forward.16} parent=62 // pred_fallthru
              _
            // Predicated region
            $region68: #{siamese_forward.16} parent=62 // pred_check
              _
            $region69: #{siamese_forward.16} parent=62 // pred_check_branch
              %248 = sbr.rel target = $region71
            $region70: #{siamese_forward.16} parent=62 // pred_region
              %s250 = ssub.s32 256, 1
              loop: start=0, step=1, limit=1
              $region72: #{siamese_forward.16} parent=70 // loop_pre_header
                _
              $region73: #{siamese_forward.16} parent=70 // loop_header
                %s252 = sphi 0, %s256
                %p253 = scmp.ge.s32.totalorder %s252, 1
                %s257 = sphi %s236, %s236
                %s258 = sphi %s242, %s242
              $region74: #{siamese_forward.16} parent=70 // loop_header_branch
                %255 = sbr.rel (%p253) target = $region78
              $region75: #{siamese_forward.16} parent=70 // loop_body
                %v259 = vld [vmem:[%s257] sm:%s250]
                %260 = vst [vmem:[%s258] sm:%s250] %v259
                %v261 = vld [vmem:[%s257 + $0x8] sm:%s250]
                %262 = vst [vmem:[%s258 + $0x10] sm:%s250] %v261
              $region76: #{siamese_forward.16} parent=70 // loop_footer
                %s256 = sadd.s32 1, %s252
              $region77: #{siamese_forward.16} parent=70 // loop_footer_branch
                %251 = sbr.rel target = $region73
              $region78: #{siamese_forward.16} parent=70 // loop_exit
                _
            $region71: #{siamese_forward.16} parent=62 // pred_fallthru
              _
          $region63: #{siamese_forward.16} parent=58 // pred_fallthru
            _
          %279 = vnop
        $region59: #{siamese_forward.16} parent=50 // pred_fallthru
          _
      $region51: #{siamese_forward.16} parent=5 // pred_fallthru
        _
      %p280 = scmp.le.s32.totalorder 2, %s9
      // Predicated region
      $region94: #{siamese_forward.16} parent=5 // pred_check
        %p281 = pneg %p280
      $region95: #{siamese_forward.16} parent=5 // pred_check_branch
        %283 = sbr.rel (%p281) target = $region97
      $region96: #{siamese_forward.16} parent=5 // pred_region
        %s284 = ssub.s32 %s9, 2
        // Predicated region
        $region98: #{siamese_forward.16} parent=96 // pred_check
          %p285 = pneg %p106
        $region99: #{siamese_forward.16} parent=96 // pred_check_branch
          %287 = sbr.rel (%p285) target = $region101
        $region100: #{siamese_forward.16} parent=96 // pred_region
          %s288 = sand.u32 %s91, 1
          %s289 = sand.u32 %s91, 1
          %s290 = smul.addr %s289, 16
          %s291 = scalar_lea.vmem [#allocation3], %s290
        $region101: #{siamese_forward.16} parent=96 // pred_fallthru
          _
      $region97: #{siamese_forward.16} parent=5 // pred_fallthru
        _
    $region6: #{siamese_forward.16} parent=1 // loop_footer
      %s13 = sadd.s32 1, %s9
    $region7: #{siamese_forward.16} parent=1 // loop_footer_branch
      %8 = sbr.rel target = $region3
    $region8: #{siamese_forward.16} parent=1 // loop_exit
      _

// kernel: siamese_forward.17
$region0: #{siamese_forward.17}
  #allocation0 [shape = 'u32[]', space=smem, size = 0x4, offset = 0x4, fixed_abs, tag = 'smem constant byte address 0x4 - core index']
  #allocation1 [shape = 'u32[72,128]{1,0:T(1,128)}', space=vmem, size = 0x9000, scoped, tag = 'internal scratch']
  %s0 = inlined_call_operand.vmem [shape: bf16[144,512], index: 0, kind: input, shape index: {}]
  %s1 = inlined_call_operand.vmem [shape: bf16[32,144], index: 1, kind: input, shape index: {}]
  %s2 = inlined_call_operand.vmem [shape: f32[32,1], index: 2, kind: input, shape index: {}]
  %s3 = inlined_call_operand.vmem [shape: f32[32,512], index: 3, kind: output, shape index: {0}]
  %s4 = inlined_call_operand.vmem [shape: f32[2,2,32,1], index: 4, kind: output, shape index: {1}]
  %5 = xla_tuple %s3, %s4
  %s6 = sld [smem:[#allocation0]]
  $region110: #{siamese_forward.17} parent=0
    _
  %s8 = ssub.s32 1, %s6
  %s9 = scalar_select 0, %s8, %s6
  $region1: #{siamese_forward.17} parent=0
    #allocation2 [shape = 'u8[147456]{0}', space=vmem, size = 0x24000, scoped, tag = 'input window, operand 0']
    #allocation3 [shape = 'u8[65536]{0}', space=vmem, size = 0x10000, scoped, tag = 'output window, operand 0']
    loop: start=0, step=1, limit=4
    $region2: #{siamese_forward.17} parent=1 // loop_pre_header
      _
    $region3: #{siamese_forward.17} parent=1 // loop_header
      %s11 = sphi 0, %s15
      %p12 = scmp.ge.s32.totalorder %s11, 4
      %s21 = sphi 0, %s23
      %s24 = sphi 0, %s21
      %s25 = sphi 0, %s24
      %s41 = sphi 0, %s25
      %s45 = sphi 0, %s45
      %s47 = sphi 0, %s45
      %s48 = sphi 0, %s47
      %s62 = sphi 0, %s48
      %s66 = sphi 0, %s66
      %s68 = sphi 0, %s66
      %s69 = sphi 0, %s68
      %s83 = sphi 0, %s69
      %s89 = sphi 0, %s91
      %s92 = sphi 0, %s89
      %s93 = sphi 0, %s92
      %s109 = sphi 0, %s93
      %s115 = sphi 0, %s117
      %s118 = sphi 0, %s115
      %s119 = sphi 0, %s118
      %s135 = sphi 0, %s119
    $region4: #{siamese_forward.17} parent=1 // loop_header_branch
      %14 = sbr.rel (%p12) target = $region8
    $region5: #{siamese_forward.17} parent=1 // loop_body
      %s16 = ssub.s32 %s11, 1
      %s17 = ssub.s32 %s11, 2
      %s18 = sadd.s32 %s11, 1
      %s19 = ssub.s32 %s11, %s18
      %p20 = scmp.eq.s32.totalorder %s19, 0
      %s22 = sadd.s32 %s21, 1
      %s23 = scalar_select %p20, %s21, %s22
      %p26 = pneg %p20
      %p27 = scmp.eq.s32.totalorder %s11, 1
      %p28 = por %p26, %p27
      %p29 = scmp.ne.s32.totalorder %s21, %s24
      %p30 = scmp.eq.s32.totalorder %s11, 0
      %p31 = por %p29, %p30
      %p32 = scmp.ne.s32.totalorder %s21, %s24
      %p33 = scmp.eq.s32.totalorder %s16, 1
      %p34 = por %p32, %p33
      %p35 = scmp.ne.s32.totalorder %s24, %s25
      %p36 = scmp.eq.s32.totalorder %s16, 0
      %p37 = por %p35, %p36
      %p38 = scmp.ne.s32.totalorder %s24, %s25
      %p39 = scmp.eq.s32.totalorder %s17, 1
      %p40 = por %p38, %p39
      %p42 = scmp.ne.s32.totalorder %s25, %s41
      %p43 = scmp.eq.s32.totalorder %s17, 0
      %p44 = por %p42, %p43
      %s46 = sadd.s32 %s45, 1
      %p49 = scmp.eq.s32.totalorder %s11, 1
      %p50 = scmp.ne.s32.totalorder %s45, %s47
      %p51 = scmp.eq.s32.totalorder %s11, 0
      %p52 = por %p50, %p51
      %p53 = scmp.ne.s32.totalorder %s45, %s47
      %p54 = scmp.eq.s32.totalorder %s16, 1
      %p55 = por %p53, %p54
      %p56 = scmp.ne.s32.totalorder %s47, %s48
      %p57 = scmp.eq.s32.totalorder %s16, 0
      %p58 = por %p56, %p57
      %p59 = scmp.ne.s32.totalorder %s47, %s48
      %p60 = scmp.eq.s32.totalorder %s17, 1
      %p61 = por %p59, %p60
      %p63 = scmp.ne.s32.totalorder %s48, %s62
      %p64 = scmp.eq.s32.totalorder %s17, 0
      %p65 = por %p63, %p64
      %s67 = sadd.s32 %s66, 1
      %p70 = scmp.eq.s32.totalorder %s11, 1
      %p71 = scmp.ne.s32.totalorder %s66, %s68
      %p72 = scmp.eq.s32.totalorder %s11, 0
      %p73 = por %p71, %p72
      %p74 = scmp.ne.s32.totalorder %s66, %s68
      %p75 = scmp.eq.s32.totalorder %s16, 1
      %p76 = por %p74, %p75
      %p77 = scmp.ne.s32.totalorder %s68, %s69
      %p78 = scmp.eq.s32.totalorder %s16, 0
      %p79 = por %p77, %p78
      %p80 = scmp.ne.s32.totalorder %s68, %s69
      %p81 = scmp.eq.s32.totalorder %s17, 1
      %p82 = por %p80, %p81
      %p84 = scmp.ne.s32.totalorder %s69, %s83
      %p85 = scmp.eq.s32.totalorder %s17, 0
      %p86 = por %p84, %p85
      %s87 = ssub.s32 %s11, %s18
      %p88 = scmp.eq.s32.totalorder %s87, 0
      %s90 = sadd.s32 %s89, 1
      %s91 = scalar_select %p88, %s89, %s90
      %p94 = pneg %p88
      %p95 = scmp.eq.s32.totalorder %s11, 1
      %p96 = por %p94, %p95
      %p97 = scmp.ne.s32.totalorder %s89, %s92
      %p98 = scmp.eq.s32.totalorder %s11, 0
      %p99 = por %p97, %p98
      %p100 = scmp.ne.s32.totalorder %s89, %s92
      %p101 = scmp.eq.s32.totalorder %s16, 1
      %p102 = por %p100, %p101
      %p103 = scmp.ne.s32.totalorder %s92, %s93
      %p104 = scmp.eq.s32.totalorder %s16, 0
      %p105 = por %p103, %p104
      %p106 = scmp.ne.s32.totalorder %s92, %s93
      %p107 = scmp.eq.s32.totalorder %s17, 1
      %p108 = por %p106, %p107
      %p110 = scmp.ne.s32.totalorder %s93, %s109
      %p111 = scmp.eq.s32.totalorder %s17, 0
      %p112 = por %p110, %p111
      %s113 = ssub.s32 %s11, %s18
      %p114 = scmp.eq.s32.totalorder %s113, 0
      %s116 = sadd.s32 %s115, 1
      %s117 = scalar_select %p114, %s115, %s116
      %p120 = pneg %p114
      %p121 = scmp.eq.s32.totalorder %s11, 1
      %p122 = por %p120, %p121
      %p123 = scmp.ne.s32.totalorder %s115, %s118
      %p124 = scmp.eq.s32.totalorder %s11, 0
      %p125 = por %p123, %p124
      %p126 = scmp.ne.s32.totalorder %s115, %s118
      %p127 = scmp.eq.s32.totalorder %s16, 1
      %p128 = por %p126, %p127
      %p129 = scmp.ne.s32.totalorder %s118, %s119
      %p130 = scmp.eq.s32.totalorder %s16, 0
      %p131 = por %p129, %p130
      %p132 = scmp.ne.s32.totalorder %s118, %s119
      %p133 = scmp.eq.s32.totalorder %s17, 1
      %p134 = por %p132, %p133
      %p136 = scmp.ne.s32.totalorder %s119, %s135
      %p137 = scmp.eq.s32.totalorder %s17, 0
      %p138 = por %p136, %p137
      %p139 = scmp.le.s32.totalorder 1, %s11
      %p140 = scmp.lt.s32.totalorder %s11, 3
      %p141 = pnand %p139, %p140
      %p142 = pneg %p141
      // Predicated region
      $region9: #{siamese_forward.17} parent=5 // pred_check
        _
      $region10: #{siamese_forward.17} parent=5 // pred_check_branch
        %144 = sbr.rel (%p141) target = $region12
      $region11: #{siamese_forward.17} parent=5 // pred_region
        %s145 = ssub.s32 %s11, 1
        // Predicated region
        $region13: #{siamese_forward.17} parent=11 // pred_check
          %p146 = pneg %p58
        $region14: #{siamese_forward.17} parent=11 // pred_check_branch
          %148 = sbr.rel (%p146) target = $region16
        $region15: #{siamese_forward.17} parent=11 // pred_region
          _
        $region16: #{siamese_forward.17} parent=11 // pred_fallthru
          _
        // Predicated region
        $region17: #{siamese_forward.17} parent=11 // pred_check
          %p149 = pneg %p79
        $region18: #{siamese_forward.17} parent=11 // pred_check_branch
          %151 = sbr.rel (%p149) target = $region20
        $region19: #{siamese_forward.17} parent=11 // pred_region
          _
        $region20: #{siamese_forward.17} parent=11 // pred_fallthru
          _
      $region12: #{siamese_forward.17} parent=5 // pred_fallthru
        _
      %p152 = scmp.lt.s32.totalorder %s11, 2
      // Predicated region
      $region21: #{siamese_forward.17} parent=5 // pred_check
        %p153 = pneg %p152
      $region22: #{siamese_forward.17} parent=5 // pred_check_branch
        %155 = sbr.rel (%p153) target = $region24
      $region23: #{siamese_forward.17} parent=5 // pred_region
        // Predicated region
        $region25: #{siamese_forward.17} parent=23 // pred_check
          %p156 = pneg %p31
        $region26: #{siamese_forward.17} parent=23 // pred_check_branch
          %158 = sbr.rel (%p156) target = $region28
        $region27: #{siamese_forward.17} parent=23 // pred_region
          %s159 = sand.u32 %s21, 1
          %s160 = sand.u32 %s21, 1
          %s161 = smul.addr %s160, 144
          %s162 = scalar_lea.vmem [#allocation2], %s161
          %s163 = smul.u32 2, %s11
          %s164 = smul.addr %s163, 4
          %s165 = scalar_lea.vmem %s0, %s164
          // Predicated region
          $region29: #{siamese_forward.17} parent=27 // pred_check
            _
          $region30: #{siamese_forward.17} parent=27 // pred_check_branch
            %167 = sbr.rel (0) target = $region32
          $region31: #{siamese_forward.17} parent=27 // pred_region
            // Predicated region
            $region33: #{siamese_forward.17} parent=31 // pred_check
              _
            $region34: #{siamese_forward.17} parent=31 // pred_check_branch
              %169 = sbr.rel (0) target = $region36
            $region35: #{siamese_forward.17} parent=31 // pred_region
              // Predicated region
              $region48: #{siamese_forward.17} parent=35 // pred_check
                _
              $region49: #{siamese_forward.17} parent=35 // pred_check_branch
                %219 = sbr.rel (0) target = $region51
              $region50: #{siamese_forward.17} parent=35 // pred_region
                loop: start=0, step=1, limit=1
                $region52: #{siamese_forward.17} parent=50 // loop_pre_header
                  _
                $region53: #{siamese_forward.17} parent=50 // loop_header
                  %s221 = sphi 0, %s225
                  %p222 = scmp.ge.s32.totalorder %s221, 1
                  %s226 = sphi %s165, %s165
                  %s227 = sphi %s162, %s162
                $region54: #{siamese_forward.17} parent=50 // loop_header_branch
                  %224 = sbr.rel (%p222) target = $region58
                $region55: #{siamese_forward.17} parent=50 // loop_body
                  %v228 = vld [vmem:[%s226] sm:$0xff]
                  %229 = vst [vmem:[%s227] sm:$0xff] %v228
                  %v230 = vld [vmem:[%s226 + $0x10] sm:$0xff]
                  %231 = vst [vmem:[%s227 + $0x8] sm:$0xff] %v230
                  %v232 = vld [vmem:[%s226 + $0x20] sm:$0xff]
                  %233 = vst [vmem:[%s227 + $0x10] sm:$0xff] %v232
                  %v234 = vld [vmem:[%s226 + $0x30] sm:$0xff]
                  %235 = vst [vmem:[%s227 + $0x18] sm:$0xff] %v234
                  %v236 = vld [vmem:[%s226 + $0x40] sm:$0xff]
                  %237 = vst [vmem:[%s227 + $0x20] sm:$0xff] %v236
                  %v238 = vld [vmem:[%s226 + $0x50] sm:$0xff]
                  %239 = vst [vmem:[%s227 + $0x28] sm:$0xff] %v238
                  %v240 = vld [vmem:[%s226 + $0x60] sm:$0xff]
                  %241 = vst [vmem:[%s227 + $0x30] sm:$0xff] %v240
                  %v242 = vld [vmem:[%s226 + $0x70] sm:$0xff]
                  %243 = vst [vmem:[%s227 + $0x38] sm:$0xff] %v242
                  %v244 = vld [vmem:[%s226 + $0x80] sm:$0xff]
                  %245 = vst [vmem:[%s227 + $0x40] sm:$0xff] %v244
                  %v246 = vld [vmem:[%s226 + $0x90] sm:$0xff]
                  %247 = vst [vmem:[%s227 + $0x48] sm:$0xff] %v246
                  %v248 = vld [vmem:[%s226 + $0xa0] sm:$0xff]
                  %249 = vst [vmem:[%s227 + $0x50] sm:$0xff] %v248
                  %v250 = vld [vmem:[%s226 + $0xb0] sm:$0xff]
                  %251 = vst [vmem:[%s227 + $0x58] sm:$0xff] %v250
                  %v252 = vld [vmem:[%s226 + $0xc0] sm:$0xff]
                  %253 = vst [vmem:[%s227 + $0x60] sm:$0xff] %v252
                  %v254 = vld [vmem:[%s226 + $0xd0] sm:$0xff]
                  %255 = vst [vmem:[%s227 + $0x68] sm:$0xff] %v254
                  %v256 = vld [vmem:[%s226 + $0xe0] sm:$0xff]
                  %257 = vst [vmem:[%s227 + $0x70] sm:$0xff] %v256
                  %v258 = vld [vmem:[%s226 + $0xf0] sm:$0xff]
                  %259 = vst [vmem:[%s227 + $0x78] sm:$0xff] %v258
                  %v260 = vld [vmem:[%s226 + $0x100] sm:$0xff]
                  %261 = vst [vmem:[%s227 + $0x80] sm:$0xff] %v260
                  %v262 = vld [vmem:[%s226 + $0x110] sm:$0xff]
                  %263 = vst [vmem:[%s227 + $0x88] sm:$0xff] %v262
                $region56: #{siamese_forward.17} parent=50 // loop_footer
                  %s225 = sadd.s32 1, %s221
                $region57: #{siamese_forward.17} parent=50 // loop_footer_branch
                  %220 = sbr.rel target = $region53
                $region58: #{siamese_forward.17} parent=50 // loop_exit
                  _
              $region51: #{siamese_forward.17} parent=35 // pred_fallthru
                _
              // Predicated region
              $region59: #{siamese_forward.17} parent=35 // pred_check
                _
              $region60: #{siamese_forward.17} parent=35 // pred_check_branch
                %265 = sbr.rel target = $region62
              $region61: #{siamese_forward.17} parent=35 // pred_region
                _
              $region62: #{siamese_forward.17} parent=35 // pred_fallthru
                _
            $region36: #{siamese_forward.17} parent=31 // pred_fallthru
              _
            // Predicated region
            $region37: #{siamese_forward.17} parent=31 // pred_check
              _
            $region38: #{siamese_forward.17} parent=31 // pred_check_branch
              %171 = sbr.rel target = $region40
            $region39: #{siamese_forward.17} parent=31 // pred_region
              %s173 = ssub.s32 256, 1
              loop: start=0, step=1, limit=1
              $region41: #{siamese_forward.17} parent=39 // loop_pre_header
                _
              $region42: #{siamese_forward.17} parent=39 // loop_header
                %s175 = sphi 0, %s179
                %p176 = scmp.ge.s32.totalorder %s175, 1
                %s180 = sphi %s165, %s165
                %s181 = sphi %s162, %s162
              $region43: #{siamese_forward.17} parent=39 // loop_header_branch
                %178 = sbr.rel (%p176) target = $region47
              $region44: #{siamese_forward.17} parent=39 // loop_body
                %v182 = vld [vmem:[%s180] sm:%s173]
                %183 = vst [vmem:[%s181] sm:%s173] %v182
                %v184 = vld [vmem:[%s180 + $0x10] sm:%s173]
                %185 = vst [vmem:[%s181 + $0x8] sm:%s173] %v184
                %v186 = vld [vmem:[%s180 + $0x20] sm:%s173]
                %187 = vst [vmem:[%s181 + $0x10] sm:%s173] %v186
                %v188 = vld [vmem:[%s180 + $0x30] sm:%s173]
                %189 = vst [vmem:[%s181 + $0x18] sm:%s173] %v188
                %v190 = vld [vmem:[%s180 + $0x40] sm:%s173]
                %191 = vst [vmem:[%s181 + $0x20] sm:%s173] %v190
                %v192 = vld [vmem:[%s180 + $0x50] sm:%s173]
                %193 = vst [vmem:[%s181 + $0x28] sm:%s173] %v192
                %v194 = vld [vmem:[%s180 + $0x60] sm:%s173]
                %195 = vst [vmem:[%s181 + $0x30] sm:%s173] %v194
                %v196 = vld [vmem:[%s180 + $0x70] sm:%s173]
                %197 = vst [vmem:[%s181 + $0x38] sm:%s173] %v196
                %v198 = vld [vmem:[%s180 + $0x80] sm:%s173]
                %199 = vst [vmem:[%s181 + $0x40] sm:%s173] %v198
                %v200 = vld [vmem:[%s180 + $0x90] sm:%s173]
                %201 = vst [vmem:[%s181 + $0x48] sm:%s173] %v200
                %v202 = vld [vmem:[%s180 + $0xa0] sm:%s173]
                %203 = vst [vmem:[%s181 + $0x50] sm:%s173] %v202
                %v204 = vld [vmem:[%s180 + $0xb0] sm:%s173]
                %205 = vst [vmem:[%s181 + $0x58] sm:%s173] %v204
                %v206 = vld [vmem:[%s180 + $0xc0] sm:%s173]
                %207 = vst [vmem:[%s181 + $0x60] sm:%s173] %v206
                %v208 = vld [vmem:[%s180 + $0xd0] sm:%s173]
                %209 = vst [vmem:[%s181 + $0x68] sm:%s173] %v208
                %v210 = vld [vmem:[%s180 + $0xe0] sm:%s173]
                %211 = vst [vmem:[%s181 + $0x70] sm:%s173] %v210
                %v212 = vld [vmem:[%s180 + $0xf0] sm:%s173]
                %213 = vst [vmem:[%s181 + $0x78] sm:%s173] %v212
                %v214 = vld [vmem:[%s180 + $0x100] sm:%s173]
                %215 = vst [vmem:[%s181 + $0x80] sm:%s173] %v214
                %v216 = vld [vmem:[%s180 + $0x110] sm:%s173]
                %217 = vst [vmem:[%s181 + $0x88] sm:%s173] %v216
              $region45: #{siamese_forward.17} parent=39 // loop_footer
                %s179 = sadd.s32 1, %s175
              $region46: #{siamese_forward.17} parent=39 // loop_footer_branch
                %174 = sbr.rel target = $region42
              $region47: #{siamese_forward.17} parent=39 // loop_exit
                _
            $region40: #{siamese_forward.17} parent=31 // pred_fallthru
              _
          $region32: #{siamese_forward.17} parent=27 // pred_fallthru
            _
          %266 = vnop
        $region28: #{siamese_forward.17} parent=23 // pred_fallthru
          _
      $region24: #{siamese_forward.17} parent=5 // pred_fallthru
        _
      %p267 = scmp.le.s32.totalorder 1, %s11
      %p268 = scmp.lt.s32.totalorder %s11, 3
      %p269 = pnand %p267, %p268
      %p270 = pneg %p269
      // Predicated region
      $region63: #{siamese_forward.17} parent=5 // pred_check
        _
      $region64: #{siamese_forward.17} parent=5 // pred_check_branch
        %272 = sbr.rel (%p269) target = $region66
      $region65: #{siamese_forward.17} parent=5 // pred_region
        %s273 = ssub.s32 %s11, 1
        %s274 = sand.u32 %s24, 1
        %s275 = sand.u32 %s24, 1
        %s276 = smul.addr %s275, 144
        %s277 = scalar_lea.vmem [#allocation2], %s276
        // Predicated region
        $region67: #{siamese_forward.17} parent=65 // pred_check
          %p278 = pneg %p37
        $region68: #{siamese_forward.17} parent=65 // pred_check_branch
          %280 = sbr.rel (%p278) target = $region70
        $region69: #{siamese_forward.17} parent=65 // pred_region
          _
        $region70: #{siamese_forward.17} parent=65 // pred_fallthru
          _
        %s281 = sand.u32 %s24, 1
        %s282 = sand.u32 %s24, 1
        %s283 = smul.addr %s282, 144
        %s284 = scalar_lea.vmem [#allocation2], %s283
        %p285 = pneg %p37
        %p286 = pneg %p34
        %p287 = pneg %p58
        %p288 = pneg %p55
        %p289 = pneg %p79
        %p290 = pneg %p76
        %p291 = pneg %p105
        %p292 = pneg %p102
        %s293 = sand.u32 %s92, 1
        %s294 = sand.u32 %s92, 1
        %s295 = smul.addr %s294, 64
        %s296 = scalar_lea.vmem [#allocation3], %s295
        %p297 = pneg %p131
        %p298 = pneg %p128
        %p299 = scmp.lt.s32.totalorder %s16, 1
        %s300 = scalar_select %p299, %s16, 1
        %s301 = smul.addr %s300, 8
        %s302 = smul.addr %s301, 8
        %s303 = scalar_lea.vmem %s4, %s302
        %s304 = smul.u32 2, %s16
        %s305 = smul.u32 2, %s16
        %p306 = scmp.lt.s32.totalorder %s16, 1
        %s307 = scalar_select %p306, %s16, 1
        %s308 = smul.addr %s307, 8
        %s309 = smul.addr %s308, 8
        %s310 = scalar_lea.vmem %s4, %s309
        %v312 = vld [vmem:[%s1] sm:$0xff]
        %v313 = vld [vmem:[%s1 + $0x8] sm:$0xff]
        %v314 = vld [vmem:[%s1 + $0x10] sm:$0xff]
        %v315 = vld [vmem:[%s1 + $0x18] sm:$0xff]
        %v316 = vld [vmem:[%s277] sm:$0xff]
        %v317 = vld [vmem:[%s277 + $0x8] sm:$0xff]
        %v318 = vld [vmem:[%s277 + $0x10] sm:$0xff]
        %v319 = vld [vmem:[%s277 + $0x18] sm:$0xff]
        %v320 = vld [vmem:[%s277 + $0x20] sm:$0xff]
        %v321 = vld [vmem:[%s277 + $0x28] sm:$0xff]
        %v322 = vld [vmem:[%s277 + $0x30] sm:$0xff]
        %v323 = vld [vmem:[%s277 + $0x38] sm:$0xff]
        %v324 = vld [vmem:[%s277 + $0x40] sm:$0xff]
        %v325 = vld [vmem:[%s277 + $0x48] sm:$0xff]
        %v326 = vld [vmem:[%s277 + $0x50] sm:$0xff]
        %v327 = vld [vmem:[%s277 + $0x58] sm:$0xff]
        %v328 = vld [vmem:[%s277 + $0x60] sm:$0xff]
        %v329 = vld [vmem:[%s277 + $0x68] sm:$0xff]
        %v330 = vld [vmem:[%s277 + $0x70] sm:$0xff]
        %v331 = vld [vmem:[%s277 + $0x78] sm:$0xff]
        %v332 = vld [vmem:[%s277 + $0x80] sm:$0xff]
        %v333 = vld [vmem:[%s277 + $0x88] sm:$0xff]
        %v334 = vld [vmem:[%s2] sm:$0xff]
        %v335 = vld [vmem:[%s2 + $0x8] sm:$0xff]
        %v336 = vld [vmem:[%s2 + $0x10] sm:$0xff]
        %v337 = vld [vmem:[%s2 + $0x18] sm:$0xff]
        %339 = vset.pattern.permute.xlu0 0
        %340 = vperm.xlu0 %339, %v334
        %v341 = vpop.permute.xlu0 %340
        %344 = vset.pattern.permute.xlu0 0
        %345 = vperm.xlu0 %344, %v335
        %v346 = vpop.permute.xlu0 %345
        %349 = vset.pattern.permute.xlu0 0
        %350 = vperm.xlu0 %349, %v336
        %v351 = vpop.permute.xlu0 %350
        %354 = vset.pattern.permute.xlu0 0
        %355 = vperm.xlu0 %354, %v337
        %v356 = vpop.permute.xlu0 %355
        %v362 = vunpack.c.l.b16 %v312
        %v363 = vunpack.c.h.b16 %v312
        %v364 = vunpack.c.l.b16 %v313
        %v365 = vunpack.c.h.b16 %v313
        %v366 = vunpack.c.l.b16 %v314
        %v367 = vunpack.c.h.b16 %v314
        %v368 = vunpack.c.l.b16 %v315
        %v369 = vunpack.c.h.b16 %v315
        %v370 = vpack.c.b16 %v364, %v362
        %v371 = vpack.c.b16 %v365, %v363
        %v372 = vpack.c.b16 %v368, %v366
        %v373 = vpack.c.b16 %v369, %v367
        %v394 = vunpack.c.l.b16 %v316
        %v395 = vunpack.c.h.b16 %v316
        %v396 = vunpack.c.l.b16 %v317
        %v397 = vunpack.c.h.b16 %v317
        %v398 = vunpack.c.l.b16 %v318
        %v399 = vunpack.c.h.b16 %v318
        %v400 = vunpack.c.l.b16 %v319
        %v401 = vunpack.c.h.b16 %v319
        %v402 = vunpack.c.l.b16 %v320
        %v403 = vunpack.c.h.b16 %v320
        %v404 = vunpack.c.l.b16 %v321
        %v405 = vunpack.c.h.b16 %v321
        %v406 = vunpack.c.l.b16 %v322
        %v407 = vunpack.c.h.b16 %v322
        %v408 = vunpack.c.l.b16 %v323
        %v409 = vunpack.c.h.b16 %v323
        %v410 = vunpack.c.l.b16 %v324
        %v411 = vunpack.c.h.b16 %v324
        %v412 = vunpack.c.l.b16 %v325
        %v413 = vunpack.c.h.b16 %v325
        %v414 = vunpack.c.l.b16 %v326
        %v415 = vunpack.c.h.b16 %v326
        %v416 = vunpack.c.l.b16 %v327
        %v417 = vunpack.c.h.b16 %v327
        %v418 = vunpack.c.l.b16 %v328
        %v419 = vunpack.c.h.b16 %v328
        %v420 = vunpack.c.l.b16 %v329
        %v421 = vunpack.c.h.b16 %v329
        %v422 = vunpack.c.l.b16 %v330
        %v423 = vunpack.c.h.b16 %v330
        %v424 = vunpack.c.l.b16 %v331
        %v425 = vunpack.c.h.b16 %v331
        %v426 = vunpack.c.l.b16 %v332
        %v427 = vunpack.c.h.b16 %v332
        %v428 = vunpack.c.l.b16 %v333
        %v429 = vunpack.c.h.b16 %v333
        %v430 = vpack.c.b16 %v396, %v394
        %v431 = vpack.c.b16 %v397, %v395
        %v432 = vpack.c.b16 %v400, %v398
        %v433 = vpack.c.b16 %v401, %v399
        %v434 = vpack.c.b16 %v404, %v402
        %v435 = vpack.c.b16 %v405, %v403
        %v436 = vpack.c.b16 %v408, %v406
        %v437 = vpack.c.b16 %v409, %v407
        %v438 = vpack.c.b16 %v412, %v410
        %v439 = vpack.c.b16 %v413, %v411
        %v440 = vpack.c.b16 %v416, %v414
        %v441 = vpack.c.b16 %v417, %v415
        %v442 = vpack.c.b16 %v420, %v418
        %v443 = vpack.c.b16 %v421, %v419
        %v444 = vpack.c.b16 %v424, %v422
        %v445 = vpack.c.b16 %v425, %v423
        %v446 = vpack.c.b16 %v428, %v426
        %v447 = vpack.c.b16 %v429, %v427
        %vm466 = vcmask 130048
        %v468 = vsel %vm466, %v371, 0
        %v471 = vsel %vm466, %v373, 0
        %473 = vmatpush.bf16.msra.mxu0 %v444
        %474 = vmatpush.bf16.msra.mxu0 %v442
        %475 = vmatpush.bf16.msra.mxu0 %v440
        %476 = vmatpush.bf16.msra.mxu0 %v438
        %477 = vmatpush.bf16.msra.mxu0 %v436
        %478 = vmatpush.bf16.msra.mxu0 %v434
        %479 = vmatpush.bf16.msra.mxu0 %v432
        %480 = vmatpush.bf16.msra.mxu0 %v430
        %481 = vmatmul.bf16.gmra.mxu0 %v370
        %v482 = vpop.f32.mrf.mxu0
        %v483 = vadd.f32 %v341, %v482
        %v484 = vpop.f32.mrf.mxu0
        %v485 = vadd.f32 %v346, %v484
        %486 = vmatmul.bf16.gmra.mxu0 %v372
        %v487 = vpop.f32.mrf.mxu0
        %v488 = vadd.f32 %v351, %v487
        %v489 = vpop.f32.mrf.mxu0
        %v490 = vadd.f32 %v356, %v489
        %491 = vdwg.mxu0
        %492 = vmatpush.bf16.msra.mxu0 0
        %493 = vmatpush.bf16.msra.mxu0 0
        %494 = vmatpush.bf16.msra.mxu0 0
        %495 = vmatpush.bf16.msra.mxu0 0
        %496 = vmatpush.bf16.msra.mxu0 0
        %497 = vmatpush.bf16.msra.mxu0 0
        %498 = vmatpush.bf16.msra.mxu0 0
        %499 = vmatpush.bf16.msra.mxu0 %v446
        %500 = vmatmul.bf16.gmra.mxu0 %v468
        %v501 = vpop.f32.mrf.mxu0
        %v502 = vadd.f32 %v483, %v501
        %v503 = vpop.f32.mrf.mxu0
        %v504 = vadd.f32 %v485, %v503
        %505 = vmatmul.bf16.gmra.mxu0 %v471
        %v506 = vpop.f32.mrf.mxu0
        %v507 = vadd.f32 %v488, %v506
        %v508 = vpop.f32.mrf.mxu0
        %v509 = vadd.f32 %v490, %v508
        %510 = vdwg.mxu0
        %511 = vmatpush.bf16.msra.mxu0 %v445
        %512 = vmatpush.bf16.msra.mxu0 %v443
        %513 = vmatpush.bf16.msra.mxu0 %v441
        %514 = vmatpush.bf16.msra.mxu0 %v439
        %515 = vmatpush.bf16.msra.mxu0 %v437
        %516 = vmatpush.bf16.msra.mxu0 %v435
        %517 = vmatpush.bf16.msra.mxu0 %v433
        %518 = vmatpush.bf16.msra.mxu0 %v431
        %519 = vmatmul.bf16.gmra.mxu0 %v370
        %v520 = vpop.f32.mrf.mxu0
        %v521 = vadd.f32 %v341, %v520
        %v522 = vpop.f32.mrf.mxu0
        %v523 = vadd.f32 %v346, %v522
        %524 = vmatmul.bf16.gmra.mxu0 %v372
        %v525 = vpop.f32.mrf.mxu0
        %v526 = vadd.f32 %v351, %v525
        %v527 = vpop.f32.mrf.mxu0
        %v528 = vadd.f32 %v356, %v527
        %529 = vdwg.mxu0
        %530 = vmatpush.bf16.msra.mxu0 0
        %531 = vmatpush.bf16.msra.mxu0 0
        %532 = vmatpush.bf16.msra.mxu0 0
        %533 = vmatpush.bf16.msra.mxu0 0
        %534 = vmatpush.bf16.msra.mxu0 0
        %535 = vmatpush.bf16.msra.mxu0 0
        %536 = vmatpush.bf16.msra.mxu0 0
        %537 = vmatpush.bf16.msra.mxu0 %v447
        %538 = vmatmul.bf16.gmra.mxu0 %v468
        %v539 = vpop.f32.mrf.mxu0
        %v540 = vadd.f32 %v521, %v539
        %v541 = vpop.f32.mrf.mxu0
        %v542 = vadd.f32 %v523, %v541
        %543 = vmatmul.bf16.gmra.mxu0 %v471
        %v544 = vpop.f32.mrf.mxu0
        %v545 = vadd.f32 %v526, %v544
        %v546 = vpop.f32.mrf.mxu0
        %v547 = vadd.f32 %v528, %v546
        %548 = vdwg.mxu0
        %v549 = vmax.f32 %v502, 0.0
        %v550 = vmax.f32 %v540, 0.0
        %v551 = vmax.f32 %v504, 0.0
        %v552 = vmax.f32 %v542, 0.0
        %v553 = vmax.f32 %v507, 0.0
        %v554 = vmax.f32 %v545, 0.0
        %v555 = vmax.f32 %v509, 0.0
        %v556 = vmax.f32 %v547, 0.0
        %557 = vst [vmem:[%s296] sm:$0xff] %v549
        %558 = vst [vmem:[%s296 + $0x8] sm:$0xff] %v550
        %559 = vst [vmem:[%s296 + $0x10] sm:$0xff] %v551
        %560 = vst [vmem:[%s296 + $0x18] sm:$0xff] %v552
        %561 = vst [vmem:[%s296 + $0x20] sm:$0xff] %v553
        %562 = vst [vmem:[%s296 + $0x28] sm:$0xff] %v554
        %563 = vst [vmem:[%s296 + $0x30] sm:$0xff] %v555
        %564 = vst [vmem:[%s296 + $0x38] sm:$0xff] %v556
        %v565 = vadd.f32 %v549, %v550
        %566 = vadd.xlane.f32.xlu0 %v565
        %v567 = vpop.xlane.xlu0 %566
        %v568 = vadd.f32 %v551, %v552
        %569 = vadd.xlane.f32.xlu0 %v568
        %v570 = vpop.xlane.xlu0 %569
        %v571 = vadd.f32 %v553, %v554
        %572 = vadd.xlane.f32.xlu0 %v571
        %v573 = vpop.xlane.xlu0 %572
        %v574 = vadd.f32 %v555, %v556
        %575 = vadd.xlane.f32.xlu0 %v574
        %v576 = vpop.xlane.xlu0 %575
        %vm577 = vcmask 7168
        %578 = vst.msk [vmem:[%s310] sm:$0xff] %vm577, %v567
        %579 = vst.msk [vmem:[%s310 + $0x8] sm:$0xff] %vm577, %v570
        %580 = vst.msk [vmem:[%s310 + $0x10] sm:$0xff] %vm577, %v573
        %581 = vst.msk [vmem:[%s310 + $0x18] sm:$0xff] %vm577, %v576
        %v582 = vmul.f32 %v549, %v549
        %v583 = vmul.f32 %v550, %v550
        %v584 = vmul.f32 %v551, %v551
        %v585 = vmul.f32 %v552, %v552
        %v586 = vmul.f32 %v553, %v553
        %v587 = vmul.f32 %v554, %v554
        %v588 = vmul.f32 %v555, %v555
        %v589 = vmul.f32 %v556, %v556
        %v590 = vadd.f32 %v582, %v583
        %591 = vadd.xlane.f32.xlu0 %v590
        %v592 = vpop.xlane.xlu0 %591
        %v593 = vadd.f32 %v584, %v585
        %594 = vadd.xlane.f32.xlu0 %v593
        %v595 = vpop.xlane.xlu0 %594
        %v596 = vadd.f32 %v586, %v587
        %597 = vadd.xlane.f32.xlu0 %v596
        %v598 = vpop.xlane.xlu0 %597
        %v599 = vadd.f32 %v588, %v589
        %600 = vadd.xlane.f32.xlu0 %v599
        %v601 = vpop.xlane.xlu0 %600
        %s602 = scalar_lea.vmem %s310, 32
        %603 = vst.msk [vmem:[%s602] sm:$0xff] %vm577, %v592
        %604 = vst.msk [vmem:[%s602 + $0x8] sm:$0xff] %vm577, %v595
        %605 = vst.msk [vmem:[%s602 + $0x10] sm:$0xff] %vm577, %v598
        %606 = vst.msk [vmem:[%s602 + $0x18] sm:$0xff] %vm577, %v601
        %s607 = sand.u32 %s92, 1
        %s608 = sand.u32 %s92, 1
        %s609 = smul.addr %s608, 64
        %s610 = scalar_lea.vmem [#allocation3], %s609
        %p611 = scmp.lt.s32.totalorder %s16, 1
        %s612 = scalar_select %p611, %s16, 1
        %s613 = smul.addr %s612, 8
        %s614 = smul.addr %s613, 8
        %s615 = scalar_lea.vmem %s4, %s614
        // Predicated region
        $region71: #{siamese_forward.17} parent=65 // pred_check
          %p616 = pneg %p102
        $region72: #{siamese_forward.17} parent=65 // pred_check_branch
          %618 = sbr.rel (%p616) target = $region74
        $region73: #{siamese_forward.17} parent=65 // pred_region
          %s619 = smul.u32 2, %s16
          %s620 = smul.addr %s619, 8
          %s621 = scalar_lea.vmem %s3, %s620
          // Predicated region
          $region75: #{siamese_forward.17} parent=73 // pred_check
            _
          $region76: #{siamese_forward.17} parent=73 // pred_check_branch
            %623 = sbr.rel (0) target = $region78
          $region77: #{siamese_forward.17} parent=73 // pred_region
            // Predicated region
            $region79: #{siamese_forward.17} parent=77 // pred_check
              _
            $region80: #{siamese_forward.17} parent=77 // pred_check_branch
              %625 = sbr.rel (0) target = $region82
            $region81: #{siamese_forward.17} parent=77 // pred_region
              loop: start=0, step=1, limit=1
              $region83: #{siamese_forward.17} parent=81 // loop_pre_header
                _
              $region84: #{siamese_forward.17} parent=81 // loop_header
                %s627 = sphi 0, %s631
                %p628 = scmp.ge.s32.totalorder %s627, 1
                %s632 = sphi %s610, %s610
                %s633 = sphi %s621, %s621
              $region85: #{siamese_forward.17} parent=81 // loop_header_branch
                %630 = sbr.rel (%p628) target = $region89
              $region86: #{siamese_forward.17} parent=81 // loop_body
                %v634 = vld [vmem:[%s632] sm:$0xff]
                %635 = vst [vmem:[%s633] sm:$0xff] %v634
                %v636 = vld [vmem:[%s632 + $0x8] sm:$0xff]
                %637 = vst [vmem:[%s633 + $0x8] sm:$0xff] %v636
                %v638 = vld [vmem:[%s632 + $0x10] sm:$0xff]
                %639 = vst [vmem:[%s633 + $0x20] sm:$0xff] %v638
                %v640 = vld [vmem:[%s632 + $0x18] sm:$0xff]
                %641 = vst [vmem:[%s633 + $0x28] sm:$0xff] %v640
                %v642 = vld [vmem:[%s632 + $0x20] sm:$0xff]
                %643 = vst [vmem:[%s633 + $0x40] sm:$0xff] %v642
                %v644 = vld [vmem:[%s632 + $0x28] sm:$0xff]
                %645 = vst [vmem:[%s633 + $0x48] sm:$0xff] %v644
                %v646 = vld [vmem:[%s632 + $0x30] sm:$0xff]
                %647 = vst [vmem:[%s633 + $0x60] sm:$0xff] %v646
                %v648 = vld [vmem:[%s632 + $0x38] sm:$0xff]
                %649 = vst [vmem:[%s633 + $0x68] sm:$0xff] %v648
              $region87: #{siamese_forward.17} parent=81 // loop_footer
                %s631 = sadd.s32 1, %s627
              $region88: #{siamese_forward.17} parent=81 // loop_footer_branch
                %626 = sbr.rel target = $region84
              $region89: #{siamese_forward.17} parent=81 // loop_exit
                _
            $region82: #{siamese_forward.17} parent=77 // pred_fallthru
              _
            // Predicated region
            $region90: #{siamese_forward.17} parent=77 // pred_check
              _
            $region91: #{siamese_forward.17} parent=77 // pred_check_branch
              %651 = sbr.rel target = $region93
            $region92: #{siamese_forward.17} parent=77 // pred_region
              _
            $region93: #{siamese_forward.17} parent=77 // pred_fallthru
              _
          $region78: #{siamese_forward.17} parent=73 // pred_fallthru
            _
          %652 = vnop
        $region74: #{siamese_forward.17} parent=65 // pred_fallthru
          _
        // Predicated region
        $region94: #{siamese_forward.17} parent=65 // pred_check
          %p653 = pneg %p128
        $region95: #{siamese_forward.17} parent=65 // pred_check_branch
          %655 = sbr.rel (%p653) target = $region97
        $region96: #{siamese_forward.17} parent=65 // pred_region
          _
        $region97: #{siamese_forward.17} parent=65 // pred_fallthru
          _
      $region66: #{siamese_forward.17} parent=5 // pred_fallthru
        _
      %p656 = scmp.le.s32.totalorder 2, %s11
      // Predicated region
      $region98: #{siamese_forward.17} parent=5 // pred_check
        %p657 = pneg %p656
      $region99: #{siamese_forward.17} parent=5 // pred_check_branch
        %659 = sbr.rel (%p657) target = $region101
      $region100: #{siamese_forward.17} parent=5 // pred_region
        %s660 = ssub.s32 %s11, 2
        // Predicated region
        $region102: #{siamese_forward.17} parent=100 // pred_check
          %p661 = pneg %p108
        $region103: #{siamese_forward.17} parent=100 // pred_check_branch
          %663 = sbr.rel (%p661) target = $region105
        $region104: #{siamese_forward.17} parent=100 // pred_region
          %s664 = sand.u32 %s93, 1
          %s665 = sand.u32 %s93, 1
          %s666 = smul.addr %s665, 64
          %s667 = scalar_lea.vmem [#allocation3], %s666
        $region105: #{siamese_forward.17} parent=100 // pred_fallthru
          _
        // Predicated region
        $region106: #{siamese_forward.17} parent=100 // pred_check
          %p668 = pneg %p134
        $region107: #{siamese_forward.17} parent=100 // pred_check_branch
          %670 = sbr.rel (%p668) target = $region109
        $region108: #{siamese_forward.17} parent=100 // pred_region
          %p671 = scmp.lt.s32.totalorder %s17, 1
          %s672 = scalar_select %p671, %s17, 1
          %s673 = smul.addr %s672, 8
          %s674 = smul.addr %s673, 8
          %s675 = scalar_lea.vmem %s4, %s674
        $region109: #{siamese_forward.17} parent=100 // pred_fallthru
          _
      $region101: #{siamese_forward.17} parent=5 // pred_fallthru
        _
    $region6: #{siamese_forward.17} parent=1 // loop_footer
      %s15 = sadd.s32 1, %s11
    $region7: #{siamese_forward.17} parent=1 // loop_footer_branch
      %10 = sbr.rel target = $region3
    $region8: #{siamese_forward.17} parent=1 // loop_exit
      _

// kernel: siamese_forward.18
$region0: #{siamese_forward.18}
  #allocation0 [shape = 'u32[]', space=smem, size = 0x4, offset = 0x4, fixed_abs, tag = 'smem constant byte address 0x4 - core index']
  #allocation1 [shape = 'u32[72,128]{1,0:T(1,128)}', space=vmem, size = 0x9000, scoped, tag = 'internal scratch']
  %s0 = inlined_call_operand.vmem [shape: f32[32,512], index: 0, kind: input, shape index: {}]
  %s1 = inlined_call_operand.vmem [shape: f32[32,1], index: 1, kind: input, shape index: {}]
  %s2 = inlined_call_operand.vmem [shape: f32[32,1], index: 2, kind: input, shape index: {}]
  %s3 = inlined_call_operand.vmem [shape: bf16[32,512], index: 3, kind: output, shape index: {}]
  %s4 = sld [smem:[#allocation0]]
  $region102: #{siamese_forward.18} parent=0
    _
  %s6 = ssub.s32 1, %s4
  %s7 = scalar_select 0, %s6, %s4
  $region1: #{siamese_forward.18} parent=0
    #allocation2 [shape = 'u8[65536]{0}', space=vmem, size = 0x10000, scoped, tag = 'input window, operand 0']
    #allocation3 [shape = 'u8[32768]{0}', space=vmem, size = 0x8000, scoped, tag = 'output window, operand 0']
    loop: start=0, step=1, limit=4
    $region2: #{siamese_forward.18} parent=1 // loop_pre_header
      _
    $region3: #{siamese_forward.18} parent=1 // loop_header
      %s9 = sphi 0, %s13
      %p10 = scmp.ge.s32.totalorder %s9, 4
      %s19 = sphi 0, %s21
      %s22 = sphi 0, %s19
      %s23 = sphi 0, %s22
      %s39 = sphi 0, %s23
      %s43 = sphi 0, %s43
      %s45 = sphi 0, %s43
      %s46 = sphi 0, %s45
      %s60 = sphi 0, %s46
      %s64 = sphi 0, %s64
      %s66 = sphi 0, %s64
      %s67 = sphi 0, %s66
      %s81 = sphi 0, %s67
      %s87 = sphi 0, %s89
      %s90 = sphi 0, %s87
      %s91 = sphi 0, %s90
      %s107 = sphi 0, %s91
    $region4: #{siamese_forward.18} parent=1 // loop_header_branch
      %12 = sbr.rel (%p10) target = $region8
    $region5: #{siamese_forward.18} parent=1 // loop_body
      %s14 = ssub.s32 %s9, 1
      %s15 = ssub.s32 %s9, 2
      %s16 = sadd.s32 %s9, 1
      %s17 = ssub.s32 %s9, %s16
      %p18 = scmp.eq.s32.totalorder %s17, 0
      %s20 = sadd.s32 %s19, 1
      %s21 = scalar_select %p18, %s19, %s20
      %p24 = pneg %p18
      %p25 = scmp.eq.s32.totalorder %s9, 1
      %p26 = por %p24, %p25
      %p27 = scmp.ne.s32.totalorder %s19, %s22
      %p28 = scmp.eq.s32.totalorder %s9, 0
      %p29 = por %p27, %p28
      %p30 = scmp.ne.s32.totalorder %s19, %s22
      %p31 = scmp.eq.s32.totalorder %s14, 1
      %p32 = por %p30, %p31
      %p33 = scmp.ne.s32.totalorder %s22, %s23
      %p34 = scmp.eq.s32.totalorder %s14, 0
      %p35 = por %p33, %p34
      %p36 = scmp.ne.s32.totalorder %s22, %s23
      %p37 = scmp.eq.s32.totalorder %s15, 1
      %p38 = por %p36, %p37
      %p40 = scmp.ne.s32.totalorder %s23, %s39
      %p41 = scmp.eq.s32.totalorder %s15, 0
      %p42 = por %p40, %p41
      %s44 = sadd.s32 %s43, 1
      %p47 = scmp.eq.s32.totalorder %s9, 1
      %p48 = scmp.ne.s32.totalorder %s43, %s45
      %p49 = scmp.eq.s32.totalorder %s9, 0
      %p50 = por %p48, %p49
      %p51 = scmp.ne.s32.totalorder %s43, %s45
      %p52 = scmp.eq.s32.totalorder %s14, 1
      %p53 = por %p51, %p52
      %p54 = scmp.ne.s32.totalorder %s45, %s46
      %p55 = scmp.eq.s32.totalorder %s14, 0
      %p56 = por %p54, %p55
      %p57 = scmp.ne.s32.totalorder %s45, %s46
      %p58 = scmp.eq.s32.totalorder %s15, 1
      %p59 = por %p57, %p58
      %p61 = scmp.ne.s32.totalorder %s46, %s60
      %p62 = scmp.eq.s32.totalorder %s15, 0
      %p63 = por %p61, %p62
      %s65 = sadd.s32 %s64, 1
      %p68 = scmp.eq.s32.totalorder %s9, 1
      %p69 = scmp.ne.s32.totalorder %s64, %s66
      %p70 = scmp.eq.s32.totalorder %s9, 0
      %p71 = por %p69, %p70
      %p72 = scmp.ne.s32.totalorder %s64, %s66
      %p73 = scmp.eq.s32.totalorder %s14, 1
      %p74 = por %p72, %p73
      %p75 = scmp.ne.s32.totalorder %s66, %s67
      %p76 = scmp.eq.s32.totalorder %s14, 0
      %p77 = por %p75, %p76
      %p78 = scmp.ne.s32.totalorder %s66, %s67
      %p79 = scmp.eq.s32.totalorder %s15, 1
      %p80 = por %p78, %p79
      %p82 = scmp.ne.s32.totalorder %s67, %s81
      %p83 = scmp.eq.s32.totalorder %s15, 0
      %p84 = por %p82, %p83
      %s85 = ssub.s32 %s9, %s16
      %p86 = scmp.eq.s32.totalorder %s85, 0
      %s88 = sadd.s32 %s87, 1
      %s89 = scalar_select %p86, %s87, %s88
      %p92 = pneg %p86
      %p93 = scmp.eq.s32.totalorder %s9, 1
      %p94 = por %p92, %p93
      %p95 = scmp.ne.s32.totalorder %s87, %s90
      %p96 = scmp.eq.s32.totalorder %s9, 0
      %p97 = por %p95, %p96
      %p98 = scmp.ne.s32.totalorder %s87, %s90
      %p99 = scmp.eq.s32.totalorder %s14, 1
      %p100 = por %p98, %p99
      %p101 = scmp.ne.s32.totalorder %s90, %s91
      %p102 = scmp.eq.s32.totalorder %s14, 0
      %p103 = por %p101, %p102
      %p104 = scmp.ne.s32.totalorder %s90, %s91
      %p105 = scmp.eq.s32.totalorder %s15, 1
      %p106 = por %p104, %p105
      %p108 = scmp.ne.s32.totalorder %s91, %s107
      %p109 = scmp.eq.s32.totalorder %s15, 0
      %p110 = por %p108, %p109
      %p111 = scmp.le.s32.totalorder 1, %s9
      %p112 = scmp.lt.s32.totalorder %s9, 3
      %p113 = pnand %p111, %p112
      %p114 = pneg %p113
      // Predicated region
      $region9: #{siamese_forward.18} parent=5 // pred_check
        _
      $region10: #{siamese_forward.18} parent=5 // pred_check_branch
        %116 = sbr.rel (%p113) target = $region12
      $region11: #{siamese_forward.18} parent=5 // pred_region
        %s117 = ssub.s32 %s9, 1
        // Predicated region
        $region13: #{siamese_forward.18} parent=11 // pred_check
          %p118 = pneg %p56
        $region14: #{siamese_forward.18} parent=11 // pred_check_branch
          %120 = sbr.rel (%p118) target = $region16
        $region15: #{siamese_forward.18} parent=11 // pred_region
          _
        $region16: #{siamese_forward.18} parent=11 // pred_fallthru
          _
        // Predicated region
        $region17: #{siamese_forward.18} parent=11 // pred_check
          %p121 = pneg %p77
        $region18: #{siamese_forward.18} parent=11 // pred_check_branch
          %123 = sbr.rel (%p121) target = $region20
        $region19: #{siamese_forward.18} parent=11 // pred_region
          _
        $region20: #{siamese_forward.18} parent=11 // pred_fallthru
          _
      $region12: #{siamese_forward.18} parent=5 // pred_fallthru
        _
      %p124 = scmp.lt.s32.totalorder %s9, 2
      // Predicated region
      $region21: #{siamese_forward.18} parent=5 // pred_check
        %p125 = pneg %p124
      $region22: #{siamese_forward.18} parent=5 // pred_check_branch
        %127 = sbr.rel (%p125) target = $region24
      $region23: #{siamese_forward.18} parent=5 // pred_region
        // Predicated region
        $region25: #{siamese_forward.18} parent=23 // pred_check
          %p128 = pneg %p29
        $region26: #{siamese_forward.18} parent=23 // pred_check_branch
          %130 = sbr.rel (%p128) target = $region28
        $region27: #{siamese_forward.18} parent=23 // pred_region
          %s131 = sand.u32 %s19, 1
          %s132 = sand.u32 %s19, 1
          %s133 = smul.addr %s132, 64
          %s134 = scalar_lea.vmem [#allocation2], %s133
          %s135 = smul.u32 2, %s9
          %s136 = smul.addr %s135, 8
          %s137 = scalar_lea.vmem %s0, %s136
          // Predicated region
          $region29: #{siamese_forward.18} parent=27 // pred_check
            _
          $region30: #{siamese_forward.18} parent=27 // pred_check_branch
            %139 = sbr.rel (0) target = $region32
          $region31: #{siamese_forward.18} parent=27 // pred_region
            // Predicated region
            $region33: #{siamese_forward.18} parent=31 // pred_check
              _
            $region34: #{siamese_forward.18} parent=31 // pred_check_branch
              %141 = sbr.rel (0) target = $region36
            $region35: #{siamese_forward.18} parent=31 // pred_region
              loop: start=0, step=1, limit=1
              $region37: #{siamese_forward.18} parent=35 // loop_pre_header
                _
              $region38: #{siamese_forward.18} parent=35 // loop_header
                %s143 = sphi 0, %s147
                %p144 = scmp.ge.s32.totalorder %s143, 1
                %s148 = sphi %s137, %s137
                %s149 = sphi %s134, %s134
              $region39: #{siamese_forward.18} parent=35 // loop_header_branch
                %146 = sbr.rel (%p144) target = $region43
              $region40: #{siamese_forward.18} parent=35 // loop_body
                %v150 = vld [vmem:[%s148] sm:$0xff]
                %151 = vst [vmem:[%s149] sm:$0xff] %v150
                %v152 = vld [vmem:[%s148 + $0x8] sm:$0xff]
                %153 = vst [vmem:[%s149 + $0x8] sm:$0xff] %v152
                %v154 = vld [vmem:[%s148 + $0x20] sm:$0xff]
                %155 = vst [vmem:[%s149 + $0x10] sm:$0xff] %v154
                %v156 = vld [vmem:[%s148 + $0x28] sm:$0xff]
                %157 = vst [vmem:[%s149 + $0x18] sm:$0xff] %v156
                %v158 = vld [vmem:[%s148 + $0x40] sm:$0xff]
                %159 = vst [vmem:[%s149 + $0x20] sm:$0xff] %v158
                %v160 = vld [vmem:[%s148 + $0x48] sm:$0xff]
                %161 = vst [vmem:[%s149 + $0x28] sm:$0xff] %v160
                %v162 = vld [vmem:[%s148 + $0x60] sm:$0xff]
                %163 = vst [vmem:[%s149 + $0x30] sm:$0xff] %v162
                %v164 = vld [vmem:[%s148 + $0x68] sm:$0xff]
                %165 = vst [vmem:[%s149 + $0x38] sm:$0xff] %v164
              $region41: #{siamese_forward.18} parent=35 // loop_footer
                %s147 = sadd.s32 1, %s143
              $region42: #{siamese_forward.18} parent=35 // loop_footer_branch
                %142 = sbr.rel target = $region38
              $region43: #{siamese_forward.18} parent=35 // loop_exit
                _
            $region36: #{siamese_forward.18} parent=31 // pred_fallthru
              _
            // Predicated region
            $region44: #{siamese_forward.18} parent=31 // pred_check
              _
            $region45: #{siamese_forward.18} parent=31 // pred_check_branch
              %167 = sbr.rel target = $region47
            $region46: #{siamese_forward.18} parent=31 // pred_region
              _
            $region47: #{siamese_forward.18} parent=31 // pred_fallthru
              _
          $region32: #{siamese_forward.18} parent=27 // pred_fallthru
            _
          %168 = vnop
        $region28: #{siamese_forward.18} parent=23 // pred_fallthru
          _
      $region24: #{siamese_forward.18} parent=5 // pred_fallthru
        _
      %p169 = scmp.le.s32.totalorder 1, %s9
      %p170 = scmp.lt.s32.totalorder %s9, 3
      %p171 = pnand %p169, %p170
      %p172 = pneg %p171
      // Predicated region
      $region48: #{siamese_forward.18} parent=5 // pred_check
        _
      $region49: #{siamese_forward.18} parent=5 // pred_check_branch
        %174 = sbr.rel (%p171) target = $region51
      $region50: #{siamese_forward.18} parent=5 // pred_region
        %s175 = ssub.s32 %s9, 1
        %s176 = sand.u32 %s22, 1
        %s177 = sand.u32 %s22, 1
        %s178 = smul.addr %s177, 64
        %s179 = scalar_lea.vmem [#allocation2], %s178
        // Predicated region
        $region52: #{siamese_forward.18} parent=50 // pred_check
          %p180 = pneg %p35
        $region53: #{siamese_forward.18} parent=50 // pred_check_branch
          %182 = sbr.rel (%p180) target = $region55
        $region54: #{siamese_forward.18} parent=50 // pred_region
          _
        $region55: #{siamese_forward.18} parent=50 // pred_fallthru
          _
        %s183 = sand.u32 %s22, 1
        %s184 = sand.u32 %s22, 1
        %s185 = smul.addr %s184, 64
        %s186 = scalar_lea.vmem [#allocation2], %s185
        %p187 = pneg %p35
        %p188 = pneg %p32
        %p189 = pneg %p56
        %p190 = pneg %p53
        %p191 = pneg %p77
        %p192 = pneg %p74
        %p193 = pneg %p103
        %p194 = pneg %p100
        %s195 = sand.u32 %s90, 1
        %s196 = sand.u32 %s90, 1
        %s197 = smul.addr %s196, 32
        %s198 = scalar_lea.vmem [#allocation3], %s197
        %s199 = smul.u32 2, %s14
        %s200 = smul.u32 2, %s14
        %v201 = vld [vmem:[%s179] sm:$0xff]
        %v202 = vld [vmem:[%s179 + $0x8] sm:$0xff]
        %v203 = vld [vmem:[%s179 + $0x10] sm:$0xff]
        %v204 = vld [vmem:[%s179 + $0x18] sm:$0xff]
        %v205 = vld [vmem:[%s179 + $0x20] sm:$0xff]
        %v206 = vld [vmem:[%s179 + $0x28] sm:$0xff]
        %v207 = vld [vmem:[%s179 + $0x30] sm:$0xff]
        %v208 = vld [vmem:[%s179 + $0x38] sm:$0xff]
        %v209 = vld [vmem:[%s1] sm:$0xff]
        %v210 = vld [vmem:[%s1 + $0x8] sm:$0xff]
        %v211 = vld [vmem:[%s1 + $0x10] sm:$0xff]
        %v212 = vld [vmem:[%s1 + $0x18] sm:$0xff]
        %214 = vset.pattern.permute.xlu0 0
        %215 = vperm.xlu0 %214, %v209
        %v216 = vpop.permute.xlu0 %215
        %219 = vset.pattern.permute.xlu0 0
        %220 = vperm.xlu0 %219, %v210
        %v221 = vpop.permute.xlu0 %220
        %224 = vset.pattern.permute.xlu0 0
        %225 = vperm.xlu0 %224, %v211
        %v226 = vpop.permute.xlu0 %225
        %229 = vset.pattern.permute.xlu0 0
        %230 = vperm.xlu0 %229, %v212
        %v231 = vpop.permute.xlu0 %230
        %v233 = vmul.f32 %v201, %v216
        %v234 = vmul.f32 %v202, %v216
        %v235 = vmul.f32 %v203, %v221
        %v236 = vmul.f32 %v204, %v221
        %v237 = vmul.f32 %v205, %v226
        %v238 = vmul.f32 %v206, %v226
        %v239 = vmul.f32 %v207, %v231
        %v240 = vmul.f32 %v208, %v231
        %v241 = vld [vmem:[%s2] sm:$0xff]
        %v242 = vld [vmem:[%s2 + $0x8] sm:$0xff]
        %v243 = vld [vmem:[%s2 + $0x10] sm:$0xff]
        %v244 = vld [vmem:[%s2 + $0x18] sm:$0xff]
        %246 = vset.pattern.permute.xlu0 0
        %247 = vperm.xlu0 %246, %v241
        %v248 = vpop.permute.xlu0 %247
        %251 = vset.pattern.permute.xlu0 0
        %252 = vperm.xlu0 %251, %v242
        %v253 = vpop.permute.xlu0 %252
        %256 = vset.pattern.permute.xlu0 0
        %257 = vperm.xlu0 %256, %v243
        %v258 = vpop.permute.xlu0 %257
        %261 = vset.pattern.permute.xlu0 0
        %262 = vperm.xlu0 %261, %v244
        %v263 = vpop.permute.xlu0 %262
        %v265 = vadd.f32 %v233, %v248
        %v266 = vadd.f32 %v234, %v248
        %v267 = vadd.f32 %v235, %v253
        %v268 = vadd.f32 %v236, %v253
        %v269 = vadd.f32 %v237, %v258
        %v270 = vadd.f32 %v238, %v258
        %v271 = vadd.f32 %v239, %v263
        %v272 = vadd.f32 %v240, %v263
        %v273 = vpack.c.bf16 %v266, %v265
        %v274 = vpack.c.bf16 %v268, %v267
        %v275 = vpack.c.bf16 %v270, %v269
        %v276 = vpack.c.bf16 %v272, %v271
        %277 = vst [vmem:[%s198] sm:$0xff] %v273
        %278 = vst [vmem:[%s198 + $0x8] sm:$0xff] %v274
        %279 = vst [vmem:[%s198 + $0x10] sm:$0xff] %v275
        %280 = vst [vmem:[%s198 + $0x18] sm:$0xff] %v276
        %s281 = sand.u32 %s90, 1
        %s282 = sand.u32 %s90, 1
        %s283 = smul.addr %s282, 32
        %s284 = scalar_lea.vmem [#allocation3], %s283
        // Predicated region
        $region56: #{siamese_forward.18} parent=50 // pred_check
          %p285 = pneg %p100
        $region57: #{siamese_forward.18} parent=50 // pred_check_branch
          %287 = sbr.rel (%p285) target = $region59
        $region58: #{siamese_forward.18} parent=50 // pred_region
          %s288 = smul.u32 2, %s14
          %s289 = smul.addr %s288, 4
          %s290 = scalar_lea.vmem %s3, %s289
          // Predicated region
          $region60: #{siamese_forward.18} parent=58 // pred_check
            _
          $region61: #{siamese_forward.18} parent=58 // pred_check_branch
            %292 = sbr.rel (0) target = $region63
          $region62: #{siamese_forward.18} parent=58 // pred_region
            // Predicated region
            $region64: #{siamese_forward.18} parent=62 // pred_check
              _
            $region65: #{siamese_forward.18} parent=62 // pred_check_branch
              %294 = sbr.rel (0) target = $region67
            $region66: #{siamese_forward.18} parent=62 // pred_region
              // Predicated region
              $region79: #{siamese_forward.18} parent=66 // pred_check
                _
              $region80: #{siamese_forward.18} parent=66 // pred_check_branch
                %316 = sbr.rel (0) target = $region82
              $region81: #{siamese_forward.18} parent=66 // pred_region
                loop: start=0, step=1, limit=1
                $region83: #{siamese_forward.18} parent=81 // loop_pre_header
                  _
                $region84: #{siamese_forward.18} parent=81 // loop_header
                  %s318 = sphi 0, %s322
                  %p319 = scmp.ge.s32.totalorder %s318, 1
                  %s323 = sphi %s284, %s284
                  %s324 = sphi %s290, %s290
                $region85: #{siamese_forward.18} parent=81 // loop_header_branch
                  %321 = sbr.rel (%p319) target = $region89
                $region86: #{siamese_forward.18} parent=81 // loop_body
                  %v325 = vld [vmem:[%s323] sm:$0xff]
                  %326 = vst [vmem:[%s324] sm:$0xff] %v325
                  %v327 = vld [vmem:[%s323 + $0x8] sm:$0xff]
                  %328 = vst [vmem:[%s324 + $0x10] sm:$0xff] %v327
                  %v329 = vld [vmem:[%s323 + $0x10] sm:$0xff]
                  %330 = vst [vmem:[%s324 + $0x20] sm:$0xff] %v329
                  %v331 = vld [vmem:[%s323 + $0x18] sm:$0xff]
                  %332 = vst [vmem:[%s324 + $0x30] sm:$0xff] %v331
                $region87: #{siamese_forward.18} parent=81 // loop_footer
                  %s322 = sadd.s32 1, %s318
                $region88: #{siamese_forward.18} parent=81 // loop_footer_branch
                  %317 = sbr.rel target = $region84
                $region89: #{siamese_forward.18} parent=81 // loop_exit
                  _
              $region82: #{siamese_forward.18} parent=66 // pred_fallthru
                _
              // Predicated region
              $region90: #{siamese_forward.18} parent=66 // pred_check
                _
              $region91: #{siamese_forward.18} parent=66 // pred_check_branch
                %334 = sbr.rel target = $region93
              $region92: #{siamese_forward.18} parent=66 // pred_region
                _
              $region93: #{siamese_forward.18} parent=66 // pred_fallthru
                _
            $region67: #{siamese_forward.18} parent=62 // pred_fallthru
              _
            // Predicated region
            $region68: #{siamese_forward.18} parent=62 // pred_check
              _
            $region69: #{siamese_forward.18} parent=62 // pred_check_branch
              %296 = sbr.rel target = $region71
            $region70: #{siamese_forward.18} parent=62 // pred_region
              %s298 = ssub.s32 256, 1
              loop: start=0, step=1, limit=1
              $region72: #{siamese_forward.18} parent=70 // loop_pre_header
                _
              $region73: #{siamese_forward.18} parent=70 // loop_header
                %s300 = sphi 0, %s304
                %p301 = scmp.ge.s32.totalorder %s300, 1
                %s305 = sphi %s284, %s284
                %s306 = sphi %s290, %s290
              $region74: #{siamese_forward.18} parent=70 // loop_header_branch
                %303 = sbr.rel (%p301) target = $region78
              $region75: #{siamese_forward.18} parent=70 // loop_body
                %v307 = vld [vmem:[%s305] sm:%s298]
                %308 = vst [vmem:[%s306] sm:%s298] %v307
                %v309 = vld [vmem:[%s305 + $0x8] sm:%s298]
                %310 = vst [vmem:[%s306 + $0x10] sm:%s298] %v309
                %v311 = vld [vmem:[%s305 + $0x10] sm:%s298]
                %312 = vst [vmem:[%s306 + $0x20] sm:%s298] %v311
                %v313 = vld [vmem:[%s305 + $0x18] sm:%s298]
                %314 = vst [vmem:[%s306 + $0x30] sm:%s298] %v313
              $region76: #{siamese_forward.18} parent=70 // loop_footer
                %s304 = sadd.s32 1, %s300
              $region77: #{siamese_forward.18} parent=70 // loop_footer_branch
                %299 = sbr.rel target = $region73
              $region78: #{siamese_forward.18} parent=70 // loop_exit
                _
            $region71: #{siamese_forward.18} parent=62 // pred_fallthru
              _
          $region63: #{siamese_forward.18} parent=58 // pred_fallthru
            _
          %335 = vnop
        $region59: #{siamese_forward.18} parent=50 // pred_fallthru
          _
      $region51: #{siamese_forward.18} parent=5 // pred_fallthru
        _
      %p336 = scmp.le.s32.totalorder 2, %s9
      // Predicated region
      $region94: #{siamese_forward.18} parent=5 // pred_check
        %p337 = pneg %p336
      $region95: #{siamese_forward.18} parent=5 // pred_check_branch
        %339 = sbr.rel (%p337) target = $region97
      $region96: #{siamese_forward.18} parent=5 // pred_region
        %s340 = ssub.s32 %s9, 2
        // Predicated region
        $region98: #{siamese_forward.18} parent=96 // pred_check
          %p341 = pneg %p106
        $region99: #{siamese_forward.18} parent=96 // pred_check_branch
          %343 = sbr.rel (%p341) target = $region101
        $region100: #{siamese_forward.18} parent=96 // pred_region
          %s344 = sand.u32 %s91, 1
          %s345 = sand.u32 %s91, 1
          %s346 = smul.addr %s345, 32
          %s347 = scalar_lea.vmem [#allocation3], %s346
        $region101: #{siamese_forward.18} parent=96 // pred_fallthru
          _
      $region97: #{siamese_forward.18} parent=5 // pred_fallthru
        _
    $region6: #{siamese_forward.18} parent=1 // loop_footer
      %s13 = sadd.s32 1, %s9
    $region7: #{siamese_forward.18} parent=1 // loop_footer_branch
      %8 = sbr.rel target = $region3
    $region8: #{siamese_forward.18} parent=1 // loop_exit
      _

// kernel: siamese_forward.20
$region0: #{siamese_forward.20}
  #allocation0 [shape = 'u32[]', space=smem, size = 0x4, offset = 0x4, fixed_abs, tag = 'smem constant byte address 0x4 - core index']
  #allocation1 [shape = 'u32[72,128]{1,0:T(1,128)}', space=vmem, size = 0x9000, scoped, tag = 'internal scratch']
  #allocation2 [shape = 'f32[2,256]{1,0:T(2,128)}', space=vmem, size = 0x800, scoped, tag = 'scratch operand']
  %s0 = inlined_call_operand.vmem [shape: bf16[2,512], index: 0, kind: input, shape index: {}]
  %s1 = inlined_call_operand.vmem [shape: bf16[512,512], index: 1, kind: input, shape index: {}]
  %s2 = inlined_call_operand.vmem [shape: f32[1,512], index: 2, kind: input, shape index: {}]
  %s3 = inlined_call_operand.vmem [shape: bf16[2,512], index: 3, kind: output, shape index: {}]
  %s4 = sld [smem:[#allocation0]]
  $region91: #{siamese_forward.20} parent=0
    _
  %s6 = ssub.s32 1, %s4
  %s7 = scalar_select 0, %s6, %s4
  $region1: #{siamese_forward.20} parent=0
    #allocation3 [shape = 'u8[524288]{0}', space=vmem, size = 0x80000, scoped, tag = 'input window, operand 1']
    loop: start=0, step=1, limit=4
    $region2: #{siamese_forward.20} parent=1 // loop_pre_header
      _
    $region3: #{siamese_forward.20} parent=1 // loop_header
      %s9 = sphi 0, %s13
      %p10 = scmp.ge.s32.totalorder %s9, 4
      %s16 = sphi 0, %s28
      %s17 = sphi 0, %s24
      %s18 = sphi 0, %s16
      %s19 = sphi 0, %s17
      %s20 = sphi 0, %s18
      %s21 = sphi 0, %s19
      %s31 = sphi 0, %s33
      %s34 = sphi 0, %s31
      %s35 = sphi 0, %s34
      %s51 = sphi 0, %s35
      %s59 = sphi 0, %s61
      %s62 = sphi 0, %s59
      %s63 = sphi 0, %s62
      %s79 = sphi 0, %s63
      %s85 = sphi 0, %s87
      %s88 = sphi 0, %s85
      %s89 = sphi 0, %s88
      %s105 = sphi 0, %s89
      %s111 = sphi 0, %s113
      %s114 = sphi 0, %s111
      %s115 = sphi 0, %s114
      %s131 = sphi 0, %s115
    $region4: #{siamese_forward.20} parent=1 // loop_header_branch
      %12 = sbr.rel (%p10) target = $region8
    $region5: #{siamese_forward.20} parent=1 // loop_body
      %s14 = ssub.s32 %s9, 1
      %s15 = ssub.s32 %s9, 2
      %s22 = sadd.s32 1, %s17
      %p23 = scmp.ge.s32.totalorder %s22, 1
      %s24 = scalar_select %p23, 0, %s22
      %s25 = sadd.s32 1, %s16
      %s26 = scalar_select %p23, %s25, %s16
      %p27 = scmp.ge.s32.totalorder %s26, 2
      %s28 = scalar_select %p27, 0, %s26
      %s29 = ssub.s32 %s17, %s24
      %p30 = scmp.eq.s32.totalorder %s29, 0
      %s32 = sadd.s32 %s31, 1
      %s33 = scalar_select %p30, %s31, %s32
      %p36 = pneg %p30
      %p37 = scmp.eq.s32.totalorder %s9, 1
      %p38 = por %p36, %p37
      %p39 = scmp.ne.s32.totalorder %s31, %s34
      %p40 = scmp.eq.s32.totalorder %s9, 0
      %p41 = por %p39, %p40
      %p42 = scmp.ne.s32.totalorder %s31, %s34
      %p43 = scmp.eq.s32.totalorder %s14, 1
      %p44 = por %p42, %p43
      %p45 = scmp.ne.s32.totalorder %s34, %s35
      %p46 = scmp.eq.s32.totalorder %s14, 0
      %p47 = por %p45, %p46
      %p48 = scmp.ne.s32.totalorder %s34, %s35
      %p49 = scmp.eq.s32.totalorder %s15, 1
      %p50 = por %p48, %p49
      %p52 = scmp.ne.s32.totalorder %s35, %s51
      %p53 = scmp.eq.s32.totalorder %s15, 0
      %p54 = por %p52, %p53
      %s55 = ssub.s32 %s17, %s24
      %s56 = ssub.s32 %s16, %s28
      %s57 = sor.u32 %s55, %s56
      %p58 = scmp.eq.s32.totalorder %s57, 0
      %s60 = sadd.s32 %s59, 1
      %s61 = scalar_select %p58, %s59, %s60
      %p64 = pneg %p58
      %p65 = scmp.eq.s32.totalorder %s9, 1
      %p66 = por %p64, %p65
      %p67 = scmp.ne.s32.totalorder %s59, %s62
      %p68 = scmp.eq.s32.totalorder %s9, 0
      %p69 = por %p67, %p68
      %p70 = scmp.ne.s32.totalorder %s59, %s62
      %p71 = scmp.eq.s32.totalorder %s14, 1
      %p72 = por %p70, %p71
      %p73 = scmp.ne.s32.totalorder %s62, %s63
      %p74 = scmp.eq.s32.totalorder %s14, 0
      %p75 = por %p73, %p74
      %p76 = scmp.ne.s32.totalorder %s62, %s63
      %p77 = scmp.eq.s32.totalorder %s15, 1
      %p78 = por %p76, %p77
      %p80 = scmp.ne.s32.totalorder %s63, %s79
      %p81 = scmp.eq.s32.totalorder %s15, 0
      %p82 = por %p80, %p81
      %s83 = ssub.s32 %s16, %s28
      %p84 = scmp.eq.s32.totalorder %s83, 0
      %s86 = sadd.s32 %s85, 1
      %s87 = scalar_select %p84, %s85, %s86
      %p90 = pneg %p84
      %p91 = scmp.eq.s32.totalorder %s9, 1
      %p92 = por %p90, %p91
      %p93 = scmp.ne.s32.totalorder %s85, %s88
      %p94 = scmp.eq.s32.totalorder %s9, 0
      %p95 = por %p93, %p94
      %p96 = scmp.ne.s32.totalorder %s85, %s88
      %p97 = scmp.eq.s32.totalorder %s14, 1
      %p98 = por %p96, %p97
      %p99 = scmp.ne.s32.totalorder %s88, %s89
      %p100 = scmp.eq.s32.totalorder %s14, 0
      %p101 = por %p99, %p100
      %p102 = scmp.ne.s32.totalorder %s88, %s89
      %p103 = scmp.eq.s32.totalorder %s15, 1
      %p104 = por %p102, %p103
      %p106 = scmp.ne.s32.totalorder %s89, %s105
      %p107 = scmp.eq.s32.totalorder %s15, 0
      %p108 = por %p106, %p107
      %s109 = ssub.s32 %s16, %s28
      %p110 = scmp.eq.s32.totalorder %s109, 0
      %s112 = sadd.s32 %s111, 1
      %s113 = scalar_select %p110, %s111, %s112
      %p116 = pneg %p110
      %p117 = scmp.eq.s32.totalorder %s9, 1
      %p118 = por %p116, %p117
      %p119 = scmp.ne.s32.totalorder %s111, %s114
      %p120 = scmp.eq.s32.totalorder %s9, 0
      %p121 = por %p119, %p120
      %p122 = scmp.ne.s32.totalorder %s111, %s114
      %p123 = scmp.eq.s32.totalorder %s14, 1
      %p124 = por %p122, %p123
      %p125 = scmp.ne.s32.totalorder %s114, %s115
      %p126 = scmp.eq.s32.totalorder %s14, 0
      %p127 = por %p125, %p126
      %p128 = scmp.ne.s32.totalorder %s114, %s115
      %p129 = scmp.eq.s32.totalorder %s15, 1
      %p130 = por %p128, %p129
      %p132 = scmp.ne.s32.totalorder %s115, %s131
      %p133 = scmp.eq.s32.totalorder %s15, 0
      %p134 = por %p132, %p133
      %p135 = scmp.le.s32.totalorder 1, %s9
      %p136 = scmp.lt.s32.totalorder %s9, 3
      %p137 = pnand %p135, %p136
      %p138 = pneg %p137
      // Predicated region
      $region9: #{siamese_forward.20} parent=5 // pred_check
        _
      $region10: #{siamese_forward.20} parent=5 // pred_check_branch
        %140 = sbr.rel (%p137) target = $region12
      $region11: #{siamese_forward.20} parent=5 // pred_region
        %s141 = ssub.s32 %s9, 1
        // Predicated region
        $region13: #{siamese_forward.20} parent=11 // pred_check
          %p142 = pneg %p47
        $region14: #{siamese_forward.20} parent=11 // pred_check_branch
          %144 = sbr.rel (%p142) target = $region16
        $region15: #{siamese_forward.20} parent=11 // pred_region
          %s145 = smul.u32 4, %s19
          %p146 = scmp.lt.s32.totalorder %s145, 3
          %s147 = scalar_select %p146, %s145, 3
          %s148 = scalar_lea.vmem %s0, %s147
          %s149 = smul.u32 4, %s19
        $region16: #{siamese_forward.20} parent=11 // pred_fallthru
          _
      $region12: #{siamese_forward.20} parent=5 // pred_fallthru
        _
      %p150 = scmp.lt.s32.totalorder %s9, 2
      // Predicated region
      $region17: #{siamese_forward.20} parent=5 // pred_check
        %p151 = pneg %p150
      $region18: #{siamese_forward.20} parent=5 // pred_check_branch
        %153 = sbr.rel (%p151) target = $region20
      $region19: #{siamese_forward.20} parent=5 // pred_region
        // Predicated region
        $region21: #{siamese_forward.20} parent=19 // pred_check
          %p154 = pneg %p69
        $region22: #{siamese_forward.20} parent=19 // pred_check_branch
          %156 = sbr.rel (%p154) target = $region24
        $region23: #{siamese_forward.20} parent=19 // pred_region
          %s157 = sand.u32 %s59, 1
          %s158 = sand.u32 %s59, 1
          %s159 = smul.addr %s158, 512
          %s160 = scalar_lea.vmem [#allocation3], %s159
          %s161 = smul.u32 64, %s17
          %s162 = smul.u32 2, %s16
          %s163 = smul.addr %s161, 4
          %s164 = sadd.s32 %s162, %s163
          %s165 = smul.addr %s164, 4
          %s166 = scalar_lea.vmem %s1, %s165
          // Predicated region
          $region25: #{siamese_forward.20} parent=23 // pred_check
            _
          $region26: #{siamese_forward.20} parent=23 // pred_check_branch
            %168 = sbr.rel (0) target = $region28
          $region27: #{siamese_forward.20} parent=23 // pred_region
            // Predicated region
            $region29: #{siamese_forward.20} parent=27 // pred_check
              _
            $region30: #{siamese_forward.20} parent=27 // pred_check_branch
              %170 = sbr.rel (0) target = $region32
            $region31: #{siamese_forward.20} parent=27 // pred_region
              // Predicated region
              $region44: #{siamese_forward.20} parent=31 // pred_check
                _
              $region45: #{siamese_forward.20} parent=31 // pred_check_branch
                %312 = sbr.rel (0) target = $region47
              $region46: #{siamese_forward.20} parent=31 // pred_region
                loop: start=0, step=1, limit=1
                $region48: #{siamese_forward.20} parent=46 // loop_pre_header
                  _
                $region49: #{siamese_forward.20} parent=46 // loop_header
                  %s314 = sphi 0, %s318
                  %p315 = scmp.ge.s32.totalorder %s314, 1
                  %s319 = sphi %s166, %s166
                  %s320 = sphi %s160, %s160
                $region50: #{siamese_forward.20} parent=46 // loop_header_branch
                  %317 = sbr.rel (%p315) target = $region54
                $region51: #{siamese_forward.20} parent=46 // loop_body
                  %v321 = vld [vmem:[%s319] sm:$0xff]
                  %322 = vst [vmem:[%s320] sm:$0xff] %v321
                  %v323 = vld [vmem:[%s319 + $0x10] sm:$0xff]
                  %324 = vst [vmem:[%s320 + $0x8] sm:$0xff] %v323
                  %v325 = vld [vmem:[%s319 + $0x20] sm:$0xff]
                  %326 = vst [vmem:[%s320 + $0x10] sm:$0xff] %v325
                  %v327 = vld [vmem:[%s319 + $0x30] sm:$0xff]
                  %328 = vst [vmem:[%s320 + $0x18] sm:$0xff] %v327
                  %v329 = vld [vmem:[%s319 + $0x40] sm:$0xff]
                  %330 = vst [vmem:[%s320 + $0x20] sm:$0xff] %v329
                  %v331 = vld [vmem:[%s319 + $0x50] sm:$0xff]
                  %332 = vst [vmem:[%s320 + $0x28] sm:$0xff] %v331
                  %v333 = vld [vmem:[%s319 + $0x60] sm:$0xff]
                  %334 = vst [vmem:[%s320 + $0x30] sm:$0xff] %v333
                  %v335 = vld [vmem:[%s319 + $0x70] sm:$0xff]
                  %336 = vst [vmem:[%s320 + $0x38] sm:$0xff] %v335
                  %v337 = vld [vmem:[%s319 + $0x80] sm:$0xff]
                  %338 = vst [vmem:[%s320 + $0x40] sm:$0xff] %v337
                  %v339 = vld [vmem:[%s319 + $0x90] sm:$0xff]
                  %340 = vst [vmem:[%s320 + $0x48] sm:$0xff] %v339
                  %v341 = vld [vmem:[%s319 + $0xa0] sm:$0xff]
                  %342 = vst [vmem:[%s320 + $0x50] sm:$0xff] %v341
                  %v343 = vld [vmem:[%s319 + $0xb0] sm:$0xff]
                  %344 = vst [vmem:[%s320 + $0x58] sm:$0xff] %v343
                  %v345 = vld [vmem:[%s319 + $0xc0] sm:$0xff]
                  %346 = vst [vmem:[%s320 + $0x60] sm:$0xff] %v345
                  %v347 = vld [vmem:[%s319 + $0xd0] sm:$0xff]
                  %348 = vst [vmem:[%s320 + $0x68] sm:$0xff] %v347
                  %v349 = vld [vmem:[%s319 + $0xe0] sm:$0xff]
                  %350 = vst [vmem:[%s320 + $0x70] sm:$0xff] %v349
                  %v351 = vld [vmem:[%s319 + $0xf0] sm:$0xff]
                  %352 = vst [vmem:[%s320 + $0x78] sm:$0xff] %v351
                  %v353 = vld [vmem:[%s319 + $0x100] sm:$0xff]
                  %354 = vst [vmem:[%s320 + $0x80] sm:$0xff] %v353
                  %v355 = vld [vmem:[%s319 + $0x110] sm:$0xff]
                  %356 = vst [vmem:[%s320 + $0x88] sm:$0xff] %v355
                  %v357 = vld [vmem:[%s319 + $0x120] sm:$0xff]
                  %358 = vst [vmem:[%s320 + $0x90] sm:$0xff] %v357
                  %v359 = vld [vmem:[%s319 + $0x130] sm:$0xff]
                  %360 = vst [vmem:[%s320 + $0x98] sm:$0xff] %v359
                  %v361 = vld [vmem:[%s319 + $0x140] sm:$0xff]
                  %362 = vst [vmem:[%s320 + $0xa0] sm:$0xff] %v361
                  %v363 = vld [vmem:[%s319 + $0x150] sm:$0xff]
                  %364 = vst [vmem:[%s320 + $0xa8] sm:$0xff] %v363
                  %v365 = vld [vmem:[%s319 + $0x160] sm:$0xff]
                  %366 = vst [vmem:[%s320 + $0xb0] sm:$0xff] %v365
                  %v367 = vld [vmem:[%s319 + $0x170] sm:$0xff]
                  %368 = vst [vmem:[%s320 + $0xb8] sm:$0xff] %v367
                  %v369 = vld [vmem:[%s319 + $0x180] sm:$0xff]
                  %370 = vst [vmem:[%s320 + $0xc0] sm:$0xff] %v369
                  %v371 = vld [vmem:[%s319 + $0x190] sm:$0xff]
                  %372 = vst [vmem:[%s320 + $0xc8] sm:$0xff] %v371
                  %v373 = vld [vmem:[%s319 + $0x1a0] sm:$0xff]
                  %374 = vst [vmem:[%s320 + $0xd0] sm:$0xff] %v373
                  %v375 = vld [vmem:[%s319 + $0x1b0] sm:$0xff]
                  %376 = vst [vmem:[%s320 + $0xd8] sm:$0xff] %v375
                  %v377 = vld [vmem:[%s319 + $0x1c0] sm:$0xff]
                  %378 = vst [vmem:[%s320 + $0xe0] sm:$0xff] %v377
                  %v379 = vld [vmem:[%s319 + $0x1d0] sm:$0xff]
                  %380 = vst [vmem:[%s320 + $0xe8] sm:$0xff] %v379
                  %v381 = vld [vmem:[%s319 + $0x1e0] sm:$0xff]
                  %382 = vst [vmem:[%s320 + $0xf0] sm:$0xff] %v381
                  %v383 = vld [vmem:[%s319 + $0x1f0] sm:$0xff]
                  %384 = vst [vmem:[%s320 + $0xf8] sm:$0xff] %v383
                  %v385 = vld [vmem:[%s319 + $0x200] sm:$0xff]
                  %386 = vst [vmem:[%s320 + $0x100] sm:$0xff] %v385
                  %v387 = vld [vmem:[%s319 + $0x210] sm:$0xff]
                  %388 = vst [vmem:[%s320 + $0x108] sm:$0xff] %v387
                  %v389 = vld [vmem:[%s319 + $0x220] sm:$0xff]
                  %390 = vst [vmem:[%s320 + $0x110] sm:$0xff] %v389
                  %v391 = vld [vmem:[%s319 + $0x230] sm:$0xff]
                  %392 = vst [vmem:[%s320 + $0x118] sm:$0xff] %v391
                  %v393 = vld [vmem:[%s319 + $0x240] sm:$0xff]
                  %394 = vst [vmem:[%s320 + $0x120] sm:$0xff] %v393
                  %v395 = vld [vmem:[%s319 + $0x250] sm:$0xff]
                  %396 = vst [vmem:[%s320 + $0x128] sm:$0xff] %v395
                  %v397 = vld [vmem:[%s319 + $0x260] sm:$0xff]
                  %398 = vst [vmem:[%s320 + $0x130] sm:$0xff] %v397
                  %v399 = vld [vmem:[%s319 + $0x270] sm:$0xff]
                  %400 = vst [vmem:[%s320 + $0x138] sm:$0xff] %v399
                  %v401 = vld [vmem:[%s319 + $0x280] sm:$0xff]
                  %402 = vst [vmem:[%s320 + $0x140] sm:$0xff] %v401
                  %v403 = vld [vmem:[%s319 + $0x290] sm:$0xff]
                  %404 = vst [vmem:[%s320 + $0x148] sm:$0xff] %v403
                  %v405 = vld [vmem:[%s319 + $0x2a0] sm:$0xff]
                  %406 = vst [vmem:[%s320 + $0x150] sm:$0xff] %v405
                  %v407 = vld [vmem:[%s319 + $0x2b0] sm:$0xff]
                  %408 = vst [vmem:[%s320 + $0x158] sm:$0xff] %v407
                  %v409 = vld [vmem:[%s319 + $0x2c0] sm:$0xff]
                  %410 = vst [vmem:[%s320 + $0x160] sm:$0xff] %v409
                  %v411 = vld [vmem:[%s319 + $0x2d0] sm:$0xff]
                  %412 = vst [vmem:[%s320 + $0x168] sm:$0xff] %v411
                  %v413 = vld [vmem:[%s319 + $0x2e0] sm:$0xff]
                  %414 = vst [vmem:[%s320 + $0x170] sm:$0xff] %v413
                  %v415 = vld [vmem:[%s319 + $0x2f0] sm:$0xff]
                  %416 = vst [vmem:[%s320 + $0x178] sm:$0xff] %v415
                  %v417 = vld [vmem:[%s319 + $0x300] sm:$0xff]
                  %418 = vst [vmem:[%s320 + $0x180] sm:$0xff] %v417
                  %v419 = vld [vmem:[%s319 + $0x310] sm:$0xff]
                  %420 = vst [vmem:[%s320 + $0x188] sm:$0xff] %v419
                  %v421 = vld [vmem:[%s319 + $0x320] sm:$0xff]
                  %422 = vst [vmem:[%s320 + $0x190] sm:$0xff] %v421
                  %v423 = vld [vmem:[%s319 + $0x330] sm:$0xff]
                  %424 = vst [vmem:[%s320 + $0x198] sm:$0xff] %v423
                  %v425 = vld [vmem:[%s319 + $0x340] sm:$0xff]
                  %426 = vst [vmem:[%s320 + $0x1a0] sm:$0xff] %v425
                  %v427 = vld [vmem:[%s319 + $0x350] sm:$0xff]
                  %428 = vst [vmem:[%s320 + $0x1a8] sm:$0xff] %v427
                  %v429 = vld [vmem:[%s319 + $0x360] sm:$0xff]
                  %430 = vst [vmem:[%s320 + $0x1b0] sm:$0xff] %v429
                  %v431 = vld [vmem:[%s319 + $0x370] sm:$0xff]
                  %432 = vst [vmem:[%s320 + $0x1b8] sm:$0xff] %v431
                  %v433 = vld [vmem:[%s319 + $0x380] sm:$0xff]
                  %434 = vst [vmem:[%s320 + $0x1c0] sm:$0xff] %v433
                  %v435 = vld [vmem:[%s319 + $0x390] sm:$0xff]
                  %436 = vst [vmem:[%s320 + $0x1c8] sm:$0xff] %v435
                  %v437 = vld [vmem:[%s319 + $0x3a0] sm:$0xff]
                  %438 = vst [vmem:[%s320 + $0x1d0] sm:$0xff] %v437
                  %v439 = vld [vmem:[%s319 + $0x3b0] sm:$0xff]
                  %440 = vst [vmem:[%s320 + $0x1d8] sm:$0xff] %v439
                  %v441 = vld [vmem:[%s319 + $0x3c0] sm:$0xff]
                  %442 = vst [vmem:[%s320 + $0x1e0] sm:$0xff] %v441
                  %v443 = vld [vmem:[%s319 + $0x3d0] sm:$0xff]
                  %444 = vst [vmem:[%s320 + $0x1e8] sm:$0xff] %v443
                  %v445 = vld [vmem:[%s319 + $0x3e0] sm:$0xff]
                  %446 = vst [vmem:[%s320 + $0x1f0] sm:$0xff] %v445
                  %v447 = vld [vmem:[%s319 + $0x3f0] sm:$0xff]
                  %448 = vst [vmem:[%s320 + $0x1f8] sm:$0xff] %v447
                $region52: #{siamese_forward.20} parent=46 // loop_footer
                  %s318 = sadd.s32 1, %s314
                $region53: #{siamese_forward.20} parent=46 // loop_footer_branch
                  %313 = sbr.rel target = $region49
                $region54: #{siamese_forward.20} parent=46 // loop_exit
                  _
              $region47: #{siamese_forward.20} parent=31 // pred_fallthru
                _
              // Predicated region
              $region55: #{siamese_forward.20} parent=31 // pred_check
                _
              $region56: #{siamese_forward.20} parent=31 // pred_check_branch
                %450 = sbr.rel target = $region58
              $region57: #{siamese_forward.20} parent=31 // pred_region
                _
              $region58: #{siamese_forward.20} parent=31 // pred_fallthru
                _
            $region32: #{siamese_forward.20} parent=27 // pred_fallthru
              _
            // Predicated region
            $region33: #{siamese_forward.20} parent=27 // pred_check
              _
            $region34: #{siamese_forward.20} parent=27 // pred_check_branch
              %172 = sbr.rel target = $region36
            $region35: #{siamese_forward.20} parent=27 // pred_region
              %s174 = ssub.s32 256, 1
              loop: start=0, step=1, limit=1
              $region37: #{siamese_forward.20} parent=35 // loop_pre_header
                _
              $region38: #{siamese_forward.20} parent=35 // loop_header
                %s176 = sphi 0, %s180
                %p177 = scmp.ge.s32.totalorder %s176, 1
                %s181 = sphi %s166, %s166
                %s182 = sphi %s160, %s160
              $region39: #{siamese_forward.20} parent=35 // loop_header_branch
                %179 = sbr.rel (%p177) target = $region43
              $region40: #{siamese_forward.20} parent=35 // loop_body
                %v183 = vld [vmem:[%s181] sm:%s174]
                %184 = vst [vmem:[%s182] sm:%s174] %v183
                %v185 = vld [vmem:[%s181 + $0x10] sm:%s174]
                %186 = vst [vmem:[%s182 + $0x8] sm:%s174] %v185
                %v187 = vld [vmem:[%s181 + $0x20] sm:%s174]
                %188 = vst [vmem:[%s182 + $0x10] sm:%s174] %v187
                %v189 = vld [vmem:[%s181 + $0x30] sm:%s174]
                %190 = vst [vmem:[%s182 + $0x18] sm:%s174] %v189
                %v191 = vld [vmem:[%s181 + $0x40] sm:%s174]
                %192 = vst [vmem:[%s182 + $0x20] sm:%s174] %v191
                %v193 = vld [vmem:[%s181 + $0x50] sm:%s174]
                %194 = vst [vmem:[%s182 + $0x28] sm:%s174] %v193
                %v195 = vld [vmem:[%s181 + $0x60] sm:%s174]
                %196 = vst [vmem:[%s182 + $0x30] sm:%s174] %v195
                %v197 = vld [vmem:[%s181 + $0x70] sm:%s174]
                %198 = vst [vmem:[%s182 + $0x38] sm:%s174] %v197
                %v199 = vld [vmem:[%s181 + $0x80] sm:%s174]
                %200 = vst [vmem:[%s182 + $0x40] sm:%s174] %v199
                %v201 = vld [vmem:[%s181 + $0x90] sm:%s174]
                %202 = vst [vmem:[%s182 + $0x48] sm:%s174] %v201
                %v203 = vld [vmem:[%s181 + $0xa0] sm:%s174]
                %204 = vst [vmem:[%s182 + $0x50] sm:%s174] %v203
                %v205 = vld [vmem:[%s181 + $0xb0] sm:%s174]
                %206 = vst [vmem:[%s182 + $0x58] sm:%s174] %v205
                %v207 = vld [vmem:[%s181 + $0xc0] sm:%s174]
                %208 = vst [vmem:[%s182 + $0x60] sm:%s174] %v207
                %v209 = vld [vmem:[%s181 + $0xd0] sm:%s174]
                %210 = vst [vmem:[%s182 + $0x68] sm:%s174] %v209
                %v211 = vld [vmem:[%s181 + $0xe0] sm:%s174]
                %212 = vst [vmem:[%s182 + $0x70] sm:%s174] %v211
                %v213 = vld [vmem:[%s181 + $0xf0] sm:%s174]
                %214 = vst [vmem:[%s182 + $0x78] sm:%s174] %v213
                %v215 = vld [vmem:[%s181 + $0x100] sm:%s174]
                %216 = vst [vmem:[%s182 + $0x80] sm:%s174] %v215
                %v217 = vld [vmem:[%s181 + $0x110] sm:%s174]
                %218 = vst [vmem:[%s182 + $0x88] sm:%s174] %v217
                %v219 = vld [vmem:[%s181 + $0x120] sm:%s174]
                %220 = vst [vmem:[%s182 + $0x90] sm:%s174] %v219
                %v221 = vld [vmem:[%s181 + $0x130] sm:%s174]
                %222 = vst [vmem:[%s182 + $0x98] sm:%s174] %v221
                %v223 = vld [vmem:[%s181 + $0x140] sm:%s174]
                %224 = vst [vmem:[%s182 + $0xa0] sm:%s174] %v223
                %v225 = vld [vmem:[%s181 + $0x150] sm:%s174]
                %226 = vst [vmem:[%s182 + $0xa8] sm:%s174] %v225
                %v227 = vld [vmem:[%s181 + $0x160] sm:%s174]
                %228 = vst [vmem:[%s182 + $0xb0] sm:%s174] %v227
                %v229 = vld [vmem:[%s181 + $0x170] sm:%s174]
                %230 = vst [vmem:[%s182 + $0xb8] sm:%s174] %v229
                %v231 = vld [vmem:[%s181 + $0x180] sm:%s174]
                %232 = vst [vmem:[%s182 + $0xc0] sm:%s174] %v231
                %v233 = vld [vmem:[%s181 + $0x190] sm:%s174]
                %234 = vst [vmem:[%s182 + $0xc8] sm:%s174] %v233
                %v235 = vld [vmem:[%s181 + $0x1a0] sm:%s174]
                %236 = vst [vmem:[%s182 + $0xd0] sm:%s174] %v235
                %v237 = vld [vmem:[%s181 + $0x1b0] sm:%s174]
                %238 = vst [vmem:[%s182 + $0xd8] sm:%s174] %v237
                %v239 = vld [vmem:[%s181 + $0x1c0] sm:%s174]
                %240 = vst [vmem:[%s182 + $0xe0] sm:%s174] %v239
                %v241 = vld [vmem:[%s181 + $0x1d0] sm:%s174]
                %242 = vst [vmem:[%s182 + $0xe8] sm:%s174] %v241
                %v243 = vld [vmem:[%s181 + $0x1e0] sm:%s174]
                %244 = vst [vmem:[%s182 + $0xf0] sm:%s174] %v243
                %v245 = vld [vmem:[%s181 + $0x1f0] sm:%s174]
                %246 = vst [vmem:[%s182 + $0xf8] sm:%s174] %v245
                %v247 = vld [vmem:[%s181 + $0x200] sm:%s174]
                %248 = vst [vmem:[%s182 + $0x100] sm:%s174] %v247
                %v249 = vld [vmem:[%s181 + $0x210] sm:%s174]
                %250 = vst [vmem:[%s182 + $0x108] sm:%s174] %v249
                %v251 = vld [vmem:[%s181 + $0x220] sm:%s174]
                %252 = vst [vmem:[%s182 + $0x110] sm:%s174] %v251
                %v253 = vld [vmem:[%s181 + $0x230] sm:%s174]
                %254 = vst [vmem:[%s182 + $0x118] sm:%s174] %v253
                %v255 = vld [vmem:[%s181 + $0x240] sm:%s174]
                %256 = vst [vmem:[%s182 + $0x120] sm:%s174] %v255
                %v257 = vld [vmem:[%s181 + $0x250] sm:%s174]
                %258 = vst [vmem:[%s182 + $0x128] sm:%s174] %v257
                %v259 = vld [vmem:[%s181 + $0x260] sm:%s174]
                %260 = vst [vmem:[%s182 + $0x130] sm:%s174] %v259
                %v261 = vld [vmem:[%s181 + $0x270] sm:%s174]
                %262 = vst [vmem:[%s182 + $0x138] sm:%s174] %v261
                %v263 = vld [vmem:[%s181 + $0x280] sm:%s174]
                %264 = vst [vmem:[%s182 + $0x140] sm:%s174] %v263
                %v265 = vld [vmem:[%s181 + $0x290] sm:%s174]
                %266 = vst [vmem:[%s182 + $0x148] sm:%s174] %v265
                %v267 = vld [vmem:[%s181 + $0x2a0] sm:%s174]
                %268 = vst [vmem:[%s182 + $0x150] sm:%s174] %v267
                %v269 = vld [vmem:[%s181 + $0x2b0] sm:%s174]
                %270 = vst [vmem:[%s182 + $0x158] sm:%s174] %v269
                %v271 = vld [vmem:[%s181 + $0x2c0] sm:%s174]
                %272 = vst [vmem:[%s182 + $0x160] sm:%s174] %v271
                %v273 = vld [vmem:[%s181 + $0x2d0] sm:%s174]
                %274 = vst [vmem:[%s182 + $0x168] sm:%s174] %v273
                %v275 = vld [vmem:[%s181 + $0x2e0] sm:%s174]
                %276 = vst [vmem:[%s182 + $0x170] sm:%s174] %v275
                %v277 = vld [vmem:[%s181 + $0x2f0] sm:%s174]
                %278 = vst [vmem:[%s182 + $0x178] sm:%s174] %v277
                %v279 = vld [vmem:[%s181 + $0x300] sm:%s174]
                %280 = vst [vmem:[%s182 + $0x180] sm:%s174] %v279
                %v281 = vld [vmem:[%s181 + $0x310] sm:%s174]
                %282 = vst [vmem:[%s182 + $0x188] sm:%s174] %v281
                %v283 = vld [vmem:[%s181 + $0x320] sm:%s174]
                %284 = vst [vmem:[%s182 + $0x190] sm:%s174] %v283
                %v285 = vld [vmem:[%s181 + $0x330] sm:%s174]
                %286 = vst [vmem:[%s182 + $0x198] sm:%s174] %v285
                %v287 = vld [vmem:[%s181 + $0x340] sm:%s174]
                %288 = vst [vmem:[%s182 + $0x1a0] sm:%s174] %v287
                %v289 = vld [vmem:[%s181 + $0x350] sm:%s174]
                %290 = vst [vmem:[%s182 + $0x1a8] sm:%s174] %v289
                %v291 = vld [vmem:[%s181 + $0x360] sm:%s174]
                %292 = vst [vmem:[%s182 + $0x1b0] sm:%s174] %v291
                %v293 = vld [vmem:[%s181 + $0x370] sm:%s174]
                %294 = vst [vmem:[%s182 + $0x1b8] sm:%s174] %v293
                %v295 = vld [vmem:[%s181 + $0x380] sm:%s174]
                %296 = vst [vmem:[%s182 + $0x1c0] sm:%s174] %v295
                %v297 = vld [vmem:[%s181 + $0x390] sm:%s174]
                %298 = vst [vmem:[%s182 + $0x1c8] sm:%s174] %v297
                %v299 = vld [vmem:[%s181 + $0x3a0] sm:%s174]
                %300 = vst [vmem:[%s182 + $0x1d0] sm:%s174] %v299
                %v301 = vld [vmem:[%s181 + $0x3b0] sm:%s174]
                %302 = vst [vmem:[%s182 + $0x1d8] sm:%s174] %v301
                %v303 = vld [vmem:[%s181 + $0x3c0] sm:%s174]
                %304 = vst [vmem:[%s182 + $0x1e0] sm:%s174] %v303
                %v305 = vld [vmem:[%s181 + $0x3d0] sm:%s174]
                %306 = vst [vmem:[%s182 + $0x1e8] sm:%s174] %v305
                %v307 = vld [vmem:[%s181 + $0x3e0] sm:%s174]
                %308 = vst [vmem:[%s182 + $0x1f0] sm:%s174] %v307
                %v309 = vld [vmem:[%s181 + $0x3f0] sm:%s174]
                %310 = vst [vmem:[%s182 + $0x1f8] sm:%s174] %v309
              $region41: #{siamese_forward.20} parent=35 // loop_footer
                %s180 = sadd.s32 1, %s176
              $region42: #{siamese_forward.20} parent=35 // loop_footer_branch
                %175 = sbr.rel target = $region38
              $region43: #{siamese_forward.20} parent=35 // loop_exit
                _
            $region36: #{siamese_forward.20} parent=27 // pred_fallthru
              _
          $region28: #{siamese_forward.20} parent=23 // pred_fallthru
            _
          %451 = vnop
        $region24: #{siamese_forward.20} parent=19 // pred_fallthru
          _
        // Predicated region
        $region59: #{siamese_forward.20} parent=19 // pred_check
          %p452 = pneg %p95
        $region60: #{siamese_forward.20} parent=19 // pred_check_branch
          %454 = sbr.rel (%p452) target = $region62
        $region61: #{siamese_forward.20} parent=19 // pred_region
          %s455 = smul.u32 2, %s16
          %p456 = scmp.lt.s32.totalorder %s455, 3
          %s457 = scalar_select %p456, %s455, 3
          %s458 = scalar_lea.vmem %s2, %s457
          %s459 = smul.u32 2, %s16
        $region62: #{siamese_forward.20} parent=19 // pred_fallthru
          _
      $region20: #{siamese_forward.20} parent=5 // pred_fallthru
        _
      %p460 = scmp.le.s32.totalorder 1, %s9
      %p461 = scmp.lt.s32.totalorder %s9, 3
      %p462 = pnand %p460, %p461
      %p463 = pneg %p462
      // Predicated region
      $region63: #{siamese_forward.20} parent=5 // pred_check
        _
      $region64: #{siamese_forward.20} parent=5 // pred_check_branch
        %465 = sbr.rel (%p462) target = $region66
      $region65: #{siamese_forward.20} parent=5 // pred_region
        %s466 = ssub.s32 %s9, 1
        %s467 = sand.u32 %s62, 1
        %s468 = sand.u32 %s62, 1
        %s469 = smul.addr %s468, 512
        %s470 = scalar_lea.vmem [#allocation3], %s469
        // Predicated region
        $region67: #{siamese_forward.20} parent=65 // pred_check
          %p471 = pneg %p75
        $region68: #{siamese_forward.20} parent=65 // pred_check_branch
          %473 = sbr.rel (%p471) target = $region70
        $region69: #{siamese_forward.20} parent=65 // pred_region
          _
        $region70: #{siamese_forward.20} parent=65 // pred_fallthru
          _
        %s474 = smul.u32 4, %s19
        %p475 = scmp.lt.s32.totalorder %s474, 3
        %s476 = scalar_select %p475, %s474, 3
        %s477 = scalar_lea.vmem %s0, %s476
        %p478 = pneg %p47
        %p479 = pneg %p44
        %s480 = sand.u32 %s62, 1
        %s481 = sand.u32 %s62, 1
        %s482 = smul.addr %s481, 512
        %s483 = scalar_lea.vmem [#allocation3], %s482
        %p484 = pneg %p75
        %p485 = pneg %p72
        %s486 = smul.u32 2, %s18
        %p487 = scmp.lt.s32.totalorder %s486, 3
        %s488 = scalar_select %p487, %s486, 3
        %s489 = scalar_lea.vmem %s2, %s488
        %p490 = pneg %p101
        %p491 = pneg %p98
        %p492 = pneg %p127
        %p493 = pneg %p124
        %s494 = smul.u32 2, %s18
        %p495 = scmp.lt.s32.totalorder %s494, 3
        %s496 = scalar_select %p495, %s494, 3
        %s497 = scalar_lea.vmem %s3, %s496
        %s498 = smul.u32 4, %s19
        %p499 = scmp.lt.s32.totalorder %s498, 3
        %s500 = scalar_select %p499, %s498, 3
        %s501 = scalar_lea.vmem %s0, %s500
        %s502 = smul.u32 4, %s19
        %s503 = smul.u32 64, %s19
        %s504 = smul.u32 2, %s18
        %s505 = smul.u32 2, %s18
        %p506 = scmp.lt.s32.totalorder %s505, 3
        %s507 = scalar_select %p506, %s505, 3
        %s508 = scalar_lea.vmem %s2, %s507
        %s509 = smul.u32 2, %s18
        %s510 = smul.u32 2, %s18
        %p511 = scmp.lt.s32.totalorder %s510, 3
        %s512 = scalar_select %p511, %s510, 3
        %s513 = scalar_lea.vmem %s3, %s512
        %s514 = smul.u32 2, %s18
        %p515 = scmp.eq.s32.totalorder %s19, 0
        // Predicated region
        $region71: #{siamese_forward.20} parent=65 // pred_check
          %p516 = pneg %p515
        $region72: #{siamese_forward.20} parent=65 // pred_check_branch
          %518 = sbr.rel (%p516) target = $region74
        $region73: #{siamese_forward.20} parent=65 // pred_region
          %519 = vst [vmem:[#allocation2] sm:$0xf] 0.0
        $region74: #{siamese_forward.20} parent=65 // pred_fallthru
          _
        %v520 = vld [vmem:[#allocation2] sm:$0xf]
        %v521 = vld [vmem:[%s501] sm:$0xf]
        %v522 = vld [vmem:[%s470] sm:$0xff]
        %v523 = vld [vmem:[%s470 + $0x8] sm:$0xff]
        %v524 = vld [vmem:[%s470 + $0x10] sm:$0xff]
        %v525 = vld [vmem:[%s470 + $0x18] sm:$0xff]
        %v526 = vld [vmem:[%s470 + $0x20] sm:$0xff]
        %v527 = vld [vmem:[%s470 + $0x28] sm:$0xff]
        %v528 = vld [vmem:[%s470 + $0x30] sm:$0xff]
        %v529 = vld [vmem:[%s470 + $0x38] sm:$0xff]
        %v530 = vld [vmem:[%s470 + $0x40] sm:$0xff]
        %v531 = vld [vmem:[%s470 + $0x48] sm:$0xff]
        %v532 = vld [vmem:[%s470 + $0x50] sm:$0xff]
        %v533 = vld [vmem:[%s470 + $0x58] sm:$0xff]
        %v534 = vld [vmem:[%s470 + $0x60] sm:$0xff]
        %v535 = vld [vmem:[%s470 + $0x68] sm:$0xff]
        %v536 = vld [vmem:[%s470 + $0x70] sm:$0xff]
        %v537 = vld [vmem:[%s470 + $0x78] sm:$0xff]
        %v538 = vld [vmem:[%s470 + $0x80] sm:$0xff]
        %v539 = vld [vmem:[%s470 + $0x88] sm:$0xff]
        %v540 = vld [vmem:[%s470 + $0x90] sm:$0xff]
        %v541 = vld [vmem:[%s470 + $0x98] sm:$0xff]
        %v542 = vld [vmem:[%s470 + $0xa0] sm:$0xff]
        %v543 = vld [vmem:[%s470 + $0xa8] sm:$0xff]
        %v544 = vld [vmem:[%s470 + $0xb0] sm:$0xff]
        %v545 = vld [vmem:[%s470 + $0xb8] sm:$0xff]
        %v546 = vld [vmem:[%s470 + $0xc0] sm:$0xff]
        %v547 = vld [vmem:[%s470 + $0xc8] sm:$0xff]
        %v548 = vld [vmem:[%s470 + $0xd0] sm:$0xff]
        %v549 = vld [vmem:[%s470 + $0xd8] sm:$0xff]
        %v550 = vld [vmem:[%s470 + $0xe0] sm:$0xff]
        %v551 = vld [vmem:[%s470 + $0xe8] sm:$0xff]
        %v552 = vld [vmem:[%s470 + $0xf0] sm:$0xff]
        %v553 = vld [vmem:[%s470 + $0xf8] sm:$0xff]
        %v554 = vld [vmem:[%s470 + $0x100] sm:$0xff]
        %v555 = vld [vmem:[%s470 + $0x108] sm:$0xff]
        %v556 = vld [vmem:[%s470 + $0x110] sm:$0xff]
        %v557 = vld [vmem:[%s470 + $0x118] sm:$0xff]
        %v558 = vld [vmem:[%s470 + $0x120] sm:$0xff]
        %v559 = vld [vmem:[%s470 + $0x128] sm:$0xff]
        %v560 = vld [vmem:[%s470 + $0x130] sm:$0xff]
        %v561 = vld [vmem:[%s470 + $0x138] sm:$0xff]
        %v562 = vld [vmem:[%s470 + $0x140] sm:$0xff]
        %v563 = vld [vmem:[%s470 + $0x148] sm:$0xff]
        %v564 = vld [vmem:[%s470 + $0x150] sm:$0xff]
        %v565 = vld [vmem:[%s470 + $0x158] sm:$0xff]
        %v566 = vld [vmem:[%s470 + $0x160] sm:$0xff]
        %v567 = vld [vmem:[%s470 + $0x168] sm:$0xff]
        %v568 = vld [vmem:[%s470 + $0x170] sm:$0xff]
        %v569 = vld [vmem:[%s470 + $0x178] sm:$0xff]
        %v570 = vld [vmem:[%s470 + $0x180] sm:$0xff]
        %v571 = vld [vmem:[%s470 + $0x188] sm:$0xff]
        %v572 = vld [vmem:[%s470 + $0x190] sm:$0xff]
        %v573 = vld [vmem:[%s470 + $0x198] sm:$0xff]
        %v574 = vld [vmem:[%s470 + $0x1a0] sm:$0xff]
        %v575 = vld [vmem:[%s470 + $0x1a8] sm:$0xff]
        %v576 = vld [vmem:[%s470 + $0x1b0] sm:$0xff]
        %v577 = vld [vmem:[%s470 + $0x1b8] sm:$0xff]
        %v578 = vld [vmem:[%s470 + $0x1c0] sm:$0xff]
        %v579 = vld [vmem:[%s470 + $0x1c8] sm:$0xff]
        %v580 = vld [vmem:[%s470 + $0x1d0] sm:$0xff]
        %v581 = vld [vmem:[%s470 + $0x1d8] sm:$0xff]
        %v582 = vld [vmem:[%s470 + $0x1e0] sm:$0xff]
        %v583 = vld [vmem:[%s470 + $0x1e8] sm:$0xff]
        %v584 = vld [vmem:[%s470 + $0x1f0] sm:$0xff]
        %v585 = vld [vmem:[%s470 + $0x1f8] sm:$0xff]
        %587 = vst [vmem:[#allocation1] ss:$9 sm:$0xff] %v521
        %v588 = vld [vmem:[#allocation1] sm:$0xff]
        %v589 = vld [vmem:[#allocation1 + $0x9] sm:$0xff]
        %v590 = vld [vmem:[#allocation1 + $0x12] sm:$0xff]
        %v591 = vld [vmem:[#allocation1 + $0x1b] sm:$0xff]
        %v660 = vunpack.c.l.b16 %v522
        %v661 = vunpack.c.h.b16 %v522
        %v662 = vunpack.c.l.b16 %v523
        %v663 = vunpack.c.h.b16 %v523
        %v664 = vunpack.c.l.b16 %v524
        %v665 = vunpack.c.h.b16 %v524
        %v666 = vunpack.c.l.b16 %v525
        %v667 = vunpack.c.h.b16 %v525
        %v668 = vunpack.c.l.b16 %v526
        %v669 = vunpack.c.h.b16 %v526
        %v670 = vunpack.c.l.b16 %v527
        %v671 = vunpack.c.h.b16 %v527
        %v672 = vunpack.c.l.b16 %v528
        %v673 = vunpack.c.h.b16 %v528
        %v674 = vunpack.c.l.b16 %v529
        %v675 = vunpack.c.h.b16 %v529
        %v676 = vunpack.c.l.b16 %v530
        %v677 = vunpack.c.h.b16 %v530
        %v678 = vunpack.c.l.b16 %v531
        %v679 = vunpack.c.h.b16 %v531
        %v680 = vunpack.c.l.b16 %v532
        %v681 = vunpack.c.h.b16 %v532
        %v682 = vunpack.c.l.b16 %v533
        %v683 = vunpack.c.h.b16 %v533
        %v684 = vunpack.c.l.b16 %v534
        %v685 = vunpack.c.h.b16 %v534
        %v686 = vunpack.c.l.b16 %v535
        %v687 = vunpack.c.h.b16 %v535
        %v688 = vunpack.c.l.b16 %v536
        %v689 = vunpack.c.h.b16 %v536
        %v690 = vunpack.c.l.b16 %v537
        %v691 = vunpack.c.h.b16 %v537
        %v692 = vunpack.c.l.b16 %v538
        %v693 = vunpack.c.h.b16 %v538
        %v694 = vunpack.c.l.b16 %v539
        %v695 = vunpack.c.h.b16 %v539
        %v696 = vunpack.c.l.b16 %v540
        %v697 = vunpack.c.h.b16 %v540
        %v698 = vunpack.c.l.b16 %v541
        %v699 = vunpack.c.h.b16 %v541
        %v700 = vunpack.c.l.b16 %v542
        %v701 = vunpack.c.h.b16 %v542
        %v702 = vunpack.c.l.b16 %v543
        %v703 = vunpack.c.h.b16 %v543
        %v704 = vunpack.c.l.b16 %v544
        %v705 = vunpack.c.h.b16 %v544
        %v706 = vunpack.c.l.b16 %v545
        %v707 = vunpack.c.h.b16 %v545
        %v708 = vunpack.c.l.b16 %v546
        %v709 = vunpack.c.h.b16 %v546
        %v710 = vunpack.c.l.b16 %v547
        %v711 = vunpack.c.h.b16 %v547
        %v712 = vunpack.c.l.b16 %v548
        %v713 = vunpack.c.h.b16 %v548
        %v714 = vunpack.c.l.b16 %v549
        %v715 = vunpack.c.h.b16 %v549
        %v716 = vunpack.c.l.b16 %v550
        %v717 = vunpack.c.h.b16 %v550
        %v718 = vunpack.c.l.b16 %v551
        %v719 = vunpack.c.h.b16 %v551
        %v720 = vunpack.c.l.b16 %v552
        %v721 = vunpack.c.h.b16 %v552
        %v722 = vunpack.c.l.b16 %v553
        %v723 = vunpack.c.h.b16 %v553
        %v724 = vunpack.c.l.b16 %v554
        %v725 = vunpack.c.h.b16 %v554
        %v726 = vunpack.c.l.b16 %v555
        %v727 = vunpack.c.h.b16 %v555
        %v728 = vunpack.c.l.b16 %v556
        %v729 = vunpack.c.h.b16 %v556
        %v730 = vunpack.c.l.b16 %v557
        %v731 = vunpack.c.h.b16 %v557
        %v732 = vunpack.c.l.b16 %v558
        %v733 = vunpack.c.h.b16 %v558
        %v734 = vunpack.c.l.b16 %v559
        %v735 = vunpack.c.h.b16 %v559
        %v736 = vunpack.c.l.b16 %v560
        %v737 = vunpack.c.h.b16 %v560
        %v738 = vunpack.c.l.b16 %v561
        %v739 = vunpack.c.h.b16 %v561
        %v740 = vunpack.c.l.b16 %v562
        %v741 = vunpack.c.h.b16 %v562
        %v742 = vunpack.c.l.b16 %v563
        %v743 = vunpack.c.h.b16 %v563
        %v744 = vunpack.c.l.b16 %v564
        %v745 = vunpack.c.h.b16 %v564
        %v746 = vunpack.c.l.b16 %v565
        %v747 = vunpack.c.h.b16 %v565
        %v748 = vunpack.c.l.b16 %v566
        %v749 = vunpack.c.h.b16 %v566
        %v750 = vunpack.c.l.b16 %v567
        %v751 = vunpack.c.h.b16 %v567
        %v752 = vunpack.c.l.b16 %v568
        %v753 = vunpack.c.h.b16 %v568
        %v754 = vunpack.c.l.b16 %v569
        %v755 = vunpack.c.h.b16 %v569
        %v756 = vunpack.c.l.b16 %v570
        %v757 = vunpack.c.h.b16 %v570
        %v758 = vunpack.c.l.b16 %v571
        %v759 = vunpack.c.h.b16 %v571
        %v760 = vunpack.c.l.b16 %v572
        %v761 = vunpack.c.h.b16 %v572
        %v762 = vunpack.c.l.b16 %v573
        %v763 = vunpack.c.h.b16 %v573
        %v764 = vunpack.c.l.b16 %v574
        %v765 = vunpack.c.h.b16 %v574
        %v766 = vunpack.c.l.b16 %v575
        %v767 = vunpack.c.h.b16 %v575
        %v768 = vunpack.c.l.b16 %v576
        %v769 = vunpack.c.h.b16 %v576
        %v770 = vunpack.c.l.b16 %v577
        %v771 = vunpack.c.h.b16 %v577
        %v772 = vunpack.c.l.b16 %v578
        %v773 = vunpack.c.h.b16 %v578
        %v774 = vunpack.c.l.b16 %v579
        %v775 = vunpack.c.h.b16 %v579
        %v776 = vunpack.c.l.b16 %v580
        %v777 = vunpack.c.h.b16 %v580
        %v778 = vunpack.c.l.b16 %v581
        %v779 = vunpack.c.h.b16 %v581
        %v780 = vunpack.c.l.b16 %v582
        %v781 = vunpack.c.h.b16 %v582
        %v782 = vunpack.c.l.b16 %v583
        %v783 = vunpack.c.h.b16 %v583
        %v784 = vunpack.c.l.b16 %v584
        %v785 = vunpack.c.h.b16 %v584
        %v786 = vunpack.c.l.b16 %v585
        %v787 = vunpack.c.h.b16 %v585
        %v788 = vpack.c.b16 %v662, %v660
        %v789 = vpack.c.b16 %v663, %v661
        %v790 = vpack.c.b16 %v666, %v664
        %v791 = vpack.c.b16 %v667, %v665
        %v792 = vpack.c.b16 %v670, %v668
        %v793 = vpack.c.b16 %v671, %v669
        %v794 = vpack.c.b16 %v674, %v672
        %v795 = vpack.c.b16 %v675, %v673
        %v796 = vpack.c.b16 %v678, %v676
        %v797 = vpack.c.b16 %v679, %v677
        %v798 = vpack.c.b16 %v682, %v680
        %v799 = vpack.c.b16 %v683, %v681
        %v800 = vpack.c.b16 %v686, %v684
        %v801 = vpack.c.b16 %v687, %v685
        %v802 = vpack.c.b16 %v690, %v688
        %v803 = vpack.c.b16 %v691, %v689
        %v804 = vpack.c.b16 %v694, %v692
        %v805 = vpack.c.b16 %v695, %v693
        %v806 = vpack.c.b16 %v698, %v696
        %v807 = vpack.c.b16 %v699, %v697
        %v808 = vpack.c.b16 %v702, %v700
        %v809 = vpack.c.b16 %v703, %v701
        %v810 = vpack.c.b16 %v706, %v704
        %v811 = vpack.c.b16 %v707, %v705
        %v812 = vpack.c.b16 %v710, %v708
        %v813 = vpack.c.b16 %v711, %v709
        %v814 = vpack.c.b16 %v714, %v712
        %v815 = vpack.c.b16 %v715, %v713
        %v816 = vpack.c.b16 %v718, %v716
        %v817 = vpack.c.b16 %v719, %v717
        %v818 = vpack.c.b16 %v722, %v720
        %v819 = vpack.c.b16 %v723, %v721
        %v820 = vpack.c.b16 %v726, %v724
        %v821 = vpack.c.b16 %v727, %v725
        %v822 = vpack.c.b16 %v730, %v728
        %v823 = vpack.c.b16 %v731, %v729
        %v824 = vpack.c.b16 %v734, %v732
        %v825 = vpack.c.b16 %v735, %v733
        %v826 = vpack.c.b16 %v738, %v736
        %v827 = vpack.c.b16 %v739, %v737
        %v828 = vpack.c.b16 %v742, %v740
        %v829 = vpack.c.b16 %v743, %v741
        %v830 = vpack.c.b16 %v746, %v744
        %v831 = vpack.c.b16 %v747, %v745
        %v832 = vpack.c.b16 %v750, %v748
        %v833 = vpack.c.b16 %v751, %v749
        %v834 = vpack.c.b16 %v754, %v752
        %v835 = vpack.c.b16 %v755, %v753
        %v836 = vpack.c.b16 %v758, %v756
        %v837 = vpack.c.b16 %v759, %v757
        %v838 = vpack.c.b16 %v762, %v760
        %v839 = vpack.c.b16 %v763, %v761
        %v840 = vpack.c.b16 %v766, %v764
        %v841 = vpack.c.b16 %v767, %v765
        %v842 = vpack.c.b16 %v770, %v768
        %v843 = vpack.c.b16 %v771, %v769
        %v844 = vpack.c.b16 %v774, %v772
        %v845 = vpack.c.b16 %v775, %v773
        %v846 = vpack.c.b16 %v778, %v776
        %v847 = vpack.c.b16 %v779, %v777
        %v848 = vpack.c.b16 %v782, %v780
        %v849 = vpack.c.b16 %v783, %v781
        %v850 = vpack.c.b16 %v786, %v784
        %v851 = vpack.c.b16 %v787, %v785
        %916 = vmatpush.bf16.msra.mxu0 %v802
        %917 = vmatpush.bf16.msra.mxu0 %v800
        %918 = vmatpush.bf16.msra.mxu0 %v798
        %919 = vmatpush.bf16.msra.mxu0 %v796
        %920 = vmatpush.bf16.msra.mxu0 %v794
        %921 = vmatpush.bf16.msra.mxu0 %v792
        %922 = vmatpush.bf16.msra.mxu0 %v790
        %923 = vmatpush.bf16.msra.mxu0 %v788
        %924 = vmatmul.bf16.gmra.mxu0 %v588
        %v925 = vpop.f32.mrf.mxu0
        %v926 = vadd.f32 0.0, %v925
        %v927 = vpop.f32.mrf.mxu0
        %928 = vdwg.mxu0
        %929 = vmatpush.bf16.msra.mxu0 %v818
        %930 = vmatpush.bf16.msra.mxu0 %v816
        %931 = vmatpush.bf16.msra.mxu0 %v814
        %932 = vmatpush.bf16.msra.mxu0 %v812
        %933 = vmatpush.bf16.msra.mxu0 %v810
        %934 = vmatpush.bf16.msra.mxu0 %v808
        %935 = vmatpush.bf16.msra.mxu0 %v806
        %936 = vmatpush.bf16.msra.mxu0 %v804
        %937 = vmatmul.bf16.gmra.mxu0 %v589
        %v938 = vpop.f32.mrf.mxu0
        %v939 = vadd.f32 %v926, %v938
        %v940 = vpop.f32.mrf.mxu0
        %941 = vdwg.mxu0
        %942 = vmatpush.bf16.msra.mxu0 %v834
        %943 = vmatpush.bf16.msra.mxu0 %v832
        %944 = vmatpush.bf16.msra.mxu0 %v830
        %945 = vmatpush.bf16.msra.mxu0 %v828
        %946 = vmatpush.bf16.msra.mxu0 %v826
        %947 = vmatpush.bf16.msra.mxu0 %v824
        %948 = vmatpush.bf16.msra.mxu0 %v822
        %949 = vmatpush.bf16.msra.mxu0 %v820
        %950 = vmatmul.bf16.gmra.mxu0 %v590
        %v951 = vpop.f32.mrf.mxu0
        %v952 = vadd.f32 %v939, %v951
        %v953 = vpop.f32.mrf.mxu0
        %954 = vdwg.mxu0
        %955 = vmatpush.bf16.msra.mxu0 %v850
        %956 = vmatpush.bf16.msra.mxu0 %v848
        %957 = vmatpush.bf16.msra.mxu0 %v846
        %958 = vmatpush.bf16.msra.mxu0 %v844
        %959 = vmatpush.bf16.msra.mxu0 %v842
        %960 = vmatpush.bf16.msra.mxu0 %v840
        %961 = vmatpush.bf16.msra.mxu0 %v838
        %962 = vmatpush.bf16.msra.mxu0 %v836
        %963 = vmatmul.bf16.gmra.mxu0 %v591
        %v964 = vpop.f32.mrf.mxu0
        %v965 = vadd.f32 %v952, %v964
        %v966 = vpop.f32.mrf.mxu0
        %967 = vdwg.mxu0
        %968 = vmatpush.bf16.msra.mxu0 %v803
        %969 = vmatpush.bf16.msra.mxu0 %v801
        %970 = vmatpush.bf16.msra.mxu0 %v799
        %971 = vmatpush.bf16.msra.mxu0 %v797
        %972 = vmatpush.bf16.msra.mxu0 %v795
        %973 = vmatpush.bf16.msra.mxu0 %v793
        %974 = vmatpush.bf16.msra.mxu0 %v791
        %975 = vmatpush.bf16.msra.mxu0 %v789
        %976 = vmatmul.bf16.gmra.mxu0 %v588
        %v977 = vpop.f32.mrf.mxu0
        %v978 = vadd.f32 0.0, %v977
        %v979 = vpop.f32.mrf.mxu0
        %980 = vdwg.mxu0
        %981 = vmatpush.bf16.msra.mxu0 %v819
        %982 = vmatpush.bf16.msra.mxu0 %v817
        %983 = vmatpush.bf16.msra.mxu0 %v815
        %984 = vmatpush.bf16.msra.mxu0 %v813
        %985 = vmatpush.bf16.msra.mxu0 %v811
        %986 = vmatpush.bf16.msra.mxu0 %v809
        %987 = vmatpush.bf16.msra.mxu0 %v807
        %988 = vmatpush.bf16.msra.mxu0 %v805
        %989 = vmatmul.bf16.gmra.mxu0 %v589
        %v990 = vpop.f32.mrf.mxu0
        %v991 = vadd.f32 %v978, %v990
        %v992 = vpop.f32.mrf.mxu0
        %993 = vdwg.mxu0
        %994 = vmatpush.bf16.msra.mxu0 %v835
        %995 = vmatpush.bf16.msra.mxu0 %v833
        %996 = vmatpush.bf16.msra.mxu0 %v831
        %997 = vmatpush.bf16.msra.mxu0 %v829
        %998 = vmatpush.bf16.msra.mxu0 %v827
        %999 = vmatpush.bf16.msra.mxu0 %v825
        %1000 = vmatpush.bf16.msra.mxu0 %v823
        %1001 = vmatpush.bf16.msra.mxu0 %v821
        %1002 = vmatmul.bf16.gmra.mxu0 %v590
        %v1003 = vpop.f32.mrf.mxu0
        %v1004 = vadd.f32 %v991, %v1003
        %v1005 = vpop.f32.mrf.mxu0
        %1006 = vdwg.mxu0
        %1007 = vmatpush.bf16.msra.mxu0 %v851
        %1008 = vmatpush.bf16.msra.mxu0 %v849
        %1009 = vmatpush.bf16.msra.mxu0 %v847
        %1010 = vmatpush.bf16.msra.mxu0 %v845
        %1011 = vmatpush.bf16.msra.mxu0 %v843
        %1012 = vmatpush.bf16.msra.mxu0 %v841
        %1013 = vmatpush.bf16.msra.mxu0 %v839
        %1014 = vmatpush.bf16.msra.mxu0 %v837
        %1015 = vmatmul.bf16.gmra.mxu0 %v591
        %v1016 = vpop.f32.mrf.mxu0
        %v1017 = vadd.f32 %v1004, %v1016
        %v1018 = vpop.f32.mrf.mxu0
        %1019 = vdwg.mxu0
        %v1022 = vrot.slane %v1017, 6
        %vm1023 = vcmask 1041408
        %v1024 = vsel %vm1023, %v965, %v1022
        %v1026 = vadd.f32 %v520, %v1024
        %1027 = vst [vmem:[#allocation2] sm:$0xf] %v1026
        // Predicated region
        $region75: #{siamese_forward.20} parent=65 // pred_check
          %p1028 = pneg %p515
        $region76: #{siamese_forward.20} parent=65 // pred_check_branch
          %1030 = sbr.rel (%p1028) target = $region78
        $region77: #{siamese_forward.20} parent=65 // pred_region
          %v1031 = vld [vmem:[#allocation2] sm:$0xf]
          %v1032 = vld [vmem:[%s508] sm:$0x3]
          %v1034 = vperm.slane %v1032, 0
          %v1035 = vperm.slane %v1032, 1
          %v1036 = vrot.slane %v1035, 6
          %v1037 = vsel %vm1023, %v1034, %v1036
          %v1039 = vadd.f32 %v1031, %v1037
          %v1040 = vmax.f32 %v1039, 0.0
          %1042 = vst [vmem:[#allocation1] ss:$4 sm:$0xff] %v1040
          %v1043 = vld.sshfl [vmem:[#allocation1] sm:$0xff pattern:$0x73625140]
          %v1044 = vld.sshfl [vmem:[#allocation1 + $0x8] sm:$0xff pattern:$0x73625140]
          %v1047 = vpack.c.bf16 %v1044, %v1043
          %v1049 = vrot.slane %v1047, 3
          %vm1050 = vcmask 1040384
          %v1053 = vsel %vm1050, %v1047, %v1049
          %1055 = vst [vmem:[%s513] sm:$0x3] %v1053
        $region78: #{siamese_forward.20} parent=65 // pred_fallthru
          _
        %s1056 = smul.u32 2, %s18
        %p1057 = scmp.lt.s32.totalorder %s1056, 3
        %s1058 = scalar_select %p1057, %s1056, 3
        %s1059 = scalar_lea.vmem %s3, %s1058
        // Predicated region
        $region79: #{siamese_forward.20} parent=65 // pred_check
          %p1060 = pneg %p124
        $region80: #{siamese_forward.20} parent=65 // pred_check_branch
          %1062 = sbr.rel (%p1060) target = $region82
        $region81: #{siamese_forward.20} parent=65 // pred_region
          %s1063 = smul.u32 2, %s18
        $region82: #{siamese_forward.20} parent=65 // pred_fallthru
          _
      $region66: #{siamese_forward.20} parent=5 // pred_fallthru
        _
      %p1064 = scmp.le.s32.totalorder 2, %s9
      // Predicated region
      $region83: #{siamese_forward.20} parent=5 // pred_check
        %p1065 = pneg %p1064
      $region84: #{siamese_forward.20} parent=5 // pred_check_branch
        %1067 = sbr.rel (%p1065) target = $region86
      $region85: #{siamese_forward.20} parent=5 // pred_region
        %s1068 = ssub.s32 %s9, 2
        // Predicated region
        $region87: #{siamese_forward.20} parent=85 // pred_check
          %p1069 = pneg %p130
        $region88: #{siamese_forward.20} parent=85 // pred_check_branch
          %1071 = sbr.rel (%p1069) target = $region90
        $region89: #{siamese_forward.20} parent=85 // pred_region
          %s1072 = smul.u32 2, %s20
          %p1073 = scmp.lt.s32.totalorder %s1072, 3
          %s1074 = scalar_select %p1073, %s1072, 3
          %s1075 = scalar_lea.vmem %s3, %s1074
        $region90: #{siamese_forward.20} parent=85 // pred_fallthru
          _
      $region86: #{siamese_forward.20} parent=5 // pred_fallthru
        _
    $region6: #{siamese_forward.20} parent=1 // loop_footer
      %s13 = sadd.s32 1, %s9
    $region7: #{siamese_forward.20} parent=1 // loop_footer_branch
      %8 = sbr.rel target = $region3
    $region8: #{siamese_forward.20} parent=1 // loop_exit
      _

// kernel: siamese_forward.19
$region0: #{siamese_forward.19}
  #allocation0 [shape = 'u32[]', space=smem, size = 0x4, offset = 0x4, fixed_abs, tag = 'smem constant byte address 0x4 - core index']
  #allocation1 [shape = 'u32[72,128]{1,0:T(1,128)}', space=vmem, size = 0x9000, scoped, tag = 'internal scratch']
  #allocation2 [shape = 'f32[2,256]{1,0:T(2,128)}', space=vmem, size = 0x800, scoped, tag = 'scratch operand']
  %s0 = inlined_call_operand.vmem [shape: bf16[2,8192], index: 0, kind: input, shape index: {}]
  %s1 = inlined_call_operand.hbm [shape: bf16[8192,512], index: 1, kind: input, shape index: {}]
  %s2 = inlined_call_operand.vmem [shape: f32[1,512], index: 2, kind: input, shape index: {}]
  %s3 = inlined_call_operand.vmem [shape: bf16[2,512], index: 3, kind: output, shape index: {}]
  %s4 = sld [smem:[#allocation0]]
  $region57: #{siamese_forward.19} parent=0
    _
  %s6 = ssub.s32 1, %s4
  %s7 = scalar_select 0, %s6, %s4
  $region1: #{siamese_forward.19} parent=0
    #allocation3 [shape = 'u8[2097152]{0}', space=vmem, size = 0x200000, scoped, tag = 'input window, operand 1']
    #allocation4 [shape = 's32[2]{0}', space=sflag, size = 0x8, scoped, tag = 'scoped memory for siamese_forward.19']
    %8 = vsyncpa [#allocation4], 0
    %s9 = scalar_lea.sflag [#allocation4], 1
    %10 = vsyncpa %s9, 0
    loop: start=0, step=1, limit=10
    $region2: #{siamese_forward.19} parent=1 // loop_pre_header
      _
    $region3: #{siamese_forward.19} parent=1 // loop_header
      %s12 = sphi 0, %s16
      %p13 = scmp.ge.s32.totalorder %s12, 10
      %s19 = sphi 0, %s31
      %s20 = sphi 0, %s27
      %s21 = sphi 0, %s19
      %s22 = sphi 0, %s20
      %s23 = sphi 0, %s21
      %s24 = sphi 0, %s22
      %s34 = sphi 0, %s36
      %s37 = sphi 0, %s34
      %s38 = sphi 0, %s37
      %s54 = sphi 0, %s38
      %s62 = sphi 0, %s64
      %s65 = sphi 0, %s62
      %s66 = sphi 0, %s65
      %s82 = sphi 0, %s66
      %s88 = sphi 0, %s90
      %s91 = sphi 0, %s88
      %s92 = sphi 0, %s91
      %s108 = sphi 0, %s92
      %s114 = sphi 0, %s116
      %s117 = sphi 0, %s114
      %s118 = sphi 0, %s117
      %s134 = sphi 0, %s118
    $region4: #{siamese_forward.19} parent=1 // loop_header_branch
      %15 = sbr.rel (%p13) target = $region8
    $region5: #{siamese_forward.19} parent=1 // loop_body
      %s17 = ssub.s32 %s12, 1
      %s18 = ssub.s32 %s12, 2
      %s25 = sadd.s32 1, %s20
      %p26 = scmp.ge.s32.totalorder %s25, 4
      %s27 = scalar_select %p26, 0, %s25
      %s28 = sadd.s32 1, %s19
      %s29 = scalar_select %p26, %s28, %s19
      %p30 = scmp.ge.s32.totalorder %s29, 2
      %s31 = scalar_select %p30, 0, %s29
      %s32 = ssub.s32 %s20, %s27
      %p33 = scmp.eq.s32.totalorder %s32, 0
      %s35 = sadd.s32 %s34, 1
      %s36 = scalar_select %p33, %s34, %s35
      %p39 = pneg %p33
      %p40 = scmp.eq.s32.totalorder %s12, 7
      %p41 = por %p39, %p40
      %p42 = scmp.ne.s32.totalorder %s34, %s37
      %p43 = scmp.eq.s32.totalorder %s12, 0
      %p44 = por %p42, %p43
      %p45 = scmp.ne.s32.totalorder %s34, %s37
      %p46 = scmp.eq.s32.totalorder %s17, 7
      %p47 = por %p45, %p46
      %p48 = scmp.ne.s32.totalorder %s37, %s38
      %p49 = scmp.eq.s32.totalorder %s17, 0
      %p50 = por %p48, %p49
      %p51 = scmp.ne.s32.totalorder %s37, %s38
      %p52 = scmp.eq.s32.totalorder %s18, 7
      %p53 = por %p51, %p52
      %p55 = scmp.ne.s32.totalorder %s38, %s54
      %p56 = scmp.eq.s32.totalorder %s18, 0
      %p57 = por %p55, %p56
      %s58 = ssub.s32 %s20, %s27
      %s59 = ssub.s32 %s19, %s31
      %s60 = sor.u32 %s58, %s59
      %p61 = scmp.eq.s32.totalorder %s60, 0
      %s63 = sadd.s32 %s62, 1
      %s64 = scalar_select %p61, %s62, %s63
      %p67 = pneg %p61
      %p68 = scmp.eq.s32.totalorder %s12, 7
      %p69 = por %p67, %p68
      %p70 = scmp.ne.s32.totalorder %s62, %s65
      %p71 = scmp.eq.s32.totalorder %s12, 0
      %p72 = por %p70, %p71
      %p73 = scmp.ne.s32.totalorder %s62, %s65
      %p74 = scmp.eq.s32.totalorder %s17, 7
      %p75 = por %p73, %p74
      %p76 = scmp.ne.s32.totalorder %s65, %s66
      %p77 = scmp.eq.s32.totalorder %s17, 0
      %p78 = por %p76, %p77
      %p79 = scmp.ne.s32.totalorder %s65, %s66
      %p80 = scmp.eq.s32.totalorder %s18, 7
      %p81 = por %p79, %p80
      %p83 = scmp.ne.s32.totalorder %s66, %s82
      %p84 = scmp.eq.s32.totalorder %s18, 0
      %p85 = por %p83, %p84
      %s86 = ssub.s32 %s19, %s31
      %p87 = scmp.eq.s32.totalorder %s86, 0
      %s89 = sadd.s32 %s88, 1
      %s90 = scalar_select %p87, %s88, %s89
      %p93 = pneg %p87
      %p94 = scmp.eq.s32.totalorder %s12, 7
      %p95 = por %p93, %p94
      %p96 = scmp.ne.s32.totalorder %s88, %s91
      %p97 = scmp.eq.s32.totalorder %s12, 0
      %p98 = por %p96, %p97
      %p99 = scmp.ne.s32.totalorder %s88, %s91
      %p100 = scmp.eq.s32.totalorder %s17, 7
      %p101 = por %p99, %p100
      %p102 = scmp.ne.s32.totalorder %s91, %s92
      %p103 = scmp.eq.s32.totalorder %s17, 0
      %p104 = por %p102, %p103
      %p105 = scmp.ne.s32.totalorder %s91, %s92
      %p106 = scmp.eq.s32.totalorder %s18, 7
      %p107 = por %p105, %p106
      %p109 = scmp.ne.s32.totalorder %s92, %s108
      %p110 = scmp.eq.s32.totalorder %s18, 0
      %p111 = por %p109, %p110
      %s112 = ssub.s32 %s19, %s31
      %p113 = scmp.eq.s32.totalorder %s112, 0
      %s115 = sadd.s32 %s114, 1
      %s116 = scalar_select %p113, %s114, %s115
      %p119 = pneg %p113
      %p120 = scmp.eq.s32.totalorder %s12, 7
      %p121 = por %p119, %p120
      %p122 = scmp.ne.s32.totalorder %s114, %s117
      %p123 = scmp.eq.s32.totalorder %s12, 0
      %p124 = por %p122, %p123
      %p125 = scmp.ne.s32.totalorder %s114, %s117
      %p126 = scmp.eq.s32.totalorder %s17, 7
      %p127 = por %p125, %p126
      %p128 = scmp.ne.s32.totalorder %s117, %s118
      %p129 = scmp.eq.s32.totalorder %s17, 0
      %p130 = por %p128, %p129
      %p131 = scmp.ne.s32.totalorder %s117, %s118
      %p132 = scmp.eq.s32.totalorder %s18, 7
      %p133 = por %p131, %p132
      %p135 = scmp.ne.s32.totalorder %s118, %s134
      %p136 = scmp.eq.s32.totalorder %s18, 0
      %p137 = por %p135, %p136
      %p138 = scmp.le.s32.totalorder 1, %s12
      %p139 = scmp.lt.s32.totalorder %s12, 9
      %p140 = pnand %p138, %p139
      %p141 = pneg %p140
      // Predicated region
      $region9: #{siamese_forward.19} parent=5 // pred_check
        _
      $region10: #{siamese_forward.19} parent=5 // pred_check_branch
        %143 = sbr.rel (%p140) target = $region12
      $region11: #{siamese_forward.19} parent=5 // pred_region
        %s144 = ssub.s32 %s12, 1
      $region12: #{siamese_forward.19} parent=5 // pred_fallthru
        _
      %p145 = scmp.lt.s32.totalorder %s12, 8
      // Predicated region
      $region13: #{siamese_forward.19} parent=5 // pred_check
        %p146 = pneg %p145
      $region14: #{siamese_forward.19} parent=5 // pred_check_branch
        %148 = sbr.rel (%p146) target = $region16
      $region15: #{siamese_forward.19} parent=5 // pred_region
        // Predicated region
        $region17: #{siamese_forward.19} parent=15 // pred_check
          %p149 = pneg %p44
        $region18: #{siamese_forward.19} parent=15 // pred_check_branch
          %151 = sbr.rel (%p149) target = $region20
        $region19: #{siamese_forward.19} parent=15 // pred_region
          %s152 = smul.u32 16, %s20
          %p153 = scmp.lt.s32.totalorder %s152, 63
          %s154 = scalar_select %p153, %s152, 63
          %s155 = scalar_lea.vmem %s0, %s154
          %s156 = smul.u32 16, %s20
        $region20: #{siamese_forward.19} parent=15 // pred_fallthru
          _
        // Predicated region
        $region21: #{siamese_forward.19} parent=15 // pred_check
          %p157 = pneg %p72
        $region22: #{siamese_forward.19} parent=15 // pred_check_branch
          %159 = sbr.rel (%p157) target = $region24
        $region23: #{siamese_forward.19} parent=15 // pred_region
          %s160 = sand.u32 %s62, 1
          %s161 = scalar_lea.sflag [#allocation4], %s160
          %s162 = sand.u32 %s62, 1
          %s163 = smul.addr %s162, 2048
          %s164 = scalar_lea.vmem [#allocation3], %s163
          %s165 = smul.u32 256, %s20
          %s166 = smul.u32 2, %s19
          %168 = vsyncadd %s161, 0
          %s169 = smul.addr %s165, 4
          %s170 = sadd.s32 %s166, %s169
          %s171 = smul.addr %s170, 4
          %s172 = scalar_lea.hbm %s1, %s171
          %s173 = sshll.u32 %s172, 4
          %s174 = int_to_ptr.hbm [resolvable:$true] %s173
          %s175 = sshll.u32 %s164, 4
          %s176 = int_to_ptr.vmem [resolvable:$true] %s175
          %181 = dma.hbm_to_vmem [thread:$0]  %s174, 32768, %s176, %s161, 256, 128, 8
        $region24: #{siamese_forward.19} parent=15 // pred_fallthru
          _
        // Predicated region
        $region25: #{siamese_forward.19} parent=15 // pred_check
          %p182 = pneg %p98
        $region26: #{siamese_forward.19} parent=15 // pred_check_branch
          %184 = sbr.rel (%p182) target = $region28
        $region27: #{siamese_forward.19} parent=15 // pred_region
          %s185 = smul.u32 2, %s19
          %p186 = scmp.lt.s32.totalorder %s185, 3
          %s187 = scalar_select %p186, %s185, 3
          %s188 = scalar_lea.vmem %s2, %s187
          %s189 = smul.u32 2, %s19
        $region28: #{siamese_forward.19} parent=15 // pred_fallthru
          _
      $region16: #{siamese_forward.19} parent=5 // pred_fallthru
        _
      %p190 = scmp.le.s32.totalorder 1, %s12
      %p191 = scmp.lt.s32.totalorder %s12, 9
      %p192 = pnand %p190, %p191
      %p193 = pneg %p192
      // Predicated region
      $region29: #{siamese_forward.19} parent=5 // pred_check
        _
      $region30: #{siamese_forward.19} parent=5 // pred_check_branch
        %195 = sbr.rel (%p192) target = $region32
      $region31: #{siamese_forward.19} parent=5 // pred_region
        %s196 = ssub.s32 %s12, 1
        %s197 = sand.u32 %s65, 1
        %s198 = scalar_lea.sflag [#allocation4], %s197
        %s199 = sand.u32 %s65, 1
        %s200 = smul.addr %s199, 2048
        %s201 = scalar_lea.vmem [#allocation3], %s200
        // Predicated region
        $region33: #{siamese_forward.19} parent=31 // pred_check
          %p202 = pneg %p78
        $region34: #{siamese_forward.19} parent=31 // pred_check_branch
          %204 = sbr.rel (%p202) target = $region36
        $region35: #{siamese_forward.19} parent=31 // pred_region
          %206 = dma.done %s198, 32768
        $region36: #{siamese_forward.19} parent=31 // pred_fallthru
          _
        %s207 = smul.u32 16, %s22
        %p208 = scmp.lt.s32.totalorder %s207, 63
        %s209 = scalar_select %p208, %s207, 63
        %s210 = scalar_lea.vmem %s0, %s209
        %p211 = pneg %p50
        %p212 = pneg %p47
        %s213 = sand.u32 %s65, 1
        %s214 = scalar_lea.sflag [#allocation4], %s213
        %s215 = sand.u32 %s65, 1
        %s216 = smul.addr %s215, 2048
        %s217 = scalar_lea.vmem [#allocation3], %s216
        %p218 = pneg %p78
        %p219 = pneg %p75
        %s220 = smul.u32 2, %s21
        %p221 = scmp.lt.s32.totalorder %s220, 3
        %s222 = scalar_select %p221, %s220, 3
        %s223 = scalar_lea.vmem %s2, %s222
        %p224 = pneg %p104
        %p225 = pneg %p101
        %p226 = pneg %p130
        %p227 = pneg %p127
        %s228 = smul.u32 2, %s21
        %p229 = scmp.lt.s32.totalorder %s228, 3
        %s230 = scalar_select %p229, %s228, 3
        %s231 = scalar_lea.vmem %s3, %s230
        %s232 = smul.u32 16, %s22
        %p233 = scmp.lt.s32.totalorder %s232, 63
        %s234 = scalar_select %p233, %s232, 63
        %s235 = scalar_lea.vmem %s0, %s234
        %s236 = smul.u32 16, %s22
        %s237 = smul.u32 256, %s22
        %s238 = smul.u32 2, %s21
        %s239 = smul.u32 2, %s21
        %p240 = scmp.lt.s32.totalorder %s239, 3
        %s241 = scalar_select %p240, %s239, 3
        %s242 = scalar_lea.vmem %s2, %s241
        %s243 = smul.u32 2, %s21
        %s244 = smul.u32 2, %s21
        %p245 = scmp.lt.s32.totalorder %s244, 3
        %s246 = scalar_select %p245, %s244, 3
        %s247 = scalar_lea.vmem %s3, %s246
        %s248 = smul.u32 2, %s21
        %p249 = scmp.eq.s32.totalorder %s22, 0
        // Predicated region
        $region37: #{siamese_forward.19} parent=31 // pred_check
          %p250 = pneg %p249
        $region38: #{siamese_forward.19} parent=31 // pred_check_branch
          %252 = sbr.rel (%p250) target = $region40
        $region39: #{siamese_forward.19} parent=31 // pred_region
          %253 = vst [vmem:[#allocation2] sm:$0xf] 0.0
        $region40: #{siamese_forward.19} parent=31 // pred_fallthru
          _
        %v254 = vld [vmem:[#allocation2] sm:$0xf]
        %v255 = vld [vmem:[%s235] sm:$0xff]
        %v256 = vld [vmem:[%s235 + $0x8] sm:$0xff]
        %v257 = vld [vmem:[%s201] sm:$0xff]
        %v258 = vld [vmem:[%s201 + $0x8] sm:$0xff]
        %v259 = vld [vmem:[%s201 + $0x10] sm:$0xff]
        %v260 = vld [vmem:[%s201 + $0x18] sm:$0xff]
        %v261 = vld [vmem:[%s201 + $0x20] sm:$0xff]
        %v262 = vld [vmem:[%s201 + $0x28] sm:$0xff]
        %v263 = vld [vmem:[%s201 + $0x30] sm:$0xff]
        %v264 = vld [vmem:[%s201 + $0x38] sm:$0xff]
        %v265 = vld [vmem:[%s201 + $0x40] sm:$0xff]
        %v266 = vld [vmem:[%s201 + $0x48] sm:$0xff]
        %v267 = vld [vmem:[%s201 + $0x50] sm:$0xff]
        %v268 = vld [vmem:[%s201 + $0x58] sm:$0xff]
        %v269 = vld [vmem:[%s201 + $0x60] sm:$0xff]
        %v270 = vld [vmem:[%s201 + $0x68] sm:$0xff]
        %v271 = vld [vmem:[%s201 + $0x70] sm:$0xff]
        %v272 = vld [vmem:[%s201 + $0x78] sm:$0xff]
        %v273 = vld [vmem:[%s201 + $0x80] sm:$0xff]
        %v274 = vld [vmem:[%s201 + $0x88] sm:$0xff]
        %v275 = vld [vmem:[%s201 + $0x90] sm:$0xff]
        %v276 = vld [vmem:[%s201 + $0x98] sm:$0xff]
        %v277 = vld [vmem:[%s201 + $0xa0] sm:$0xff]
        %v278 = vld [vmem:[%s201 + $0xa8] sm:$0xff]
        %v279 = vld [vmem:[%s201 + $0xb0] sm:$0xff]
        %v280 = vld [vmem:[%s201 + $0xb8] sm:$0xff]
        %v281 = vld [vmem:[%s201 + $0xc0] sm:$0xff]
        %v282 = vld [vmem:[%s201 + $0xc8] sm:$0xff]
        %v283 = vld [vmem:[%s201 + $0xd0] sm:$0xff]
        %v284 = vld [vmem:[%s201 + $0xd8] sm:$0xff]
        %v285 = vld [vmem:[%s201 + $0xe0] sm:$0xff]
        %v286 = vld [vmem:[%s201 + $0xe8] sm:$0xff]
        %v287 = vld [vmem:[%s201 + $0xf0] sm:$0xff]
        %v288 = vld [vmem:[%s201 + $0xf8] sm:$0xff]
        %v289 = vld [vmem:[%s201 + $0x100] sm:$0xff]
        %v290 = vld [vmem:[%s201 + $0x108] sm:$0xff]
        %v291 = vld [vmem:[%s201 + $0x110] sm:$0xff]
        %v292 = vld [vmem:[%s201 + $0x118] sm:$0xff]
        %v293 = vld [vmem:[%s201 + $0x120] sm:$0xff]
        %v294 = vld [vmem:[%s201 + $0x128] sm:$0xff]
        %v295 = vld [vmem:[%s201 + $0x130] sm:$0xff]
        %v296 = vld [vmem:[%s201 + $0x138] sm:$0xff]
        %v297 = vld [vmem:[%s201 + $0x140] sm:$0xff]
        %v298 = vld [vmem:[%s201 + $0x148] sm:$0xff]
        %v299 = vld [vmem:[%s201 + $0x150] sm:$0xff]
        %v300 = vld [vmem:[%s201 + $0x158] sm:$0xff]
        %v301 = vld [vmem:[%s201 + $0x160] sm:$0xff]
        %v302 = vld [vmem:[%s201 + $0x168] sm:$0xff]
        %v303 = vld [vmem:[%s201 + $0x170] sm:$0xff]
        %v304 = vld [vmem:[%s201 + $0x178] sm:$0xff]
        %v305 = vld [vmem:[%s201 + $0x180] sm:$0xff]
        %v306 = vld [vmem:[%s201 + $0x188] sm:$0xff]
        %v307 = vld [vmem:[%s201 + $0x190] sm:$0xff]
        %v308 = vld [vmem:[%s201 + $0x198] sm:$0xff]
        %v309 = vld [vmem:[%s201 + $0x1a0] sm:$0xff]
        %v310 = vld [vmem:[%s201 + $0x1a8] sm:$0xff]
        %v311 = vld [vmem:[%s201 + $0x1b0] sm:$0xff]
        %v312 = vld [vmem:[%s201 + $0x1b8] sm:$0xff]
        %v313 = vld [vmem:[%s201 + $0x1c0] sm:$0xff]
        %v314 = vld [vmem:[%s201 + $0x1c8] sm:$0xff]
        %v315 = vld [vmem:[%s201 + $0x1d0] sm:$0xff]
        %v316 = vld [vmem:[%s201 + $0x1d8] sm:$0xff]
        %v317 = vld [vmem:[%s201 + $0x1e0] sm:$0xff]
        %v318 = vld [vmem:[%s201 + $0x1e8] sm:$0xff]
        %v319 = vld [vmem:[%s201 + $0x1f0] sm:$0xff]
        %v320 = vld [vmem:[%s201 + $0x1f8] sm:$0xff]
        %v321 = vld [vmem:[%s201 + $0x200] sm:$0xff]
        %v322 = vld [vmem:[%s201 + $0x208] sm:$0xff]
        %v323 = vld [vmem:[%s201 + $0x210] sm:$0xff]
        %v324 = vld [vmem:[%s201 + $0x218] sm:$0xff]
        %v325 = vld [vmem:[%s201 + $0x220] sm:$0xff]
        %v326 = vld [vmem:[%s201 + $0x228] sm:$0xff]
        %v327 = vld [vmem:[%s201 + $0x230] sm:$0xff]
        %v328 = vld [vmem:[%s201 + $0x238] sm:$0xff]
        %v329 = vld [vmem:[%s201 + $0x240] sm:$0xff]
        %v330 = vld [vmem:[%s201 + $0x248] sm:$0xff]
        %v331 = vld [vmem:[%s201 + $0x250] sm:$0xff]
        %v332 = vld [vmem:[%s201 + $0x258] sm:$0xff]
        %v333 = vld [vmem:[%s201 + $0x260] sm:$0xff]
        %v334 = vld [vmem:[%s201 + $0x268] sm:$0xff]
        %v335 = vld [vmem:[%s201 + $0x270] sm:$0xff]
        %v336 = vld [vmem:[%s201 + $0x278] sm:$0xff]
        %v337 = vld [vmem:[%s201 + $0x280] sm:$0xff]
        %v338 = vld [vmem:[%s201 + $0x288] sm:$0xff]
        %v339 = vld [vmem:[%s201 + $0x290] sm:$0xff]
        %v340 = vld [vmem:[%s201 + $0x298] sm:$0xff]
        %v341 = vld [vmem:[%s201 + $0x2a0] sm:$0xff]
        %v342 = vld [vmem:[%s201 + $0x2a8] sm:$0xff]
        %v343 = vld [vmem:[%s201 + $0x2b0] sm:$0xff]
        %v344 = vld [vmem:[%s201 + $0x2b8] sm:$0xff]
        %v345 = vld [vmem:[%s201 + $0x2c0] sm:$0xff]
        %v346 = vld [vmem:[%s201 + $0x2c8] sm:$0xff]
        %v347 = vld [vmem:[%s201 + $0x2d0] sm:$0xff]
        %v348 = vld [vmem:[%s201 + $0x2d8] sm:$0xff]
        %v349 = vld [vmem:[%s201 + $0x2e0] sm:$0xff]
        %v350 = vld [vmem:[%s201 + $0x2e8] sm:$0xff]
        %v351 = vld [vmem:[%s201 + $0x2f0] sm:$0xff]
        %v352 = vld [vmem:[%s201 + $0x2f8] sm:$0xff]
        %v353 = vld [vmem:[%s201 + $0x300] sm:$0xff]
        %v354 = vld [vmem:[%s201 + $0x308] sm:$0xff]
        %v355 = vld [vmem:[%s201 + $0x310] sm:$0xff]
        %v356 = vld [vmem:[%s201 + $0x318] sm:$0xff]
        %v357 = vld [vmem:[%s201 + $0x320] sm:$0xff]
        %v358 = vld [vmem:[%s201 + $0x328] sm:$0xff]
        %v359 = vld [vmem:[%s201 + $0x330] sm:$0xff]
        %v360 = vld [vmem:[%s201 + $0x338] sm:$0xff]
        %v361 = vld [vmem:[%s201 + $0x340] sm:$0xff]
        %v362 = vld [vmem:[%s201 + $0x348] sm:$0xff]
        %v363 = vld [vmem:[%s201 + $0x350] sm:$0xff]
        %v364 = vld [vmem:[%s201 + $0x358] sm:$0xff]
        %v365 = vld [vmem:[%s201 + $0x360] sm:$0xff]
        %v366 = vld [vmem:[%s201 + $0x368] sm:$0xff]
        %v367 = vld [vmem:[%s201 + $0x370] sm:$0xff]
        %v368 = vld [vmem:[%s201 + $0x378] sm:$0xff]
        %v369 = vld [vmem:[%s201 + $0x380] sm:$0xff]
        %v370 = vld [vmem:[%s201 + $0x388] sm:$0xff]
        %v371 = vld [vmem:[%s201 + $0x390] sm:$0xff]
        %v372 = vld [vmem:[%s201 + $0x398] sm:$0xff]
        %v373 = vld [vmem:[%s201 + $0x3a0] sm:$0xff]
        %v374 = vld [vmem:[%s201 + $0x3a8] sm:$0xff]
        %v375 = vld [vmem:[%s201 + $0x3b0] sm:$0xff]
        %v376 = vld [vmem:[%s201 + $0x3b8] sm:$0xff]
        %v377 = vld [vmem:[%s201 + $0x3c0] sm:$0xff]
        %v378 = vld [vmem:[%s201 + $0x3c8] sm:$0xff]
        %v379 = vld [vmem:[%s201 + $0x3d0] sm:$0xff]
        %v380 = vld [vmem:[%s201 + $0x3d8] sm:$0xff]
        %v381 = vld [vmem:[%s201 + $0x3e0] sm:$0xff]
        %v382 = vld [vmem:[%s201 + $0x3e8] sm:$0xff]
        %v383 = vld [vmem:[%s201 + $0x3f0] sm:$0xff]
        %v384 = vld [vmem:[%s201 + $0x3f8] sm:$0xff]
        %v385 = vld [vmem:[%s201 + $0x400] sm:$0xff]
        %v386 = vld [vmem:[%s201 + $0x408] sm:$0xff]
        %v387 = vld [vmem:[%s201 + $0x410] sm:$0xff]
        %v388 = vld [vmem:[%s201 + $0x418] sm:$0xff]
        %v389 = vld [vmem:[%s201 + $0x420] sm:$0xff]
        %v390 = vld [vmem:[%s201 + $0x428] sm:$0xff]
        %v391 = vld [vmem:[%s201 + $0x430] sm:$0xff]
        %v392 = vld [vmem:[%s201 + $0x438] sm:$0xff]
        %v393 = vld [vmem:[%s201 + $0x440] sm:$0xff]
        %v394 = vld [vmem:[%s201 + $0x448] sm:$0xff]
        %v395 = vld [vmem:[%s201 + $0x450] sm:$0xff]
        %v396 = vld [vmem:[%s201 + $0x458] sm:$0xff]
        %v397 = vld [vmem:[%s201 + $0x460] sm:$0xff]
        %v398 = vld [vmem:[%s201 + $0x468] sm:$0xff]
        %v399 = vld [vmem:[%s201 + $0x470] sm:$0xff]
        %v400 = vld [vmem:[%s201 + $0x478] sm:$0xff]
        %v401 = vld [vmem:[%s201 + $0x480] sm:$0xff]
        %v402 = vld [vmem:[%s201 + $0x488] sm:$0xff]
        %v403 = vld [vmem:[%s201 + $0x490] sm:$0xff]
        %v404 = vld [vmem:[%s201 + $0x498] sm:$0xff]
        %v405 = vld [vmem:[%s201 + $0x4a0] sm:$0xff]
        %v406 = vld [vmem:[%s201 + $0x4a8] sm:$0xff]
        %v407 = vld [vmem:[%s201 + $0x4b0] sm:$0xff]
        %v408 = vld [vmem:[%s201 + $0x4b8] sm:$0xff]
        %v409 = vld [vmem:[%s201 + $0x4c0] sm:$0xff]
        %v410 = vld [vmem:[%s201 + $0x4c8] sm:$0xff]
        %v411 = vld [vmem:[%s201 + $0x4d0] sm:$0xff]
        %v412 = vld [vmem:[%s201 + $0x4d8] sm:$0xff]
        %v413 = vld [vmem:[%s201 + $0x4e0] sm:$0xff]
        %v414 = vld [vmem:[%s201 + $0x4e8] sm:$0xff]
        %v415 = vld [vmem:[%s201 + $0x4f0] sm:$0xff]
        %v416 = vld [vmem:[%s201 + $0x4f8] sm:$0xff]
        %v417 = vld [vmem:[%s201 + $0x500] sm:$0xff]
        %v418 = vld [vmem:[%s201 + $0x508] sm:$0xff]
        %v419 = vld [vmem:[%s201 + $0x510] sm:$0xff]
        %v420 = vld [vmem:[%s201 + $0x518] sm:$0xff]
        %v421 = vld [vmem:[%s201 + $0x520] sm:$0xff]
        %v422 = vld [vmem:[%s201 + $0x528] sm:$0xff]
        %v423 = vld [vmem:[%s201 + $0x530] sm:$0xff]
        %v424 = vld [vmem:[%s201 + $0x538] sm:$0xff]
        %v425 = vld [vmem:[%s201 + $0x540] sm:$0xff]
        %v426 = vld [vmem:[%s201 + $0x548] sm:$0xff]
        %v427 = vld [vmem:[%s201 + $0x550] sm:$0xff]
        %v428 = vld [vmem:[%s201 + $0x558] sm:$0xff]
        %v429 = vld [vmem:[%s201 + $0x560] sm:$0xff]
        %v430 = vld [vmem:[%s201 + $0x568] sm:$0xff]
        %v431 = vld [vmem:[%s201 + $0x570] sm:$0xff]
        %v432 = vld [vmem:[%s201 + $0x578] sm:$0xff]
        %v433 = vld [vmem:[%s201 + $0x580] sm:$0xff]
        %v434 = vld [vmem:[%s201 + $0x588] sm:$0xff]
        %v435 = vld [vmem:[%s201 + $0x590] sm:$0xff]
        %v436 = vld [vmem:[%s201 + $0x598] sm:$0xff]
        %v437 = vld [vmem:[%s201 + $0x5a0] sm:$0xff]
        %v438 = vld [vmem:[%s201 + $0x5a8] sm:$0xff]
        %v439 = vld [vmem:[%s201 + $0x5b0] sm:$0xff]
        %v440 = vld [vmem:[%s201 + $0x5b8] sm:$0xff]
        %v441 = vld [vmem:[%s201 + $0x5c0] sm:$0xff]
        %v442 = vld [vmem:[%s201 + $0x5c8] sm:$0xff]
        %v443 = vld [vmem:[%s201 + $0x5d0] sm:$0xff]
        %v444 = vld [vmem:[%s201 + $0x5d8] sm:$0xff]
        %v445 = vld [vmem:[%s201 + $0x5e0] sm:$0xff]
        %v446 = vld [vmem:[%s201 + $0x5e8] sm:$0xff]
        %v447 = vld [vmem:[%s201 + $0x5f0] sm:$0xff]
        %v448 = vld [vmem:[%s201 + $0x5f8] sm:$0xff]
        %v449 = vld [vmem:[%s201 + $0x600] sm:$0xff]
        %v450 = vld [vmem:[%s201 + $0x608] sm:$0xff]
        %v451 = vld [vmem:[%s201 + $0x610] sm:$0xff]
        %v452 = vld [vmem:[%s201 + $0x618] sm:$0xff]
        %v453 = vld [vmem:[%s201 + $0x620] sm:$0xff]
        %v454 = vld [vmem:[%s201 + $0x628] sm:$0xff]
        %v455 = vld [vmem:[%s201 + $0x630] sm:$0xff]
        %v456 = vld [vmem:[%s201 + $0x638] sm:$0xff]
        %v457 = vld [vmem:[%s201 + $0x640] sm:$0xff]
        %v458 = vld [vmem:[%s201 + $0x648] sm:$0xff]
        %v459 = vld [vmem:[%s201 + $0x650] sm:$0xff]
        %v460 = vld [vmem:[%s201 + $0x658] sm:$0xff]
        %v461 = vld [vmem:[%s201 + $0x660] sm:$0xff]
        %v462 = vld [vmem:[%s201 + $0x668] sm:$0xff]
        %v463 = vld [vmem:[%s201 + $0x670] sm:$0xff]
        %v464 = vld [vmem:[%s201 + $0x678] sm:$0xff]
        %v465 = vld [vmem:[%s201 + $0x680] sm:$0xff]
        %v466 = vld [vmem:[%s201 + $0x688] sm:$0xff]
        %v467 = vld [vmem:[%s201 + $0x690] sm:$0xff]
        %v468 = vld [vmem:[%s201 + $0x698] sm:$0xff]
        %v469 = vld [vmem:[%s201 + $0x6a0] sm:$0xff]
        %v470 = vld [vmem:[%s201 + $0x6a8] sm:$0xff]
        %v471 = vld [vmem:[%s201 + $0x6b0] sm:$0xff]
        %v472 = vld [vmem:[%s201 + $0x6b8] sm:$0xff]
        %v473 = vld [vmem:[%s201 + $0x6c0] sm:$0xff]
        %v474 = vld [vmem:[%s201 + $0x6c8] sm:$0xff]
        %v475 = vld [vmem:[%s201 + $0x6d0] sm:$0xff]
        %v476 = vld [vmem:[%s201 + $0x6d8] sm:$0xff]
        %v477 = vld [vmem:[%s201 + $0x6e0] sm:$0xff]
        %v478 = vld [vmem:[%s201 + $0x6e8] sm:$0xff]
        %v479 = vld [vmem:[%s201 + $0x6f0] sm:$0xff]
        %v480 = vld [vmem:[%s201 + $0x6f8] sm:$0xff]
        %v481 = vld [vmem:[%s201 + $0x700] sm:$0xff]
        %v482 = vld [vmem:[%s201 + $0x708] sm:$0xff]
        %v483 = vld [vmem:[%s201 + $0x710] sm:$0xff]
        %v484 = vld [vmem:[%s201 + $0x718] sm:$0xff]
        %v485 = vld [vmem:[%s201 + $0x720] sm:$0xff]
        %v486 = vld [vmem:[%s201 + $0x728] sm:$0xff]
        %v487 = vld [vmem:[%s201 + $0x730] sm:$0xff]
        %v488 = vld [vmem:[%s201 + $0x738] sm:$0xff]
        %v489 = vld [vmem:[%s201 + $0x740] sm:$0xff]
        %v490 = vld [vmem:[%s201 + $0x748] sm:$0xff]
        %v491 = vld [vmem:[%s201 + $0x750] sm:$0xff]
        %v492 = vld [vmem:[%s201 + $0x758] sm:$0xff]
        %v493 = vld [vmem:[%s201 + $0x760] sm:$0xff]
        %v494 = vld [vmem:[%s201 + $0x768] sm:$0xff]
        %v495 = vld [vmem:[%s201 + $0x770] sm:$0xff]
        %v496 = vld [vmem:[%s201 + $0x778] sm:$0xff]
        %v497 = vld [vmem:[%s201 + $0x780] sm:$0xff]
        %v498 = vld [vmem:[%s201 + $0x788] sm:$0xff]
        %v499 = vld [vmem:[%s201 + $0x790] sm:$0xff]
        %v500 = vld [vmem:[%s201 + $0x798] sm:$0xff]
        %v501 = vld [vmem:[%s201 + $0x7a0] sm:$0xff]
        %v502 = vld [vmem:[%s201 + $0x7a8] sm:$0xff]
        %v503 = vld [vmem:[%s201 + $0x7b0] sm:$0xff]
        %v504 = vld [vmem:[%s201 + $0x7b8] sm:$0xff]
        %v505 = vld [vmem:[%s201 + $0x7c0] sm:$0xff]
        %v506 = vld [vmem:[%s201 + $0x7c8] sm:$0xff]
        %v507 = vld [vmem:[%s201 + $0x7d0] sm:$0xff]
        %v508 = vld [vmem:[%s201 + $0x7d8] sm:$0xff]
        %v509 = vld [vmem:[%s201 + $0x7e0] sm:$0xff]
        %v510 = vld [vmem:[%s201 + $0x7e8] sm:$0xff]
        %v511 = vld [vmem:[%s201 + $0x7f0] sm:$0xff]
        %v512 = vld [vmem:[%s201 + $0x7f8] sm:$0xff]
        %514 = vst [vmem:[#allocation1] ss:$9 sm:$0xff] %v255
        %v515 = vld [vmem:[#allocation1] sm:$0xff]
        %v516 = vld [vmem:[#allocation1 + $0x9] sm:$0xff]
        %v517 = vld [vmem:[#allocation1 + $0x12] sm:$0xff]
        %v518 = vld [vmem:[#allocation1 + $0x1b] sm:$0xff]
        %v519 = vld [vmem:[#allocation1 + $0x24] sm:$0xff]
        %v520 = vld [vmem:[#allocation1 + $0x2d] sm:$0xff]
        %v521 = vld [vmem:[#allocation1 + $0x36] sm:$0xff]
        %v522 = vld [vmem:[#allocation1 + $0x3f] sm:$0xff]
        %524 = vst [vmem:[#allocation1] ss:$9 sm:$0xff] %v256
        %v525 = vld [vmem:[#allocation1] sm:$0xff]
        %v526 = vld [vmem:[#allocation1 + $0x9] sm:$0xff]
        %v527 = vld [vmem:[#allocation1 + $0x12] sm:$0xff]
        %v528 = vld [vmem:[#allocation1 + $0x1b] sm:$0xff]
        %v529 = vld [vmem:[#allocation1 + $0x24] sm:$0xff]
        %v530 = vld [vmem:[#allocation1 + $0x2d] sm:$0xff]
        %v531 = vld [vmem:[#allocation1 + $0x36] sm:$0xff]
        %v532 = vld [vmem:[#allocation1 + $0x3f] sm:$0xff]
        %v805 = vunpack.c.l.b16 %v257
        %v806 = vunpack.c.h.b16 %v257
        %v807 = vunpack.c.l.b16 %v258
        %v808 = vunpack.c.h.b16 %v258
        %v809 = vunpack.c.l.b16 %v259
        %v810 = vunpack.c.h.b16 %v259
        %v811 = vunpack.c.l.b16 %v260
        %v812 = vunpack.c.h.b16 %v260
        %v813 = vunpack.c.l.b16 %v261
        %v814 = vunpack.c.h.b16 %v261
        %v815 = vunpack.c.l.b16 %v262
        %v816 = vunpack.c.h.b16 %v262
        %v817 = vunpack.c.l.b16 %v263
        %v818 = vunpack.c.h.b16 %v263
        %v819 = vunpack.c.l.b16 %v264
        %v820 = vunpack.c.h.b16 %v264
        %v821 = vunpack.c.l.b16 %v265
        %v822 = vunpack.c.h.b16 %v265
        %v823 = vunpack.c.l.b16 %v266
        %v824 = vunpack.c.h.b16 %v266
        %v825 = vunpack.c.l.b16 %v267
        %v826 = vunpack.c.h.b16 %v267
        %v827 = vunpack.c.l.b16 %v268
        %v828 = vunpack.c.h.b16 %v268
        %v829 = vunpack.c.l.b16 %v269
        %v830 = vunpack.c.h.b16 %v269
        %v831 = vunpack.c.l.b16 %v270
        %v832 = vunpack.c.h.b16 %v270
        %v833 = vunpack.c.l.b16 %v271
        %v834 = vunpack.c.h.b16 %v271
        %v835 = vunpack.c.l.b16 %v272
        %v836 = vunpack.c.h.b16 %v272
        %v837 = vunpack.c.l.b16 %v273
        %v838 = vunpack.c.h.b16 %v273
        %v839 = vunpack.c.l.b16 %v274
        %v840 = vunpack.c.h.b16 %v274
        %v841 = vunpack.c.l.b16 %v275
        %v842 = vunpack.c.h.b16 %v275
        %v843 = vunpack.c.l.b16 %v276
        %v844 = vunpack.c.h.b16 %v276
        %v845 = vunpack.c.l.b16 %v277
        %v846 = vunpack.c.h.b16 %v277
        %v847 = vunpack.c.l.b16 %v278
        %v848 = vunpack.c.h.b16 %v278
        %v849 = vunpack.c.l.b16 %v279
        %v850 = vunpack.c.h.b16 %v279
        %v851 = vunpack.c.l.b16 %v280
        %v852 = vunpack.c.h.b16 %v280
        %v853 = vunpack.c.l.b16 %v281
        %v854 = vunpack.c.h.b16 %v281
        %v855 = vunpack.c.l.b16 %v282
        %v856 = vunpack.c.h.b16 %v282
        %v857 = vunpack.c.l.b16 %v283
        %v858 = vunpack.c.h.b16 %v283
        %v859 = vunpack.c.l.b16 %v284
        %v860 = vunpack.c.h.b16 %v284
        %v861 = vunpack.c.l.b16 %v285
        %v862 = vunpack.c.h.b16 %v285
        %v863 = vunpack.c.l.b16 %v286
        %v864 = vunpack.c.h.b16 %v286
        %v865 = vunpack.c.l.b16 %v287
        %v866 = vunpack.c.h.b16 %v287
        %v867 = vunpack.c.l.b16 %v288
        %v868 = vunpack.c.h.b16 %v288
        %v869 = vunpack.c.l.b16 %v289
        %v870 = vunpack.c.h.b16 %v289
        %v871 = vunpack.c.l.b16 %v290
        %v872 = vunpack.c.h.b16 %v290
        %v873 = vunpack.c.l.b16 %v291
        %v874 = vunpack.c.h.b16 %v291
        %v875 = vunpack.c.l.b16 %v292
        %v876 = vunpack.c.h.b16 %v292
        %v877 = vunpack.c.l.b16 %v293
        %v878 = vunpack.c.h.b16 %v293
        %v879 = vunpack.c.l.b16 %v294
        %v880 = vunpack.c.h.b16 %v294
        %v881 = vunpack.c.l.b16 %v295
        %v882 = vunpack.c.h.b16 %v295
        %v883 = vunpack.c.l.b16 %v296
        %v884 = vunpack.c.h.b16 %v296
        %v885 = vunpack.c.l.b16 %v297
        %v886 = vunpack.c.h.b16 %v297
        %v887 = vunpack.c.l.b16 %v298
        %v888 = vunpack.c.h.b16 %v298
        %v889 = vunpack.c.l.b16 %v299
        %v890 = vunpack.c.h.b16 %v299
        %v891 = vunpack.c.l.b16 %v300
        %v892 = vunpack.c.h.b16 %v300
        %v893 = vunpack.c.l.b16 %v301
        %v894 = vunpack.c.h.b16 %v301
        %v895 = vunpack.c.l.b16 %v302
        %v896 = vunpack.c.h.b16 %v302
        %v897 = vunpack.c.l.b16 %v303
        %v898 = vunpack.c.h.b16 %v303
        %v899 = vunpack.c.l.b16 %v304
        %v900 = vunpack.c.h.b16 %v304
        %v901 = vunpack.c.l.b16 %v305
        %v902 = vunpack.c.h.b16 %v305
        %v903 = vunpack.c.l.b16 %v306
        %v904 = vunpack.c.h.b16 %v306
        %v905 = vunpack.c.l.b16 %v307
        %v906 = vunpack.c.h.b16 %v307
        %v907 = vunpack.c.l.b16 %v308
        %v908 = vunpack.c.h.b16 %v308
        %v909 = vunpack.c.l.b16 %v309
        %v910 = vunpack.c.h.b16 %v309
        %v911 = vunpack.c.l.b16 %v310
        %v912 = vunpack.c.h.b16 %v310
        %v913 = vunpack.c.l.b16 %v311
        %v914 = vunpack.c.h.b16 %v311
        %v915 = vunpack.c.l.b16 %v312
        %v916 = vunpack.c.h.b16 %v312
        %v917 = vunpack.c.l.b16 %v313
        %v918 = vunpack.c.h.b16 %v313
        %v919 = vunpack.c.l.b16 %v314
        %v920 = vunpack.c.h.b16 %v314
        %v921 = vunpack.c.l.b16 %v315
        %v922 = vunpack.c.h.b16 %v315
        %v923 = vunpack.c.l.b16 %v316
        %v924 = vunpack.c.h.b16 %v316
        %v925 = vunpack.c.l.b16 %v317
        %v926 = vunpack.c.h.b16 %v317
        %v927 = vunpack.c.l.b16 %v318
        %v928 = vunpack.c.h.b16 %v318
        %v929 = vunpack.c.l.b16 %v319
        %v930 = vunpack.c.h.b16 %v319
        %v931 = vunpack.c.l.b16 %v320
        %v932 = vunpack.c.h.b16 %v320
        %v933 = vunpack.c.l.b16 %v321
        %v934 = vunpack.c.h.b16 %v321
        %v935 = vunpack.c.l.b16 %v322
        %v936 = vunpack.c.h.b16 %v322
        %v937 = vunpack.c.l.b16 %v323
        %v938 = vunpack.c.h.b16 %v323
        %v939 = vunpack.c.l.b16 %v324
        %v940 = vunpack.c.h.b16 %v324
        %v941 = vunpack.c.l.b16 %v325
        %v942 = vunpack.c.h.b16 %v325
        %v943 = vunpack.c.l.b16 %v326
        %v944 = vunpack.c.h.b16 %v326
        %v945 = vunpack.c.l.b16 %v327
        %v946 = vunpack.c.h.b16 %v327
        %v947 = vunpack.c.l.b16 %v328
        %v948 = vunpack.c.h.b16 %v328
        %v949 = vunpack.c.l.b16 %v329
        %v950 = vunpack.c.h.b16 %v329
        %v951 = vunpack.c.l.b16 %v330
        %v952 = vunpack.c.h.b16 %v330
        %v953 = vunpack.c.l.b16 %v331
        %v954 = vunpack.c.h.b16 %v331
        %v955 = vunpack.c.l.b16 %v332
        %v956 = vunpack.c.h.b16 %v332
        %v957 = vunpack.c.l.b16 %v333
        %v958 = vunpack.c.h.b16 %v333
        %v959 = vunpack.c.l.b16 %v334
        %v960 = vunpack.c.h.b16 %v334
        %v961 = vunpack.c.l.b16 %v335
        %v962 = vunpack.c.h.b16 %v335
        %v963 = vunpack.c.l.b16 %v336
        %v964 = vunpack.c.h.b16 %v336
        %v965 = vunpack.c.l.b16 %v337
        %v966 = vunpack.c.h.b16 %v337
        %v967 = vunpack.c.l.b16 %v338
        %v968 = vunpack.c.h.b16 %v338
        %v969 = vunpack.c.l.b16 %v339
        %v970 = vunpack.c.h.b16 %v339
        %v971 = vunpack.c.l.b16 %v340
        %v972 = vunpack.c.h.b16 %v340
        %v973 = vunpack.c.l.b16 %v341
        %v974 = vunpack.c.h.b16 %v341
        %v975 = vunpack.c.l.b16 %v342
        %v976 = vunpack.c.h.b16 %v342
        %v977 = vunpack.c.l.b16 %v343
        %v978 = vunpack.c.h.b16 %v343
        %v979 = vunpack.c.l.b16 %v344
        %v980 = vunpack.c.h.b16 %v344
        %v981 = vunpack.c.l.b16 %v345
        %v982 = vunpack.c.h.b16 %v345
        %v983 = vunpack.c.l.b16 %v346
        %v984 = vunpack.c.h.b16 %v346
        %v985 = vunpack.c.l.b16 %v347
        %v986 = vunpack.c.h.b16 %v347
        %v987 = vunpack.c.l.b16 %v348
        %v988 = vunpack.c.h.b16 %v348
        %v989 = vunpack.c.l.b16 %v349
        %v990 = vunpack.c.h.b16 %v349
        %v991 = vunpack.c.l.b16 %v350
        %v992 = vunpack.c.h.b16 %v350
        %v993 = vunpack.c.l.b16 %v351
        %v994 = vunpack.c.h.b16 %v351
        %v995 = vunpack.c.l.b16 %v352
        %v996 = vunpack.c.h.b16 %v352
        %v997 = vunpack.c.l.b16 %v353
        %v998 = vunpack.c.h.b16 %v353
        %v999 = vunpack.c.l.b16 %v354
        %v1000 = vunpack.c.h.b16 %v354
        %v1001 = vunpack.c.l.b16 %v355
        %v1002 = vunpack.c.h.b16 %v355
        %v1003 = vunpack.c.l.b16 %v356
        %v1004 = vunpack.c.h.b16 %v356
        %v1005 = vunpack.c.l.b16 %v357
        %v1006 = vunpack.c.h.b16 %v357
        %v1007 = vunpack.c.l.b16 %v358
        %v1008 = vunpack.c.h.b16 %v358
        %v1009 = vunpack.c.l.b16 %v359
        %v1010 = vunpack.c.h.b16 %v359
        %v1011 = vunpack.c.l.b16 %v360
        %v1012 = vunpack.c.h.b16 %v360
        %v1013 = vunpack.c.l.b16 %v361
        %v1014 = vunpack.c.h.b16 %v361
        %v1015 = vunpack.c.l.b16 %v362
        %v1016 = vunpack.c.h.b16 %v362
        %v1017 = vunpack.c.l.b16 %v363
        %v1018 = vunpack.c.h.b16 %v363
        %v1019 = vunpack.c.l.b16 %v364
        %v1020 = vunpack.c.h.b16 %v364
        %v1021 = vunpack.c.l.b16 %v365
        %v1022 = vunpack.c.h.b16 %v365
        %v1023 = vunpack.c.l.b16 %v366
        %v1024 = vunpack.c.h.b16 %v366
        %v1025 = vunpack.c.l.b16 %v367
        %v1026 = vunpack.c.h.b16 %v367
        %v1027 = vunpack.c.l.b16 %v368
        %v1028 = vunpack.c.h.b16 %v368
        %v1029 = vunpack.c.l.b16 %v369
        %v1030 = vunpack.c.h.b16 %v369
        %v1031 = vunpack.c.l.b16 %v370
        %v1032 = vunpack.c.h.b16 %v370
        %v1033 = vunpack.c.l.b16 %v371
        %v1034 = vunpack.c.h.b16 %v371
        %v1035 = vunpack.c.l.b16 %v372
        %v1036 = vunpack.c.h.b16 %v372
        %v1037 = vunpack.c.l.b16 %v373
        %v1038 = vunpack.c.h.b16 %v373
        %v1039 = vunpack.c.l.b16 %v374
        %v1040 = vunpack.c.h.b16 %v374
        %v1041 = vunpack.c.l.b16 %v375
        %v1042 = vunpack.c.h.b16 %v375
        %v1043 = vunpack.c.l.b16 %v376
        %v1044 = vunpack.c.h.b16 %v376
        %v1045 = vunpack.c.l.b16 %v377
        %v1046 = vunpack.c.h.b16 %v377
        %v1047 = vunpack.c.l.b16 %v378
        %v1048 = vunpack.c.h.b16 %v378
        %v1049 = vunpack.c.l.b16 %v379
        %v1050 = vunpack.c.h.b16 %v379
        %v1051 = vunpack.c.l.b16 %v380
        %v1052 = vunpack.c.h.b16 %v380
        %v1053 = vunpack.c.l.b16 %v381
        %v1054 = vunpack.c.h.b16 %v381
        %v1055 = vunpack.c.l.b16 %v382
        %v1056 = vunpack.c.h.b16 %v382
        %v1057 = vunpack.c.l.b16 %v383
        %v1058 = vunpack.c.h.b16 %v383
        %v1059 = vunpack.c.l.b16 %v384
        %v1060 = vunpack.c.h.b16 %v384
        %v1061 = vunpack.c.l.b16 %v385
        %v1062 = vunpack.c.h.b16 %v385
        %v1063 = vunpack.c.l.b16 %v386
        %v1064 = vunpack.c.h.b16 %v386
        %v1065 = vunpack.c.l.b16 %v387
        %v1066 = vunpack.c.h.b16 %v387
        %v1067 = vunpack.c.l.b16 %v388
        %v1068 = vunpack.c.h.b16 %v388
        %v1069 = vunpack.c.l.b16 %v389
        %v1070 = vunpack.c.h.b16 %v389
        %v1071 = vunpack.c.l.b16 %v390
        %v1072 = vunpack.c.h.b16 %v390
        %v1073 = vunpack.c.l.b16 %v391
        %v1074 = vunpack.c.h.b16 %v391
        %v1075 = vunpack.c.l.b16 %v392
        %v1076 = vunpack.c.h.b16 %v392
        %v1077 = vunpack.c.l.b16 %v393
        %v1078 = vunpack.c.h.b16 %v393
        %v1079 = vunpack.c.l.b16 %v394
        %v1080 = vunpack.c.h.b16 %v394
        %v1081 = vunpack.c.l.b16 %v395
        %v1082 = vunpack.c.h.b16 %v395
        %v1083 = vunpack.c.l.b16 %v396
        %v1084 = vunpack.c.h.b16 %v396
        %v1085 = vunpack.c.l.b16 %v397
        %v1086 = vunpack.c.h.b16 %v397
        %v1087 = vunpack.c.l.b16 %v398
        %v1088 = vunpack.c.h.b16 %v398
        %v1089 = vunpack.c.l.b16 %v399
        %v1090 = vunpack.c.h.b16 %v399
        %v1091 = vunpack.c.l.b16 %v400
        %v1092 = vunpack.c.h.b16 %v400
        %v1093 = vunpack.c.l.b16 %v401
        %v1094 = vunpack.c.h.b16 %v401
        %v1095 = vunpack.c.l.b16 %v402
        %v1096 = vunpack.c.h.b16 %v402
        %v1097 = vunpack.c.l.b16 %v403
        %v1098 = vunpack.c.h.b16 %v403
        %v1099 = vunpack.c.l.b16 %v404
        %v1100 = vunpack.c.h.b16 %v404
        %v1101 = vunpack.c.l.b16 %v405
        %v1102 = vunpack.c.h.b16 %v405
        %v1103 = vunpack.c.l.b16 %v406
        %v1104 = vunpack.c.h.b16 %v406
        %v1105 = vunpack.c.l.b16 %v407
        %v1106 = vunpack.c.h.b16 %v407
        %v1107 = vunpack.c.l.b16 %v408
        %v1108 = vunpack.c.h.b16 %v408
        %v1109 = vunpack.c.l.b16 %v409
        %v1110 = vunpack.c.h.b16 %v409
        %v1111 = vunpack.c.l.b16 %v410
        %v1112 = vunpack.c.h.b16 %v410
        %v1113 = vunpack.c.l.b16 %v411
        %v1114 = vunpack.c.h.b16 %v411
        %v1115 = vunpack.c.l.b16 %v412
        %v1116 = vunpack.c.h.b16 %v412
        %v1117 = vunpack.c.l.b16 %v413
        %v1118 = vunpack.c.h.b16 %v413
        %v1119 = vunpack.c.l.b16 %v414
        %v1120 = vunpack.c.h.b16 %v414
        %v1121 = vunpack.c.l.b16 %v415
        %v1122 = vunpack.c.h.b16 %v415
        %v1123 = vunpack.c.l.b16 %v416
        %v1124 = vunpack.c.h.b16 %v416
        %v1125 = vunpack.c.l.b16 %v417
        %v1126 = vunpack.c.h.b16 %v417
        %v1127 = vunpack.c.l.b16 %v418
        %v1128 = vunpack.c.h.b16 %v418
        %v1129 = vunpack.c.l.b16 %v419
        %v1130 = vunpack.c.h.b16 %v419
        %v1131 = vunpack.c.l.b16 %v420
        %v1132 = vunpack.c.h.b16 %v420
        %v1133 = vunpack.c.l.b16 %v421
        %v1134 = vunpack.c.h.b16 %v421
        %v1135 = vunpack.c.l.b16 %v422
        %v1136 = vunpack.c.h.b16 %v422
        %v1137 = vunpack.c.l.b16 %v423
        %v1138 = vunpack.c.h.b16 %v423
        %v1139 = vunpack.c.l.b16 %v424
        %v1140 = vunpack.c.h.b16 %v424
        %v1141 = vunpack.c.l.b16 %v425
        %v1142 = vunpack.c.h.b16 %v425
        %v1143 = vunpack.c.l.b16 %v426
        %v1144 = vunpack.c.h.b16 %v426
        %v1145 = vunpack.c.l.b16 %v427
        %v1146 = vunpack.c.h.b16 %v427
        %v1147 = vunpack.c.l.b16 %v428
        %v1148 = vunpack.c.h.b16 %v428
        %v1149 = vunpack.c.l.b16 %v429
        %v1150 = vunpack.c.h.b16 %v429
        %v1151 = vunpack.c.l.b16 %v430
        %v1152 = vunpack.c.h.b16 %v430
        %v1153 = vunpack.c.l.b16 %v431
        %v1154 = vunpack.c.h.b16 %v431
        %v1155 = vunpack.c.l.b16 %v432
        %v1156 = vunpack.c.h.b16 %v432
        %v1157 = vunpack.c.l.b16 %v433
        %v1158 = vunpack.c.h.b16 %v433
        %v1159 = vunpack.c.l.b16 %v434
        %v1160 = vunpack.c.h.b16 %v434
        %v1161 = vunpack.c.l.b16 %v435
        %v1162 = vunpack.c.h.b16 %v435
        %v1163 = vunpack.c.l.b16 %v436
        %v1164 = vunpack.c.h.b16 %v436
        %v1165 = vunpack.c.l.b16 %v437
        %v1166 = vunpack.c.h.b16 %v437
        %v1167 = vunpack.c.l.b16 %v438
        %v1168 = vunpack.c.h.b16 %v438
        %v1169 = vunpack.c.l.b16 %v439
        %v1170 = vunpack.c.h.b16 %v439
        %v1171 = vunpack.c.l.b16 %v440
        %v1172 = vunpack.c.h.b16 %v440
        %v1173 = vunpack.c.l.b16 %v441
        %v1174 = vunpack.c.h.b16 %v441
        %v1175 = vunpack.c.l.b16 %v442
        %v1176 = vunpack.c.h.b16 %v442
        %v1177 = vunpack.c.l.b16 %v443
        %v1178 = vunpack.c.h.b16 %v443
        %v1179 = vunpack.c.l.b16 %v444
        %v1180 = vunpack.c.h.b16 %v444
        %v1181 = vunpack.c.l.b16 %v445
        %v1182 = vunpack.c.h.b16 %v445
        %v1183 = vunpack.c.l.b16 %v446
        %v1184 = vunpack.c.h.b16 %v446
        %v1185 = vunpack.c.l.b16 %v447
        %v1186 = vunpack.c.h.b16 %v447
        %v1187 = vunpack.c.l.b16 %v448
        %v1188 = vunpack.c.h.b16 %v448
        %v1189 = vunpack.c.l.b16 %v449
        %v1190 = vunpack.c.h.b16 %v449
        %v1191 = vunpack.c.l.b16 %v450
        %v1192 = vunpack.c.h.b16 %v450
        %v1193 = vunpack.c.l.b16 %v451
        %v1194 = vunpack.c.h.b16 %v451
        %v1195 = vunpack.c.l.b16 %v452
        %v1196 = vunpack.c.h.b16 %v452
        %v1197 = vunpack.c.l.b16 %v453
        %v1198 = vunpack.c.h.b16 %v453
        %v1199 = vunpack.c.l.b16 %v454
        %v1200 = vunpack.c.h.b16 %v454
        %v1201 = vunpack.c.l.b16 %v455
        %v1202 = vunpack.c.h.b16 %v455
        %v1203 = vunpack.c.l.b16 %v456
        %v1204 = vunpack.c.h.b16 %v456
        %v1205 = vunpack.c.l.b16 %v457
        %v1206 = vunpack.c.h.b16 %v457
        %v1207 = vunpack.c.l.b16 %v458
        %v1208 = vunpack.c.h.b16 %v458
        %v1209 = vunpack.c.l.b16 %v459
        %v1210 = vunpack.c.h.b16 %v459
        %v1211 = vunpack.c.l.b16 %v460
        %v1212 = vunpack.c.h.b16 %v460
        %v1213 = vunpack.c.l.b16 %v461
        %v1214 = vunpack.c.h.b16 %v461
        %v1215 = vunpack.c.l.b16 %v462
        %v1216 = vunpack.c.h.b16 %v462
        %v1217 = vunpack.c.l.b16 %v463
        %v1218 = vunpack.c.h.b16 %v463
        %v1219 = vunpack.c.l.b16 %v464
        %v1220 = vunpack.c.h.b16 %v464
        %v1221 = vunpack.c.l.b16 %v465
        %v1222 = vunpack.c.h.b16 %v465
        %v1223 = vunpack.c.l.b16 %v466
        %v1224 = vunpack.c.h.b16 %v466
        %v1225 = vunpack.c.l.b16 %v467
        %v1226 = vunpack.c.h.b16 %v467
        %v1227 = vunpack.c.l.b16 %v468
        %v1228 = vunpack.c.h.b16 %v468
        %v1229 = vunpack.c.l.b16 %v469
        %v1230 = vunpack.c.h.b16 %v469
        %v1231 = vunpack.c.l.b16 %v470
        %v1232 = vunpack.c.h.b16 %v470
        %v1233 = vunpack.c.l.b16 %v471
        %v1234 = vunpack.c.h.b16 %v471
        %v1235 = vunpack.c.l.b16 %v472
        %v1236 = vunpack.c.h.b16 %v472
        %v1237 = vunpack.c.l.b16 %v473
        %v1238 = vunpack.c.h.b16 %v473
        %v1239 = vunpack.c.l.b16 %v474
        %v1240 = vunpack.c.h.b16 %v474
        %v1241 = vunpack.c.l.b16 %v475
        %v1242 = vunpack.c.h.b16 %v475
        %v1243 = vunpack.c.l.b16 %v476
        %v1244 = vunpack.c.h.b16 %v476
        %v1245 = vunpack.c.l.b16 %v477
        %v1246 = vunpack.c.h.b16 %v477
        %v1247 = vunpack.c.l.b16 %v478
        %v1248 = vunpack.c.h.b16 %v478
        %v1249 = vunpack.c.l.b16 %v479
        %v1250 = vunpack.c.h.b16 %v479
        %v1251 = vunpack.c.l.b16 %v480
        %v1252 = vunpack.c.h.b16 %v480
        %v1253 = vunpack.c.l.b16 %v481
        %v1254 = vunpack.c.h.b16 %v481
        %v1255 = vunpack.c.l.b16 %v482
        %v1256 = vunpack.c.h.b16 %v482
        %v1257 = vunpack.c.l.b16 %v483
        %v1258 = vunpack.c.h.b16 %v483
        %v1259 = vunpack.c.l.b16 %v484
        %v1260 = vunpack.c.h.b16 %v484
        %v1261 = vunpack.c.l.b16 %v485
        %v1262 = vunpack.c.h.b16 %v485
        %v1263 = vunpack.c.l.b16 %v486
        %v1264 = vunpack.c.h.b16 %v486
        %v1265 = vunpack.c.l.b16 %v487
        %v1266 = vunpack.c.h.b16 %v487
        %v1267 = vunpack.c.l.b16 %v488
        %v1268 = vunpack.c.h.b16 %v488
        %v1269 = vunpack.c.l.b16 %v489
        %v1270 = vunpack.c.h.b16 %v489
        %v1271 = vunpack.c.l.b16 %v490
        %v1272 = vunpack.c.h.b16 %v490
        %v1273 = vunpack.c.l.b16 %v491
        %v1274 = vunpack.c.h.b16 %v491
        %v1275 = vunpack.c.l.b16 %v492
        %v1276 = vunpack.c.h.b16 %v492
        %v1277 = vunpack.c.l.b16 %v493
        %v1278 = vunpack.c.h.b16 %v493
        %v1279 = vunpack.c.l.b16 %v494
        %v1280 = vunpack.c.h.b16 %v494
        %v1281 = vunpack.c.l.b16 %v495
        %v1282 = vunpack.c.h.b16 %v495
        %v1283 = vunpack.c.l.b16 %v496
        %v1284 = vunpack.c.h.b16 %v496
        %v1285 = vunpack.c.l.b16 %v497
        %v1286 = vunpack.c.h.b16 %v497
        %v1287 = vunpack.c.l.b16 %v498
        %v1288 = vunpack.c.h.b16 %v498
        %v1289 = vunpack.c.l.b16 %v499
        %v1290 = vunpack.c.h.b16 %v499
        %v1291 = vunpack.c.l.b16 %v500
        %v1292 = vunpack.c.h.b16 %v500
        %v1293 = vunpack.c.l.b16 %v501
        %v1294 = vunpack.c.h.b16 %v501
        %v1295 = vunpack.c.l.b16 %v502
        %v1296 = vunpack.c.h.b16 %v502
        %v1297 = vunpack.c.l.b16 %v503
        %v1298 = vunpack.c.h.b16 %v503
        %v1299 = vunpack.c.l.b16 %v504
        %v1300 = vunpack.c.h.b16 %v504
        %v1301 = vunpack.c.l.b16 %v505
        %v1302 = vunpack.c.h.b16 %v505
        %v1303 = vunpack.c.l.b16 %v506
        %v1304 = vunpack.c.h.b16 %v506
        %v1305 = vunpack.c.l.b16 %v507
        %v1306 = vunpack.c.h.b16 %v507
        %v1307 = vunpack.c.l.b16 %v508
        %v1308 = vunpack.c.h.b16 %v508
        %v1309 = vunpack.c.l.b16 %v509
        %v1310 = vunpack.c.h.b16 %v509
        %v1311 = vunpack.c.l.b16 %v510
        %v1312 = vunpack.c.h.b16 %v510
        %v1313 = vunpack.c.l.b16 %v511
        %v1314 = vunpack.c.h.b16 %v511
        %v1315 = vunpack.c.l.b16 %v512
        %v1316 = vunpack.c.h.b16 %v512
        %v1317 = vpack.c.b16 %v807, %v805
        %v1318 = vpack.c.b16 %v808, %v806
        %v1319 = vpack.c.b16 %v811, %v809
        %v1320 = vpack.c.b16 %v812, %v810
        %v1321 = vpack.c.b16 %v815, %v813
        %v1322 = vpack.c.b16 %v816, %v814
        %v1323 = vpack.c.b16 %v819, %v817
        %v1324 = vpack.c.b16 %v820, %v818
        %v1325 = vpack.c.b16 %v823, %v821
        %v1326 = vpack.c.b16 %v824, %v822
        %v1327 = vpack.c.b16 %v827, %v825
        %v1328 = vpack.c.b16 %v828, %v826
        %v1329 = vpack.c.b16 %v831, %v829
        %v1330 = vpack.c.b16 %v832, %v830
        %v1331 = vpack.c.b16 %v835, %v833
        %v1332 = vpack.c.b16 %v836, %v834
        %v1333 = vpack.c.b16 %v839, %v837
        %v1334 = vpack.c.b16 %v840, %v838
        %v1335 = vpack.c.b16 %v843, %v841
        %v1336 = vpack.c.b16 %v844, %v842
        %v1337 = vpack.c.b16 %v847, %v845
        %v1338 = vpack.c.b16 %v848, %v846
        %v1339 = vpack.c.b16 %v851, %v849
        %v1340 = vpack.c.b16 %v852, %v850
        %v1341 = vpack.c.b16 %v855, %v853
        %v1342 = vpack.c.b16 %v856, %v854
        %v1343 = vpack.c.b16 %v859, %v857
        %v1344 = vpack.c.b16 %v860, %v858
        %v1345 = vpack.c.b16 %v863, %v861
        %v1346 = vpack.c.b16 %v864, %v862
        %v1347 = vpack.c.b16 %v867, %v865
        %v1348 = vpack.c.b16 %v868, %v866
        %v1349 = vpack.c.b16 %v871, %v869
        %v1350 = vpack.c.b16 %v872, %v870
        %v1351 = vpack.c.b16 %v875, %v873
        %v1352 = vpack.c.b16 %v876, %v874
        %v1353 = vpack.c.b16 %v879, %v877
        %v1354 = vpack.c.b16 %v880, %v878
        %v1355 = vpack.c.b16 %v883, %v881
        %v1356 = vpack.c.b16 %v884, %v882
        %v1357 = vpack.c.b16 %v887, %v885
        %v1358 = vpack.c.b16 %v888, %v886
        %v1359 = vpack.c.b16 %v891, %v889
        %v1360 = vpack.c.b16 %v892, %v890
        %v1361 = vpack.c.b16 %v895, %v893
        %v1362 = vpack.c.b16 %v896, %v894
        %v1363 = vpack.c.b16 %v899, %v897
        %v1364 = vpack.c.b16 %v900, %v898
        %v1365 = vpack.c.b16 %v903, %v901
        %v1366 = vpack.c.b16 %v904, %v902
        %v1367 = vpack.c.b16 %v907, %v905
        %v1368 = vpack.c.b16 %v908, %v906
        %v1369 = vpack.c.b16 %v911, %v909
        %v1370 = vpack.c.b16 %v912, %v910
        %v1371 = vpack.c.b16 %v915, %v913
        %v1372 = vpack.c.b16 %v916, %v914
        %v1373 = vpack.c.b16 %v919, %v917
        %v1374 = vpack.c.b16 %v920, %v918
        %v1375 = vpack.c.b16 %v923, %v921
        %v1376 = vpack.c.b16 %v924, %v922
        %v1377 = vpack.c.b16 %v927, %v925
        %v1378 = vpack.c.b16 %v928, %v926
        %v1379 = vpack.c.b16 %v931, %v929
        %v1380 = vpack.c.b16 %v932, %v930
        %v1381 = vpack.c.b16 %v935, %v933
        %v1382 = vpack.c.b16 %v936, %v934
        %v1383 = vpack.c.b16 %v939, %v937
        %v1384 = vpack.c.b16 %v940, %v938
        %v1385 = vpack.c.b16 %v943, %v941
        %v1386 = vpack.c.b16 %v944, %v942
        %v1387 = vpack.c.b16 %v947, %v945
        %v1388 = vpack.c.b16 %v948, %v946
        %v1389 = vpack.c.b16 %v951, %v949
        %v1390 = vpack.c.b16 %v952, %v950
        %v1391 = vpack.c.b16 %v955, %v953
        %v1392 = vpack.c.b16 %v956, %v954
        %v1393 = vpack.c.b16 %v959, %v957
        %v1394 = vpack.c.b16 %v960, %v958
        %v1395 = vpack.c.b16 %v963, %v961
        %v1396 = vpack.c.b16 %v964, %v962
        %v1397 = vpack.c.b16 %v967, %v965
        %v1398 = vpack.c.b16 %v968, %v966
        %v1399 = vpack.c.b16 %v971, %v969
        %v1400 = vpack.c.b16 %v972, %v970
        %v1401 = vpack.c.b16 %v975, %v973
        %v1402 = vpack.c.b16 %v976, %v974
        %v1403 = vpack.c.b16 %v979, %v977
        %v1404 = vpack.c.b16 %v980, %v978
        %v1405 = vpack.c.b16 %v983, %v981
        %v1406 = vpack.c.b16 %v984, %v982
        %v1407 = vpack.c.b16 %v987, %v985
        %v1408 = vpack.c.b16 %v988, %v986
        %v1409 = vpack.c.b16 %v991, %v989
        %v1410 = vpack.c.b16 %v992, %v990
        %v1411 = vpack.c.b16 %v995, %v993
        %v1412 = vpack.c.b16 %v996, %v994
        %v1413 = vpack.c.b16 %v999, %v997
        %v1414 = vpack.c.b16 %v1000, %v998
        %v1415 = vpack.c.b16 %v1003, %v1001
        %v1416 = vpack.c.b16 %v1004, %v1002
        %v1417 = vpack.c.b16 %v1007, %v1005
        %v1418 = vpack.c.b16 %v1008, %v1006
        %v1419 = vpack.c.b16 %v1011, %v1009
        %v1420 = vpack.c.b16 %v1012, %v1010
        %v1421 = vpack.c.b16 %v1015, %v1013
        %v1422 = vpack.c.b16 %v1016, %v1014
        %v1423 = vpack.c.b16 %v1019, %v1017
        %v1424 = vpack.c.b16 %v1020, %v1018
        %v1425 = vpack.c.b16 %v1023, %v1021
        %v1426 = vpack.c.b16 %v1024, %v1022
        %v1427 = vpack.c.b16 %v1027, %v1025
        %v1428 = vpack.c.b16 %v1028, %v1026
        %v1429 = vpack.c.b16 %v1031, %v1029
        %v1430 = vpack.c.b16 %v1032, %v1030
        %v1431 = vpack.c.b16 %v1035, %v1033
        %v1432 = vpack.c.b16 %v1036, %v1034
        %v1433 = vpack.c.b16 %v1039, %v1037
        %v1434 = vpack.c.b16 %v1040, %v1038
        %v1435 = vpack.c.b16 %v1043, %v1041
        %v1436 = vpack.c.b16 %v1044, %v1042
        %v1437 = vpack.c.b16 %v1047, %v1045
        %v1438 = vpack.c.b16 %v1048, %v1046
        %v1439 = vpack.c.b16 %v1051, %v1049
        %v1440 = vpack.c.b16 %v1052, %v1050
        %v1441 = vpack.c.b16 %v1055, %v1053
        %v1442 = vpack.c.b16 %v1056, %v1054
        %v1443 = vpack.c.b16 %v1059, %v1057
        %v1444 = vpack.c.b16 %v1060, %v1058
        %v1445 = vpack.c.b16 %v1063, %v1061
        %v1446 = vpack.c.b16 %v1064, %v1062
        %v1447 = vpack.c.b16 %v1067, %v1065
        %v1448 = vpack.c.b16 %v1068, %v1066
        %v1449 = vpack.c.b16 %v1071, %v1069
        %v1450 = vpack.c.b16 %v1072, %v1070
        %v1451 = vpack.c.b16 %v1075, %v1073
        %v1452 = vpack.c.b16 %v1076, %v1074
        %v1453 = vpack.c.b16 %v1079, %v1077
        %v1454 = vpack.c.b16 %v1080, %v1078
        %v1455 = vpack.c.b16 %v1083, %v1081
        %v1456 = vpack.c.b16 %v1084, %v1082
        %v1457 = vpack.c.b16 %v1087, %v1085
        %v1458 = vpack.c.b16 %v1088, %v1086
        %v1459 = vpack.c.b16 %v1091, %v1089
        %v1460 = vpack.c.b16 %v1092, %v1090
        %v1461 = vpack.c.b16 %v1095, %v1093
        %v1462 = vpack.c.b16 %v1096, %v1094
        %v1463 = vpack.c.b16 %v1099, %v1097
        %v1464 = vpack.c.b16 %v1100, %v1098
        %v1465 = vpack.c.b16 %v1103, %v1101
        %v1466 = vpack.c.b16 %v1104, %v1102
        %v1467 = vpack.c.b16 %v1107, %v1105
        %v1468 = vpack.c.b16 %v1108, %v1106
        %v1469 = vpack.c.b16 %v1111, %v1109
        %v1470 = vpack.c.b16 %v1112, %v1110
        %v1471 = vpack.c.b16 %v1115, %v1113
        %v1472 = vpack.c.b16 %v1116, %v1114
        %v1473 = vpack.c.b16 %v1119, %v1117
        %v1474 = vpack.c.b16 %v1120, %v1118
        %v1475 = vpack.c.b16 %v1123, %v1121
        %v1476 = vpack.c.b16 %v1124, %v1122
        %v1477 = vpack.c.b16 %v1127, %v1125
        %v1478 = vpack.c.b16 %v1128, %v1126
        %v1479 = vpack.c.b16 %v1131, %v1129
        %v1480 = vpack.c.b16 %v1132, %v1130
        %v1481 = vpack.c.b16 %v1135, %v1133
        %v1482 = vpack.c.b16 %v1136, %v1134
        %v1483 = vpack.c.b16 %v1139, %v1137
        %v1484 = vpack.c.b16 %v1140, %v1138
        %v1485 = vpack.c.b16 %v1143, %v1141
        %v1486 = vpack.c.b16 %v1144, %v1142
        %v1487 = vpack.c.b16 %v1147, %v1145
        %v1488 = vpack.c.b16 %v1148, %v1146
        %v1489 = vpack.c.b16 %v1151, %v1149
        %v1490 = vpack.c.b16 %v1152, %v1150
        %v1491 = vpack.c.b16 %v1155, %v1153
        %v1492 = vpack.c.b16 %v1156, %v1154
        %v1493 = vpack.c.b16 %v1159, %v1157
        %v1494 = vpack.c.b16 %v1160, %v1158
        %v1495 = vpack.c.b16 %v1163, %v1161
        %v1496 = vpack.c.b16 %v1164, %v1162
        %v1497 = vpack.c.b16 %v1167, %v1165
        %v1498 = vpack.c.b16 %v1168, %v1166
        %v1499 = vpack.c.b16 %v1171, %v1169
        %v1500 = vpack.c.b16 %v1172, %v1170
        %v1501 = vpack.c.b16 %v1175, %v1173
        %v1502 = vpack.c.b16 %v1176, %v1174
        %v1503 = vpack.c.b16 %v1179, %v1177
        %v1504 = vpack.c.b16 %v1180, %v1178
        %v1505 = vpack.c.b16 %v1183, %v1181
        %v1506 = vpack.c.b16 %v1184, %v1182
        %v1507 = vpack.c.b16 %v1187, %v1185
        %v1508 = vpack.c.b16 %v1188, %v1186
        %v1509 = vpack.c.b16 %v1191, %v1189
        %v1510 = vpack.c.b16 %v1192, %v1190
        %v1511 = vpack.c.b16 %v1195, %v1193
        %v1512 = vpack.c.b16 %v1196, %v1194
        %v1513 = vpack.c.b16 %v1199, %v1197
        %v1514 = vpack.c.b16 %v1200, %v1198
        %v1515 = vpack.c.b16 %v1203, %v1201
        %v1516 = vpack.c.b16 %v1204, %v1202
        %v1517 = vpack.c.b16 %v1207, %v1205
        %v1518 = vpack.c.b16 %v1208, %v1206
        %v1519 = vpack.c.b16 %v1211, %v1209
        %v1520 = vpack.c.b16 %v1212, %v1210
        %v1521 = vpack.c.b16 %v1215, %v1213
        %v1522 = vpack.c.b16 %v1216, %v1214
        %v1523 = vpack.c.b16 %v1219, %v1217
        %v1524 = vpack.c.b16 %v1220, %v1218
        %v1525 = vpack.c.b16 %v1223, %v1221
        %v1526 = vpack.c.b16 %v1224, %v1222
        %v1527 = vpack.c.b16 %v1227, %v1225
        %v1528 = vpack.c.b16 %v1228, %v1226
        %v1529 = vpack.c.b16 %v1231, %v1229
        %v1530 = vpack.c.b16 %v1232, %v1230
        %v1531 = vpack.c.b16 %v1235, %v1233
        %v1532 = vpack.c.b16 %v1236, %v1234
        %v1533 = vpack.c.b16 %v1239, %v1237
        %v1534 = vpack.c.b16 %v1240, %v1238
        %v1535 = vpack.c.b16 %v1243, %v1241
        %v1536 = vpack.c.b16 %v1244, %v1242
        %v1537 = vpack.c.b16 %v1247, %v1245
        %v1538 = vpack.c.b16 %v1248, %v1246
        %v1539 = vpack.c.b16 %v1251, %v1249
        %v1540 = vpack.c.b16 %v1252, %v1250
        %v1541 = vpack.c.b16 %v1255, %v1253
        %v1542 = vpack.c.b16 %v1256, %v1254
        %v1543 = vpack.c.b16 %v1259, %v1257
        %v1544 = vpack.c.b16 %v1260, %v1258
        %v1545 = vpack.c.b16 %v1263, %v1261
        %v1546 = vpack.c.b16 %v1264, %v1262
        %v1547 = vpack.c.b16 %v1267, %v1265
        %v1548 = vpack.c.b16 %v1268, %v1266
        %v1549 = vpack.c.b16 %v1271, %v1269
        %v1550 = vpack.c.b16 %v1272, %v1270
        %v1551 = vpack.c.b16 %v1275, %v1273
        %v1552 = vpack.c.b16 %v1276, %v1274
        %v1553 = vpack.c.b16 %v1279, %v1277
        %v1554 = vpack.c.b16 %v1280, %v1278
        %v1555 = vpack.c.b16 %v1283, %v1281
        %v1556 = vpack.c.b16 %v1284, %v1282
        %v1557 = vpack.c.b16 %v1287, %v1285
        %v1558 = vpack.c.b16 %v1288, %v1286
        %v1559 = vpack.c.b16 %v1291, %v1289
        %v1560 = vpack.c.b16 %v1292, %v1290
        %v1561 = vpack.c.b16 %v1295, %v1293
        %v1562 = vpack.c.b16 %v1296, %v1294
        %v1563 = vpack.c.b16 %v1299, %v1297
        %v1564 = vpack.c.b16 %v1300, %v1298
        %v1565 = vpack.c.b16 %v1303, %v1301
        %v1566 = vpack.c.b16 %v1304, %v1302
        %v1567 = vpack.c.b16 %v1307, %v1305
        %v1568 = vpack.c.b16 %v1308, %v1306
        %v1569 = vpack.c.b16 %v1311, %v1309
        %v1570 = vpack.c.b16 %v1312, %v1310
        %v1571 = vpack.c.b16 %v1315, %v1313
        %v1572 = vpack.c.b16 %v1316, %v1314
        %1829 = vmatpush.bf16.msra.mxu0 %v1331
        %1830 = vmatpush.bf16.msra.mxu0 %v1329
        %1831 = vmatpush.bf16.msra.mxu0 %v1327
        %1832 = vmatpush.bf16.msra.mxu0 %v1325
        %1833 = vmatpush.bf16.msra.mxu0 %v1323
        %1834 = vmatpush.bf16.msra.mxu0 %v1321
        %1835 = vmatpush.bf16.msra.mxu0 %v1319
        %1836 = vmatpush.bf16.msra.mxu0 %v1317
        %1837 = vmatmul.bf16.gmra.mxu0 %v515
        %v1838 = vpop.f32.mrf.mxu0
        %v1839 = vadd.f32 0.0, %v1838
        %v1840 = vpop.f32.mrf.mxu0
        %1841 = vdwg.mxu0
        %1842 = vmatpush.bf16.msra.mxu0 %v1347
        %1843 = vmatpush.bf16.msra.mxu0 %v1345
        %1844 = vmatpush.bf16.msra.mxu0 %v1343
        %1845 = vmatpush.bf16.msra.mxu0 %v1341
        %1846 = vmatpush.bf16.msra.mxu0 %v1339
        %1847 = vmatpush.bf16.msra.mxu0 %v1337
        %1848 = vmatpush.bf16.msra.mxu0 %v1335
        %1849 = vmatpush.bf16.msra.mxu0 %v1333
        %1850 = vmatmul.bf16.gmra.mxu0 %v516
        %v1851 = vpop.f32.mrf.mxu0
        %v1852 = vadd.f32 %v1839, %v1851
        %v1853 = vpop.f32.mrf.mxu0
        %1854 = vdwg.mxu0
        %1855 = vmatpush.bf16.msra.mxu0 %v1363
        %1856 = vmatpush.bf16.msra.mxu0 %v1361
        %1857 = vmatpush.bf16.msra.mxu0 %v1359
        %1858 = vmatpush.bf16.msra.mxu0 %v1357
        %1859 = vmatpush.bf16.msra.mxu0 %v1355
        %1860 = vmatpush.bf16.msra.mxu0 %v1353
        %1861 = vmatpush.bf16.msra.mxu0 %v1351
        %1862 = vmatpush.bf16.msra.mxu0 %v1349
        %1863 = vmatmul.bf16.gmra.mxu0 %v517
        %v1864 = vpop.f32.mrf.mxu0
        %v1865 = vadd.f32 %v1852, %v1864
        %v1866 = vpop.f32.mrf.mxu0
        %1867 = vdwg.mxu0
        %1868 = vmatpush.bf16.msra.mxu0 %v1379
        %1869 = vmatpush.bf16.msra.mxu0 %v1377
        %1870 = vmatpush.bf16.msra.mxu0 %v1375
        %1871 = vmatpush.bf16.msra.mxu0 %v1373
        %1872 = vmatpush.bf16.msra.mxu0 %v1371
        %1873 = vmatpush.bf16.msra.mxu0 %v1369
        %1874 = vmatpush.bf16.msra.mxu0 %v1367
        %1875 = vmatpush.bf16.msra.mxu0 %v1365
        %1876 = vmatmul.bf16.gmra.mxu0 %v518
        %v1877 = vpop.f32.mrf.mxu0
        %v1878 = vadd.f32 %v1865, %v1877
        %v1879 = vpop.f32.mrf.mxu0
        %1880 = vdwg.mxu0
        %1881 = vmatpush.bf16.msra.mxu0 %v1395
        %1882 = vmatpush.bf16.msra.mxu0 %v1393
        %1883 = vmatpush.bf16.msra.mxu0 %v1391
        %1884 = vmatpush.bf16.msra.mxu0 %v1389
        %1885 = vmatpush.bf16.msra.mxu0 %v1387
        %1886 = vmatpush.bf16.msra.mxu0 %v1385
        %1887 = vmatpush.bf16.msra.mxu0 %v1383
        %1888 = vmatpush.bf16.msra.mxu0 %v1381
        %1889 = vmatmul.bf16.gmra.mxu0 %v519
        %v1890 = vpop.f32.mrf.mxu0
        %v1891 = vadd.f32 %v1878, %v1890
        %v1892 = vpop.f32.mrf.mxu0
        %1893 = vdwg.mxu0
        %1894 = vmatpush.bf16.msra.mxu0 %v1411
        %1895 = vmatpush.bf16.msra.mxu0 %v1409
        %1896 = vmatpush.bf16.msra.mxu0 %v1407
        %1897 = vmatpush.bf16.msra.mxu0 %v1405
        %1898 = vmatpush.bf16.msra.mxu0 %v1403
        %1899 = vmatpush.bf16.msra.mxu0 %v1401
        %1900 = vmatpush.bf16.msra.mxu0 %v1399
        %1901 = vmatpush.bf16.msra.mxu0 %v1397
        %1902 = vmatmul.bf16.gmra.mxu0 %v520
        %v1903 = vpop.f32.mrf.mxu0
        %v1904 = vadd.f32 %v1891, %v1903
        %v1905 = vpop.f32.mrf.mxu0
        %1906 = vdwg.mxu0
        %1907 = vmatpush.bf16.msra.mxu0 %v1427
        %1908 = vmatpush.bf16.msra.mxu0 %v1425
        %1909 = vmatpush.bf16.msra.mxu0 %v1423
        %1910 = vmatpush.bf16.msra.mxu0 %v1421
        %1911 = vmatpush.bf16.msra.mxu0 %v1419
        %1912 = vmatpush.bf16.msra.mxu0 %v1417
        %1913 = vmatpush.bf16.msra.mxu0 %v1415
        %1914 = vmatpush.bf16.msra.mxu0 %v1413
        %1915 = vmatmul.bf16.gmra.mxu0 %v521
        %v1916 = vpop.f32.mrf.mxu0
        %v1917 = vadd.f32 %v1904, %v1916
        %v1918 = vpop.f32.mrf.mxu0
        %1919 = vdwg.mxu0
        %1920 = vmatpush.bf16.msra.mxu0 %v1443
        %1921 = vmatpush.bf16.msra.mxu0 %v1441
        %1922 = vmatpush.bf16.msra.mxu0 %v1439
        %1923 = vmatpush.bf16.msra.mxu0 %v1437
        %1924 = vmatpush.bf16.msra.mxu0 %v1435
        %1925 = vmatpush.bf16.msra.mxu0 %v1433
        %1926 = vmatpush.bf16.msra.mxu0 %v1431
        %1927 = vmatpush.bf16.msra.mxu0 %v1429
        %1928 = vmatmul.bf16.gmra.mxu0 %v522
        %v1929 = vpop.f32.mrf.mxu0
        %v1930 = vadd.f32 %v1917, %v1929
        %v1931 = vpop.f32.mrf.mxu0
        %1932 = vdwg.mxu0
        %1933 = vmatpush.bf16.msra.mxu0 %v1459
        %1934 = vmatpush.bf16.msra.mxu0 %v1457
        %1935 = vmatpush.bf16.msra.mxu0 %v1455
        %1936 = vmatpush.bf16.msra.mxu0 %v1453
        %1937 = vmatpush.bf16.msra.mxu0 %v1451
        %1938 = vmatpush.bf16.msra.mxu0 %v1449
        %1939 = vmatpush.bf16.msra.mxu0 %v1447
        %1940 = vmatpush.bf16.msra.mxu0 %v1445
        %1941 = vmatmul.bf16.gmra.mxu0 %v525
        %v1942 = vpop.f32.mrf.mxu0
        %v1943 = vadd.f32 %v1930, %v1942
        %v1944 = vpop.f32.mrf.mxu0
        %1945 = vdwg.mxu0
        %1946 = vmatpush.bf16.msra.mxu0 %v1475
        %1947 = vmatpush.bf16.msra.mxu0 %v1473
        %1948 = vmatpush.bf16.msra.mxu0 %v1471
        %1949 = vmatpush.bf16.msra.mxu0 %v1469
        %1950 = vmatpush.bf16.msra.mxu0 %v1467
        %1951 = vmatpush.bf16.msra.mxu0 %v1465
        %1952 = vmatpush.bf16.msra.mxu0 %v1463
        %1953 = vmatpush.bf16.msra.mxu0 %v1461
        %1954 = vmatmul.bf16.gmra.mxu0 %v526
        %v1955 = vpop.f32.mrf.mxu0
        %v1956 = vadd.f32 %v1943, %v1955
        %v1957 = vpop.f32.mrf.mxu0
        %1958 = vdwg.mxu0
        %1959 = vmatpush.bf16.msra.mxu0 %v1491
        %1960 = vmatpush.bf16.msra.mxu0 %v1489
        %1961 = vmatpush.bf16.msra.mxu0 %v1487
        %1962 = vmatpush.bf16.msra.mxu0 %v1485
        %1963 = vmatpush.bf16.msra.mxu0 %v1483
        %1964 = vmatpush.bf16.msra.mxu0 %v1481
        %1965 = vmatpush.bf16.msra.mxu0 %v1479
        %1966 = vmatpush.bf16.msra.mxu0 %v1477
        %1967 = vmatmul.bf16.gmra.mxu0 %v527
        %v1968 = vpop.f32.mrf.mxu0
        %v1969 = vadd.f32 %v1956, %v1968
        %v1970 = vpop.f32.mrf.mxu0
        %1971 = vdwg.mxu0
        %1972 = vmatpush.bf16.msra.mxu0 %v1507
        %1973 = vmatpush.bf16.msra.mxu0 %v1505
        %1974 = vmatpush.bf16.msra.mxu0 %v1503
        %1975 = vmatpush.bf16.msra.mxu0 %v1501
        %1976 = vmatpush.bf16.msra.mxu0 %v1499
        %1977 = vmatpush.bf16.msra.mxu0 %v1497
        %1978 = vmatpush.bf16.msra.mxu0 %v1495
        %1979 = vmatpush.bf16.msra.mxu0 %v1493
        %1980 = vmatmul.bf16.gmra.mxu0 %v528
        %v1981 = vpop.f32.mrf.mxu0
        %v1982 = vadd.f32 %v1969, %v1981
        %v1983 = vpop.f32.mrf.mxu0
        %1984 = vdwg.mxu0
        %1985 = vmatpush.bf16.msra.mxu0 %v1523
        %1986 = vmatpush.bf16.msra.mxu0 %v1521
        %1987 = vmatpush.bf16.msra.mxu0 %v1519
        %1988 = vmatpush.bf16.msra.mxu0 %v1517
        %1989 = vmatpush.bf16.msra.mxu0 %v1515
        %1990 = vmatpush.bf16.msra.mxu0 %v1513
        %1991 = vmatpush.bf16.msra.mxu0 %v1511
        %1992 = vmatpush.bf16.msra.mxu0 %v1509
        %1993 = vmatmul.bf16.gmra.mxu0 %v529
        %v1994 = vpop.f32.mrf.mxu0
        %v1995 = vadd.f32 %v1982, %v1994
        %v1996 = vpop.f32.mrf.mxu0
        %1997 = vdwg.mxu0
        %1998 = vmatpush.bf16.msra.mxu0 %v1539
        %1999 = vmatpush.bf16.msra.mxu0 %v1537
        %2000 = vmatpush.bf16.msra.mxu0 %v1535
        %2001 = vmatpush.bf16.msra.mxu0 %v1533
        %2002 = vmatpush.bf16.msra.mxu0 %v1531
        %2003 = vmatpush.bf16.msra.mxu0 %v1529
        %2004 = vmatpush.bf16.msra.mxu0 %v1527
        %2005 = vmatpush.bf16.msra.mxu0 %v1525
        %2006 = vmatmul.bf16.gmra.mxu0 %v530
        %v2007 = vpop.f32.mrf.mxu0
        %v2008 = vadd.f32 %v1995, %v2007
        %v2009 = vpop.f32.mrf.mxu0
        %2010 = vdwg.mxu0
        %2011 = vmatpush.bf16.msra.mxu0 %v1555
        %2012 = vmatpush.bf16.msra.mxu0 %v1553
        %2013 = vmatpush.bf16.msra.mxu0 %v1551
        %2014 = vmatpush.bf16.msra.mxu0 %v1549
        %2015 = vmatpush.bf16.msra.mxu0 %v1547
        %2016 = vmatpush.bf16.msra.mxu0 %v1545
        %2017 = vmatpush.bf16.msra.mxu0 %v1543
        %2018 = vmatpush.bf16.msra.mxu0 %v1541
        %2019 = vmatmul.bf16.gmra.mxu0 %v531
        %v2020 = vpop.f32.mrf.mxu0
        %v2021 = vadd.f32 %v2008, %v2020
        %v2022 = vpop.f32.mrf.mxu0
        %2023 = vdwg.mxu0
        %2024 = vmatpush.bf16.msra.mxu0 %v1571
        %2025 = vmatpush.bf16.msra.mxu0 %v1569
        %2026 = vmatpush.bf16.msra.mxu0 %v1567
        %2027 = vmatpush.bf16.msra.mxu0 %v1565
        %2028 = vmatpush.bf16.msra.mxu0 %v1563
        %2029 = vmatpush.bf16.msra.mxu0 %v1561
        %2030 = vmatpush.bf16.msra.mxu0 %v1559
        %2031 = vmatpush.bf16.msra.mxu0 %v1557
        %2032 = vmatmul.bf16.gmra.mxu0 %v532
        %v2033 = vpop.f32.mrf.mxu0
        %v2034 = vadd.f32 %v2021, %v2033
        %v2035 = vpop.f32.mrf.mxu0
        %2036 = vdwg.mxu0
        %2037 = vmatpush.bf16.msra.mxu0 %v1332
        %2038 = vmatpush.bf16.msra.mxu0 %v1330
        %2039 = vmatpush.bf16.msra.mxu0 %v1328
        %2040 = vmatpush.bf16.msra.mxu0 %v1326
        %2041 = vmatpush.bf16.msra.mxu0 %v1324
        %2042 = vmatpush.bf16.msra.mxu0 %v1322
        %2043 = vmatpush.bf16.msra.mxu0 %v1320
        %2044 = vmatpush.bf16.msra.mxu0 %v1318
        %2045 = vmatmul.bf16.gmra.mxu0 %v515
        %v2046 = vpop.f32.mrf.mxu0
        %v2047 = vadd.f32 0.0, %v2046
        %v2048 = vpop.f32.mrf.mxu0
        %2049 = vdwg.mxu0
        %2050 = vmatpush.bf16.msra.mxu0 %v1348
        %2051 = vmatpush.bf16.msra.mxu0 %v1346
        %2052 = vmatpush.bf16.msra.mxu0 %v1344
        %2053 = vmatpush.bf16.msra.mxu0 %v1342
        %2054 = vmatpush.bf16.msra.mxu0 %v1340
        %2055 = vmatpush.bf16.msra.mxu0 %v1338
        %2056 = vmatpush.bf16.msra.mxu0 %v1336
        %2057 = vmatpush.bf16.msra.mxu0 %v1334
        %2058 = vmatmul.bf16.gmra.mxu0 %v516
        %v2059 = vpop.f32.mrf.mxu0
        %v2060 = vadd.f32 %v2047, %v2059
        %v2061 = vpop.f32.mrf.mxu0
        %2062 = vdwg.mxu0
        %2063 = vmatpush.bf16.msra.mxu0 %v1364
        %2064 = vmatpush.bf16.msra.mxu0 %v1362
        %2065 = vmatpush.bf16.msra.mxu0 %v1360
        %2066 = vmatpush.bf16.msra.mxu0 %v1358
        %2067 = vmatpush.bf16.msra.mxu0 %v1356
        %2068 = vmatpush.bf16.msra.mxu0 %v1354
        %2069 = vmatpush.bf16.msra.mxu0 %v1352
        %2070 = vmatpush.bf16.msra.mxu0 %v1350
        %2071 = vmatmul.bf16.gmra.mxu0 %v517
        %v2072 = vpop.f32.mrf.mxu0
        %v2073 = vadd.f32 %v2060, %v2072
        %v2074 = vpop.f32.mrf.mxu0
        %2075 = vdwg.mxu0
        %2076 = vmatpush.bf16.msra.mxu0 %v1380
        %2077 = vmatpush.bf16.msra.mxu0 %v1378
        %2078 = vmatpush.bf16.msra.mxu0 %v1376
        %2079 = vmatpush.bf16.msra.mxu0 %v1374
        %2080 = vmatpush.bf16.msra.mxu0 %v1372
        %2081 = vmatpush.bf16.msra.mxu0 %v1370
        %2082 = vmatpush.bf16.msra.mxu0 %v1368
        %2083 = vmatpush.bf16.msra.mxu0 %v1366
        %2084 = vmatmul.bf16.gmra.mxu0 %v518
        %v2085 = vpop.f32.mrf.mxu0
        %v2086 = vadd.f32 %v2073, %v2085
        %v2087 = vpop.f32.mrf.mxu0
        %2088 = vdwg.mxu0
        %2089 = vmatpush.bf16.msra.mxu0 %v1396
        %2090 = vmatpush.bf16.msra.mxu0 %v1394
        %2091 = vmatpush.bf16.msra.mxu0 %v1392
        %2092 = vmatpush.bf16.msra.mxu0 %v1390
        %2093 = vmatpush.bf16.msra.mxu0 %v1388
        %2094 = vmatpush.bf16.msra.mxu0 %v1386
        %2095 = vmatpush.bf16.msra.mxu0 %v1384
        %2096 = vmatpush.bf16.msra.mxu0 %v1382
        %2097 = vmatmul.bf16.gmra.mxu0 %v519
        %v2098 = vpop.f32.mrf.mxu0
        %v2099 = vadd.f32 %v2086, %v2098
        %v2100 = vpop.f32.mrf.mxu0
        %2101 = vdwg.mxu0
        %2102 = vmatpush.bf16.msra.mxu0 %v1412
        %2103 = vmatpush.bf16.msra.mxu0 %v1410
        %2104 = vmatpush.bf16.msra.mxu0 %v1408
        %2105 = vmatpush.bf16.msra.mxu0 %v1406
        %2106 = vmatpush.bf16.msra.mxu0 %v1404
        %2107 = vmatpush.bf16.msra.mxu0 %v1402
        %2108 = vmatpush.bf16.msra.mxu0 %v1400
        %2109 = vmatpush.bf16.msra.mxu0 %v1398
        %2110 = vmatmul.bf16.gmra.mxu0 %v520
        %v2111 = vpop.f32.mrf.mxu0
        %v2112 = vadd.f32 %v2099, %v2111
        %v2113 = vpop.f32.mrf.mxu0
        %2114 = vdwg.mxu0
        %2115 = vmatpush.bf16.msra.mxu0 %v1428
        %2116 = vmatpush.bf16.msra.mxu0 %v1426
        %2117 = vmatpush.bf16.msra.mxu0 %v1424
        %2118 = vmatpush.bf16.msra.mxu0 %v1422
        %2119 = vmatpush.bf16.msra.mxu0 %v1420
        %2120 = vmatpush.bf16.msra.mxu0 %v1418
        %2121 = vmatpush.bf16.msra.mxu0 %v1416
        %2122 = vmatpush.bf16.msra.mxu0 %v1414
        %2123 = vmatmul.bf16.gmra.mxu0 %v521
        %v2124 = vpop.f32.mrf.mxu0
        %v2125 = vadd.f32 %v2112, %v2124
        %v2126 = vpop.f32.mrf.mxu0
        %2127 = vdwg.mxu0
        %2128 = vmatpush.bf16.msra.mxu0 %v1444
        %2129 = vmatpush.bf16.msra.mxu0 %v1442
        %2130 = vmatpush.bf16.msra.mxu0 %v1440
        %2131 = vmatpush.bf16.msra.mxu0 %v1438
        %2132 = vmatpush.bf16.msra.mxu0 %v1436
        %2133 = vmatpush.bf16.msra.mxu0 %v1434
        %2134 = vmatpush.bf16.msra.mxu0 %v1432
        %2135 = vmatpush.bf16.msra.mxu0 %v1430
        %2136 = vmatmul.bf16.gmra.mxu0 %v522
        %v2137 = vpop.f32.mrf.mxu0
        %v2138 = vadd.f32 %v2125, %v2137
        %v2139 = vpop.f32.mrf.mxu0
        %2140 = vdwg.mxu0
        %2141 = vmatpush.bf16.msra.mxu0 %v1460
        %2142 = vmatpush.bf16.msra.mxu0 %v1458
        %2143 = vmatpush.bf16.msra.mxu0 %v1456
        %2144 = vmatpush.bf16.msra.mxu0 %v1454
        %2145 = vmatpush.bf16.msra.mxu0 %v1452
        %2146 = vmatpush.bf16.msra.mxu0 %v1450
        %2147 = vmatpush.bf16.msra.mxu0 %v1448
        %2148 = vmatpush.bf16.msra.mxu0 %v1446
        %2149 = vmatmul.bf16.gmra.mxu0 %v525
        %v2150 = vpop.f32.mrf.mxu0
        %v2151 = vadd.f32 %v2138, %v2150
        %v2152 = vpop.f32.mrf.mxu0
        %2153 = vdwg.mxu0
        %2154 = vmatpush.bf16.msra.mxu0 %v1476
        %2155 = vmatpush.bf16.msra.mxu0 %v1474
        %2156 = vmatpush.bf16.msra.mxu0 %v1472
        %2157 = vmatpush.bf16.msra.mxu0 %v1470
        %2158 = vmatpush.bf16.msra.mxu0 %v1468
        %2159 = vmatpush.bf16.msra.mxu0 %v1466
        %2160 = vmatpush.bf16.msra.mxu0 %v1464
        %2161 = vmatpush.bf16.msra.mxu0 %v1462
        %2162 = vmatmul.bf16.gmra.mxu0 %v526
        %v2163 = vpop.f32.mrf.mxu0
        %v2164 = vadd.f32 %v2151, %v2163
        %v2165 = vpop.f32.mrf.mxu0
        %2166 = vdwg.mxu0
        %2167 = vmatpush.bf16.msra.mxu0 %v1492
        %2168 = vmatpush.bf16.msra.mxu0 %v1490
        %2169 = vmatpush.bf16.msra.mxu0 %v1488
        %2170 = vmatpush.bf16.msra.mxu0 %v1486
        %2171 = vmatpush.bf16.msra.mxu0 %v1484
        %2172 = vmatpush.bf16.msra.mxu0 %v1482
        %2173 = vmatpush.bf16.msra.mxu0 %v1480
        %2174 = vmatpush.bf16.msra.mxu0 %v1478
        %2175 = vmatmul.bf16.gmra.mxu0 %v527
        %v2176 = vpop.f32.mrf.mxu0
        %v2177 = vadd.f32 %v2164, %v2176
        %v2178 = vpop.f32.mrf.mxu0
        %2179 = vdwg.mxu0
        %2180 = vmatpush.bf16.msra.mxu0 %v1508
        %2181 = vmatpush.bf16.msra.mxu0 %v1506
        %2182 = vmatpush.bf16.msra.mxu0 %v1504
        %2183 = vmatpush.bf16.msra.mxu0 %v1502
        %2184 = vmatpush.bf16.msra.mxu0 %v1500
        %2185 = vmatpush.bf16.msra.mxu0 %v1498
        %2186 = vmatpush.bf16.msra.mxu0 %v1496
        %2187 = vmatpush.bf16.msra.mxu0 %v1494
        %2188 = vmatmul.bf16.gmra.mxu0 %v528
        %v2189 = vpop.f32.mrf.mxu0
        %v2190 = vadd.f32 %v2177, %v2189
        %v2191 = vpop.f32.mrf.mxu0
        %2192 = vdwg.mxu0
        %2193 = vmatpush.bf16.msra.mxu0 %v1524
        %2194 = vmatpush.bf16.msra.mxu0 %v1522
        %2195 = vmatpush.bf16.msra.mxu0 %v1520
        %2196 = vmatpush.bf16.msra.mxu0 %v1518
        %2197 = vmatpush.bf16.msra.mxu0 %v1516
        %2198 = vmatpush.bf16.msra.mxu0 %v1514
        %2199 = vmatpush.bf16.msra.mxu0 %v1512
        %2200 = vmatpush.bf16.msra.mxu0 %v1510
        %2201 = vmatmul.bf16.gmra.mxu0 %v529
        %v2202 = vpop.f32.mrf.mxu0
        %v2203 = vadd.f32 %v2190, %v2202
        %v2204 = vpop.f32.mrf.mxu0
        %2205 = vdwg.mxu0
        %2206 = vmatpush.bf16.msra.mxu0 %v1540
        %2207 = vmatpush.bf16.msra.mxu0 %v1538
        %2208 = vmatpush.bf16.msra.mxu0 %v1536
        %2209 = vmatpush.bf16.msra.mxu0 %v1534
        %2210 = vmatpush.bf16.msra.mxu0 %v1532
        %2211 = vmatpush.bf16.msra.mxu0 %v1530
        %2212 = vmatpush.bf16.msra.mxu0 %v1528
        %2213 = vmatpush.bf16.msra.mxu0 %v1526
        %2214 = vmatmul.bf16.gmra.mxu0 %v530
        %v2215 = vpop.f32.mrf.mxu0
        %v2216 = vadd.f32 %v2203, %v2215
        %v2217 = vpop.f32.mrf.mxu0
        %2218 = vdwg.mxu0
        %2219 = vmatpush.bf16.msra.mxu0 %v1556
        %2220 = vmatpush.bf16.msra.mxu0 %v1554
        %2221 = vmatpush.bf16.msra.mxu0 %v1552
        %2222 = vmatpush.bf16.msra.mxu0 %v1550
        %2223 = vmatpush.bf16.msra.mxu0 %v1548
        %2224 = vmatpush.bf16.msra.mxu0 %v1546
        %2225 = vmatpush.bf16.msra.mxu0 %v1544
        %2226 = vmatpush.bf16.msra.mxu0 %v1542
        %2227 = vmatmul.bf16.gmra.mxu0 %v531
        %v2228 = vpop.f32.mrf.mxu0
        %v2229 = vadd.f32 %v2216, %v2228
        %v2230 = vpop.f32.mrf.mxu0
        %2231 = vdwg.mxu0
        %2232 = vmatpush.bf16.msra.mxu0 %v1572
        %2233 = vmatpush.bf16.msra.mxu0 %v1570
        %2234 = vmatpush.bf16.msra.mxu0 %v1568
        %2235 = vmatpush.bf16.msra.mxu0 %v1566
        %2236 = vmatpush.bf16.msra.mxu0 %v1564
        %2237 = vmatpush.bf16.msra.mxu0 %v1562
        %2238 = vmatpush.bf16.msra.mxu0 %v1560
        %2239 = vmatpush.bf16.msra.mxu0 %v1558
        %2240 = vmatmul.bf16.gmra.mxu0 %v532
        %v2241 = vpop.f32.mrf.mxu0
        %v2242 = vadd.f32 %v2229, %v2241
        %v2243 = vpop.f32.mrf.mxu0
        %2244 = vdwg.mxu0
        %v2247 = vrot.slane %v2242, 6
        %vm2248 = vcmask 1041408
        %v2249 = vsel %vm2248, %v2034, %v2247
        %v2251 = vadd.f32 %v254, %v2249
        %2252 = vst [vmem:[#allocation2] sm:$0xf] %v2251
        %p2253 = scmp.eq.s32.totalorder %s22, 3
        // Predicated region
        $region41: #{siamese_forward.19} parent=31 // pred_check
          %p2254 = pneg %p2253
        $region42: #{siamese_forward.19} parent=31 // pred_check_branch
          %2256 = sbr.rel (%p2254) target = $region44
        $region43: #{siamese_forward.19} parent=31 // pred_region
          %v2257 = vld [vmem:[#allocation2] sm:$0xf]
          %v2258 = vld [vmem:[%s242] sm:$0x3]
          %v2260 = vperm.slane %v2258, 0
          %v2261 = vperm.slane %v2258, 1
          %v2262 = vrot.slane %v2261, 6
          %v2263 = vsel %vm2248, %v2260, %v2262
          %v2265 = vadd.f32 %v2257, %v2263
          %v2266 = vmax.f32 %v2265, 0.0
          %2268 = vst [vmem:[#allocation1] ss:$4 sm:$0xff] %v2266
          %v2269 = vld.sshfl [vmem:[#allocation1] sm:$0xff pattern:$0x73625140]
          %v2270 = vld.sshfl [vmem:[#allocation1 + $0x8] sm:$0xff pattern:$0x73625140]
          %v2273 = vpack.c.bf16 %v2270, %v2269
          %v2275 = vrot.slane %v2273, 3
          %vm2276 = vcmask 1040384
          %v2279 = vsel %vm2276, %v2273, %v2275
          %2281 = vst [vmem:[%s247] sm:$0x3] %v2279
        $region44: #{siamese_forward.19} parent=31 // pred_fallthru
          _
        %s2282 = smul.u32 2, %s21
        %p2283 = scmp.lt.s32.totalorder %s2282, 3
        %s2284 = scalar_select %p2283, %s2282, 3
        %s2285 = scalar_lea.vmem %s3, %s2284
        // Predicated region
        $region45: #{siamese_forward.19} parent=31 // pred_check
          %p2286 = pneg %p127
        $region46: #{siamese_forward.19} parent=31 // pred_check_branch
          %2288 = sbr.rel (%p2286) target = $region48
        $region47: #{siamese_forward.19} parent=31 // pred_region
          %s2289 = smul.u32 2, %s21
        $region48: #{siamese_forward.19} parent=31 // pred_fallthru
          _
      $region32: #{siamese_forward.19} parent=5 // pred_fallthru
        _
      %p2290 = scmp.le.s32.totalorder 2, %s12
      // Predicated region
      $region49: #{siamese_forward.19} parent=5 // pred_check
        %p2291 = pneg %p2290
      $region50: #{siamese_forward.19} parent=5 // pred_check_branch
        %2293 = sbr.rel (%p2291) target = $region52
      $region51: #{siamese_forward.19} parent=5 // pred_region
        %s2294 = ssub.s32 %s12, 2
        // Predicated region
        $region53: #{siamese_forward.19} parent=51 // pred_check
          %p2295 = pneg %p133
        $region54: #{siamese_forward.19} parent=51 // pred_check_branch
          %2297 = sbr.rel (%p2295) target = $region56
        $region55: #{siamese_forward.19} parent=51 // pred_region
          %s2298 = smul.u32 2, %s23
          %p2299 = scmp.lt.s32.totalorder %s2298, 3
          %s2300 = scalar_select %p2299, %s2298, 3
          %s2301 = scalar_lea.vmem %s3, %s2300
        $region56: #{siamese_forward.19} parent=51 // pred_fallthru
          _
      $region52: #{siamese_forward.19} parent=5 // pred_fallthru
        _
    $region6: #{siamese_forward.19} parent=1 // loop_footer
      %s16 = sadd.s32 1, %s12
    $region7: #{siamese_forward.19} parent=1 // loop_footer_branch
      %11 = sbr.rel target = $region3
    $region8: #{siamese_forward.19} parent=1 // loop_exit
      _
    %2302 = vsyncpa [#allocation4], 1
    %s2303 = scalar_lea.sflag [#allocation4], 1
    %2304 = vsyncpa %s2303, 1

// kernel: siamese_forward.21
$region0: #{siamese_forward.21}
  #allocation0 [shape = 'u32[]', space=smem, size = 0x4, offset = 0x4, fixed_abs, tag = 'smem constant byte address 0x4 - core index']
  #allocation1 [shape = 'u32[72,128]{1,0:T(1,128)}', space=vmem, size = 0x9000, scoped, tag = 'internal scratch']
  #allocation2 [shape = 'f32[2,128]{1,0:T(2,128)}', space=vmem, size = 0x400, scoped, tag = 'scratch operand']
  %s0 = inlined_call_operand.vmem [shape: bf16[2,512], index: 0, kind: input, shape index: {}]
  %s1 = inlined_call_operand.vmem [shape: bf16[512,128], index: 1, kind: input, shape index: {}]
  %s2 = inlined_call_operand.vmem [shape: f32[1,128], index: 2, kind: input, shape index: {}]
  %s3 = inlined_call_operand.hbm [shape: f32[2,128], index: 3, kind: output, shape index: {}]
  %s4 = sld [smem:[#allocation0]]
  $region30: #{siamese_forward.21} parent=0
    _
  %s6 = ssub.s32 1, %s4
  %s7 = scalar_select 0, %s6, %s4
  $region1: #{siamese_forward.21} parent=0
    #allocation3 [shape = 'u8[1024]{0}', space=vmem, size = 0x400, scoped, tag = 'output window, operand 0, single buffered']
    #allocation4 [shape = 's32[1]{0}', space=sflag, size = 0x4, scoped, tag = 'scoped memory for siamese_forward.21']
    %8 = vsyncpa [#allocation4], 0
    // Predicated region
    $region2: #{siamese_forward.21} parent=1 // pred_check
      _
    $region3: #{siamese_forward.21} parent=1 // pred_check_branch
      %10 = sbr.rel (0) target = $region5
    $region4: #{siamese_forward.21} parent=1 // pred_region
      _
    $region5: #{siamese_forward.21} parent=1 // pred_fallthru
      _
    // Predicated region
    $region6: #{siamese_forward.21} parent=1 // pred_check
      _
    $region7: #{siamese_forward.21} parent=1 // pred_check_branch
      %12 = sbr.rel (0) target = $region9
    $region8: #{siamese_forward.21} parent=1 // pred_region
      _
    $region9: #{siamese_forward.21} parent=1 // pred_fallthru
      _
    // Predicated region
    $region10: #{siamese_forward.21} parent=1 // pred_check
      _
    $region11: #{siamese_forward.21} parent=1 // pred_check_branch
      %14 = sbr.rel (0) target = $region13
    $region12: #{siamese_forward.21} parent=1 // pred_region
      _
    $region13: #{siamese_forward.21} parent=1 // pred_fallthru
      _
    %p15 = scmp.eq.s32.totalorder 0, 0
    // Predicated region
    $region14: #{siamese_forward.21} parent=1 // pred_check
      %p16 = pneg %p15
    $region15: #{siamese_forward.21} parent=1 // pred_check_branch
      %18 = sbr.rel (%p16) target = $region17
    $region16: #{siamese_forward.21} parent=1 // pred_region
      %19 = vst [vmem:[#allocation2] sm:$0x3] 0.0
    $region17: #{siamese_forward.21} parent=1 // pred_fallthru
      _
    %v20 = vld [vmem:[#allocation2] sm:$0x3]
    %v21 = vld [vmem:[%s0] sm:$0xf]
    %v22 = vld [vmem:[%s1] sm:$0xf]
    %v23 = vld [vmem:[%s1 + $0x4] sm:$0xf]
    %v24 = vld [vmem:[%s1 + $0x8] sm:$0xf]
    %v25 = vld [vmem:[%s1 + $0xc] sm:$0xf]
    %v26 = vld [vmem:[%s1 + $0x10] sm:$0xf]
    %v27 = vld [vmem:[%s1 + $0x14] sm:$0xf]
    %v28 = vld [vmem:[%s1 + $0x18] sm:$0xf]
    %v29 = vld [vmem:[%s1 + $0x1c] sm:$0xf]
    %v30 = vld [vmem:[%s1 + $0x20] sm:$0xf]
    %v31 = vld [vmem:[%s1 + $0x24] sm:$0xf]
    %v32 = vld [vmem:[%s1 + $0x28] sm:$0xf]
    %v33 = vld [vmem:[%s1 + $0x2c] sm:$0xf]
    %v34 = vld [vmem:[%s1 + $0x30] sm:$0xf]
    %v35 = vld [vmem:[%s1 + $0x34] sm:$0xf]
    %v36 = vld [vmem:[%s1 + $0x38] sm:$0xf]
    %v37 = vld [vmem:[%s1 + $0x3c] sm:$0xf]
    %v38 = vld [vmem:[%s1 + $0x40] sm:$0xf]
    %v39 = vld [vmem:[%s1 + $0x44] sm:$0xf]
    %v40 = vld [vmem:[%s1 + $0x48] sm:$0xf]
    %v41 = vld [vmem:[%s1 + $0x4c] sm:$0xf]
    %v42 = vld [vmem:[%s1 + $0x50] sm:$0xf]
    %v43 = vld [vmem:[%s1 + $0x54] sm:$0xf]
    %v44 = vld [vmem:[%s1 + $0x58] sm:$0xf]
    %v45 = vld [vmem:[%s1 + $0x5c] sm:$0xf]
    %v46 = vld [vmem:[%s1 + $0x60] sm:$0xf]
    %v47 = vld [vmem:[%s1 + $0x64] sm:$0xf]
    %v48 = vld [vmem:[%s1 + $0x68] sm:$0xf]
    %v49 = vld [vmem:[%s1 + $0x6c] sm:$0xf]
    %v50 = vld [vmem:[%s1 + $0x70] sm:$0xf]
    %v51 = vld [vmem:[%s1 + $0x74] sm:$0xf]
    %v52 = vld [vmem:[%s1 + $0x78] sm:$0xf]
    %v53 = vld [vmem:[%s1 + $0x7c] sm:$0xf]
    %v54 = vld [vmem:[%s1 + $0x80] sm:$0xf]
    %v55 = vld [vmem:[%s1 + $0x84] sm:$0xf]
    %v56 = vld [vmem:[%s1 + $0x88] sm:$0xf]
    %v57 = vld [vmem:[%s1 + $0x8c] sm:$0xf]
    %v58 = vld [vmem:[%s1 + $0x90] sm:$0xf]
    %v59 = vld [vmem:[%s1 + $0x94] sm:$0xf]
    %v60 = vld [vmem:[%s1 + $0x98] sm:$0xf]
    %v61 = vld [vmem:[%s1 + $0x9c] sm:$0xf]
    %v62 = vld [vmem:[%s1 + $0xa0] sm:$0xf]
    %v63 = vld [vmem:[%s1 + $0xa4] sm:$0xf]
    %v64 = vld [vmem:[%s1 + $0xa8] sm:$0xf]
    %v65 = vld [vmem:[%s1 + $0xac] sm:$0xf]
    %v66 = vld [vmem:[%s1 + $0xb0] sm:$0xf]
    %v67 = vld [vmem:[%s1 + $0xb4] sm:$0xf]
    %v68 = vld [vmem:[%s1 + $0xb8] sm:$0xf]
    %v69 = vld [vmem:[%s1 + $0xbc] sm:$0xf]
    %v70 = vld [vmem:[%s1 + $0xc0] sm:$0xf]
    %v71 = vld [vmem:[%s1 + $0xc4] sm:$0xf]
    %v72 = vld [vmem:[%s1 + $0xc8] sm:$0xf]
    %v73 = vld [vmem:[%s1 + $0xcc] sm:$0xf]
    %v74 = vld [vmem:[%s1 + $0xd0] sm:$0xf]
    %v75 = vld [vmem:[%s1 + $0xd4] sm:$0xf]
    %v76 = vld [vmem:[%s1 + $0xd8] sm:$0xf]
    %v77 = vld [vmem:[%s1 + $0xdc] sm:$0xf]
    %v78 = vld [vmem:[%s1 + $0xe0] sm:$0xf]
    %v79 = vld [vmem:[%s1 + $0xe4] sm:$0xf]
    %v80 = vld [vmem:[%s1 + $0xe8] sm:$0xf]
    %v81 = vld [vmem:[%s1 + $0xec] sm:$0xf]
    %v82 = vld [vmem:[%s1 + $0xf0] sm:$0xf]
    %v83 = vld [vmem:[%s1 + $0xf4] sm:$0xf]
    %v84 = vld [vmem:[%s1 + $0xf8] sm:$0xf]
    %v85 = vld [vmem:[%s1 + $0xfc] sm:$0xf]
    %87 = vst [vmem:[#allocation1] ss:$9 sm:$0xff] %v21
    %v88 = vld [vmem:[#allocation1] sm:$0xff]
    %v89 = vld [vmem:[#allocation1 + $0x9] sm:$0xff]
    %v90 = vld [vmem:[#allocation1 + $0x12] sm:$0xff]
    %v91 = vld [vmem:[#allocation1 + $0x1b] sm:$0xff]
    %v160 = vunpack.c.l.b16 %v22
    %v161 = vunpack.c.l.b16 %v23
    %v162 = vunpack.c.l.b16 %v24
    %v163 = vunpack.c.l.b16 %v25
    %v164 = vunpack.c.l.b16 %v26
    %v165 = vunpack.c.l.b16 %v27
    %v166 = vunpack.c.l.b16 %v28
    %v167 = vunpack.c.l.b16 %v29
    %v168 = vunpack.c.l.b16 %v30
    %v169 = vunpack.c.l.b16 %v31
    %v170 = vunpack.c.l.b16 %v32
    %v171 = vunpack.c.l.b16 %v33
    %v172 = vunpack.c.l.b16 %v34
    %v173 = vunpack.c.l.b16 %v35
    %v174 = vunpack.c.l.b16 %v36
    %v175 = vunpack.c.l.b16 %v37
    %v176 = vunpack.c.l.b16 %v38
    %v177 = vunpack.c.l.b16 %v39
    %v178 = vunpack.c.l.b16 %v40
    %v179 = vunpack.c.l.b16 %v41
    %v180 = vunpack.c.l.b16 %v42
    %v181 = vunpack.c.l.b16 %v43
    %v182 = vunpack.c.l.b16 %v44
    %v183 = vunpack.c.l.b16 %v45
    %v184 = vunpack.c.l.b16 %v46
    %v185 = vunpack.c.l.b16 %v47
    %v186 = vunpack.c.l.b16 %v48
    %v187 = vunpack.c.l.b16 %v49
    %v188 = vunpack.c.l.b16 %v50
    %v189 = vunpack.c.l.b16 %v51
    %v190 = vunpack.c.l.b16 %v52
    %v191 = vunpack.c.l.b16 %v53
    %v192 = vunpack.c.l.b16 %v54
    %v193 = vunpack.c.l.b16 %v55
    %v194 = vunpack.c.l.b16 %v56
    %v195 = vunpack.c.l.b16 %v57
    %v196 = vunpack.c.l.b16 %v58
    %v197 = vunpack.c.l.b16 %v59
    %v198 = vunpack.c.l.b16 %v60
    %v199 = vunpack.c.l.b16 %v61
    %v200 = vunpack.c.l.b16 %v62
    %v201 = vunpack.c.l.b16 %v63
    %v202 = vunpack.c.l.b16 %v64
    %v203 = vunpack.c.l.b16 %v65
    %v204 = vunpack.c.l.b16 %v66
    %v205 = vunpack.c.l.b16 %v67
    %v206 = vunpack.c.l.b16 %v68
    %v207 = vunpack.c.l.b16 %v69
    %v208 = vunpack.c.l.b16 %v70
    %v209 = vunpack.c.l.b16 %v71
    %v210 = vunpack.c.l.b16 %v72
    %v211 = vunpack.c.l.b16 %v73
    %v212 = vunpack.c.l.b16 %v74
    %v213 = vunpack.c.l.b16 %v75
    %v214 = vunpack.c.l.b16 %v76
    %v215 = vunpack.c.l.b16 %v77
    %v216 = vunpack.c.l.b16 %v78
    %v217 = vunpack.c.l.b16 %v79
    %v218 = vunpack.c.l.b16 %v80
    %v219 = vunpack.c.l.b16 %v81
    %v220 = vunpack.c.l.b16 %v82
    %v221 = vunpack.c.l.b16 %v83
    %v222 = vunpack.c.l.b16 %v84
    %v223 = vunpack.c.l.b16 %v85
    %v224 = vpack.c.b16 %v161, %v160
    %v225 = vpack.c.b16 %v163, %v162
    %v226 = vpack.c.b16 %v165, %v164
    %v227 = vpack.c.b16 %v167, %v166
    %v228 = vpack.c.b16 %v169, %v168
    %v229 = vpack.c.b16 %v171, %v170
    %v230 = vpack.c.b16 %v173, %v172
    %v231 = vpack.c.b16 %v175, %v174
    %v232 = vpack.c.b16 %v177, %v176
    %v233 = vpack.c.b16 %v179, %v178
    %v234 = vpack.c.b16 %v181, %v180
    %v235 = vpack.c.b16 %v183, %v182
    %v236 = vpack.c.b16 %v185, %v184
    %v237 = vpack.c.b16 %v187, %v186
    %v238 = vpack.c.b16 %v189, %v188
    %v239 = vpack.c.b16 %v191, %v190
    %v240 = vpack.c.b16 %v193, %v192
    %v241 = vpack.c.b16 %v195, %v194
    %v242 = vpack.c.b16 %v197, %v196
    %v243 = vpack.c.b16 %v199, %v198
    %v244 = vpack.c.b16 %v201, %v200
    %v245 = vpack.c.b16 %v203, %v202
    %v246 = vpack.c.b16 %v205, %v204
    %v247 = vpack.c.b16 %v207, %v206
    %v248 = vpack.c.b16 %v209, %v208
    %v249 = vpack.c.b16 %v211, %v210
    %v250 = vpack.c.b16 %v213, %v212
    %v251 = vpack.c.b16 %v215, %v214
    %v252 = vpack.c.b16 %v217, %v216
    %v253 = vpack.c.b16 %v219, %v218
    %v254 = vpack.c.b16 %v221, %v220
    %v255 = vpack.c.b16 %v223, %v222
    %288 = vmatpush.bf16.msra.mxu0 %v231
    %289 = vmatpush.bf16.msra.mxu0 %v230
    %290 = vmatpush.bf16.msra.mxu0 %v229
    %291 = vmatpush.bf16.msra.mxu0 %v228
    %292 = vmatpush.bf16.msra.mxu0 %v227
    %293 = vmatpush.bf16.msra.mxu0 %v226
    %294 = vmatpush.bf16.msra.mxu0 %v225
    %295 = vmatpush.bf16.msra.mxu0 %v224
    %296 = vmatmul.bf16.gmra.mxu0 %v88
    %v297 = vpop.f32.mrf.mxu0
    %v298 = vadd.f32 0.0, %v297
    %v299 = vpop.f32.mrf.mxu0
    %300 = vdwg.mxu0
    %301 = vmatpush.bf16.msra.mxu0 %v239
    %302 = vmatpush.bf16.msra.mxu0 %v238
    %303 = vmatpush.bf16.msra.mxu0 %v237
    %304 = vmatpush.bf16.msra.mxu0 %v236
    %305 = vmatpush.bf16.msra.mxu0 %v235
    %306 = vmatpush.bf16.msra.mxu0 %v234
    %307 = vmatpush.bf16.msra.mxu0 %v233
    %308 = vmatpush.bf16.msra.mxu0 %v232
    %309 = vmatmul.bf16.gmra.mxu0 %v89
    %v310 = vpop.f32.mrf.mxu0
    %v311 = vadd.f32 %v298, %v310
    %v312 = vpop.f32.mrf.mxu0
    %313 = vdwg.mxu0
    %314 = vmatpush.bf16.msra.mxu0 %v247
    %315 = vmatpush.bf16.msra.mxu0 %v246
    %316 = vmatpush.bf16.msra.mxu0 %v245
    %317 = vmatpush.bf16.msra.mxu0 %v244
    %318 = vmatpush.bf16.msra.mxu0 %v243
    %319 = vmatpush.bf16.msra.mxu0 %v242
    %320 = vmatpush.bf16.msra.mxu0 %v241
    %321 = vmatpush.bf16.msra.mxu0 %v240
    %322 = vmatmul.bf16.gmra.mxu0 %v90
    %v323 = vpop.f32.mrf.mxu0
    %v324 = vadd.f32 %v311, %v323
    %v325 = vpop.f32.mrf.mxu0
    %326 = vdwg.mxu0
    %327 = vmatpush.bf16.msra.mxu0 %v255
    %328 = vmatpush.bf16.msra.mxu0 %v254
    %329 = vmatpush.bf16.msra.mxu0 %v253
    %330 = vmatpush.bf16.msra.mxu0 %v252
    %331 = vmatpush.bf16.msra.mxu0 %v251
    %332 = vmatpush.bf16.msra.mxu0 %v250
    %333 = vmatpush.bf16.msra.mxu0 %v249
    %334 = vmatpush.bf16.msra.mxu0 %v248
    %335 = vmatmul.bf16.gmra.mxu0 %v91
    %v336 = vpop.f32.mrf.mxu0
    %v337 = vadd.f32 %v324, %v336
    %v338 = vpop.f32.mrf.mxu0
    %339 = vdwg.mxu0
    %v340 = vadd.f32 %v20, %v337
    %341 = vst [vmem:[#allocation2] sm:$0x3] %v340
    // Predicated region
    $region18: #{siamese_forward.21} parent=1 // pred_check
      %p342 = pneg %p15
    $region19: #{siamese_forward.21} parent=1 // pred_check_branch
      %344 = sbr.rel (%p342) target = $region21
    $region20: #{siamese_forward.21} parent=1 // pred_region
      %v345 = vld [vmem:[#allocation2] sm:$0x3]
      %v346 = vld [vmem:[%s2] sm:$0x1]
      %v348 = vperm.slane %v346, 0
      %v350 = vadd.f32 %v345, %v348
      %351 = vst [vmem:[#allocation3] sm:$0x3] %v350
    $region21: #{siamese_forward.21} parent=1 // pred_fallthru
      _
    // Predicated region
    $region22: #{siamese_forward.21} parent=1 // pred_check
      _
    $region23: #{siamese_forward.21} parent=1 // pred_check_branch
      %353 = sbr.rel (0) target = $region25
    $region24: #{siamese_forward.21} parent=1 // pred_region
      %355 = vsyncadd [#allocation4], 0
      %s357 = sshll.u32 [#allocation3], 4
      %s358 = int_to_ptr.vmem [resolvable:$true] %s357
      %s359 = sshll.u32 %s3, 4
      %s360 = int_to_ptr.hbm [resolvable:$true] %s359
      %362 = dma.vmem_to_hbm [thread:$0]  %s358, 32, %s360, [#allocation4]
    $region25: #{siamese_forward.21} parent=1 // pred_fallthru
      _
    // Predicated region
    $region26: #{siamese_forward.21} parent=1 // pred_check
      _
    $region27: #{siamese_forward.21} parent=1 // pred_check_branch
      %364 = sbr.rel (0) target = $region29
    $region28: #{siamese_forward.21} parent=1 // pred_region
      %366 = dma.done [#allocation4], 32
    $region29: #{siamese_forward.21} parent=1 // pred_fallthru
      _
    %367 = vsyncpa [#allocation4], 1

</llo_original>
